<compile_context>
chip_gen: v7x
topology: tpu7x:2x2x1
jax: 0.10.0
libtpu: 0.0.40
codegen_flags: <defaults>
</compile_context>

<pallas_src>
import jax
import jax.numpy as jnp
from jax.experimental import pallas as pl
from jax.experimental.pallas import tpu as pltpu

INPUT_SIZE = 3
HIDDEN = 80            # logical hidden size (matches PyTorch module)
HP = 128               # hidden padded to a full lane tile
NUM_LAYERS = 3
SEQ_LEN = 7
FC_HIDDEN = 256
OUT_PAD = 128          # padded FC2 output width; real output is column 0
TILE_B = 8             # batch tile (sublane aligned)


def _sigmoid(x):
    # exp + reciprocal both go to the EUP slot (idle during the recurrence).
    return pl.reciprocal(1.0 + jnp.exp(-x), approx=True)


def lstm_mlp_kernel(x_ref,
                    wih0_ref, whh0_ref, b0_ref,
                    wih1_ref, whh1_ref, b1_ref,
                    wih2_ref, whh2_ref, b2_ref,
                    w1_ref, bfc1_ref, w2_ref, bfc2_ref,
                    out_ref):
    """One batch tile of the whole model. Gate order i,f,g,o (PyTorch)."""
    x = x_ref[...]                                           # (TILE_B, SEQ, IN) f32
    xs = [x[:, t, :].astype(jnp.bfloat16) for t in range(SEQ_LEN)]

    layer_params = ((wih0_ref, whh0_ref, b0_ref),
                    (wih1_ref, whh1_ref, b1_ref),
                    (wih2_ref, whh2_ref, b2_ref))

    for wih_ref, whh_ref, b_ref in layer_params:
        wih = wih_ref[...]                                   # (in_dim, 4*HP) bf16
        whh = whh_ref[...]                                   # (HP, 4*HP)     bf16
        b = b_ref[...]                                       # (1, 4*HP)      f32

        # Input projection (+bias) has no recurrence dependency: hoisted off
        # the serial chain, one fused (.,4H) matmul per timestep.
        pre_x = [jnp.dot(x_t, wih, preferred_element_type=jnp.float32) + b
                 for x_t in xs]

        h = jnp.zeros((TILE_B, HP), jnp.float32)
        c = jnp.zeros((TILE_B, HP), jnp.float32)
        outs = []
        for t in range(SEQ_LEN):
            pre = pre_x[t] + jnp.dot(h.astype(jnp.bfloat16), whh,
                                     preferred_element_type=jnp.float32)
            # 128-aligned gate slices (i, f, g, o)
            i_g = _sigmoid(pre[:, 0 * HP:1 * HP])
            f_g = _sigmoid(pre[:, 1 * HP:2 * HP])
            g_g = jnp.tanh(pre[:, 2 * HP:3 * HP])
            o_g = _sigmoid(pre[:, 3 * HP:4 * HP])
            c = f_g * c + i_g * g_g
            h = o_g * jnp.tanh(c)
            outs.append(h)
        xs = [h_t.astype(jnp.bfloat16) for h_t in outs]      # feed next layer

    # FC head: reshape(bs, -1) @ W1.T + b1 expressed as a tile-aligned
    # accumulation over timesteps (no lane-unaligned concatenate).
    acc = jnp.broadcast_to(bfc1_ref[...], (TILE_B, FC_HIDDEN)).astype(jnp.float32)
    for t in range(SEQ_LEN):
        acc = acc + jnp.dot(xs[t], w1_ref[t],                # (TILE_B,HP)@(HP,256)
                            preferred_element_type=jnp.float32)
    z = jnp.where(acc > 0, acc, 0.01 * acc)                  # LeakyReLU(0.01)

    y = jnp.dot(z.astype(jnp.bfloat16), w2_ref[...],
                preferred_element_type=jnp.float32) + bfc2_ref[...]
    out_ref[...] = y                                         # (TILE_B, OUT_PAD); col 0 real


def lstm_model_v1(x, params):
    bs = x.shape[0]
    padded_bs = ((bs + TILE_B - 1) // TILE_B) * TILE_B
    x = x.astype(jnp.float32)
    if padded_bs != bs:
        x = jnp.pad(x, ((0, padded_bs - bs), (0, 0), (0, 0)))

    grid = (padded_bs // TILE_B,)
    in_specs = [pl.BlockSpec((TILE_B, SEQ_LEN, INPUT_SIZE), lambda b: (b, 0, 0))]
    for p in params:  # weights: whole array, broadcast across the batch grid
        in_specs.append(pl.BlockSpec(p.shape, lambda b, nd=p.ndim: (0,) * nd))
    out_spec = pl.BlockSpec((TILE_B, OUT_PAD), lambda b: (b, 0))

    y = pl.pallas_call(
        lstm_mlp_kernel,
        out_shape=jax.ShapeDtypeStruct((padded_bs, OUT_PAD), jnp.float32),
        grid_spec=pltpu.PrefetchScalarGridSpec(
            num_scalar_prefetch=0,
            grid=grid,
            in_specs=in_specs,
            out_specs=out_spec,
        ),
        compiler_params=pltpu.CompilerParams(
            dimension_semantics=("parallel",)),
    )(x, *params)
    return y[:bs, :1]


# ----------------------------- parameter packing -----------------------------

def _pad_gate_cols(w_t):
    """(in_dim, 4*HIDDEN) -> (in_dim, 4*HP): each 80-wide gate zero-padded to 128."""
    in_dim = w_t.shape[0]
    w4 = w_t.reshape(in_dim, 4, HIDDEN)
    w4 = jnp.pad(w4, ((0, 0), (0, 0), (0, HP - HIDDEN)))
    return w4.reshape(in_dim, 4 * HP)


def pack_params(lstm_torch, w1, bfc1, w2, bfc2):
    """Convert PyTorch-layout params to fused/padded kernel layout.

    Padded hidden units stay exactly 0 through the recurrence because their
    weight columns, biases and the corresponding w1 rows are all zero.
    """
    params = []
    for layer, (w_ih, w_hh, b_ih, b_hh) in enumerate(lstm_torch):
        wih = _pad_gate_cols(w_ih.T)                          # (in_dim, 4*HP)
        if layer > 0:
            wih = jnp.pad(wih, ((0, HP - HIDDEN), (0, 0)))    # input dim 80 -> 128
        whh = _pad_gate_cols(w_hh.T)
        whh = jnp.pad(whh, ((0, HP - HIDDEN), (0, 0)))        # (HP, 4*HP)
        b = _pad_gate_cols((b_ih + b_hh).reshape(1, 4 * HIDDEN))  # (1, 4*HP)
        params += [wih.astype(jnp.bfloat16),
                   whh.astype(jnp.bfloat16),
                   b.astype(jnp.float32)]

    # FC1: y = flat @ w1.T + b1; flat rows ordered [t, hidden] -> (SEQ, HP, 256)
    w1_t = w1.T.reshape(SEQ_LEN, HIDDEN, FC_HIDDEN)
    w1_t = jnp.pad(w1_t, ((0, 0), (0, HP - HIDDEN), (0, 0)))
    params += [w1_t.astype(jnp.bfloat16),
               bfc1.reshape(1, FC_HIDDEN).astype(jnp.float32)]

    # FC2: (1, 256) -> (256, OUT_PAD) with only column 0 nonzero (lane-dense store)
    w2_t = jnp.pad(w2.T, ((0, 0), (0, OUT_PAD - 1)))
    bfc2_p = jnp.pad(bfc2.reshape(1, 1), ((0, 0), (0, OUT_PAD - 1)))
    params += [w2_t.astype(jnp.bfloat16), bfc2_p.astype(jnp.float32)]
    return tuple(params)


def init_params(key):
    """Deterministic init matching PyTorch parameter shapes / init bounds."""
    keys = jax.random.split(key, 4 * NUM_LAYERS + 4)
    idx = [0]

    def unif(shape, bound):
        k = keys[idx[0]]
        idx[0] += 1
        return jax.random.uniform(k, shape, jnp.float32, -bound, bound)

    bound_lstm = 1.0 / float(HIDDEN) ** 0.5
    lstm_torch = []
    in_dim = INPUT_SIZE
    for _ in range(NUM_LAYERS):
        w_ih = unif((4 * HIDDEN, in_dim), bound_lstm)        # PyTorch layout
        w_hh = unif((4 * HIDDEN, HIDDEN), bound_lstm)
        b_ih = unif((4 * HIDDEN,), bound_lstm)
        b_hh = unif((4 * HIDDEN,), bound_lstm)
        lstm_torch.append((w_ih, w_hh, b_ih, b_hh))
        in_dim = HIDDEN

    K = SEQ_LEN * HIDDEN                                      # 560
    b1 = 1.0 / float(K) ** 0.5
    w1 = unif((FC_HIDDEN, K), b1)
    bfc1 = unif((FC_HIDDEN,), b1)
    b2 = 1.0 / float(FC_HIDDEN) ** 0.5
    w2 = unif((1, FC_HIDDEN), b2)
    bfc2 = unif((1,), b2)
    return pack_params(lstm_torch, w1, bfc1, w2, bfc2)


if __name__ == "__main__":
    key = jax.random.PRNGKey(0)
    pkey, xkey = jax.random.split(key)
    params = init_params(pkey)

    bs = 2
    x = jax.random.normal(xkey, (bs, SEQ_LEN, INPUT_SIZE), jnp.float32)

    y = lstm_model_v1(x, params)
    jax.block_until_ready(y)
    assert y.shape == (bs, 1) and y.dtype == jnp.float32
    print("KERNEL_OK")
</pallas_src>

<mosaic_0001>
module attributes {stable_mosaic.version = 11 : i64} {
  func.func @lstm_mlp_kernel(%arg0: i32, %arg1: memref<8x7x3xf32, #tpu.memory_space<vmem>>, %arg2: memref<3x512xbf16, #tpu.memory_space<vmem>>, %arg3: memref<128x512xbf16, #tpu.memory_space<vmem>>, %arg4: memref<1x512xf32, #tpu.memory_space<vmem>>, %arg5: memref<128x512xbf16, #tpu.memory_space<vmem>>, %arg6: memref<128x512xbf16, #tpu.memory_space<vmem>>, %arg7: memref<1x512xf32, #tpu.memory_space<vmem>>, %arg8: memref<128x512xbf16, #tpu.memory_space<vmem>>, %arg9: memref<128x512xbf16, #tpu.memory_space<vmem>>, %arg10: memref<1x512xf32, #tpu.memory_space<vmem>>, %arg11: memref<7x128x256xbf16, #tpu.memory_space<vmem>>, %arg12: memref<1x256xf32, #tpu.memory_space<vmem>>, %arg13: memref<256x128xbf16, #tpu.memory_space<vmem>>, %arg14: memref<1x128xf32, #tpu.memory_space<vmem>>, %arg15: memref<8x128xf32, #tpu.memory_space<vmem>>) attributes {dimension_semantics = [#tpu.dimension_semantics<parallel>], iteration_bounds = array<i64: 1>, scalar_prefetch = 0 : i64, scratch_operands = 0 : i64, tpu.core_type = #tpu.core_type<tc>, window_params = [{transform_indices = @transform_0, window_bounds = array<i64: 8, 7, 3>}, {pipeline_mode = #tpu.pipeline_mode<synchronous>, transform_indices = @transform_1, window_bounds = array<i64: 3, 512>}, {pipeline_mode = #tpu.pipeline_mode<synchronous>, transform_indices = @transform_2, window_bounds = array<i64: 128, 512>}, {pipeline_mode = #tpu.pipeline_mode<synchronous>, transform_indices = @transform_3, window_bounds = array<i64: 1, 512>}, {pipeline_mode = #tpu.pipeline_mode<synchronous>, transform_indices = @transform_4, window_bounds = array<i64: 128, 512>}, {pipeline_mode = #tpu.pipeline_mode<synchronous>, transform_indices = @transform_5, window_bounds = array<i64: 128, 512>}, {pipeline_mode = #tpu.pipeline_mode<synchronous>, transform_indices = @transform_6, window_bounds = array<i64: 1, 512>}, {pipeline_mode = #tpu.pipeline_mode<synchronous>, transform_indices = @transform_7, window_bounds = array<i64: 128, 512>}, {pipeline_mode = #tpu.pipeline_mode<synchronous>, transform_indices = @transform_8, window_bounds = array<i64: 128, 512>}, {pipeline_mode = #tpu.pipeline_mode<synchronous>, transform_indices = @transform_9, window_bounds = array<i64: 1, 512>}, {pipeline_mode = #tpu.pipeline_mode<synchronous>, transform_indices = @transform_10, window_bounds = array<i64: 7, 128, 256>}, {pipeline_mode = #tpu.pipeline_mode<synchronous>, transform_indices = @transform_11, window_bounds = array<i64: 1, 256>}, {pipeline_mode = #tpu.pipeline_mode<synchronous>, transform_indices = @transform_12, window_bounds = array<i64: 256, 128>}, {pipeline_mode = #tpu.pipeline_mode<synchronous>, transform_indices = @transform_13, window_bounds = array<i64: 1, 128>}, {transform_indices = @transform_14, window_bounds = array<i64: 8, 128>}]} {
    %c0 = arith.constant 0 : index
    %c0_0 = arith.constant 0 : index
    %c0_1 = arith.constant 0 : index
    %0 = vector.load %arg1[%c0, %c0_0, %c0_1] : memref<8x7x3xf32, #tpu.memory_space<vmem>>, vector<8x7x3xf32>
    %1 = vector.extract_strided_slice %0 {offsets = [0, 0, 0], sizes = [8, 1, 3], strides = [1, 1, 1]} : vector<8x7x3xf32> to vector<8x1x3xf32>
    %2 = vector.shape_cast %1 : vector<8x1x3xf32> to vector<8x3xf32>
    %3 = arith.truncf %2 : vector<8x3xf32> to vector<8x3xbf16>
    %4 = vector.extract_strided_slice %0 {offsets = [0, 1, 0], sizes = [8, 1, 3], strides = [1, 1, 1]} : vector<8x7x3xf32> to vector<8x1x3xf32>
    %5 = vector.shape_cast %4 : vector<8x1x3xf32> to vector<8x3xf32>
    %6 = arith.truncf %5 : vector<8x3xf32> to vector<8x3xbf16>
    %7 = vector.extract_strided_slice %0 {offsets = [0, 2, 0], sizes = [8, 1, 3], strides = [1, 1, 1]} : vector<8x7x3xf32> to vector<8x1x3xf32>
    %8 = vector.shape_cast %7 : vector<8x1x3xf32> to vector<8x3xf32>
    %9 = arith.truncf %8 : vector<8x3xf32> to vector<8x3xbf16>
    %10 = vector.extract_strided_slice %0 {offsets = [0, 3, 0], sizes = [8, 1, 3], strides = [1, 1, 1]} : vector<8x7x3xf32> to vector<8x1x3xf32>
    %11 = vector.shape_cast %10 : vector<8x1x3xf32> to vector<8x3xf32>
    %12 = arith.truncf %11 : vector<8x3xf32> to vector<8x3xbf16>
    %13 = vector.extract_strided_slice %0 {offsets = [0, 4, 0], sizes = [8, 1, 3], strides = [1, 1, 1]} : vector<8x7x3xf32> to vector<8x1x3xf32>
    %14 = vector.shape_cast %13 : vector<8x1x3xf32> to vector<8x3xf32>
    %15 = arith.truncf %14 : vector<8x3xf32> to vector<8x3xbf16>
    %16 = vector.extract_strided_slice %0 {offsets = [0, 5, 0], sizes = [8, 1, 3], strides = [1, 1, 1]} : vector<8x7x3xf32> to vector<8x1x3xf32>
    %17 = vector.shape_cast %16 : vector<8x1x3xf32> to vector<8x3xf32>
    %18 = arith.truncf %17 : vector<8x3xf32> to vector<8x3xbf16>
    %19 = vector.extract_strided_slice %0 {offsets = [0, 6, 0], sizes = [8, 1, 3], strides = [1, 1, 1]} : vector<8x7x3xf32> to vector<8x1x3xf32>
    %20 = vector.shape_cast %19 : vector<8x1x3xf32> to vector<8x3xf32>
    %21 = arith.truncf %20 : vector<8x3xf32> to vector<8x3xbf16>
    %c0_2 = arith.constant 0 : index
    %c0_3 = arith.constant 0 : index
    %22 = vector.load %arg2[%c0_2, %c0_3] : memref<3x512xbf16, #tpu.memory_space<vmem>>, vector<3x512xbf16>
    %c0_4 = arith.constant 0 : index
    %c0_5 = arith.constant 0 : index
    %23 = vector.load %arg3[%c0_4, %c0_5] : memref<128x512xbf16, #tpu.memory_space<vmem>>, vector<128x512xbf16>
    %c0_6 = arith.constant 0 : index
    %c0_7 = arith.constant 0 : index
    %24 = vector.load %arg4[%c0_6, %c0_7] : memref<1x512xf32, #tpu.memory_space<vmem>>, vector<1x512xf32>
    %cst = arith.constant dense<0.000000e+00> : vector<8x512xf32>
    %25 = tpu.matmul %3, %22, %cst {dimension_numbers = #tpu.dot_dimension_numbers<[1], [0], [0], [1], [0, 0, 1, 1], [], []>} : vector<8x3xbf16>, vector<3x512xbf16>, vector<8x512xf32> -> vector<8x512xf32>
    %26 = vector.broadcast %24 : vector<1x512xf32> to vector<8x512xf32>
    %27 = arith.addf %25, %26 : vector<8x512xf32>
    %cst_8 = arith.constant dense<0.000000e+00> : vector<8x512xf32>
    %28 = tpu.matmul %6, %22, %cst_8 {dimension_numbers = #tpu.dot_dimension_numbers<[1], [0], [0], [1], [0, 0, 1, 1], [], []>} : vector<8x3xbf16>, vector<3x512xbf16>, vector<8x512xf32> -> vector<8x512xf32>
    %29 = vector.broadcast %24 : vector<1x512xf32> to vector<8x512xf32>
    %30 = arith.addf %28, %29 : vector<8x512xf32>
    %cst_9 = arith.constant dense<0.000000e+00> : vector<8x512xf32>
    %31 = tpu.matmul %9, %22, %cst_9 {dimension_numbers = #tpu.dot_dimension_numbers<[1], [0], [0], [1], [0, 0, 1, 1], [], []>} : vector<8x3xbf16>, vector<3x512xbf16>, vector<8x512xf32> -> vector<8x512xf32>
    %32 = vector.broadcast %24 : vector<1x512xf32> to vector<8x512xf32>
    %33 = arith.addf %31, %32 : vector<8x512xf32>
    %cst_10 = arith.constant dense<0.000000e+00> : vector<8x512xf32>
    %34 = tpu.matmul %12, %22, %cst_10 {dimension_numbers = #tpu.dot_dimension_numbers<[1], [0], [0], [1], [0, 0, 1, 1], [], []>} : vector<8x3xbf16>, vector<3x512xbf16>, vector<8x512xf32> -> vector<8x512xf32>
    %35 = vector.broadcast %24 : vector<1x512xf32> to vector<8x512xf32>
    %36 = arith.addf %34, %35 : vector<8x512xf32>
    %cst_11 = arith.constant dense<0.000000e+00> : vector<8x512xf32>
    %37 = tpu.matmul %15, %22, %cst_11 {dimension_numbers = #tpu.dot_dimension_numbers<[1], [0], [0], [1], [0, 0, 1, 1], [], []>} : vector<8x3xbf16>, vector<3x512xbf16>, vector<8x512xf32> -> vector<8x512xf32>
    %38 = vector.broadcast %24 : vector<1x512xf32> to vector<8x512xf32>
    %39 = arith.addf %37, %38 : vector<8x512xf32>
    %cst_12 = arith.constant dense<0.000000e+00> : vector<8x512xf32>
    %40 = tpu.matmul %18, %22, %cst_12 {dimension_numbers = #tpu.dot_dimension_numbers<[1], [0], [0], [1], [0, 0, 1, 1], [], []>} : vector<8x3xbf16>, vector<3x512xbf16>, vector<8x512xf32> -> vector<8x512xf32>
    %41 = vector.broadcast %24 : vector<1x512xf32> to vector<8x512xf32>
    %42 = arith.addf %40, %41 : vector<8x512xf32>
    %cst_13 = arith.constant dense<0.000000e+00> : vector<8x512xf32>
    %43 = tpu.matmul %21, %22, %cst_13 {dimension_numbers = #tpu.dot_dimension_numbers<[1], [0], [0], [1], [0, 0, 1, 1], [], []>} : vector<8x3xbf16>, vector<3x512xbf16>, vector<8x512xf32> -> vector<8x512xf32>
    %44 = vector.broadcast %24 : vector<1x512xf32> to vector<8x512xf32>
    %45 = arith.addf %43, %44 : vector<8x512xf32>
    %cst_14 = arith.constant 0.000000e+00 : f32
    %46 = vector.broadcast %cst_14 : f32 to vector<8x128xf32>
    %cst_15 = arith.constant 0.000000e+00 : f32
    %47 = vector.broadcast %cst_15 : f32 to vector<8x128xf32>
    %48 = arith.truncf %46 : vector<8x128xf32> to vector<8x128xbf16>
    %cst_16 = arith.constant dense<0.000000e+00> : vector<8x512xf32>
    %49 = tpu.matmul %48, %23, %cst_16 {dimension_numbers = #tpu.dot_dimension_numbers<[1], [0], [0], [1], [0, 0, 1, 1], [], []>} : vector<8x128xbf16>, vector<128x512xbf16>, vector<8x512xf32> -> vector<8x512xf32>
    %50 = arith.addf %27, %49 : vector<8x512xf32>
    %51 = vector.extract_strided_slice %50 {offsets = [0, 0], sizes = [8, 128], strides = [1, 1]} : vector<8x512xf32> to vector<8x128xf32>
    %cst_17 = arith.constant 0.000000e+00 : f32
    %52 = vector.broadcast %cst_17 : f32 to vector<8x128xf32>
    %53 = arith.subf %52, %51 : vector<8x128xf32>
    %54 = math.exp %53 : vector<8x128xf32>
    %cst_18 = arith.constant 1.000000e+00 : f32
    %55 = vector.broadcast %cst_18 : f32 to vector<8x128xf32>
    %56 = arith.addf %55, %54 : vector<8x128xf32>
    %57 = tpu.reciprocal %56 {approx = true} : vector<8x128xf32> -> vector<8x128xf32>
    %58 = vector.extract_strided_slice %50 {offsets = [0, 128], sizes = [8, 128], strides = [1, 1]} : vector<8x512xf32> to vector<8x128xf32>
    %cst_19 = arith.constant 0.000000e+00 : f32
    %59 = vector.broadcast %cst_19 : f32 to vector<8x128xf32>
    %60 = arith.subf %59, %58 : vector<8x128xf32>
    %61 = math.exp %60 : vector<8x128xf32>
    %cst_20 = arith.constant 1.000000e+00 : f32
    %62 = vector.broadcast %cst_20 : f32 to vector<8x128xf32>
    %63 = arith.addf %62, %61 : vector<8x128xf32>
    %64 = tpu.reciprocal %63 {approx = true} : vector<8x128xf32> -> vector<8x128xf32>
    %65 = vector.extract_strided_slice %50 {offsets = [0, 256], sizes = [8, 128], strides = [1, 1]} : vector<8x512xf32> to vector<8x128xf32>
    %66 = math.tanh %65 : vector<8x128xf32>
    %67 = vector.extract_strided_slice %50 {offsets = [0, 384], sizes = [8, 128], strides = [1, 1]} : vector<8x512xf32> to vector<8x128xf32>
    %cst_21 = arith.constant 0.000000e+00 : f32
    %68 = vector.broadcast %cst_21 : f32 to vector<8x128xf32>
    %69 = arith.subf %68, %67 : vector<8x128xf32>
    %70 = math.exp %69 : vector<8x128xf32>
    %cst_22 = arith.constant 1.000000e+00 : f32
    %71 = vector.broadcast %cst_22 : f32 to vector<8x128xf32>
    %72 = arith.addf %71, %70 : vector<8x128xf32>
    %73 = tpu.reciprocal %72 {approx = true} : vector<8x128xf32> -> vector<8x128xf32>
    %74 = arith.mulf %64, %47 : vector<8x128xf32>
    %75 = arith.mulf %57, %66 : vector<8x128xf32>
    %76 = arith.addf %74, %75 : vector<8x128xf32>
    %77 = math.tanh %76 : vector<8x128xf32>
    %78 = arith.mulf %73, %77 : vector<8x128xf32>
    %79 = arith.truncf %78 : vector<8x128xf32> to vector<8x128xbf16>
    %cst_23 = arith.constant dense<0.000000e+00> : vector<8x512xf32>
    %80 = tpu.matmul %79, %23, %cst_23 {dimension_numbers = #tpu.dot_dimension_numbers<[1], [0], [0], [1], [0, 0, 1, 1], [], []>} : vector<8x128xbf16>, vector<128x512xbf16>, vector<8x512xf32> -> vector<8x512xf32>
    %81 = arith.addf %30, %80 : vector<8x512xf32>
    %82 = vector.extract_strided_slice %81 {offsets = [0, 0], sizes = [8, 128], strides = [1, 1]} : vector<8x512xf32> to vector<8x128xf32>
    %cst_24 = arith.constant 0.000000e+00 : f32
    %83 = vector.broadcast %cst_24 : f32 to vector<8x128xf32>
    %84 = arith.subf %83, %82 : vector<8x128xf32>
    %85 = math.exp %84 : vector<8x128xf32>
    %cst_25 = arith.constant 1.000000e+00 : f32
    %86 = vector.broadcast %cst_25 : f32 to vector<8x128xf32>
    %87 = arith.addf %86, %85 : vector<8x128xf32>
    %88 = tpu.reciprocal %87 {approx = true} : vector<8x128xf32> -> vector<8x128xf32>
    %89 = vector.extract_strided_slice %81 {offsets = [0, 128], sizes = [8, 128], strides = [1, 1]} : vector<8x512xf32> to vector<8x128xf32>
    %cst_26 = arith.constant 0.000000e+00 : f32
    %90 = vector.broadcast %cst_26 : f32 to vector<8x128xf32>
    %91 = arith.subf %90, %89 : vector<8x128xf32>
    %92 = math.exp %91 : vector<8x128xf32>
    %cst_27 = arith.constant 1.000000e+00 : f32
    %93 = vector.broadcast %cst_27 : f32 to vector<8x128xf32>
    %94 = arith.addf %93, %92 : vector<8x128xf32>
    %95 = tpu.reciprocal %94 {approx = true} : vector<8x128xf32> -> vector<8x128xf32>
    %96 = vector.extract_strided_slice %81 {offsets = [0, 256], sizes = [8, 128], strides = [1, 1]} : vector<8x512xf32> to vector<8x128xf32>
    %97 = math.tanh %96 : vector<8x128xf32>
    %98 = vector.extract_strided_slice %81 {offsets = [0, 384], sizes = [8, 128], strides = [1, 1]} : vector<8x512xf32> to vector<8x128xf32>
    %cst_28 = arith.constant 0.000000e+00 : f32
    %99 = vector.broadcast %cst_28 : f32 to vector<8x128xf32>
    %100 = arith.subf %99, %98 : vector<8x128xf32>
    %101 = math.exp %100 : vector<8x128xf32>
    %cst_29 = arith.constant 1.000000e+00 : f32
    %102 = vector.broadcast %cst_29 : f32 to vector<8x128xf32>
    %103 = arith.addf %102, %101 : vector<8x128xf32>
    %104 = tpu.reciprocal %103 {approx = true} : vector<8x128xf32> -> vector<8x128xf32>
    %105 = arith.mulf %95, %76 : vector<8x128xf32>
    %106 = arith.mulf %88, %97 : vector<8x128xf32>
    %107 = arith.addf %105, %106 : vector<8x128xf32>
    %108 = math.tanh %107 : vector<8x128xf32>
    %109 = arith.mulf %104, %108 : vector<8x128xf32>
    %110 = arith.truncf %109 : vector<8x128xf32> to vector<8x128xbf16>
    %cst_30 = arith.constant dense<0.000000e+00> : vector<8x512xf32>
    %111 = tpu.matmul %110, %23, %cst_30 {dimension_numbers = #tpu.dot_dimension_numbers<[1], [0], [0], [1], [0, 0, 1, 1], [], []>} : vector<8x128xbf16>, vector<128x512xbf16>, vector<8x512xf32> -> vector<8x512xf32>
    %112 = arith.addf %33, %111 : vector<8x512xf32>
    %113 = vector.extract_strided_slice %112 {offsets = [0, 0], sizes = [8, 128], strides = [1, 1]} : vector<8x512xf32> to vector<8x128xf32>
    %cst_31 = arith.constant 0.000000e+00 : f32
    %114 = vector.broadcast %cst_31 : f32 to vector<8x128xf32>
    %115 = arith.subf %114, %113 : vector<8x128xf32>
    %116 = math.exp %115 : vector<8x128xf32>
    %cst_32 = arith.constant 1.000000e+00 : f32
    %117 = vector.broadcast %cst_32 : f32 to vector<8x128xf32>
    %118 = arith.addf %117, %116 : vector<8x128xf32>
    %119 = tpu.reciprocal %118 {approx = true} : vector<8x128xf32> -> vector<8x128xf32>
    %120 = vector.extract_strided_slice %112 {offsets = [0, 128], sizes = [8, 128], strides = [1, 1]} : vector<8x512xf32> to vector<8x128xf32>
    %cst_33 = arith.constant 0.000000e+00 : f32
    %121 = vector.broadcast %cst_33 : f32 to vector<8x128xf32>
    %122 = arith.subf %121, %120 : vector<8x128xf32>
    %123 = math.exp %122 : vector<8x128xf32>
    %cst_34 = arith.constant 1.000000e+00 : f32
    %124 = vector.broadcast %cst_34 : f32 to vector<8x128xf32>
    %125 = arith.addf %124, %123 : vector<8x128xf32>
    %126 = tpu.reciprocal %125 {approx = true} : vector<8x128xf32> -> vector<8x128xf32>
    %127 = vector.extract_strided_slice %112 {offsets = [0, 256], sizes = [8, 128], strides = [1, 1]} : vector<8x512xf32> to vector<8x128xf32>
    %128 = math.tanh %127 : vector<8x128xf32>
    %129 = vector.extract_strided_slice %112 {offsets = [0, 384], sizes = [8, 128], strides = [1, 1]} : vector<8x512xf32> to vector<8x128xf32>
    %cst_35 = arith.constant 0.000000e+00 : f32
    %130 = vector.broadcast %cst_35 : f32 to vector<8x128xf32>
    %131 = arith.subf %130, %129 : vector<8x128xf32>
    %132 = math.exp %131 : vector<8x128xf32>
    %cst_36 = arith.constant 1.000000e+00 : f32
    %133 = vector.broadcast %cst_36 : f32 to vector<8x128xf32>
    %134 = arith.addf %133, %132 : vector<8x128xf32>
    %135 = tpu.reciprocal %134 {approx = true} : vector<8x128xf32> -> vector<8x128xf32>
    %136 = arith.mulf %126, %107 : vector<8x128xf32>
    %137 = arith.mulf %119, %128 : vector<8x128xf32>
    %138 = arith.addf %136, %137 : vector<8x128xf32>
    %139 = math.tanh %138 : vector<8x128xf32>
    %140 = arith.mulf %135, %139 : vector<8x128xf32>
    %141 = arith.truncf %140 : vector<8x128xf32> to vector<8x128xbf16>
    %cst_37 = arith.constant dense<0.000000e+00> : vector<8x512xf32>
    %142 = tpu.matmul %141, %23, %cst_37 {dimension_numbers = #tpu.dot_dimension_numbers<[1], [0], [0], [1], [0, 0, 1, 1], [], []>} : vector<8x128xbf16>, vector<128x512xbf16>, vector<8x512xf32> -> vector<8x512xf32>
    %143 = arith.addf %36, %142 : vector<8x512xf32>
    %144 = vector.extract_strided_slice %143 {offsets = [0, 0], sizes = [8, 128], strides = [1, 1]} : vector<8x512xf32> to vector<8x128xf32>
    %cst_38 = arith.constant 0.000000e+00 : f32
    %145 = vector.broadcast %cst_38 : f32 to vector<8x128xf32>
    %146 = arith.subf %145, %144 : vector<8x128xf32>
    %147 = math.exp %146 : vector<8x128xf32>
    %cst_39 = arith.constant 1.000000e+00 : f32
    %148 = vector.broadcast %cst_39 : f32 to vector<8x128xf32>
    %149 = arith.addf %148, %147 : vector<8x128xf32>
    %150 = tpu.reciprocal %149 {approx = true} : vector<8x128xf32> -> vector<8x128xf32>
    %151 = vector.extract_strided_slice %143 {offsets = [0, 128], sizes = [8, 128], strides = [1, 1]} : vector<8x512xf32> to vector<8x128xf32>
    %cst_40 = arith.constant 0.000000e+00 : f32
    %152 = vector.broadcast %cst_40 : f32 to vector<8x128xf32>
    %153 = arith.subf %152, %151 : vector<8x128xf32>
    %154 = math.exp %153 : vector<8x128xf32>
    %cst_41 = arith.constant 1.000000e+00 : f32
    %155 = vector.broadcast %cst_41 : f32 to vector<8x128xf32>
    %156 = arith.addf %155, %154 : vector<8x128xf32>
    %157 = tpu.reciprocal %156 {approx = true} : vector<8x128xf32> -> vector<8x128xf32>
    %158 = vector.extract_strided_slice %143 {offsets = [0, 256], sizes = [8, 128], strides = [1, 1]} : vector<8x512xf32> to vector<8x128xf32>
    %159 = math.tanh %158 : vector<8x128xf32>
    %160 = vector.extract_strided_slice %143 {offsets = [0, 384], sizes = [8, 128], strides = [1, 1]} : vector<8x512xf32> to vector<8x128xf32>
    %cst_42 = arith.constant 0.000000e+00 : f32
    %161 = vector.broadcast %cst_42 : f32 to vector<8x128xf32>
    %162 = arith.subf %161, %160 : vector<8x128xf32>
    %163 = math.exp %162 : vector<8x128xf32>
    %cst_43 = arith.constant 1.000000e+00 : f32
    %164 = vector.broadcast %cst_43 : f32 to vector<8x128xf32>
    %165 = arith.addf %164, %163 : vector<8x128xf32>
    %166 = tpu.reciprocal %165 {approx = true} : vector<8x128xf32> -> vector<8x128xf32>
    %167 = arith.mulf %157, %138 : vector<8x128xf32>
    %168 = arith.mulf %150, %159 : vector<8x128xf32>
    %169 = arith.addf %167, %168 : vector<8x128xf32>
    %170 = math.tanh %169 : vector<8x128xf32>
    %171 = arith.mulf %166, %170 : vector<8x128xf32>
    %172 = arith.truncf %171 : vector<8x128xf32> to vector<8x128xbf16>
    %cst_44 = arith.constant dense<0.000000e+00> : vector<8x512xf32>
    %173 = tpu.matmul %172, %23, %cst_44 {dimension_numbers = #tpu.dot_dimension_numbers<[1], [0], [0], [1], [0, 0, 1, 1], [], []>} : vector<8x128xbf16>, vector<128x512xbf16>, vector<8x512xf32> -> vector<8x512xf32>
    %174 = arith.addf %39, %173 : vector<8x512xf32>
    %175 = vector.extract_strided_slice %174 {offsets = [0, 0], sizes = [8, 128], strides = [1, 1]} : vector<8x512xf32> to vector<8x128xf32>
    %cst_45 = arith.constant 0.000000e+00 : f32
    %176 = vector.broadcast %cst_45 : f32 to vector<8x128xf32>
    %177 = arith.subf %176, %175 : vector<8x128xf32>
    %178 = math.exp %177 : vector<8x128xf32>
    %cst_46 = arith.constant 1.000000e+00 : f32
    %179 = vector.broadcast %cst_46 : f32 to vector<8x128xf32>
    %180 = arith.addf %179, %178 : vector<8x128xf32>
    %181 = tpu.reciprocal %180 {approx = true} : vector<8x128xf32> -> vector<8x128xf32>
    %182 = vector.extract_strided_slice %174 {offsets = [0, 128], sizes = [8, 128], strides = [1, 1]} : vector<8x512xf32> to vector<8x128xf32>
    %cst_47 = arith.constant 0.000000e+00 : f32
    %183 = vector.broadcast %cst_47 : f32 to vector<8x128xf32>
    %184 = arith.subf %183, %182 : vector<8x128xf32>
    %185 = math.exp %184 : vector<8x128xf32>
    %cst_48 = arith.constant 1.000000e+00 : f32
    %186 = vector.broadcast %cst_48 : f32 to vector<8x128xf32>
    %187 = arith.addf %186, %185 : vector<8x128xf32>
    %188 = tpu.reciprocal %187 {approx = true} : vector<8x128xf32> -> vector<8x128xf32>
    %189 = vector.extract_strided_slice %174 {offsets = [0, 256], sizes = [8, 128], strides = [1, 1]} : vector<8x512xf32> to vector<8x128xf32>
    %190 = math.tanh %189 : vector<8x128xf32>
    %191 = vector.extract_strided_slice %174 {offsets = [0, 384], sizes = [8, 128], strides = [1, 1]} : vector<8x512xf32> to vector<8x128xf32>
    %cst_49 = arith.constant 0.000000e+00 : f32
    %192 = vector.broadcast %cst_49 : f32 to vector<8x128xf32>
    %193 = arith.subf %192, %191 : vector<8x128xf32>
    %194 = math.exp %193 : vector<8x128xf32>
    %cst_50 = arith.constant 1.000000e+00 : f32
    %195 = vector.broadcast %cst_50 : f32 to vector<8x128xf32>
    %196 = arith.addf %195, %194 : vector<8x128xf32>
    %197 = tpu.reciprocal %196 {approx = true} : vector<8x128xf32> -> vector<8x128xf32>
    %198 = arith.mulf %188, %169 : vector<8x128xf32>
    %199 = arith.mulf %181, %190 : vector<8x128xf32>
    %200 = arith.addf %198, %199 : vector<8x128xf32>
    %201 = math.tanh %200 : vector<8x128xf32>
    %202 = arith.mulf %197, %201 : vector<8x128xf32>
    %203 = arith.truncf %202 : vector<8x128xf32> to vector<8x128xbf16>
    %cst_51 = arith.constant dense<0.000000e+00> : vector<8x512xf32>
    %204 = tpu.matmul %203, %23, %cst_51 {dimension_numbers = #tpu.dot_dimension_numbers<[1], [0], [0], [1], [0, 0, 1, 1], [], []>} : vector<8x128xbf16>, vector<128x512xbf16>, vector<8x512xf32> -> vector<8x512xf32>
    %205 = arith.addf %42, %204 : vector<8x512xf32>
    %206 = vector.extract_strided_slice %205 {offsets = [0, 0], sizes = [8, 128], strides = [1, 1]} : vector<8x512xf32> to vector<8x128xf32>
    %cst_52 = arith.constant 0.000000e+00 : f32
    %207 = vector.broadcast %cst_52 : f32 to vector<8x128xf32>
    %208 = arith.subf %207, %206 : vector<8x128xf32>
    %209 = math.exp %208 : vector<8x128xf32>
    %cst_53 = arith.constant 1.000000e+00 : f32
    %210 = vector.broadcast %cst_53 : f32 to vector<8x128xf32>
    %211 = arith.addf %210, %209 : vector<8x128xf32>
    %212 = tpu.reciprocal %211 {approx = true} : vector<8x128xf32> -> vector<8x128xf32>
    %213 = vector.extract_strided_slice %205 {offsets = [0, 128], sizes = [8, 128], strides = [1, 1]} : vector<8x512xf32> to vector<8x128xf32>
    %cst_54 = arith.constant 0.000000e+00 : f32
    %214 = vector.broadcast %cst_54 : f32 to vector<8x128xf32>
    %215 = arith.subf %214, %213 : vector<8x128xf32>
    %216 = math.exp %215 : vector<8x128xf32>
    %cst_55 = arith.constant 1.000000e+00 : f32
    %217 = vector.broadcast %cst_55 : f32 to vector<8x128xf32>
    %218 = arith.addf %217, %216 : vector<8x128xf32>
    %219 = tpu.reciprocal %218 {approx = true} : vector<8x128xf32> -> vector<8x128xf32>
    %220 = vector.extract_strided_slice %205 {offsets = [0, 256], sizes = [8, 128], strides = [1, 1]} : vector<8x512xf32> to vector<8x128xf32>
    %221 = math.tanh %220 : vector<8x128xf32>
    %222 = vector.extract_strided_slice %205 {offsets = [0, 384], sizes = [8, 128], strides = [1, 1]} : vector<8x512xf32> to vector<8x128xf32>
    %cst_56 = arith.constant 0.000000e+00 : f32
    %223 = vector.broadcast %cst_56 : f32 to vector<8x128xf32>
    %224 = arith.subf %223, %222 : vector<8x128xf32>
    %225 = math.exp %224 : vector<8x128xf32>
    %cst_57 = arith.constant 1.000000e+00 : f32
    %226 = vector.broadcast %cst_57 : f32 to vector<8x128xf32>
    %227 = arith.addf %226, %225 : vector<8x128xf32>
    %228 = tpu.reciprocal %227 {approx = true} : vector<8x128xf32> -> vector<8x128xf32>
    %229 = arith.mulf %219, %200 : vector<8x128xf32>
    %230 = arith.mulf %212, %221 : vector<8x128xf32>
    %231 = arith.addf %229, %230 : vector<8x128xf32>
    %232 = math.tanh %231 : vector<8x128xf32>
    %233 = arith.mulf %228, %232 : vector<8x128xf32>
    %234 = arith.truncf %233 : vector<8x128xf32> to vector<8x128xbf16>
    %cst_58 = arith.constant dense<0.000000e+00> : vector<8x512xf32>
    %235 = tpu.matmul %234, %23, %cst_58 {dimension_numbers = #tpu.dot_dimension_numbers<[1], [0], [0], [1], [0, 0, 1, 1], [], []>} : vector<8x128xbf16>, vector<128x512xbf16>, vector<8x512xf32> -> vector<8x512xf32>
    %236 = arith.addf %45, %235 : vector<8x512xf32>
    %237 = vector.extract_strided_slice %236 {offsets = [0, 0], sizes = [8, 128], strides = [1, 1]} : vector<8x512xf32> to vector<8x128xf32>
    %cst_59 = arith.constant 0.000000e+00 : f32
    %238 = vector.broadcast %cst_59 : f32 to vector<8x128xf32>
    %239 = arith.subf %238, %237 : vector<8x128xf32>
    %240 = math.exp %239 : vector<8x128xf32>
    %cst_60 = arith.constant 1.000000e+00 : f32
    %241 = vector.broadcast %cst_60 : f32 to vector<8x128xf32>
    %242 = arith.addf %241, %240 : vector<8x128xf32>
    %243 = tpu.reciprocal %242 {approx = true} : vector<8x128xf32> -> vector<8x128xf32>
    %244 = vector.extract_strided_slice %236 {offsets = [0, 128], sizes = [8, 128], strides = [1, 1]} : vector<8x512xf32> to vector<8x128xf32>
    %cst_61 = arith.constant 0.000000e+00 : f32
    %245 = vector.broadcast %cst_61 : f32 to vector<8x128xf32>
    %246 = arith.subf %245, %244 : vector<8x128xf32>
    %247 = math.exp %246 : vector<8x128xf32>
    %cst_62 = arith.constant 1.000000e+00 : f32
    %248 = vector.broadcast %cst_62 : f32 to vector<8x128xf32>
    %249 = arith.addf %248, %247 : vector<8x128xf32>
    %250 = tpu.reciprocal %249 {approx = true} : vector<8x128xf32> -> vector<8x128xf32>
    %251 = vector.extract_strided_slice %236 {offsets = [0, 256], sizes = [8, 128], strides = [1, 1]} : vector<8x512xf32> to vector<8x128xf32>
    %252 = math.tanh %251 : vector<8x128xf32>
    %253 = vector.extract_strided_slice %236 {offsets = [0, 384], sizes = [8, 128], strides = [1, 1]} : vector<8x512xf32> to vector<8x128xf32>
    %cst_63 = arith.constant 0.000000e+00 : f32
    %254 = vector.broadcast %cst_63 : f32 to vector<8x128xf32>
    %255 = arith.subf %254, %253 : vector<8x128xf32>
    %256 = math.exp %255 : vector<8x128xf32>
    %cst_64 = arith.constant 1.000000e+00 : f32
    %257 = vector.broadcast %cst_64 : f32 to vector<8x128xf32>
    %258 = arith.addf %257, %256 : vector<8x128xf32>
    %259 = tpu.reciprocal %258 {approx = true} : vector<8x128xf32> -> vector<8x128xf32>
    %260 = arith.mulf %250, %231 : vector<8x128xf32>
    %261 = arith.mulf %243, %252 : vector<8x128xf32>
    %262 = arith.addf %260, %261 : vector<8x128xf32>
    %263 = math.tanh %262 : vector<8x128xf32>
    %264 = arith.mulf %259, %263 : vector<8x128xf32>
    %265 = arith.truncf %78 : vector<8x128xf32> to vector<8x128xbf16>
    %266 = arith.truncf %109 : vector<8x128xf32> to vector<8x128xbf16>
    %267 = arith.truncf %140 : vector<8x128xf32> to vector<8x128xbf16>
    %268 = arith.truncf %171 : vector<8x128xf32> to vector<8x128xbf16>
    %269 = arith.truncf %202 : vector<8x128xf32> to vector<8x128xbf16>
    %270 = arith.truncf %233 : vector<8x128xf32> to vector<8x128xbf16>
    %271 = arith.truncf %264 : vector<8x128xf32> to vector<8x128xbf16>
    %c0_65 = arith.constant 0 : index
    %c0_66 = arith.constant 0 : index
    %272 = vector.load %arg5[%c0_65, %c0_66] : memref<128x512xbf16, #tpu.memory_space<vmem>>, vector<128x512xbf16>
    %c0_67 = arith.constant 0 : index
    %c0_68 = arith.constant 0 : index
    %273 = vector.load %arg6[%c0_67, %c0_68] : memref<128x512xbf16, #tpu.memory_space<vmem>>, vector<128x512xbf16>
    %c0_69 = arith.constant 0 : index
    %c0_70 = arith.constant 0 : index
    %274 = vector.load %arg7[%c0_69, %c0_70] : memref<1x512xf32, #tpu.memory_space<vmem>>, vector<1x512xf32>
    %cst_71 = arith.constant dense<0.000000e+00> : vector<8x512xf32>
    %275 = tpu.matmul %265, %272, %cst_71 {dimension_numbers = #tpu.dot_dimension_numbers<[1], [0], [0], [1], [0, 0, 1, 1], [], []>} : vector<8x128xbf16>, vector<128x512xbf16>, vector<8x512xf32> -> vector<8x512xf32>
    %276 = vector.broadcast %274 : vector<1x512xf32> to vector<8x512xf32>
    %277 = arith.addf %275, %276 : vector<8x512xf32>
    %cst_72 = arith.constant dense<0.000000e+00> : vector<8x512xf32>
    %278 = tpu.matmul %266, %272, %cst_72 {dimension_numbers = #tpu.dot_dimension_numbers<[1], [0], [0], [1], [0, 0, 1, 1], [], []>} : vector<8x128xbf16>, vector<128x512xbf16>, vector<8x512xf32> -> vector<8x512xf32>
    %279 = vector.broadcast %274 : vector<1x512xf32> to vector<8x512xf32>
    %280 = arith.addf %278, %279 : vector<8x512xf32>
    %cst_73 = arith.constant dense<0.000000e+00> : vector<8x512xf32>
    %281 = tpu.matmul %267, %272, %cst_73 {dimension_numbers = #tpu.dot_dimension_numbers<[1], [0], [0], [1], [0, 0, 1, 1], [], []>} : vector<8x128xbf16>, vector<128x512xbf16>, vector<8x512xf32> -> vector<8x512xf32>
    %282 = vector.broadcast %274 : vector<1x512xf32> to vector<8x512xf32>
    %283 = arith.addf %281, %282 : vector<8x512xf32>
    %cst_74 = arith.constant dense<0.000000e+00> : vector<8x512xf32>
    %284 = tpu.matmul %268, %272, %cst_74 {dimension_numbers = #tpu.dot_dimension_numbers<[1], [0], [0], [1], [0, 0, 1, 1], [], []>} : vector<8x128xbf16>, vector<128x512xbf16>, vector<8x512xf32> -> vector<8x512xf32>
    %285 = vector.broadcast %274 : vector<1x512xf32> to vector<8x512xf32>
    %286 = arith.addf %284, %285 : vector<8x512xf32>
    %cst_75 = arith.constant dense<0.000000e+00> : vector<8x512xf32>
    %287 = tpu.matmul %269, %272, %cst_75 {dimension_numbers = #tpu.dot_dimension_numbers<[1], [0], [0], [1], [0, 0, 1, 1], [], []>} : vector<8x128xbf16>, vector<128x512xbf16>, vector<8x512xf32> -> vector<8x512xf32>
    %288 = vector.broadcast %274 : vector<1x512xf32> to vector<8x512xf32>
    %289 = arith.addf %287, %288 : vector<8x512xf32>
    %cst_76 = arith.constant dense<0.000000e+00> : vector<8x512xf32>
    %290 = tpu.matmul %270, %272, %cst_76 {dimension_numbers = #tpu.dot_dimension_numbers<[1], [0], [0], [1], [0, 0, 1, 1], [], []>} : vector<8x128xbf16>, vector<128x512xbf16>, vector<8x512xf32> -> vector<8x512xf32>
    %291 = vector.broadcast %274 : vector<1x512xf32> to vector<8x512xf32>
    %292 = arith.addf %290, %291 : vector<8x512xf32>
    %cst_77 = arith.constant dense<0.000000e+00> : vector<8x512xf32>
    %293 = tpu.matmul %271, %272, %cst_77 {dimension_numbers = #tpu.dot_dimension_numbers<[1], [0], [0], [1], [0, 0, 1, 1], [], []>} : vector<8x128xbf16>, vector<128x512xbf16>, vector<8x512xf32> -> vector<8x512xf32>
    %294 = vector.broadcast %274 : vector<1x512xf32> to vector<8x512xf32>
    %295 = arith.addf %293, %294 : vector<8x512xf32>
    %cst_78 = arith.constant 0.000000e+00 : f32
    %296 = vector.broadcast %cst_78 : f32 to vector<8x128xf32>
    %cst_79 = arith.constant 0.000000e+00 : f32
    %297 = vector.broadcast %cst_79 : f32 to vector<8x128xf32>
    %298 = arith.truncf %296 : vector<8x128xf32> to vector<8x128xbf16>
    %cst_80 = arith.constant dense<0.000000e+00> : vector<8x512xf32>
    %299 = tpu.matmul %298, %273, %cst_80 {dimension_numbers = #tpu.dot_dimension_numbers<[1], [0], [0], [1], [0, 0, 1, 1], [], []>} : vector<8x128xbf16>, vector<128x512xbf16>, vector<8x512xf32> -> vector<8x512xf32>
    %300 = arith.addf %277, %299 : vector<8x512xf32>
    %301 = vector.extract_strided_slice %300 {offsets = [0, 0], sizes = [8, 128], strides = [1, 1]} : vector<8x512xf32> to vector<8x128xf32>
    %cst_81 = arith.constant 0.000000e+00 : f32
    %302 = vector.broadcast %cst_81 : f32 to vector<8x128xf32>
    %303 = arith.subf %302, %301 : vector<8x128xf32>
    %304 = math.exp %303 : vector<8x128xf32>
    %cst_82 = arith.constant 1.000000e+00 : f32
    %305 = vector.broadcast %cst_82 : f32 to vector<8x128xf32>
    %306 = arith.addf %305, %304 : vector<8x128xf32>
    %307 = tpu.reciprocal %306 {approx = true} : vector<8x128xf32> -> vector<8x128xf32>
    %308 = vector.extract_strided_slice %300 {offsets = [0, 128], sizes = [8, 128], strides = [1, 1]} : vector<8x512xf32> to vector<8x128xf32>
    %cst_83 = arith.constant 0.000000e+00 : f32
    %309 = vector.broadcast %cst_83 : f32 to vector<8x128xf32>
    %310 = arith.subf %309, %308 : vector<8x128xf32>
    %311 = math.exp %310 : vector<8x128xf32>
    %cst_84 = arith.constant 1.000000e+00 : f32
    %312 = vector.broadcast %cst_84 : f32 to vector<8x128xf32>
    %313 = arith.addf %312, %311 : vector<8x128xf32>
    %314 = tpu.reciprocal %313 {approx = true} : vector<8x128xf32> -> vector<8x128xf32>
    %315 = vector.extract_strided_slice %300 {offsets = [0, 256], sizes = [8, 128], strides = [1, 1]} : vector<8x512xf32> to vector<8x128xf32>
    %316 = math.tanh %315 : vector<8x128xf32>
    %317 = vector.extract_strided_slice %300 {offsets = [0, 384], sizes = [8, 128], strides = [1, 1]} : vector<8x512xf32> to vector<8x128xf32>
    %cst_85 = arith.constant 0.000000e+00 : f32
    %318 = vector.broadcast %cst_85 : f32 to vector<8x128xf32>
    %319 = arith.subf %318, %317 : vector<8x128xf32>
    %320 = math.exp %319 : vector<8x128xf32>
    %cst_86 = arith.constant 1.000000e+00 : f32
    %321 = vector.broadcast %cst_86 : f32 to vector<8x128xf32>
    %322 = arith.addf %321, %320 : vector<8x128xf32>
    %323 = tpu.reciprocal %322 {approx = true} : vector<8x128xf32> -> vector<8x128xf32>
    %324 = arith.mulf %314, %297 : vector<8x128xf32>
    %325 = arith.mulf %307, %316 : vector<8x128xf32>
    %326 = arith.addf %324, %325 : vector<8x128xf32>
    %327 = math.tanh %326 : vector<8x128xf32>
    %328 = arith.mulf %323, %327 : vector<8x128xf32>
    %329 = arith.truncf %328 : vector<8x128xf32> to vector<8x128xbf16>
    %cst_87 = arith.constant dense<0.000000e+00> : vector<8x512xf32>
    %330 = tpu.matmul %329, %273, %cst_87 {dimension_numbers = #tpu.dot_dimension_numbers<[1], [0], [0], [1], [0, 0, 1, 1], [], []>} : vector<8x128xbf16>, vector<128x512xbf16>, vector<8x512xf32> -> vector<8x512xf32>
    %331 = arith.addf %280, %330 : vector<8x512xf32>
    %332 = vector.extract_strided_slice %331 {offsets = [0, 0], sizes = [8, 128], strides = [1, 1]} : vector<8x512xf32> to vector<8x128xf32>
    %cst_88 = arith.constant 0.000000e+00 : f32
    %333 = vector.broadcast %cst_88 : f32 to vector<8x128xf32>
    %334 = arith.subf %333, %332 : vector<8x128xf32>
    %335 = math.exp %334 : vector<8x128xf32>
    %cst_89 = arith.constant 1.000000e+00 : f32
    %336 = vector.broadcast %cst_89 : f32 to vector<8x128xf32>
    %337 = arith.addf %336, %335 : vector<8x128xf32>
    %338 = tpu.reciprocal %337 {approx = true} : vector<8x128xf32> -> vector<8x128xf32>
    %339 = vector.extract_strided_slice %331 {offsets = [0, 128], sizes = [8, 128], strides = [1, 1]} : vector<8x512xf32> to vector<8x128xf32>
    %cst_90 = arith.constant 0.000000e+00 : f32
    %340 = vector.broadcast %cst_90 : f32 to vector<8x128xf32>
    %341 = arith.subf %340, %339 : vector<8x128xf32>
    %342 = math.exp %341 : vector<8x128xf32>
    %cst_91 = arith.constant 1.000000e+00 : f32
    %343 = vector.broadcast %cst_91 : f32 to vector<8x128xf32>
    %344 = arith.addf %343, %342 : vector<8x128xf32>
    %345 = tpu.reciprocal %344 {approx = true} : vector<8x128xf32> -> vector<8x128xf32>
    %346 = vector.extract_strided_slice %331 {offsets = [0, 256], sizes = [8, 128], strides = [1, 1]} : vector<8x512xf32> to vector<8x128xf32>
    %347 = math.tanh %346 : vector<8x128xf32>
    %348 = vector.extract_strided_slice %331 {offsets = [0, 384], sizes = [8, 128], strides = [1, 1]} : vector<8x512xf32> to vector<8x128xf32>
    %cst_92 = arith.constant 0.000000e+00 : f32
    %349 = vector.broadcast %cst_92 : f32 to vector<8x128xf32>
    %350 = arith.subf %349, %348 : vector<8x128xf32>
    %351 = math.exp %350 : vector<8x128xf32>
    %cst_93 = arith.constant 1.000000e+00 : f32
    %352 = vector.broadcast %cst_93 : f32 to vector<8x128xf32>
    %353 = arith.addf %352, %351 : vector<8x128xf32>
    %354 = tpu.reciprocal %353 {approx = true} : vector<8x128xf32> -> vector<8x128xf32>
    %355 = arith.mulf %345, %326 : vector<8x128xf32>
    %356 = arith.mulf %338, %347 : vector<8x128xf32>
    %357 = arith.addf %355, %356 : vector<8x128xf32>
    %358 = math.tanh %357 : vector<8x128xf32>
    %359 = arith.mulf %354, %358 : vector<8x128xf32>
    %360 = arith.truncf %359 : vector<8x128xf32> to vector<8x128xbf16>
    %cst_94 = arith.constant dense<0.000000e+00> : vector<8x512xf32>
    %361 = tpu.matmul %360, %273, %cst_94 {dimension_numbers = #tpu.dot_dimension_numbers<[1], [0], [0], [1], [0, 0, 1, 1], [], []>} : vector<8x128xbf16>, vector<128x512xbf16>, vector<8x512xf32> -> vector<8x512xf32>
    %362 = arith.addf %283, %361 : vector<8x512xf32>
    %363 = vector.extract_strided_slice %362 {offsets = [0, 0], sizes = [8, 128], strides = [1, 1]} : vector<8x512xf32> to vector<8x128xf32>
    %cst_95 = arith.constant 0.000000e+00 : f32
    %364 = vector.broadcast %cst_95 : f32 to vector<8x128xf32>
    %365 = arith.subf %364, %363 : vector<8x128xf32>
    %366 = math.exp %365 : vector<8x128xf32>
    %cst_96 = arith.constant 1.000000e+00 : f32
    %367 = vector.broadcast %cst_96 : f32 to vector<8x128xf32>
    %368 = arith.addf %367, %366 : vector<8x128xf32>
    %369 = tpu.reciprocal %368 {approx = true} : vector<8x128xf32> -> vector<8x128xf32>
    %370 = vector.extract_strided_slice %362 {offsets = [0, 128], sizes = [8, 128], strides = [1, 1]} : vector<8x512xf32> to vector<8x128xf32>
    %cst_97 = arith.constant 0.000000e+00 : f32
    %371 = vector.broadcast %cst_97 : f32 to vector<8x128xf32>
    %372 = arith.subf %371, %370 : vector<8x128xf32>
    %373 = math.exp %372 : vector<8x128xf32>
    %cst_98 = arith.constant 1.000000e+00 : f32
    %374 = vector.broadcast %cst_98 : f32 to vector<8x128xf32>
    %375 = arith.addf %374, %373 : vector<8x128xf32>
    %376 = tpu.reciprocal %375 {approx = true} : vector<8x128xf32> -> vector<8x128xf32>
    %377 = vector.extract_strided_slice %362 {offsets = [0, 256], sizes = [8, 128], strides = [1, 1]} : vector<8x512xf32> to vector<8x128xf32>
    %378 = math.tanh %377 : vector<8x128xf32>
    %379 = vector.extract_strided_slice %362 {offsets = [0, 384], sizes = [8, 128], strides = [1, 1]} : vector<8x512xf32> to vector<8x128xf32>
    %cst_99 = arith.constant 0.000000e+00 : f32
    %380 = vector.broadcast %cst_99 : f32 to vector<8x128xf32>
    %381 = arith.subf %380, %379 : vector<8x128xf32>
    %382 = math.exp %381 : vector<8x128xf32>
    %cst_100 = arith.constant 1.000000e+00 : f32
    %383 = vector.broadcast %cst_100 : f32 to vector<8x128xf32>
    %384 = arith.addf %383, %382 : vector<8x128xf32>
    %385 = tpu.reciprocal %384 {approx = true} : vector<8x128xf32> -> vector<8x128xf32>
    %386 = arith.mulf %376, %357 : vector<8x128xf32>
    %387 = arith.mulf %369, %378 : vector<8x128xf32>
    %388 = arith.addf %386, %387 : vector<8x128xf32>
    %389 = math.tanh %388 : vector<8x128xf32>
    %390 = arith.mulf %385, %389 : vector<8x128xf32>
    %391 = arith.truncf %390 : vector<8x128xf32> to vector<8x128xbf16>
    %cst_101 = arith.constant dense<0.000000e+00> : vector<8x512xf32>
    %392 = tpu.matmul %391, %273, %cst_101 {dimension_numbers = #tpu.dot_dimension_numbers<[1], [0], [0], [1], [0, 0, 1, 1], [], []>} : vector<8x128xbf16>, vector<128x512xbf16>, vector<8x512xf32> -> vector<8x512xf32>
    %393 = arith.addf %286, %392 : vector<8x512xf32>
    %394 = vector.extract_strided_slice %393 {offsets = [0, 0], sizes = [8, 128], strides = [1, 1]} : vector<8x512xf32> to vector<8x128xf32>
    %cst_102 = arith.constant 0.000000e+00 : f32
    %395 = vector.broadcast %cst_102 : f32 to vector<8x128xf32>
    %396 = arith.subf %395, %394 : vector<8x128xf32>
    %397 = math.exp %396 : vector<8x128xf32>
    %cst_103 = arith.constant 1.000000e+00 : f32
    %398 = vector.broadcast %cst_103 : f32 to vector<8x128xf32>
    %399 = arith.addf %398, %397 : vector<8x128xf32>
    %400 = tpu.reciprocal %399 {approx = true} : vector<8x128xf32> -> vector<8x128xf32>
    %401 = vector.extract_strided_slice %393 {offsets = [0, 128], sizes = [8, 128], strides = [1, 1]} : vector<8x512xf32> to vector<8x128xf32>
    %cst_104 = arith.constant 0.000000e+00 : f32
    %402 = vector.broadcast %cst_104 : f32 to vector<8x128xf32>
    %403 = arith.subf %402, %401 : vector<8x128xf32>
    %404 = math.exp %403 : vector<8x128xf32>
    %cst_105 = arith.constant 1.000000e+00 : f32
    %405 = vector.broadcast %cst_105 : f32 to vector<8x128xf32>
    %406 = arith.addf %405, %404 : vector<8x128xf32>
    %407 = tpu.reciprocal %406 {approx = true} : vector<8x128xf32> -> vector<8x128xf32>
    %408 = vector.extract_strided_slice %393 {offsets = [0, 256], sizes = [8, 128], strides = [1, 1]} : vector<8x512xf32> to vector<8x128xf32>
    %409 = math.tanh %408 : vector<8x128xf32>
    %410 = vector.extract_strided_slice %393 {offsets = [0, 384], sizes = [8, 128], strides = [1, 1]} : vector<8x512xf32> to vector<8x128xf32>
    %cst_106 = arith.constant 0.000000e+00 : f32
    %411 = vector.broadcast %cst_106 : f32 to vector<8x128xf32>
    %412 = arith.subf %411, %410 : vector<8x128xf32>
    %413 = math.exp %412 : vector<8x128xf32>
    %cst_107 = arith.constant 1.000000e+00 : f32
    %414 = vector.broadcast %cst_107 : f32 to vector<8x128xf32>
    %415 = arith.addf %414, %413 : vector<8x128xf32>
    %416 = tpu.reciprocal %415 {approx = true} : vector<8x128xf32> -> vector<8x128xf32>
    %417 = arith.mulf %407, %388 : vector<8x128xf32>
    %418 = arith.mulf %400, %409 : vector<8x128xf32>
    %419 = arith.addf %417, %418 : vector<8x128xf32>
    %420 = math.tanh %419 : vector<8x128xf32>
    %421 = arith.mulf %416, %420 : vector<8x128xf32>
    %422 = arith.truncf %421 : vector<8x128xf32> to vector<8x128xbf16>
    %cst_108 = arith.constant dense<0.000000e+00> : vector<8x512xf32>
    %423 = tpu.matmul %422, %273, %cst_108 {dimension_numbers = #tpu.dot_dimension_numbers<[1], [0], [0], [1], [0, 0, 1, 1], [], []>} : vector<8x128xbf16>, vector<128x512xbf16>, vector<8x512xf32> -> vector<8x512xf32>
    %424 = arith.addf %289, %423 : vector<8x512xf32>
    %425 = vector.extract_strided_slice %424 {offsets = [0, 0], sizes = [8, 128], strides = [1, 1]} : vector<8x512xf32> to vector<8x128xf32>
    %cst_109 = arith.constant 0.000000e+00 : f32
    %426 = vector.broadcast %cst_109 : f32 to vector<8x128xf32>
    %427 = arith.subf %426, %425 : vector<8x128xf32>
    %428 = math.exp %427 : vector<8x128xf32>
    %cst_110 = arith.constant 1.000000e+00 : f32
    %429 = vector.broadcast %cst_110 : f32 to vector<8x128xf32>
    %430 = arith.addf %429, %428 : vector<8x128xf32>
    %431 = tpu.reciprocal %430 {approx = true} : vector<8x128xf32> -> vector<8x128xf32>
    %432 = vector.extract_strided_slice %424 {offsets = [0, 128], sizes = [8, 128], strides = [1, 1]} : vector<8x512xf32> to vector<8x128xf32>
    %cst_111 = arith.constant 0.000000e+00 : f32
    %433 = vector.broadcast %cst_111 : f32 to vector<8x128xf32>
    %434 = arith.subf %433, %432 : vector<8x128xf32>
    %435 = math.exp %434 : vector<8x128xf32>
    %cst_112 = arith.constant 1.000000e+00 : f32
    %436 = vector.broadcast %cst_112 : f32 to vector<8x128xf32>
    %437 = arith.addf %436, %435 : vector<8x128xf32>
    %438 = tpu.reciprocal %437 {approx = true} : vector<8x128xf32> -> vector<8x128xf32>
    %439 = vector.extract_strided_slice %424 {offsets = [0, 256], sizes = [8, 128], strides = [1, 1]} : vector<8x512xf32> to vector<8x128xf32>
    %440 = math.tanh %439 : vector<8x128xf32>
    %441 = vector.extract_strided_slice %424 {offsets = [0, 384], sizes = [8, 128], strides = [1, 1]} : vector<8x512xf32> to vector<8x128xf32>
    %cst_113 = arith.constant 0.000000e+00 : f32
    %442 = vector.broadcast %cst_113 : f32 to vector<8x128xf32>
    %443 = arith.subf %442, %441 : vector<8x128xf32>
    %444 = math.exp %443 : vector<8x128xf32>
    %cst_114 = arith.constant 1.000000e+00 : f32
    %445 = vector.broadcast %cst_114 : f32 to vector<8x128xf32>
    %446 = arith.addf %445, %444 : vector<8x128xf32>
    %447 = tpu.reciprocal %446 {approx = true} : vector<8x128xf32> -> vector<8x128xf32>
    %448 = arith.mulf %438, %419 : vector<8x128xf32>
    %449 = arith.mulf %431, %440 : vector<8x128xf32>
    %450 = arith.addf %448, %449 : vector<8x128xf32>
    %451 = math.tanh %450 : vector<8x128xf32>
    %452 = arith.mulf %447, %451 : vector<8x128xf32>
    %453 = arith.truncf %452 : vector<8x128xf32> to vector<8x128xbf16>
    %cst_115 = arith.constant dense<0.000000e+00> : vector<8x512xf32>
    %454 = tpu.matmul %453, %273, %cst_115 {dimension_numbers = #tpu.dot_dimension_numbers<[1], [0], [0], [1], [0, 0, 1, 1], [], []>} : vector<8x128xbf16>, vector<128x512xbf16>, vector<8x512xf32> -> vector<8x512xf32>
    %455 = arith.addf %292, %454 : vector<8x512xf32>
    %456 = vector.extract_strided_slice %455 {offsets = [0, 0], sizes = [8, 128], strides = [1, 1]} : vector<8x512xf32> to vector<8x128xf32>
    %cst_116 = arith.constant 0.000000e+00 : f32
    %457 = vector.broadcast %cst_116 : f32 to vector<8x128xf32>
    %458 = arith.subf %457, %456 : vector<8x128xf32>
    %459 = math.exp %458 : vector<8x128xf32>
    %cst_117 = arith.constant 1.000000e+00 : f32
    %460 = vector.broadcast %cst_117 : f32 to vector<8x128xf32>
    %461 = arith.addf %460, %459 : vector<8x128xf32>
    %462 = tpu.reciprocal %461 {approx = true} : vector<8x128xf32> -> vector<8x128xf32>
    %463 = vector.extract_strided_slice %455 {offsets = [0, 128], sizes = [8, 128], strides = [1, 1]} : vector<8x512xf32> to vector<8x128xf32>
    %cst_118 = arith.constant 0.000000e+00 : f32
    %464 = vector.broadcast %cst_118 : f32 to vector<8x128xf32>
    %465 = arith.subf %464, %463 : vector<8x128xf32>
    %466 = math.exp %465 : vector<8x128xf32>
    %cst_119 = arith.constant 1.000000e+00 : f32
    %467 = vector.broadcast %cst_119 : f32 to vector<8x128xf32>
    %468 = arith.addf %467, %466 : vector<8x128xf32>
    %469 = tpu.reciprocal %468 {approx = true} : vector<8x128xf32> -> vector<8x128xf32>
    %470 = vector.extract_strided_slice %455 {offsets = [0, 256], sizes = [8, 128], strides = [1, 1]} : vector<8x512xf32> to vector<8x128xf32>
    %471 = math.tanh %470 : vector<8x128xf32>
    %472 = vector.extract_strided_slice %455 {offsets = [0, 384], sizes = [8, 128], strides = [1, 1]} : vector<8x512xf32> to vector<8x128xf32>
    %cst_120 = arith.constant 0.000000e+00 : f32
    %473 = vector.broadcast %cst_120 : f32 to vector<8x128xf32>
    %474 = arith.subf %473, %472 : vector<8x128xf32>
    %475 = math.exp %474 : vector<8x128xf32>
    %cst_121 = arith.constant 1.000000e+00 : f32
    %476 = vector.broadcast %cst_121 : f32 to vector<8x128xf32>
    %477 = arith.addf %476, %475 : vector<8x128xf32>
    %478 = tpu.reciprocal %477 {approx = true} : vector<8x128xf32> -> vector<8x128xf32>
    %479 = arith.mulf %469, %450 : vector<8x128xf32>
    %480 = arith.mulf %462, %471 : vector<8x128xf32>
    %481 = arith.addf %479, %480 : vector<8x128xf32>
    %482 = math.tanh %481 : vector<8x128xf32>
    %483 = arith.mulf %478, %482 : vector<8x128xf32>
    %484 = arith.truncf %483 : vector<8x128xf32> to vector<8x128xbf16>
    %cst_122 = arith.constant dense<0.000000e+00> : vector<8x512xf32>
    %485 = tpu.matmul %484, %273, %cst_122 {dimension_numbers = #tpu.dot_dimension_numbers<[1], [0], [0], [1], [0, 0, 1, 1], [], []>} : vector<8x128xbf16>, vector<128x512xbf16>, vector<8x512xf32> -> vector<8x512xf32>
    %486 = arith.addf %295, %485 : vector<8x512xf32>
    %487 = vector.extract_strided_slice %486 {offsets = [0, 0], sizes = [8, 128], strides = [1, 1]} : vector<8x512xf32> to vector<8x128xf32>
    %cst_123 = arith.constant 0.000000e+00 : f32
    %488 = vector.broadcast %cst_123 : f32 to vector<8x128xf32>
    %489 = arith.subf %488, %487 : vector<8x128xf32>
    %490 = math.exp %489 : vector<8x128xf32>
    %cst_124 = arith.constant 1.000000e+00 : f32
    %491 = vector.broadcast %cst_124 : f32 to vector<8x128xf32>
    %492 = arith.addf %491, %490 : vector<8x128xf32>
    %493 = tpu.reciprocal %492 {approx = true} : vector<8x128xf32> -> vector<8x128xf32>
    %494 = vector.extract_strided_slice %486 {offsets = [0, 128], sizes = [8, 128], strides = [1, 1]} : vector<8x512xf32> to vector<8x128xf32>
    %cst_125 = arith.constant 0.000000e+00 : f32
    %495 = vector.broadcast %cst_125 : f32 to vector<8x128xf32>
    %496 = arith.subf %495, %494 : vector<8x128xf32>
    %497 = math.exp %496 : vector<8x128xf32>
    %cst_126 = arith.constant 1.000000e+00 : f32
    %498 = vector.broadcast %cst_126 : f32 to vector<8x128xf32>
    %499 = arith.addf %498, %497 : vector<8x128xf32>
    %500 = tpu.reciprocal %499 {approx = true} : vector<8x128xf32> -> vector<8x128xf32>
    %501 = vector.extract_strided_slice %486 {offsets = [0, 256], sizes = [8, 128], strides = [1, 1]} : vector<8x512xf32> to vector<8x128xf32>
    %502 = math.tanh %501 : vector<8x128xf32>
    %503 = vector.extract_strided_slice %486 {offsets = [0, 384], sizes = [8, 128], strides = [1, 1]} : vector<8x512xf32> to vector<8x128xf32>
    %cst_127 = arith.constant 0.000000e+00 : f32
    %504 = vector.broadcast %cst_127 : f32 to vector<8x128xf32>
    %505 = arith.subf %504, %503 : vector<8x128xf32>
    %506 = math.exp %505 : vector<8x128xf32>
    %cst_128 = arith.constant 1.000000e+00 : f32
    %507 = vector.broadcast %cst_128 : f32 to vector<8x128xf32>
    %508 = arith.addf %507, %506 : vector<8x128xf32>
    %509 = tpu.reciprocal %508 {approx = true} : vector<8x128xf32> -> vector<8x128xf32>
    %510 = arith.mulf %500, %481 : vector<8x128xf32>
    %511 = arith.mulf %493, %502 : vector<8x128xf32>
    %512 = arith.addf %510, %511 : vector<8x128xf32>
    %513 = math.tanh %512 : vector<8x128xf32>
    %514 = arith.mulf %509, %513 : vector<8x128xf32>
    %515 = arith.truncf %328 : vector<8x128xf32> to vector<8x128xbf16>
    %516 = arith.truncf %359 : vector<8x128xf32> to vector<8x128xbf16>
    %517 = arith.truncf %390 : vector<8x128xf32> to vector<8x128xbf16>
    %518 = arith.truncf %421 : vector<8x128xf32> to vector<8x128xbf16>
    %519 = arith.truncf %452 : vector<8x128xf32> to vector<8x128xbf16>
    %520 = arith.truncf %483 : vector<8x128xf32> to vector<8x128xbf16>
    %521 = arith.truncf %514 : vector<8x128xf32> to vector<8x128xbf16>
    %c0_129 = arith.constant 0 : index
    %c0_130 = arith.constant 0 : index
    %522 = vector.load %arg8[%c0_129, %c0_130] : memref<128x512xbf16, #tpu.memory_space<vmem>>, vector<128x512xbf16>
    %c0_131 = arith.constant 0 : index
    %c0_132 = arith.constant 0 : index
    %523 = vector.load %arg9[%c0_131, %c0_132] : memref<128x512xbf16, #tpu.memory_space<vmem>>, vector<128x512xbf16>
    %c0_133 = arith.constant 0 : index
    %c0_134 = arith.constant 0 : index
    %524 = vector.load %arg10[%c0_133, %c0_134] : memref<1x512xf32, #tpu.memory_space<vmem>>, vector<1x512xf32>
    %cst_135 = arith.constant dense<0.000000e+00> : vector<8x512xf32>
    %525 = tpu.matmul %515, %522, %cst_135 {dimension_numbers = #tpu.dot_dimension_numbers<[1], [0], [0], [1], [0, 0, 1, 1], [], []>} : vector<8x128xbf16>, vector<128x512xbf16>, vector<8x512xf32> -> vector<8x512xf32>
    %526 = vector.broadcast %524 : vector<1x512xf32> to vector<8x512xf32>
    %527 = arith.addf %525, %526 : vector<8x512xf32>
    %cst_136 = arith.constant dense<0.000000e+00> : vector<8x512xf32>
    %528 = tpu.matmul %516, %522, %cst_136 {dimension_numbers = #tpu.dot_dimension_numbers<[1], [0], [0], [1], [0, 0, 1, 1], [], []>} : vector<8x128xbf16>, vector<128x512xbf16>, vector<8x512xf32> -> vector<8x512xf32>
    %529 = vector.broadcast %524 : vector<1x512xf32> to vector<8x512xf32>
    %530 = arith.addf %528, %529 : vector<8x512xf32>
    %cst_137 = arith.constant dense<0.000000e+00> : vector<8x512xf32>
    %531 = tpu.matmul %517, %522, %cst_137 {dimension_numbers = #tpu.dot_dimension_numbers<[1], [0], [0], [1], [0, 0, 1, 1], [], []>} : vector<8x128xbf16>, vector<128x512xbf16>, vector<8x512xf32> -> vector<8x512xf32>
    %532 = vector.broadcast %524 : vector<1x512xf32> to vector<8x512xf32>
    %533 = arith.addf %531, %532 : vector<8x512xf32>
    %cst_138 = arith.constant dense<0.000000e+00> : vector<8x512xf32>
    %534 = tpu.matmul %518, %522, %cst_138 {dimension_numbers = #tpu.dot_dimension_numbers<[1], [0], [0], [1], [0, 0, 1, 1], [], []>} : vector<8x128xbf16>, vector<128x512xbf16>, vector<8x512xf32> -> vector<8x512xf32>
    %535 = vector.broadcast %524 : vector<1x512xf32> to vector<8x512xf32>
    %536 = arith.addf %534, %535 : vector<8x512xf32>
    %cst_139 = arith.constant dense<0.000000e+00> : vector<8x512xf32>
    %537 = tpu.matmul %519, %522, %cst_139 {dimension_numbers = #tpu.dot_dimension_numbers<[1], [0], [0], [1], [0, 0, 1, 1], [], []>} : vector<8x128xbf16>, vector<128x512xbf16>, vector<8x512xf32> -> vector<8x512xf32>
    %538 = vector.broadcast %524 : vector<1x512xf32> to vector<8x512xf32>
    %539 = arith.addf %537, %538 : vector<8x512xf32>
    %cst_140 = arith.constant dense<0.000000e+00> : vector<8x512xf32>
    %540 = tpu.matmul %520, %522, %cst_140 {dimension_numbers = #tpu.dot_dimension_numbers<[1], [0], [0], [1], [0, 0, 1, 1], [], []>} : vector<8x128xbf16>, vector<128x512xbf16>, vector<8x512xf32> -> vector<8x512xf32>
    %541 = vector.broadcast %524 : vector<1x512xf32> to vector<8x512xf32>
    %542 = arith.addf %540, %541 : vector<8x512xf32>
    %cst_141 = arith.constant dense<0.000000e+00> : vector<8x512xf32>
    %543 = tpu.matmul %521, %522, %cst_141 {dimension_numbers = #tpu.dot_dimension_numbers<[1], [0], [0], [1], [0, 0, 1, 1], [], []>} : vector<8x128xbf16>, vector<128x512xbf16>, vector<8x512xf32> -> vector<8x512xf32>
    %544 = vector.broadcast %524 : vector<1x512xf32> to vector<8x512xf32>
    %545 = arith.addf %543, %544 : vector<8x512xf32>
    %cst_142 = arith.constant 0.000000e+00 : f32
    %546 = vector.broadcast %cst_142 : f32 to vector<8x128xf32>
    %cst_143 = arith.constant 0.000000e+00 : f32
    %547 = vector.broadcast %cst_143 : f32 to vector<8x128xf32>
    %548 = arith.truncf %546 : vector<8x128xf32> to vector<8x128xbf16>
    %cst_144 = arith.constant dense<0.000000e+00> : vector<8x512xf32>
    %549 = tpu.matmul %548, %523, %cst_144 {dimension_numbers = #tpu.dot_dimension_numbers<[1], [0], [0], [1], [0, 0, 1, 1], [], []>} : vector<8x128xbf16>, vector<128x512xbf16>, vector<8x512xf32> -> vector<8x512xf32>
    %550 = arith.addf %527, %549 : vector<8x512xf32>
    %551 = vector.extract_strided_slice %550 {offsets = [0, 0], sizes = [8, 128], strides = [1, 1]} : vector<8x512xf32> to vector<8x128xf32>
    %cst_145 = arith.constant 0.000000e+00 : f32
    %552 = vector.broadcast %cst_145 : f32 to vector<8x128xf32>
    %553 = arith.subf %552, %551 : vector<8x128xf32>
    %554 = math.exp %553 : vector<8x128xf32>
    %cst_146 = arith.constant 1.000000e+00 : f32
    %555 = vector.broadcast %cst_146 : f32 to vector<8x128xf32>
    %556 = arith.addf %555, %554 : vector<8x128xf32>
    %557 = tpu.reciprocal %556 {approx = true} : vector<8x128xf32> -> vector<8x128xf32>
    %558 = vector.extract_strided_slice %550 {offsets = [0, 128], sizes = [8, 128], strides = [1, 1]} : vector<8x512xf32> to vector<8x128xf32>
    %cst_147 = arith.constant 0.000000e+00 : f32
    %559 = vector.broadcast %cst_147 : f32 to vector<8x128xf32>
    %560 = arith.subf %559, %558 : vector<8x128xf32>
    %561 = math.exp %560 : vector<8x128xf32>
    %cst_148 = arith.constant 1.000000e+00 : f32
    %562 = vector.broadcast %cst_148 : f32 to vector<8x128xf32>
    %563 = arith.addf %562, %561 : vector<8x128xf32>
    %564 = tpu.reciprocal %563 {approx = true} : vector<8x128xf32> -> vector<8x128xf32>
    %565 = vector.extract_strided_slice %550 {offsets = [0, 256], sizes = [8, 128], strides = [1, 1]} : vector<8x512xf32> to vector<8x128xf32>
    %566 = math.tanh %565 : vector<8x128xf32>
    %567 = vector.extract_strided_slice %550 {offsets = [0, 384], sizes = [8, 128], strides = [1, 1]} : vector<8x512xf32> to vector<8x128xf32>
    %cst_149 = arith.constant 0.000000e+00 : f32
    %568 = vector.broadcast %cst_149 : f32 to vector<8x128xf32>
    %569 = arith.subf %568, %567 : vector<8x128xf32>
    %570 = math.exp %569 : vector<8x128xf32>
    %cst_150 = arith.constant 1.000000e+00 : f32
    %571 = vector.broadcast %cst_150 : f32 to vector<8x128xf32>
    %572 = arith.addf %571, %570 : vector<8x128xf32>
    %573 = tpu.reciprocal %572 {approx = true} : vector<8x128xf32> -> vector<8x128xf32>
    %574 = arith.mulf %564, %547 : vector<8x128xf32>
    %575 = arith.mulf %557, %566 : vector<8x128xf32>
    %576 = arith.addf %574, %575 : vector<8x128xf32>
    %577 = math.tanh %576 : vector<8x128xf32>
    %578 = arith.mulf %573, %577 : vector<8x128xf32>
    %579 = arith.truncf %578 : vector<8x128xf32> to vector<8x128xbf16>
    %cst_151 = arith.constant dense<0.000000e+00> : vector<8x512xf32>
    %580 = tpu.matmul %579, %523, %cst_151 {dimension_numbers = #tpu.dot_dimension_numbers<[1], [0], [0], [1], [0, 0, 1, 1], [], []>} : vector<8x128xbf16>, vector<128x512xbf16>, vector<8x512xf32> -> vector<8x512xf32>
    %581 = arith.addf %530, %580 : vector<8x512xf32>
    %582 = vector.extract_strided_slice %581 {offsets = [0, 0], sizes = [8, 128], strides = [1, 1]} : vector<8x512xf32> to vector<8x128xf32>
    %cst_152 = arith.constant 0.000000e+00 : f32
    %583 = vector.broadcast %cst_152 : f32 to vector<8x128xf32>
    %584 = arith.subf %583, %582 : vector<8x128xf32>
    %585 = math.exp %584 : vector<8x128xf32>
    %cst_153 = arith.constant 1.000000e+00 : f32
    %586 = vector.broadcast %cst_153 : f32 to vector<8x128xf32>
    %587 = arith.addf %586, %585 : vector<8x128xf32>
    %588 = tpu.reciprocal %587 {approx = true} : vector<8x128xf32> -> vector<8x128xf32>
    %589 = vector.extract_strided_slice %581 {offsets = [0, 128], sizes = [8, 128], strides = [1, 1]} : vector<8x512xf32> to vector<8x128xf32>
    %cst_154 = arith.constant 0.000000e+00 : f32
    %590 = vector.broadcast %cst_154 : f32 to vector<8x128xf32>
    %591 = arith.subf %590, %589 : vector<8x128xf32>
    %592 = math.exp %591 : vector<8x128xf32>
    %cst_155 = arith.constant 1.000000e+00 : f32
    %593 = vector.broadcast %cst_155 : f32 to vector<8x128xf32>
    %594 = arith.addf %593, %592 : vector<8x128xf32>
    %595 = tpu.reciprocal %594 {approx = true} : vector<8x128xf32> -> vector<8x128xf32>
    %596 = vector.extract_strided_slice %581 {offsets = [0, 256], sizes = [8, 128], strides = [1, 1]} : vector<8x512xf32> to vector<8x128xf32>
    %597 = math.tanh %596 : vector<8x128xf32>
    %598 = vector.extract_strided_slice %581 {offsets = [0, 384], sizes = [8, 128], strides = [1, 1]} : vector<8x512xf32> to vector<8x128xf32>
    %cst_156 = arith.constant 0.000000e+00 : f32
    %599 = vector.broadcast %cst_156 : f32 to vector<8x128xf32>
    %600 = arith.subf %599, %598 : vector<8x128xf32>
    %601 = math.exp %600 : vector<8x128xf32>
    %cst_157 = arith.constant 1.000000e+00 : f32
    %602 = vector.broadcast %cst_157 : f32 to vector<8x128xf32>
    %603 = arith.addf %602, %601 : vector<8x128xf32>
    %604 = tpu.reciprocal %603 {approx = true} : vector<8x128xf32> -> vector<8x128xf32>
    %605 = arith.mulf %595, %576 : vector<8x128xf32>
    %606 = arith.mulf %588, %597 : vector<8x128xf32>
    %607 = arith.addf %605, %606 : vector<8x128xf32>
    %608 = math.tanh %607 : vector<8x128xf32>
    %609 = arith.mulf %604, %608 : vector<8x128xf32>
    %610 = arith.truncf %609 : vector<8x128xf32> to vector<8x128xbf16>
    %cst_158 = arith.constant dense<0.000000e+00> : vector<8x512xf32>
    %611 = tpu.matmul %610, %523, %cst_158 {dimension_numbers = #tpu.dot_dimension_numbers<[1], [0], [0], [1], [0, 0, 1, 1], [], []>} : vector<8x128xbf16>, vector<128x512xbf16>, vector<8x512xf32> -> vector<8x512xf32>
    %612 = arith.addf %533, %611 : vector<8x512xf32>
    %613 = vector.extract_strided_slice %612 {offsets = [0, 0], sizes = [8, 128], strides = [1, 1]} : vector<8x512xf32> to vector<8x128xf32>
    %cst_159 = arith.constant 0.000000e+00 : f32
    %614 = vector.broadcast %cst_159 : f32 to vector<8x128xf32>
    %615 = arith.subf %614, %613 : vector<8x128xf32>
    %616 = math.exp %615 : vector<8x128xf32>
    %cst_160 = arith.constant 1.000000e+00 : f32
    %617 = vector.broadcast %cst_160 : f32 to vector<8x128xf32>
    %618 = arith.addf %617, %616 : vector<8x128xf32>
    %619 = tpu.reciprocal %618 {approx = true} : vector<8x128xf32> -> vector<8x128xf32>
    %620 = vector.extract_strided_slice %612 {offsets = [0, 128], sizes = [8, 128], strides = [1, 1]} : vector<8x512xf32> to vector<8x128xf32>
    %cst_161 = arith.constant 0.000000e+00 : f32
    %621 = vector.broadcast %cst_161 : f32 to vector<8x128xf32>
    %622 = arith.subf %621, %620 : vector<8x128xf32>
    %623 = math.exp %622 : vector<8x128xf32>
    %cst_162 = arith.constant 1.000000e+00 : f32
    %624 = vector.broadcast %cst_162 : f32 to vector<8x128xf32>
    %625 = arith.addf %624, %623 : vector<8x128xf32>
    %626 = tpu.reciprocal %625 {approx = true} : vector<8x128xf32> -> vector<8x128xf32>
    %627 = vector.extract_strided_slice %612 {offsets = [0, 256], sizes = [8, 128], strides = [1, 1]} : vector<8x512xf32> to vector<8x128xf32>
    %628 = math.tanh %627 : vector<8x128xf32>
    %629 = vector.extract_strided_slice %612 {offsets = [0, 384], sizes = [8, 128], strides = [1, 1]} : vector<8x512xf32> to vector<8x128xf32>
    %cst_163 = arith.constant 0.000000e+00 : f32
    %630 = vector.broadcast %cst_163 : f32 to vector<8x128xf32>
    %631 = arith.subf %630, %629 : vector<8x128xf32>
    %632 = math.exp %631 : vector<8x128xf32>
    %cst_164 = arith.constant 1.000000e+00 : f32
    %633 = vector.broadcast %cst_164 : f32 to vector<8x128xf32>
    %634 = arith.addf %633, %632 : vector<8x128xf32>
    %635 = tpu.reciprocal %634 {approx = true} : vector<8x128xf32> -> vector<8x128xf32>
    %636 = arith.mulf %626, %607 : vector<8x128xf32>
    %637 = arith.mulf %619, %628 : vector<8x128xf32>
    %638 = arith.addf %636, %637 : vector<8x128xf32>
    %639 = math.tanh %638 : vector<8x128xf32>
    %640 = arith.mulf %635, %639 : vector<8x128xf32>
    %641 = arith.truncf %640 : vector<8x128xf32> to vector<8x128xbf16>
    %cst_165 = arith.constant dense<0.000000e+00> : vector<8x512xf32>
    %642 = tpu.matmul %641, %523, %cst_165 {dimension_numbers = #tpu.dot_dimension_numbers<[1], [0], [0], [1], [0, 0, 1, 1], [], []>} : vector<8x128xbf16>, vector<128x512xbf16>, vector<8x512xf32> -> vector<8x512xf32>
    %643 = arith.addf %536, %642 : vector<8x512xf32>
    %644 = vector.extract_strided_slice %643 {offsets = [0, 0], sizes = [8, 128], strides = [1, 1]} : vector<8x512xf32> to vector<8x128xf32>
    %cst_166 = arith.constant 0.000000e+00 : f32
    %645 = vector.broadcast %cst_166 : f32 to vector<8x128xf32>
    %646 = arith.subf %645, %644 : vector<8x128xf32>
    %647 = math.exp %646 : vector<8x128xf32>
    %cst_167 = arith.constant 1.000000e+00 : f32
    %648 = vector.broadcast %cst_167 : f32 to vector<8x128xf32>
    %649 = arith.addf %648, %647 : vector<8x128xf32>
    %650 = tpu.reciprocal %649 {approx = true} : vector<8x128xf32> -> vector<8x128xf32>
    %651 = vector.extract_strided_slice %643 {offsets = [0, 128], sizes = [8, 128], strides = [1, 1]} : vector<8x512xf32> to vector<8x128xf32>
    %cst_168 = arith.constant 0.000000e+00 : f32
    %652 = vector.broadcast %cst_168 : f32 to vector<8x128xf32>
    %653 = arith.subf %652, %651 : vector<8x128xf32>
    %654 = math.exp %653 : vector<8x128xf32>
    %cst_169 = arith.constant 1.000000e+00 : f32
    %655 = vector.broadcast %cst_169 : f32 to vector<8x128xf32>
    %656 = arith.addf %655, %654 : vector<8x128xf32>
    %657 = tpu.reciprocal %656 {approx = true} : vector<8x128xf32> -> vector<8x128xf32>
    %658 = vector.extract_strided_slice %643 {offsets = [0, 256], sizes = [8, 128], strides = [1, 1]} : vector<8x512xf32> to vector<8x128xf32>
    %659 = math.tanh %658 : vector<8x128xf32>
    %660 = vector.extract_strided_slice %643 {offsets = [0, 384], sizes = [8, 128], strides = [1, 1]} : vector<8x512xf32> to vector<8x128xf32>
    %cst_170 = arith.constant 0.000000e+00 : f32
    %661 = vector.broadcast %cst_170 : f32 to vector<8x128xf32>
    %662 = arith.subf %661, %660 : vector<8x128xf32>
    %663 = math.exp %662 : vector<8x128xf32>
    %cst_171 = arith.constant 1.000000e+00 : f32
    %664 = vector.broadcast %cst_171 : f32 to vector<8x128xf32>
    %665 = arith.addf %664, %663 : vector<8x128xf32>
    %666 = tpu.reciprocal %665 {approx = true} : vector<8x128xf32> -> vector<8x128xf32>
    %667 = arith.mulf %657, %638 : vector<8x128xf32>
    %668 = arith.mulf %650, %659 : vector<8x128xf32>
    %669 = arith.addf %667, %668 : vector<8x128xf32>
    %670 = math.tanh %669 : vector<8x128xf32>
    %671 = arith.mulf %666, %670 : vector<8x128xf32>
    %672 = arith.truncf %671 : vector<8x128xf32> to vector<8x128xbf16>
    %cst_172 = arith.constant dense<0.000000e+00> : vector<8x512xf32>
    %673 = tpu.matmul %672, %523, %cst_172 {dimension_numbers = #tpu.dot_dimension_numbers<[1], [0], [0], [1], [0, 0, 1, 1], [], []>} : vector<8x128xbf16>, vector<128x512xbf16>, vector<8x512xf32> -> vector<8x512xf32>
    %674 = arith.addf %539, %673 : vector<8x512xf32>
    %675 = vector.extract_strided_slice %674 {offsets = [0, 0], sizes = [8, 128], strides = [1, 1]} : vector<8x512xf32> to vector<8x128xf32>
    %cst_173 = arith.constant 0.000000e+00 : f32
    %676 = vector.broadcast %cst_173 : f32 to vector<8x128xf32>
    %677 = arith.subf %676, %675 : vector<8x128xf32>
    %678 = math.exp %677 : vector<8x128xf32>
    %cst_174 = arith.constant 1.000000e+00 : f32
    %679 = vector.broadcast %cst_174 : f32 to vector<8x128xf32>
    %680 = arith.addf %679, %678 : vector<8x128xf32>
    %681 = tpu.reciprocal %680 {approx = true} : vector<8x128xf32> -> vector<8x128xf32>
    %682 = vector.extract_strided_slice %674 {offsets = [0, 128], sizes = [8, 128], strides = [1, 1]} : vector<8x512xf32> to vector<8x128xf32>
    %cst_175 = arith.constant 0.000000e+00 : f32
    %683 = vector.broadcast %cst_175 : f32 to vector<8x128xf32>
    %684 = arith.subf %683, %682 : vector<8x128xf32>
    %685 = math.exp %684 : vector<8x128xf32>
    %cst_176 = arith.constant 1.000000e+00 : f32
    %686 = vector.broadcast %cst_176 : f32 to vector<8x128xf32>
    %687 = arith.addf %686, %685 : vector<8x128xf32>
    %688 = tpu.reciprocal %687 {approx = true} : vector<8x128xf32> -> vector<8x128xf32>
    %689 = vector.extract_strided_slice %674 {offsets = [0, 256], sizes = [8, 128], strides = [1, 1]} : vector<8x512xf32> to vector<8x128xf32>
    %690 = math.tanh %689 : vector<8x128xf32>
    %691 = vector.extract_strided_slice %674 {offsets = [0, 384], sizes = [8, 128], strides = [1, 1]} : vector<8x512xf32> to vector<8x128xf32>
    %cst_177 = arith.constant 0.000000e+00 : f32
    %692 = vector.broadcast %cst_177 : f32 to vector<8x128xf32>
    %693 = arith.subf %692, %691 : vector<8x128xf32>
    %694 = math.exp %693 : vector<8x128xf32>
    %cst_178 = arith.constant 1.000000e+00 : f32
    %695 = vector.broadcast %cst_178 : f32 to vector<8x128xf32>
    %696 = arith.addf %695, %694 : vector<8x128xf32>
    %697 = tpu.reciprocal %696 {approx = true} : vector<8x128xf32> -> vector<8x128xf32>
    %698 = arith.mulf %688, %669 : vector<8x128xf32>
    %699 = arith.mulf %681, %690 : vector<8x128xf32>
    %700 = arith.addf %698, %699 : vector<8x128xf32>
    %701 = math.tanh %700 : vector<8x128xf32>
    %702 = arith.mulf %697, %701 : vector<8x128xf32>
    %703 = arith.truncf %702 : vector<8x128xf32> to vector<8x128xbf16>
    %cst_179 = arith.constant dense<0.000000e+00> : vector<8x512xf32>
    %704 = tpu.matmul %703, %523, %cst_179 {dimension_numbers = #tpu.dot_dimension_numbers<[1], [0], [0], [1], [0, 0, 1, 1], [], []>} : vector<8x128xbf16>, vector<128x512xbf16>, vector<8x512xf32> -> vector<8x512xf32>
    %705 = arith.addf %542, %704 : vector<8x512xf32>
    %706 = vector.extract_strided_slice %705 {offsets = [0, 0], sizes = [8, 128], strides = [1, 1]} : vector<8x512xf32> to vector<8x128xf32>
    %cst_180 = arith.constant 0.000000e+00 : f32
    %707 = vector.broadcast %cst_180 : f32 to vector<8x128xf32>
    %708 = arith.subf %707, %706 : vector<8x128xf32>
    %709 = math.exp %708 : vector<8x128xf32>
    %cst_181 = arith.constant 1.000000e+00 : f32
    %710 = vector.broadcast %cst_181 : f32 to vector<8x128xf32>
    %711 = arith.addf %710, %709 : vector<8x128xf32>
    %712 = tpu.reciprocal %711 {approx = true} : vector<8x128xf32> -> vector<8x128xf32>
    %713 = vector.extract_strided_slice %705 {offsets = [0, 128], sizes = [8, 128], strides = [1, 1]} : vector<8x512xf32> to vector<8x128xf32>
    %cst_182 = arith.constant 0.000000e+00 : f32
    %714 = vector.broadcast %cst_182 : f32 to vector<8x128xf32>
    %715 = arith.subf %714, %713 : vector<8x128xf32>
    %716 = math.exp %715 : vector<8x128xf32>
    %cst_183 = arith.constant 1.000000e+00 : f32
    %717 = vector.broadcast %cst_183 : f32 to vector<8x128xf32>
    %718 = arith.addf %717, %716 : vector<8x128xf32>
    %719 = tpu.reciprocal %718 {approx = true} : vector<8x128xf32> -> vector<8x128xf32>
    %720 = vector.extract_strided_slice %705 {offsets = [0, 256], sizes = [8, 128], strides = [1, 1]} : vector<8x512xf32> to vector<8x128xf32>
    %721 = math.tanh %720 : vector<8x128xf32>
    %722 = vector.extract_strided_slice %705 {offsets = [0, 384], sizes = [8, 128], strides = [1, 1]} : vector<8x512xf32> to vector<8x128xf32>
    %cst_184 = arith.constant 0.000000e+00 : f32
    %723 = vector.broadcast %cst_184 : f32 to vector<8x128xf32>
    %724 = arith.subf %723, %722 : vector<8x128xf32>
    %725 = math.exp %724 : vector<8x128xf32>
    %cst_185 = arith.constant 1.000000e+00 : f32
    %726 = vector.broadcast %cst_185 : f32 to vector<8x128xf32>
    %727 = arith.addf %726, %725 : vector<8x128xf32>
    %728 = tpu.reciprocal %727 {approx = true} : vector<8x128xf32> -> vector<8x128xf32>
    %729 = arith.mulf %719, %700 : vector<8x128xf32>
    %730 = arith.mulf %712, %721 : vector<8x128xf32>
    %731 = arith.addf %729, %730 : vector<8x128xf32>
    %732 = math.tanh %731 : vector<8x128xf32>
    %733 = arith.mulf %728, %732 : vector<8x128xf32>
    %734 = arith.truncf %733 : vector<8x128xf32> to vector<8x128xbf16>
    %cst_186 = arith.constant dense<0.000000e+00> : vector<8x512xf32>
    %735 = tpu.matmul %734, %523, %cst_186 {dimension_numbers = #tpu.dot_dimension_numbers<[1], [0], [0], [1], [0, 0, 1, 1], [], []>} : vector<8x128xbf16>, vector<128x512xbf16>, vector<8x512xf32> -> vector<8x512xf32>
    %736 = arith.addf %545, %735 : vector<8x512xf32>
    %737 = vector.extract_strided_slice %736 {offsets = [0, 0], sizes = [8, 128], strides = [1, 1]} : vector<8x512xf32> to vector<8x128xf32>
    %cst_187 = arith.constant 0.000000e+00 : f32
    %738 = vector.broadcast %cst_187 : f32 to vector<8x128xf32>
    %739 = arith.subf %738, %737 : vector<8x128xf32>
    %740 = math.exp %739 : vector<8x128xf32>
    %cst_188 = arith.constant 1.000000e+00 : f32
    %741 = vector.broadcast %cst_188 : f32 to vector<8x128xf32>
    %742 = arith.addf %741, %740 : vector<8x128xf32>
    %743 = tpu.reciprocal %742 {approx = true} : vector<8x128xf32> -> vector<8x128xf32>
    %744 = vector.extract_strided_slice %736 {offsets = [0, 128], sizes = [8, 128], strides = [1, 1]} : vector<8x512xf32> to vector<8x128xf32>
    %cst_189 = arith.constant 0.000000e+00 : f32
    %745 = vector.broadcast %cst_189 : f32 to vector<8x128xf32>
    %746 = arith.subf %745, %744 : vector<8x128xf32>
    %747 = math.exp %746 : vector<8x128xf32>
    %cst_190 = arith.constant 1.000000e+00 : f32
    %748 = vector.broadcast %cst_190 : f32 to vector<8x128xf32>
    %749 = arith.addf %748, %747 : vector<8x128xf32>
    %750 = tpu.reciprocal %749 {approx = true} : vector<8x128xf32> -> vector<8x128xf32>
    %751 = vector.extract_strided_slice %736 {offsets = [0, 256], sizes = [8, 128], strides = [1, 1]} : vector<8x512xf32> to vector<8x128xf32>
    %752 = math.tanh %751 : vector<8x128xf32>
    %753 = vector.extract_strided_slice %736 {offsets = [0, 384], sizes = [8, 128], strides = [1, 1]} : vector<8x512xf32> to vector<8x128xf32>
    %cst_191 = arith.constant 0.000000e+00 : f32
    %754 = vector.broadcast %cst_191 : f32 to vector<8x128xf32>
    %755 = arith.subf %754, %753 : vector<8x128xf32>
    %756 = math.exp %755 : vector<8x128xf32>
    %cst_192 = arith.constant 1.000000e+00 : f32
    %757 = vector.broadcast %cst_192 : f32 to vector<8x128xf32>
    %758 = arith.addf %757, %756 : vector<8x128xf32>
    %759 = tpu.reciprocal %758 {approx = true} : vector<8x128xf32> -> vector<8x128xf32>
    %760 = arith.mulf %750, %731 : vector<8x128xf32>
    %761 = arith.mulf %743, %752 : vector<8x128xf32>
    %762 = arith.addf %760, %761 : vector<8x128xf32>
    %763 = math.tanh %762 : vector<8x128xf32>
    %764 = arith.mulf %759, %763 : vector<8x128xf32>
    %765 = arith.truncf %578 : vector<8x128xf32> to vector<8x128xbf16>
    %766 = arith.truncf %609 : vector<8x128xf32> to vector<8x128xbf16>
    %767 = arith.truncf %640 : vector<8x128xf32> to vector<8x128xbf16>
    %768 = arith.truncf %671 : vector<8x128xf32> to vector<8x128xbf16>
    %769 = arith.truncf %702 : vector<8x128xf32> to vector<8x128xbf16>
    %770 = arith.truncf %733 : vector<8x128xf32> to vector<8x128xbf16>
    %771 = arith.truncf %764 : vector<8x128xf32> to vector<8x128xbf16>
    %c0_193 = arith.constant 0 : index
    %c0_194 = arith.constant 0 : index
    %772 = vector.load %arg12[%c0_193, %c0_194] : memref<1x256xf32, #tpu.memory_space<vmem>>, vector<1x256xf32>
    %773 = vector.shape_cast %772 : vector<1x256xf32> to vector<1x256xf32>
    %774 = vector.broadcast %773 : vector<1x256xf32> to vector<8x256xf32>
    %c0_195 = arith.constant 0 : index
    %c0_196 = arith.constant 0 : index
    %c0_197 = arith.constant 0 : index
    %775 = vector.load %arg11[%c0_195, %c0_196, %c0_197] : memref<7x128x256xbf16, #tpu.memory_space<vmem>>, vector<1x128x256xbf16>
    %776 = vector.shape_cast %775 : vector<1x128x256xbf16> to vector<128x256xbf16>
    %cst_198 = arith.constant dense<0.000000e+00> : vector<8x256xf32>
    %777 = tpu.matmul %765, %776, %cst_198 {dimension_numbers = #tpu.dot_dimension_numbers<[1], [0], [0], [1], [0, 0, 1, 1], [], []>} : vector<8x128xbf16>, vector<128x256xbf16>, vector<8x256xf32> -> vector<8x256xf32>
    %778 = arith.addf %774, %777 : vector<8x256xf32>
    %c1 = arith.constant 1 : index
    %c0_199 = arith.constant 0 : index
    %c0_200 = arith.constant 0 : index
    %779 = vector.load %arg11[%c1, %c0_199, %c0_200] : memref<7x128x256xbf16, #tpu.memory_space<vmem>>, vector<1x128x256xbf16>
    %780 = vector.shape_cast %779 : vector<1x128x256xbf16> to vector<128x256xbf16>
    %cst_201 = arith.constant dense<0.000000e+00> : vector<8x256xf32>
    %781 = tpu.matmul %766, %780, %cst_201 {dimension_numbers = #tpu.dot_dimension_numbers<[1], [0], [0], [1], [0, 0, 1, 1], [], []>} : vector<8x128xbf16>, vector<128x256xbf16>, vector<8x256xf32> -> vector<8x256xf32>
    %782 = arith.addf %778, %781 : vector<8x256xf32>
    %c2 = arith.constant 2 : index
    %c0_202 = arith.constant 0 : index
    %c0_203 = arith.constant 0 : index
    %783 = vector.load %arg11[%c2, %c0_202, %c0_203] : memref<7x128x256xbf16, #tpu.memory_space<vmem>>, vector<1x128x256xbf16>
    %784 = vector.shape_cast %783 : vector<1x128x256xbf16> to vector<128x256xbf16>
    %cst_204 = arith.constant dense<0.000000e+00> : vector<8x256xf32>
    %785 = tpu.matmul %767, %784, %cst_204 {dimension_numbers = #tpu.dot_dimension_numbers<[1], [0], [0], [1], [0, 0, 1, 1], [], []>} : vector<8x128xbf16>, vector<128x256xbf16>, vector<8x256xf32> -> vector<8x256xf32>
    %786 = arith.addf %782, %785 : vector<8x256xf32>
    %c3 = arith.constant 3 : index
    %c0_205 = arith.constant 0 : index
    %c0_206 = arith.constant 0 : index
    %787 = vector.load %arg11[%c3, %c0_205, %c0_206] : memref<7x128x256xbf16, #tpu.memory_space<vmem>>, vector<1x128x256xbf16>
    %788 = vector.shape_cast %787 : vector<1x128x256xbf16> to vector<128x256xbf16>
    %cst_207 = arith.constant dense<0.000000e+00> : vector<8x256xf32>
    %789 = tpu.matmul %768, %788, %cst_207 {dimension_numbers = #tpu.dot_dimension_numbers<[1], [0], [0], [1], [0, 0, 1, 1], [], []>} : vector<8x128xbf16>, vector<128x256xbf16>, vector<8x256xf32> -> vector<8x256xf32>
    %790 = arith.addf %786, %789 : vector<8x256xf32>
    %c4 = arith.constant 4 : index
    %c0_208 = arith.constant 0 : index
    %c0_209 = arith.constant 0 : index
    %791 = vector.load %arg11[%c4, %c0_208, %c0_209] : memref<7x128x256xbf16, #tpu.memory_space<vmem>>, vector<1x128x256xbf16>
    %792 = vector.shape_cast %791 : vector<1x128x256xbf16> to vector<128x256xbf16>
    %cst_210 = arith.constant dense<0.000000e+00> : vector<8x256xf32>
    %793 = tpu.matmul %769, %792, %cst_210 {dimension_numbers = #tpu.dot_dimension_numbers<[1], [0], [0], [1], [0, 0, 1, 1], [], []>} : vector<8x128xbf16>, vector<128x256xbf16>, vector<8x256xf32> -> vector<8x256xf32>
    %794 = arith.addf %790, %793 : vector<8x256xf32>
    %c5 = arith.constant 5 : index
    %c0_211 = arith.constant 0 : index
    %c0_212 = arith.constant 0 : index
    %795 = vector.load %arg11[%c5, %c0_211, %c0_212] : memref<7x128x256xbf16, #tpu.memory_space<vmem>>, vector<1x128x256xbf16>
    %796 = vector.shape_cast %795 : vector<1x128x256xbf16> to vector<128x256xbf16>
    %cst_213 = arith.constant dense<0.000000e+00> : vector<8x256xf32>
    %797 = tpu.matmul %770, %796, %cst_213 {dimension_numbers = #tpu.dot_dimension_numbers<[1], [0], [0], [1], [0, 0, 1, 1], [], []>} : vector<8x128xbf16>, vector<128x256xbf16>, vector<8x256xf32> -> vector<8x256xf32>
    %798 = arith.addf %794, %797 : vector<8x256xf32>
    %c6 = arith.constant 6 : index
    %c0_214 = arith.constant 0 : index
    %c0_215 = arith.constant 0 : index
    %799 = vector.load %arg11[%c6, %c0_214, %c0_215] : memref<7x128x256xbf16, #tpu.memory_space<vmem>>, vector<1x128x256xbf16>
    %800 = vector.shape_cast %799 : vector<1x128x256xbf16> to vector<128x256xbf16>
    %cst_216 = arith.constant dense<0.000000e+00> : vector<8x256xf32>
    %801 = tpu.matmul %771, %800, %cst_216 {dimension_numbers = #tpu.dot_dimension_numbers<[1], [0], [0], [1], [0, 0, 1, 1], [], []>} : vector<8x128xbf16>, vector<128x256xbf16>, vector<8x256xf32> -> vector<8x256xf32>
    %802 = arith.addf %798, %801 : vector<8x256xf32>
    %cst_217 = arith.constant 0.000000e+00 : f32
    %803 = vector.broadcast %cst_217 : f32 to vector<8x256xf32>
    %804 = arith.cmpf ogt, %802, %803 : vector<8x256xf32>
    %cst_218 = arith.constant 0.00999999977 : f32
    %805 = vector.broadcast %cst_218 : f32 to vector<8x256xf32>
    %806 = arith.mulf %805, %802 : vector<8x256xf32>
    %807 = arith.select %804, %802, %806 : vector<8x256xi1>, vector<8x256xf32>
    %808 = arith.truncf %807 : vector<8x256xf32> to vector<8x256xbf16>
    %c0_219 = arith.constant 0 : index
    %c0_220 = arith.constant 0 : index
    %809 = vector.load %arg13[%c0_219, %c0_220] : memref<256x128xbf16, #tpu.memory_space<vmem>>, vector<256x128xbf16>
    %cst_221 = arith.constant dense<0.000000e+00> : vector<8x128xf32>
    %810 = tpu.matmul %808, %809, %cst_221 {dimension_numbers = #tpu.dot_dimension_numbers<[1], [0], [0], [1], [0, 0, 1, 1], [], []>} : vector<8x256xbf16>, vector<256x128xbf16>, vector<8x128xf32> -> vector<8x128xf32>
    %c0_222 = arith.constant 0 : index
    %c0_223 = arith.constant 0 : index
    %811 = vector.load %arg14[%c0_222, %c0_223] : memref<1x128xf32, #tpu.memory_space<vmem>>, vector<1x128xf32>
    %812 = vector.broadcast %811 : vector<1x128xf32> to vector<8x128xf32>
    %813 = arith.addf %810, %812 : vector<8x128xf32>
    %c0_224 = arith.constant 0 : index
    %c0_225 = arith.constant 0 : index
    %814 = vector.load %arg15[%c0_224, %c0_225] : memref<8x128xf32, #tpu.memory_space<vmem>>, vector<8x128xf32>
    tpu.vector_store %arg15[%c0_224, %c0_225], %813 {strides = array<i32>} : memref<8x128xf32, #tpu.memory_space<vmem>>, vector<8x128xf32>,
    return
  }
  func.func @transform_0(%arg0: i32) -> (i32, i32, i32) {
    %c0_i32 = arith.constant 0 : i32
    %c0_i32_0 = arith.constant 0 : i32
    %c0_i32_1 = arith.constant 0 : i32
    return %arg0, %c0_i32, %c0_i32_0 : i32, i32, i32
  }
  func.func @transform_1(%arg0: i32) -> (i32, i32) {
    %c0_i32 = arith.constant 0 : i32
    %c0_i32_0 = arith.constant 0 : i32
    %c0_i32_1 = arith.constant 0 : i32
    return %c0_i32, %c0_i32_0 : i32, i32
  }
  func.func @transform_2(%arg0: i32) -> (i32, i32) {
    %c0_i32 = arith.constant 0 : i32
    %c0_i32_0 = arith.constant 0 : i32
    %c0_i32_1 = arith.constant 0 : i32
    return %c0_i32, %c0_i32_0 : i32, i32
  }
  func.func @transform_3(%arg0: i32) -> (i32, i32) {
    %c0_i32 = arith.constant 0 : i32
    %c0_i32_0 = arith.constant 0 : i32
    %c0_i32_1 = arith.constant 0 : i32
    return %c0_i32, %c0_i32_0 : i32, i32
  }
  func.func @transform_4(%arg0: i32) -> (i32, i32) {
    %c0_i32 = arith.constant 0 : i32
    %c0_i32_0 = arith.constant 0 : i32
    %c0_i32_1 = arith.constant 0 : i32
    return %c0_i32, %c0_i32_0 : i32, i32
  }
  func.func @transform_5(%arg0: i32) -> (i32, i32) {
    %c0_i32 = arith.constant 0 : i32
    %c0_i32_0 = arith.constant 0 : i32
    %c0_i32_1 = arith.constant 0 : i32
    return %c0_i32, %c0_i32_0 : i32, i32
  }
  func.func @transform_6(%arg0: i32) -> (i32, i32) {
    %c0_i32 = arith.constant 0 : i32
    %c0_i32_0 = arith.constant 0 : i32
    %c0_i32_1 = arith.constant 0 : i32
    return %c0_i32, %c0_i32_0 : i32, i32
  }
  func.func @transform_7(%arg0: i32) -> (i32, i32) {
    %c0_i32 = arith.constant 0 : i32
    %c0_i32_0 = arith.constant 0 : i32
    %c0_i32_1 = arith.constant 0 : i32
    return %c0_i32, %c0_i32_0 : i32, i32
  }
  func.func @transform_8(%arg0: i32) -> (i32, i32) {
    %c0_i32 = arith.constant 0 : i32
    %c0_i32_0 = arith.constant 0 : i32
    %c0_i32_1 = arith.constant 0 : i32
    return %c0_i32, %c0_i32_0 : i32, i32
  }
  func.func @transform_9(%arg0: i32) -> (i32, i32) {
    %c0_i32 = arith.constant 0 : i32
    %c0_i32_0 = arith.constant 0 : i32
    %c0_i32_1 = arith.constant 0 : i32
    return %c0_i32, %c0_i32_0 : i32, i32
  }
  func.func @transform_10(%arg0: i32) -> (i32, i32, i32) {
    %c0_i32 = arith.constant 0 : i32
    %c0_i32_0 = arith.constant 0 : i32
    %c0_i32_1 = arith.constant 0 : i32
    %c0_i32_2 = arith.constant 0 : i32
    return %c0_i32, %c0_i32_0, %c0_i32_1 : i32, i32, i32
  }
  func.func @transform_11(%arg0: i32) -> (i32, i32) {
    %c0_i32 = arith.constant 0 : i32
    %c0_i32_0 = arith.constant 0 : i32
    %c0_i32_1 = arith.constant 0 : i32
    return %c0_i32, %c0_i32_0 : i32, i32
  }
  func.func @transform_12(%arg0: i32) -> (i32, i32) {
    %c0_i32 = arith.constant 0 : i32
    %c0_i32_0 = arith.constant 0 : i32
    %c0_i32_1 = arith.constant 0 : i32
    return %c0_i32, %c0_i32_0 : i32, i32
  }
  func.func @transform_13(%arg0: i32) -> (i32, i32) {
    %c0_i32 = arith.constant 0 : i32
    %c0_i32_0 = arith.constant 0 : i32
    %c0_i32_1 = arith.constant 0 : i32
    return %c0_i32, %c0_i32_0 : i32, i32
  }
  func.func @transform_14(%arg0: i32) -> (i32, i32) {
    %c0_i32 = arith.constant 0 : i32
    %c0_i32_0 = arith.constant 0 : i32
    return %arg0, %c0_i32 : i32, i32
  }
}

</mosaic_0001>

<llo_original>
// kernel: tpu_custom_call.1
$region0: #{tpu_custom_call.1}
  #allocation0 [shape = 'u32[]', space=smem, size = 0x4, offset = 0x4, fixed_abs, tag = 'smem constant byte address 0x4 - core index']
  #allocation1 [shape = 'u32[144,128]{1,0:T(1,128)}', space=vmem, size = 0x12000, scoped, tag = 'internal scratch']
  %s0 = inlined_call_operand.vmem [shape: f32[8,7,3], index: 0, kind: input, shape index: {}]
  %s1 = inlined_call_operand.hbm [shape: bf16[3,512], index: 1, kind: input, shape index: {}]
  %s2 = inlined_call_operand.hbm [shape: bf16[128,512], index: 2, kind: input, shape index: {}]
  %s3 = inlined_call_operand.vmem [shape: f32[1,512], index: 3, kind: input, shape index: {}]
  %s4 = inlined_call_operand.hbm [shape: bf16[128,512], index: 4, kind: input, shape index: {}]
  %s5 = inlined_call_operand.hbm [shape: bf16[128,512], index: 5, kind: input, shape index: {}]
  %s6 = inlined_call_operand.hbm [shape: f32[1,512], index: 6, kind: input, shape index: {}]
  %s7 = inlined_call_operand.hbm [shape: bf16[128,512], index: 7, kind: input, shape index: {}]
  %s8 = inlined_call_operand.hbm [shape: bf16[128,512], index: 8, kind: input, shape index: {}]
  %s9 = inlined_call_operand.hbm [shape: f32[1,512], index: 9, kind: input, shape index: {}]
  %s10 = inlined_call_operand.hbm [shape: bf16[7,128,256], index: 10, kind: input, shape index: {}]
  %s11 = inlined_call_operand.hbm [shape: f32[1,256], index: 11, kind: input, shape index: {}]
  %s12 = inlined_call_operand.vmem [shape: bf16[256,128], index: 12, kind: input, shape index: {}]
  %s13 = inlined_call_operand.vmem [shape: f32[1,128], index: 13, kind: input, shape index: {}]
  %s14 = inlined_call_operand.hbm [shape: f32[8,128], index: 14, kind: output, shape index: {}]
  %s15 = sld [smem:[#allocation0]]
  $region106: #{tpu_custom_call.1} parent=0
    _
  %s17 = ssub.s32 1, %s15
  %s18 = scalar_select 0, %s17, %s15
  $region1: #{tpu_custom_call.1} parent=0
    #allocation2 [shape = 'u8[4096]{0}', space=vmem, size = 0x1000, scoped, tag = 'input window, operand 1, single buffered']
    #allocation3 [shape = 's32[1]{0}', space=sflag, size = 0x4, scoped, tag = 'scoped memory for tpu_custom_call.1']
    #allocation4 [shape = 's32[1]{0}', space=sflag, size = 0x4, scoped, tag = 'scoped memory for tpu_custom_call.1']
    #allocation5 [shape = 'u8[131072]{0}', space=vmem, size = 0x20000, scoped, tag = 'input window, operand 2, single buffered']
    #allocation6 [shape = 's32[1]{0}', space=sflag, size = 0x4, scoped, tag = 'scoped memory for tpu_custom_call.1']
    #allocation7 [shape = 'u8[131072]{0}', space=vmem, size = 0x20000, scoped, tag = 'input window, operand 4, single buffered']
    #allocation8 [shape = 'u8[131072]{0}', space=vmem, size = 0x20000, scoped, tag = 'input window, operand 5, single buffered']
    #allocation9 [shape = 's32[1]{0}', space=sflag, size = 0x4, scoped, tag = 'scoped memory for tpu_custom_call.1']
    #allocation10 [shape = 'u8[2048]{0}', space=vmem, size = 0x800, scoped, tag = 'input window, operand 6, single buffered']
    #allocation11 [shape = 'u8[131072]{0}', space=vmem, size = 0x20000, scoped, tag = 'input window, operand 7, single buffered']
    #allocation12 [shape = 's32[1]{0}', space=sflag, size = 0x4, scoped, tag = 'scoped memory for tpu_custom_call.1']
    #allocation13 [shape = 'u8[131072]{0}', space=vmem, size = 0x20000, scoped, tag = 'input window, operand 8, single buffered']
    #allocation14 [shape = 'u8[2048]{0}', space=vmem, size = 0x800, scoped, tag = 'input window, operand 9, single buffered']
    #allocation15 [shape = 's32[1]{0}', space=sflag, size = 0x4, scoped, tag = 'scoped memory for tpu_custom_call.1']
    #allocation16 [shape = 'u8[458752]{0}', space=vmem, size = 0x70000, scoped, tag = 'input window, operand 10, single buffered']
    #allocation17 [shape = 'u8[1024]{0}', space=vmem, size = 0x400, scoped, tag = 'input window, operand 11, single buffered']
    #allocation18 [shape = 's32[1]{0}', space=sflag, size = 0x4, scoped, tag = 'scoped memory for tpu_custom_call.1']
    #allocation19 [shape = 'u8[4096]{0}', space=vmem, size = 0x1000, scoped, tag = 'output window, operand 0, single buffered']
    %19 = vsyncpa [#allocation3], 0
    %20 = vsyncpa [#allocation6], 0
    %21 = vsyncpa [#allocation9], 0
    %22 = vsyncpa [#allocation12], 0
    %23 = vsyncpa [#allocation15], 0
    %24 = vsyncpa [#allocation18], 0
    %25 = vsyncpa [#allocation4], 0
    // Predicated region
    $region2: #{tpu_custom_call.1} parent=1 // pred_check
      _
    $region3: #{tpu_custom_call.1} parent=1 // pred_check_branch
      %27 = sbr.rel (0) target = $region5
    $region4: #{tpu_custom_call.1} parent=1 // pred_region
      _
    $region5: #{tpu_custom_call.1} parent=1 // pred_fallthru
      _
    // Predicated region
    $region6: #{tpu_custom_call.1} parent=1 // pred_check
      _
    $region7: #{tpu_custom_call.1} parent=1 // pred_check_branch
      %29 = sbr.rel (0) target = $region9
    $region8: #{tpu_custom_call.1} parent=1 // pred_region
      %s31 = ssub.s32 128, 128
      %32 = vsyncadd [#allocation3], %s31
      %s34 = sshll.u32 [#allocation2], 4
      %s35 = int_to_ptr.vmem [resolvable:$true] %s34
      %37 = dma.hbm_to_vmem [thread:$0]  %s1, 128, %s35, [#allocation3]
    $region9: #{tpu_custom_call.1} parent=1 // pred_fallthru
      _
    // Predicated region
    $region10: #{tpu_custom_call.1} parent=1 // pred_check
      _
    $region11: #{tpu_custom_call.1} parent=1 // pred_check_branch
      %39 = sbr.rel (0) target = $region13
    $region12: #{tpu_custom_call.1} parent=1 // pred_region
      %s41 = ssub.s32 4096, 4096
      %42 = vsyncadd [#allocation6], %s41
      %s43 = sshll.u32 [#allocation5], 4
      %s44 = int_to_ptr.vmem [resolvable:$true] %s43
      %49 = dma.hbm_to_vmem [thread:$0]  %s2, 4096, %s44, [#allocation6], 256, 256, 16
    $region13: #{tpu_custom_call.1} parent=1 // pred_fallthru
      _
    // Predicated region
    $region14: #{tpu_custom_call.1} parent=1 // pred_check
      _
    $region15: #{tpu_custom_call.1} parent=1 // pred_check_branch
      %51 = sbr.rel (0) target = $region17
    $region16: #{tpu_custom_call.1} parent=1 // pred_region
      _
    $region17: #{tpu_custom_call.1} parent=1 // pred_fallthru
      _
    // Predicated region
    $region18: #{tpu_custom_call.1} parent=1 // pred_check
      _
    $region19: #{tpu_custom_call.1} parent=1 // pred_check_branch
      %53 = sbr.rel (0) target = $region21
    $region20: #{tpu_custom_call.1} parent=1 // pred_region
      %s55 = ssub.s32 4096, 4096
      %56 = vsyncadd [#allocation6], %s55
      %s57 = sshll.u32 [#allocation7], 4
      %s58 = int_to_ptr.vmem [resolvable:$true] %s57
      %63 = dma.hbm_to_vmem [thread:$0]  %s4, 4096, %s58, [#allocation6], 256, 256, 16
    $region21: #{tpu_custom_call.1} parent=1 // pred_fallthru
      _
    // Predicated region
    $region22: #{tpu_custom_call.1} parent=1 // pred_check
      _
    $region23: #{tpu_custom_call.1} parent=1 // pred_check_branch
      %65 = sbr.rel (0) target = $region25
    $region24: #{tpu_custom_call.1} parent=1 // pred_region
      %s67 = ssub.s32 4096, 4096
      %68 = vsyncadd [#allocation9], %s67
      %s69 = sshll.u32 [#allocation8], 4
      %s70 = int_to_ptr.vmem [resolvable:$true] %s69
      %75 = dma.hbm_to_vmem [thread:$0]  %s5, 4096, %s70, [#allocation9], 256, 256, 16
    $region25: #{tpu_custom_call.1} parent=1 // pred_fallthru
      _
    // Predicated region
    $region26: #{tpu_custom_call.1} parent=1 // pred_check
      _
    $region27: #{tpu_custom_call.1} parent=1 // pred_check_branch
      %77 = sbr.rel (0) target = $region29
    $region28: #{tpu_custom_call.1} parent=1 // pred_region
      %s79 = ssub.s32 64, 64
      %80 = vsyncadd [#allocation9], %s79
      %s82 = sshll.u32 [#allocation10], 4
      %s83 = int_to_ptr.vmem [resolvable:$true] %s82
      %85 = dma.hbm_to_vmem [thread:$0]  %s6, 64, %s83, [#allocation9]
    $region29: #{tpu_custom_call.1} parent=1 // pred_fallthru
      _
    // Predicated region
    $region30: #{tpu_custom_call.1} parent=1 // pred_check
      _
    $region31: #{tpu_custom_call.1} parent=1 // pred_check_branch
      %87 = sbr.rel (0) target = $region33
    $region32: #{tpu_custom_call.1} parent=1 // pred_region
      %s89 = ssub.s32 4096, 4096
      %90 = vsyncadd [#allocation12], %s89
      %s91 = sshll.u32 [#allocation11], 4
      %s92 = int_to_ptr.vmem [resolvable:$true] %s91
      %97 = dma.hbm_to_vmem [thread:$0]  %s7, 4096, %s92, [#allocation12], 256, 256, 16
    $region33: #{tpu_custom_call.1} parent=1 // pred_fallthru
      _
    // Predicated region
    $region34: #{tpu_custom_call.1} parent=1 // pred_check
      _
    $region35: #{tpu_custom_call.1} parent=1 // pred_check_branch
      %99 = sbr.rel (0) target = $region37
    $region36: #{tpu_custom_call.1} parent=1 // pred_region
      %s101 = ssub.s32 4096, 4096
      %102 = vsyncadd [#allocation12], %s101
      %s103 = sshll.u32 [#allocation13], 4
      %s104 = int_to_ptr.vmem [resolvable:$true] %s103
      %109 = dma.hbm_to_vmem [thread:$0]  %s8, 4096, %s104, [#allocation12], 256, 256, 16
    $region37: #{tpu_custom_call.1} parent=1 // pred_fallthru
      _
    // Predicated region
    $region38: #{tpu_custom_call.1} parent=1 // pred_check
      _
    $region39: #{tpu_custom_call.1} parent=1 // pred_check_branch
      %111 = sbr.rel (0) target = $region41
    $region40: #{tpu_custom_call.1} parent=1 // pred_region
      %s113 = ssub.s32 64, 64
      %114 = vsyncadd [#allocation15], %s113
      %s116 = sshll.u32 [#allocation14], 4
      %s117 = int_to_ptr.vmem [resolvable:$true] %s116
      %119 = dma.hbm_to_vmem [thread:$0]  %s9, 64, %s117, [#allocation15]
    $region41: #{tpu_custom_call.1} parent=1 // pred_fallthru
      _
    // Predicated region
    $region42: #{tpu_custom_call.1} parent=1 // pred_check
      _
    $region43: #{tpu_custom_call.1} parent=1 // pred_check_branch
      %121 = sbr.rel (0) target = $region45
    $region44: #{tpu_custom_call.1} parent=1 // pred_region
      %s123 = ssub.s32 14336, 14336
      %124 = vsyncadd [#allocation15], %s123
      %s125 = sshll.u32 [#allocation16], 4
      %s126 = int_to_ptr.vmem [resolvable:$true] %s125
      %131 = dma.hbm_to_vmem [thread:$0]  %s10, 14336, %s126, [#allocation15], 128, 128, 8
    $region45: #{tpu_custom_call.1} parent=1 // pred_fallthru
      _
    // Predicated region
    $region46: #{tpu_custom_call.1} parent=1 // pred_check
      _
    $region47: #{tpu_custom_call.1} parent=1 // pred_check_branch
      %133 = sbr.rel (0) target = $region49
    $region48: #{tpu_custom_call.1} parent=1 // pred_region
      %s135 = ssub.s32 32, 32
      %136 = vsyncadd [#allocation18], %s135
      %s138 = sshll.u32 [#allocation17], 4
      %s139 = int_to_ptr.vmem [resolvable:$true] %s138
      %141 = dma.hbm_to_vmem [thread:$0]  %s11, 32, %s139, [#allocation18]
    $region49: #{tpu_custom_call.1} parent=1 // pred_fallthru
      _
    // Predicated region
    $region50: #{tpu_custom_call.1} parent=1 // pred_check
      _
    $region51: #{tpu_custom_call.1} parent=1 // pred_check_branch
      %143 = sbr.rel (0) target = $region53
    $region52: #{tpu_custom_call.1} parent=1 // pred_region
      _
    $region53: #{tpu_custom_call.1} parent=1 // pred_fallthru
      _
    // Predicated region
    $region54: #{tpu_custom_call.1} parent=1 // pred_check
      _
    $region55: #{tpu_custom_call.1} parent=1 // pred_check_branch
      %145 = sbr.rel (0) target = $region57
    $region56: #{tpu_custom_call.1} parent=1 // pred_region
      _
    $region57: #{tpu_custom_call.1} parent=1 // pred_fallthru
      _
    // Predicated region
    $region58: #{tpu_custom_call.1} parent=1 // pred_check
      _
    $region59: #{tpu_custom_call.1} parent=1 // pred_check_branch
      %147 = sbr.rel (0) target = $region61
    $region60: #{tpu_custom_call.1} parent=1 // pred_region
      %148 = dma.done [#allocation3], 128
    $region61: #{tpu_custom_call.1} parent=1 // pred_fallthru
      _
    // Predicated region
    $region62: #{tpu_custom_call.1} parent=1 // pred_check
      _
    $region63: #{tpu_custom_call.1} parent=1 // pred_check_branch
      %150 = sbr.rel (0) target = $region65
    $region64: #{tpu_custom_call.1} parent=1 // pred_region
      %151 = dma.done [#allocation6], 4096
    $region65: #{tpu_custom_call.1} parent=1 // pred_fallthru
      _
    // Predicated region
    $region66: #{tpu_custom_call.1} parent=1 // pred_check
      _
    $region67: #{tpu_custom_call.1} parent=1 // pred_check_branch
      %153 = sbr.rel (0) target = $region69
    $region68: #{tpu_custom_call.1} parent=1 // pred_region
      %154 = dma.done [#allocation6], 4096
    $region69: #{tpu_custom_call.1} parent=1 // pred_fallthru
      _
    // Predicated region
    $region70: #{tpu_custom_call.1} parent=1 // pred_check
      _
    $region71: #{tpu_custom_call.1} parent=1 // pred_check_branch
      %156 = sbr.rel (0) target = $region73
    $region72: #{tpu_custom_call.1} parent=1 // pred_region
      %157 = dma.done [#allocation9], 4096
    $region73: #{tpu_custom_call.1} parent=1 // pred_fallthru
      _
    // Predicated region
    $region74: #{tpu_custom_call.1} parent=1 // pred_check
      _
    $region75: #{tpu_custom_call.1} parent=1 // pred_check_branch
      %159 = sbr.rel (0) target = $region77
    $region76: #{tpu_custom_call.1} parent=1 // pred_region
      %160 = dma.done [#allocation9], 64
    $region77: #{tpu_custom_call.1} parent=1 // pred_fallthru
      _
    // Predicated region
    $region78: #{tpu_custom_call.1} parent=1 // pred_check
      _
    $region79: #{tpu_custom_call.1} parent=1 // pred_check_branch
      %162 = sbr.rel (0) target = $region81
    $region80: #{tpu_custom_call.1} parent=1 // pred_region
      %163 = dma.done [#allocation12], 4096
    $region81: #{tpu_custom_call.1} parent=1 // pred_fallthru
      _
    // Predicated region
    $region82: #{tpu_custom_call.1} parent=1 // pred_check
      _
    $region83: #{tpu_custom_call.1} parent=1 // pred_check_branch
      %165 = sbr.rel (0) target = $region85
    $region84: #{tpu_custom_call.1} parent=1 // pred_region
      %166 = dma.done [#allocation12], 4096
    $region85: #{tpu_custom_call.1} parent=1 // pred_fallthru
      _
    // Predicated region
    $region86: #{tpu_custom_call.1} parent=1 // pred_check
      _
    $region87: #{tpu_custom_call.1} parent=1 // pred_check_branch
      %168 = sbr.rel (0) target = $region89
    $region88: #{tpu_custom_call.1} parent=1 // pred_region
      %169 = dma.done [#allocation15], 64
    $region89: #{tpu_custom_call.1} parent=1 // pred_fallthru
      _
    // Predicated region
    $region90: #{tpu_custom_call.1} parent=1 // pred_check
      _
    $region91: #{tpu_custom_call.1} parent=1 // pred_check_branch
      %171 = sbr.rel (0) target = $region93
    $region92: #{tpu_custom_call.1} parent=1 // pred_region
      %172 = dma.done [#allocation15], 14336
    $region93: #{tpu_custom_call.1} parent=1 // pred_fallthru
      _
    // Predicated region
    $region94: #{tpu_custom_call.1} parent=1 // pred_check
      _
    $region95: #{tpu_custom_call.1} parent=1 // pred_check_branch
      %174 = sbr.rel (0) target = $region97
    $region96: #{tpu_custom_call.1} parent=1 // pred_region
      %175 = dma.done [#allocation18], 32
    $region97: #{tpu_custom_call.1} parent=1 // pred_fallthru
      _
    %v177 = vld [vmem:[%s0] sm:$0x7f]
    %v178 = vld [vmem:[%s0 + $0x8] sm:$0x7f]
    %v179 = vld [vmem:[%s0 + $0x10] sm:$0x7f]
    %v180 = vld [vmem:[%s0 + $0x18] sm:$0x7f]
    %v181 = vld [vmem:[%s0 + $0x20] sm:$0x7f]
    %v182 = vld [vmem:[%s0 + $0x28] sm:$0x7f]
    %v183 = vld [vmem:[%s0 + $0x30] sm:$0x7f]
    %v184 = vld [vmem:[%s0 + $0x38] sm:$0x7f]
    %v185 = vpack.c.bf16 %v177, %v177
    %v186 = vpack.c.bf16 %v178, %v178
    %v187 = vpack.c.bf16 %v179, %v179
    %v188 = vpack.c.bf16 %v180, %v180
    %v189 = vpack.c.bf16 %v181, %v181
    %v190 = vpack.c.bf16 %v182, %v182
    %v191 = vpack.c.bf16 %v183, %v183
    %v192 = vpack.c.bf16 %v184, %v184
    %v193 = vld [vmem:[#allocation2] sm:$0xff]
    %v194 = vld [vmem:[#allocation5] sm:$0xff]
    %v195 = vld [vmem:[#allocation5 + $0x8] sm:$0xff]
    %v196 = vld [vmem:[#allocation5 + $0x10] sm:$0xff]
    %v197 = vld [vmem:[#allocation5 + $0x18] sm:$0xff]
    %v198 = vld [vmem:[#allocation5 + $0x20] sm:$0xff]
    %v199 = vld [vmem:[#allocation5 + $0x28] sm:$0xff]
    %v200 = vld [vmem:[#allocation5 + $0x30] sm:$0xff]
    %v201 = vld [vmem:[#allocation5 + $0x38] sm:$0xff]
    %v202 = vld [vmem:[#allocation5 + $0x40] sm:$0xff]
    %v203 = vld [vmem:[#allocation5 + $0x48] sm:$0xff]
    %v204 = vld [vmem:[#allocation5 + $0x50] sm:$0xff]
    %v205 = vld [vmem:[#allocation5 + $0x58] sm:$0xff]
    %v206 = vld [vmem:[#allocation5 + $0x60] sm:$0xff]
    %v207 = vld [vmem:[#allocation5 + $0x68] sm:$0xff]
    %v208 = vld [vmem:[#allocation5 + $0x70] sm:$0xff]
    %v209 = vld [vmem:[#allocation5 + $0x78] sm:$0xff]
    %v210 = vld [vmem:[#allocation5 + $0x80] sm:$0xff]
    %v211 = vld [vmem:[#allocation5 + $0x88] sm:$0xff]
    %v212 = vld [vmem:[#allocation5 + $0x90] sm:$0xff]
    %v213 = vld [vmem:[#allocation5 + $0x98] sm:$0xff]
    %v214 = vld [vmem:[#allocation5 + $0xa0] sm:$0xff]
    %v215 = vld [vmem:[#allocation5 + $0xa8] sm:$0xff]
    %v216 = vld [vmem:[#allocation5 + $0xb0] sm:$0xff]
    %v217 = vld [vmem:[#allocation5 + $0xb8] sm:$0xff]
    %v218 = vld [vmem:[#allocation5 + $0xc0] sm:$0xff]
    %v219 = vld [vmem:[#allocation5 + $0xc8] sm:$0xff]
    %v220 = vld [vmem:[#allocation5 + $0xd0] sm:$0xff]
    %v221 = vld [vmem:[#allocation5 + $0xd8] sm:$0xff]
    %v222 = vld [vmem:[#allocation5 + $0xe0] sm:$0xff]
    %v223 = vld [vmem:[#allocation5 + $0xe8] sm:$0xff]
    %v224 = vld [vmem:[#allocation5 + $0xf0] sm:$0xff]
    %v225 = vld [vmem:[#allocation5 + $0xf8] sm:$0xff]
    %v226 = vld [vmem:[%s3] sm:$0xf]
    %v228 = vlaneseq
    %v229 = vshrl.u32 %v228, 7
    %v230 = vsub.s32 0, %v229
    %v231 = vrot.slane %v226, %v230
    %v232 = vlaneseq
    %v233 = vshrl.u32 %v232, 7
    %v234 = vsub.s32 1, %v233
    %v235 = vrot.slane %v226, %v234
    %v236 = vlaneseq
    %v237 = vshrl.u32 %v236, 7
    %v238 = vsub.s32 2, %v237
    %v239 = vrot.slane %v226, %v238
    %v240 = vlaneseq
    %v241 = vshrl.u32 %v240, 7
    %v242 = vsub.s32 3, %v241
    %v243 = vrot.slane %v226, %v242
    %v256 = vunpack.c.l.b16 %v185
    %v257 = vunpack.c.l.b16 %v186
    %v258 = vunpack.c.l.b16 %v187
    %v259 = vunpack.c.l.b16 %v188
    %v260 = vunpack.c.l.b16 %v189
    %v261 = vunpack.c.l.b16 %v190
    %v262 = vunpack.c.l.b16 %v191
    %v263 = vunpack.c.l.b16 %v192
    %v264 = vrot.slane %v257, 7
    %vm265 = vcmask 1041409
    %v266 = vsel %vm265, %v264, %v256
    %v267 = vrot.slane %v258, 6
    %vm268 = vcmask 1042434
    %v269 = vsel %vm268, %v267, %v266
    %v270 = vrot.slane %v259, 5
    %vm271 = vcmask 1043459
    %v272 = vsel %vm271, %v270, %v269
    %v273 = vrot.slane %v260, 4
    %vm274 = vcmask 1044484
    %v275 = vsel %vm274, %v273, %v272
    %v276 = vrot.slane %v261, 3
    %vm277 = vcmask 1045509
    %v278 = vsel %vm277, %v276, %v275
    %v279 = vrot.slane %v262, 2
    %vm280 = vcmask 1046534
    %v281 = vsel %vm280, %v279, %v278
    %v282 = vrot.slane %v263, 1
    %vm283 = vcmask 1047559
    %v284 = vsel %vm283, %v282, %v281
    %v285 = vpack.c.b16 %v284, %v284
    %v287 = vcombine.high %v193, %v193
    %v289 = vunpack.c.l.s4 1983009808
    %v290 = vunpack.c.0.s8 %v289
    %v291 = vlaneseq
    %v292 = vshrl.u32 %v291, 7
    %v293 = vsub.s32 %v290, %v292
    %v294 = vrot.slane %v193, %v293
    %v296 = vunpack.c.l.s4 1983009808
    %v297 = vunpack.c.0.s8 %v296
    %v298 = vlaneseq
    %v299 = vshrl.u32 %v298, 7
    %v300 = vsub.s32 %v297, %v299
    %v301 = vrot.slane %v287, %v300
    %v302 = vcombine.high %v294, %v294
    %v303 = vcombine.high %v301, %v301
    %vm304 = vcmask 23552
    %v306 = vsel %vm304, %v285, 0
    %vm308 = vcmask 1040384
    %vm309 = vcmask 1041408
    %v310 = vsel %vm308, 4294967295, 65535
    %v311 = vsel %vm309, %v310, 0
    %v313 = vand.u32 %v294, %v311
    %v316 = vand.u32 %v302, %v311
    %v319 = vand.u32 %v301, %v311
    %v322 = vand.u32 %v303, %v311
    %324 = vmatprep.subr.bf16.mxu0 %v316
    %325 = vmatpush1.bf16.msra.mxu0 %v313
    %326 = vmatprep.subr.bf16.mxu0 0
    %327 = vmatpush1.bf16.msra.mxu0 0
    %328 = vmatprep.subr.bf16.mxu0 0
    %329 = vmatpush1.bf16.msra.mxu0 0
    %330 = vmatprep.subr.bf16.mxu0 0
    %331 = vmatpush1.bf16.msra.mxu0 0
    %332 = vmatprep.subr.bf16.mxu0 0
    %333 = vmatpush1.bf16.msra.mxu0 0
    %334 = vmatprep.subr.bf16.mxu0 0
    %335 = vmatpush1.bf16.msra.mxu0 0
    %336 = vmatprep.subr.bf16.mxu0 0
    %337 = vmatpush1.bf16.msra.mxu0 0
    %338 = vmatprep.subr.bf16.mxu0 0
    %339 = vmatpush1.bf16.msra.mxu0 0
    %340 = vmatprep.subr.bf16.mxu0 0
    %341 = vmatpush1.bf16.msra.mxu0 0
    %342 = vmatprep.subr.bf16.mxu0 0
    %343 = vmatpush1.bf16.msra.mxu0 0
    %344 = vmatprep.subr.bf16.mxu0 0
    %345 = vmatpush1.bf16.msra.mxu0 0
    %346 = vmatprep.subr.bf16.mxu0 0
    %347 = vmatpush1.bf16.msra.mxu0 0
    %348 = vmatprep.subr.bf16.mxu0 0
    %349 = vmatpush1.bf16.msra.mxu0 0
    %350 = vmatprep.subr.bf16.mxu0 0
    %351 = vmatpush1.bf16.msra.mxu0 0
    %352 = vmatprep.subr.bf16.mxu0 0
    %353 = vmatpush1.bf16.msra.mxu0 0
    %354 = vmatprep.subr.bf16.mxu0 0
    %355 = vmatpush1.bf16.msra.mxu0 0
    %356 = vmatprep.mubr.bf16.mxu0 0
    %357 = vmatmul.mubr.bf16.gmra.mrb[0].mxu0 %v306
    %v358 = vpop.f32.mrb[0].mxu0
    %v359 = vadd.f32 %v231, %v358
    %v360 = vpop.f32.mrb[0].mxu0
    %v361 = vadd.f32 %v235, %v360
    %v362 = vpop.f32.mrb[0].mxu0
    %v363 = vpop.f32.mrb[0].mxu0
    %364 = vdwg.mxu0
    %365 = vmatprep.subr.bf16.mxu0 %v322
    %366 = vmatpush1.bf16.msra.mxu0 %v319
    %367 = vmatprep.subr.bf16.mxu0 0
    %368 = vmatpush1.bf16.msra.mxu0 0
    %369 = vmatprep.subr.bf16.mxu0 0
    %370 = vmatpush1.bf16.msra.mxu0 0
    %371 = vmatprep.subr.bf16.mxu0 0
    %372 = vmatpush1.bf16.msra.mxu0 0
    %373 = vmatprep.subr.bf16.mxu0 0
    %374 = vmatpush1.bf16.msra.mxu0 0
    %375 = vmatprep.subr.bf16.mxu0 0
    %376 = vmatpush1.bf16.msra.mxu0 0
    %377 = vmatprep.subr.bf16.mxu0 0
    %378 = vmatpush1.bf16.msra.mxu0 0
    %379 = vmatprep.subr.bf16.mxu0 0
    %380 = vmatpush1.bf16.msra.mxu0 0
    %381 = vmatprep.subr.bf16.mxu0 0
    %382 = vmatpush1.bf16.msra.mxu0 0
    %383 = vmatprep.subr.bf16.mxu0 0
    %384 = vmatpush1.bf16.msra.mxu0 0
    %385 = vmatprep.subr.bf16.mxu0 0
    %386 = vmatpush1.bf16.msra.mxu0 0
    %387 = vmatprep.subr.bf16.mxu0 0
    %388 = vmatpush1.bf16.msra.mxu0 0
    %389 = vmatprep.subr.bf16.mxu0 0
    %390 = vmatpush1.bf16.msra.mxu0 0
    %391 = vmatprep.subr.bf16.mxu0 0
    %392 = vmatpush1.bf16.msra.mxu0 0
    %393 = vmatprep.subr.bf16.mxu0 0
    %394 = vmatpush1.bf16.msra.mxu0 0
    %395 = vmatprep.subr.bf16.mxu0 0
    %396 = vmatpush1.bf16.msra.mxu0 0
    %397 = vmatprep.mubr.bf16.mxu0 0
    %398 = vmatmul.mubr.bf16.gmra.mrb[0].mxu0 %v306
    %v399 = vpop.f32.mrb[0].mxu0
    %v400 = vadd.f32 %v239, %v399
    %v401 = vpop.f32.mrb[0].mxu0
    %v402 = vadd.f32 %v243, %v401
    %v403 = vpop.f32.mrb[0].mxu0
    %v404 = vpop.f32.mrb[0].mxu0
    %405 = vdwg.mxu0
    %v406 = vrot.slane %v256, 1
    %v407 = vsel %vm265, %v257, %v406
    %v408 = vrot.slane %v258, 7
    %v409 = vsel %vm268, %v408, %v407
    %v410 = vrot.slane %v259, 6
    %v411 = vsel %vm271, %v410, %v409
    %v412 = vrot.slane %v260, 5
    %v413 = vsel %vm274, %v412, %v411
    %v414 = vrot.slane %v261, 4
    %v415 = vsel %vm277, %v414, %v413
    %v416 = vrot.slane %v262, 3
    %v417 = vsel %vm280, %v416, %v415
    %v418 = vrot.slane %v263, 2
    %v419 = vsel %vm283, %v418, %v417
    %v420 = vpack.c.b16 %v419, %v419
    %v422 = vsel %vm304, %v420, 0
    %424 = vmatprep.subr.bf16.mxu0 %v316
    %425 = vmatpush1.bf16.msra.mxu0 %v313
    %426 = vmatprep.subr.bf16.mxu0 0
    %427 = vmatpush1.bf16.msra.mxu0 0
    %428 = vmatprep.subr.bf16.mxu0 0
    %429 = vmatpush1.bf16.msra.mxu0 0
    %430 = vmatprep.subr.bf16.mxu0 0
    %431 = vmatpush1.bf16.msra.mxu0 0
    %432 = vmatprep.subr.bf16.mxu0 0
    %433 = vmatpush1.bf16.msra.mxu0 0
    %434 = vmatprep.subr.bf16.mxu0 0
    %435 = vmatpush1.bf16.msra.mxu0 0
    %436 = vmatprep.subr.bf16.mxu0 0
    %437 = vmatpush1.bf16.msra.mxu0 0
    %438 = vmatprep.subr.bf16.mxu0 0
    %439 = vmatpush1.bf16.msra.mxu0 0
    %440 = vmatprep.subr.bf16.mxu0 0
    %441 = vmatpush1.bf16.msra.mxu0 0
    %442 = vmatprep.subr.bf16.mxu0 0
    %443 = vmatpush1.bf16.msra.mxu0 0
    %444 = vmatprep.subr.bf16.mxu0 0
    %445 = vmatpush1.bf16.msra.mxu0 0
    %446 = vmatprep.subr.bf16.mxu0 0
    %447 = vmatpush1.bf16.msra.mxu0 0
    %448 = vmatprep.subr.bf16.mxu0 0
    %449 = vmatpush1.bf16.msra.mxu0 0
    %450 = vmatprep.subr.bf16.mxu0 0
    %451 = vmatpush1.bf16.msra.mxu0 0
    %452 = vmatprep.subr.bf16.mxu0 0
    %453 = vmatpush1.bf16.msra.mxu0 0
    %454 = vmatprep.subr.bf16.mxu0 0
    %455 = vmatpush1.bf16.msra.mxu0 0
    %456 = vmatprep.mubr.bf16.mxu0 0
    %457 = vmatmul.mubr.bf16.gmra.mrb[0].mxu0 %v422
    %v458 = vpop.f32.mrb[0].mxu0
    %v459 = vadd.f32 %v231, %v458
    %v460 = vpop.f32.mrb[0].mxu0
    %v461 = vadd.f32 %v235, %v460
    %v462 = vpop.f32.mrb[0].mxu0
    %v463 = vpop.f32.mrb[0].mxu0
    %464 = vdwg.mxu0
    %465 = vmatprep.subr.bf16.mxu0 %v322
    %466 = vmatpush1.bf16.msra.mxu0 %v319
    %467 = vmatprep.subr.bf16.mxu0 0
    %468 = vmatpush1.bf16.msra.mxu0 0
    %469 = vmatprep.subr.bf16.mxu0 0
    %470 = vmatpush1.bf16.msra.mxu0 0
    %471 = vmatprep.subr.bf16.mxu0 0
    %472 = vmatpush1.bf16.msra.mxu0 0
    %473 = vmatprep.subr.bf16.mxu0 0
    %474 = vmatpush1.bf16.msra.mxu0 0
    %475 = vmatprep.subr.bf16.mxu0 0
    %476 = vmatpush1.bf16.msra.mxu0 0
    %477 = vmatprep.subr.bf16.mxu0 0
    %478 = vmatpush1.bf16.msra.mxu0 0
    %479 = vmatprep.subr.bf16.mxu0 0
    %480 = vmatpush1.bf16.msra.mxu0 0
    %481 = vmatprep.subr.bf16.mxu0 0
    %482 = vmatpush1.bf16.msra.mxu0 0
    %483 = vmatprep.subr.bf16.mxu0 0
    %484 = vmatpush1.bf16.msra.mxu0 0
    %485 = vmatprep.subr.bf16.mxu0 0
    %486 = vmatpush1.bf16.msra.mxu0 0
    %487 = vmatprep.subr.bf16.mxu0 0
    %488 = vmatpush1.bf16.msra.mxu0 0
    %489 = vmatprep.subr.bf16.mxu0 0
    %490 = vmatpush1.bf16.msra.mxu0 0
    %491 = vmatprep.subr.bf16.mxu0 0
    %492 = vmatpush1.bf16.msra.mxu0 0
    %493 = vmatprep.subr.bf16.mxu0 0
    %494 = vmatpush1.bf16.msra.mxu0 0
    %495 = vmatprep.subr.bf16.mxu0 0
    %496 = vmatpush1.bf16.msra.mxu0 0
    %497 = vmatprep.mubr.bf16.mxu0 0
    %498 = vmatmul.mubr.bf16.gmra.mrb[0].mxu0 %v422
    %v499 = vpop.f32.mrb[0].mxu0
    %v500 = vadd.f32 %v239, %v499
    %v501 = vpop.f32.mrb[0].mxu0
    %v502 = vadd.f32 %v243, %v501
    %v503 = vpop.f32.mrb[0].mxu0
    %v504 = vpop.f32.mrb[0].mxu0
    %505 = vdwg.mxu0
    %v506 = vrot.slane %v256, 2
    %v507 = vrot.slane %v257, 1
    %v508 = vsel %vm265, %v507, %v506
    %v509 = vsel %vm268, %v258, %v508
    %v510 = vrot.slane %v259, 7
    %v511 = vsel %vm271, %v510, %v509
    %v512 = vrot.slane %v260, 6
    %v513 = vsel %vm274, %v512, %v511
    %v514 = vrot.slane %v261, 5
    %v515 = vsel %vm277, %v514, %v513
    %v516 = vrot.slane %v262, 4
    %v517 = vsel %vm280, %v516, %v515
    %v518 = vrot.slane %v263, 3
    %v519 = vsel %vm283, %v518, %v517
    %v520 = vpack.c.b16 %v519, %v519
    %v522 = vsel %vm304, %v520, 0
    %524 = vmatprep.subr.bf16.mxu0 %v316
    %525 = vmatpush1.bf16.msra.mxu0 %v313
    %526 = vmatprep.subr.bf16.mxu0 0
    %527 = vmatpush1.bf16.msra.mxu0 0
    %528 = vmatprep.subr.bf16.mxu0 0
    %529 = vmatpush1.bf16.msra.mxu0 0
    %530 = vmatprep.subr.bf16.mxu0 0
    %531 = vmatpush1.bf16.msra.mxu0 0
    %532 = vmatprep.subr.bf16.mxu0 0
    %533 = vmatpush1.bf16.msra.mxu0 0
    %534 = vmatprep.subr.bf16.mxu0 0
    %535 = vmatpush1.bf16.msra.mxu0 0
    %536 = vmatprep.subr.bf16.mxu0 0
    %537 = vmatpush1.bf16.msra.mxu0 0
    %538 = vmatprep.subr.bf16.mxu0 0
    %539 = vmatpush1.bf16.msra.mxu0 0
    %540 = vmatprep.subr.bf16.mxu0 0
    %541 = vmatpush1.bf16.msra.mxu0 0
    %542 = vmatprep.subr.bf16.mxu0 0
    %543 = vmatpush1.bf16.msra.mxu0 0
    %544 = vmatprep.subr.bf16.mxu0 0
    %545 = vmatpush1.bf16.msra.mxu0 0
    %546 = vmatprep.subr.bf16.mxu0 0
    %547 = vmatpush1.bf16.msra.mxu0 0
    %548 = vmatprep.subr.bf16.mxu0 0
    %549 = vmatpush1.bf16.msra.mxu0 0
    %550 = vmatprep.subr.bf16.mxu0 0
    %551 = vmatpush1.bf16.msra.mxu0 0
    %552 = vmatprep.subr.bf16.mxu0 0
    %553 = vmatpush1.bf16.msra.mxu0 0
    %554 = vmatprep.subr.bf16.mxu0 0
    %555 = vmatpush1.bf16.msra.mxu0 0
    %556 = vmatprep.mubr.bf16.mxu0 0
    %557 = vmatmul.mubr.bf16.gmra.mrb[0].mxu0 %v522
    %v558 = vpop.f32.mrb[0].mxu0
    %v559 = vadd.f32 %v231, %v558
    %v560 = vpop.f32.mrb[0].mxu0
    %v561 = vadd.f32 %v235, %v560
    %v562 = vpop.f32.mrb[0].mxu0
    %v563 = vpop.f32.mrb[0].mxu0
    %564 = vdwg.mxu0
    %565 = vmatprep.subr.bf16.mxu0 %v322
    %566 = vmatpush1.bf16.msra.mxu0 %v319
    %567 = vmatprep.subr.bf16.mxu0 0
    %568 = vmatpush1.bf16.msra.mxu0 0
    %569 = vmatprep.subr.bf16.mxu0 0
    %570 = vmatpush1.bf16.msra.mxu0 0
    %571 = vmatprep.subr.bf16.mxu0 0
    %572 = vmatpush1.bf16.msra.mxu0 0
    %573 = vmatprep.subr.bf16.mxu0 0
    %574 = vmatpush1.bf16.msra.mxu0 0
    %575 = vmatprep.subr.bf16.mxu0 0
    %576 = vmatpush1.bf16.msra.mxu0 0
    %577 = vmatprep.subr.bf16.mxu0 0
    %578 = vmatpush1.bf16.msra.mxu0 0
    %579 = vmatprep.subr.bf16.mxu0 0
    %580 = vmatpush1.bf16.msra.mxu0 0
    %581 = vmatprep.subr.bf16.mxu0 0
    %582 = vmatpush1.bf16.msra.mxu0 0
    %583 = vmatprep.subr.bf16.mxu0 0
    %584 = vmatpush1.bf16.msra.mxu0 0
    %585 = vmatprep.subr.bf16.mxu0 0
    %586 = vmatpush1.bf16.msra.mxu0 0
    %587 = vmatprep.subr.bf16.mxu0 0
    %588 = vmatpush1.bf16.msra.mxu0 0
    %589 = vmatprep.subr.bf16.mxu0 0
    %590 = vmatpush1.bf16.msra.mxu0 0
    %591 = vmatprep.subr.bf16.mxu0 0
    %592 = vmatpush1.bf16.msra.mxu0 0
    %593 = vmatprep.subr.bf16.mxu0 0
    %594 = vmatpush1.bf16.msra.mxu0 0
    %595 = vmatprep.subr.bf16.mxu0 0
    %596 = vmatpush1.bf16.msra.mxu0 0
    %597 = vmatprep.mubr.bf16.mxu0 0
    %598 = vmatmul.mubr.bf16.gmra.mrb[0].mxu0 %v522
    %v599 = vpop.f32.mrb[0].mxu0
    %v600 = vadd.f32 %v239, %v599
    %v601 = vpop.f32.mrb[0].mxu0
    %v602 = vadd.f32 %v243, %v601
    %v603 = vpop.f32.mrb[0].mxu0
    %v604 = vpop.f32.mrb[0].mxu0
    %605 = vdwg.mxu0
    %v606 = vrot.slane %v256, 3
    %v607 = vrot.slane %v257, 2
    %v608 = vsel %vm265, %v607, %v606
    %v609 = vrot.slane %v258, 1
    %v610 = vsel %vm268, %v609, %v608
    %v611 = vsel %vm271, %v259, %v610
    %v612 = vrot.slane %v260, 7
    %v613 = vsel %vm274, %v612, %v611
    %v614 = vrot.slane %v261, 6
    %v615 = vsel %vm277, %v614, %v613
    %v616 = vrot.slane %v262, 5
    %v617 = vsel %vm280, %v616, %v615
    %v618 = vrot.slane %v263, 4
    %v619 = vsel %vm283, %v618, %v617
    %v620 = vpack.c.b16 %v619, %v619
    %v622 = vsel %vm304, %v620, 0
    %624 = vmatprep.subr.bf16.mxu0 %v316
    %625 = vmatpush1.bf16.msra.mxu0 %v313
    %626 = vmatprep.subr.bf16.mxu0 0
    %627 = vmatpush1.bf16.msra.mxu0 0
    %628 = vmatprep.subr.bf16.mxu0 0
    %629 = vmatpush1.bf16.msra.mxu0 0
    %630 = vmatprep.subr.bf16.mxu0 0
    %631 = vmatpush1.bf16.msra.mxu0 0
    %632 = vmatprep.subr.bf16.mxu0 0
    %633 = vmatpush1.bf16.msra.mxu0 0
    %634 = vmatprep.subr.bf16.mxu0 0
    %635 = vmatpush1.bf16.msra.mxu0 0
    %636 = vmatprep.subr.bf16.mxu0 0
    %637 = vmatpush1.bf16.msra.mxu0 0
    %638 = vmatprep.subr.bf16.mxu0 0
    %639 = vmatpush1.bf16.msra.mxu0 0
    %640 = vmatprep.subr.bf16.mxu0 0
    %641 = vmatpush1.bf16.msra.mxu0 0
    %642 = vmatprep.subr.bf16.mxu0 0
    %643 = vmatpush1.bf16.msra.mxu0 0
    %644 = vmatprep.subr.bf16.mxu0 0
    %645 = vmatpush1.bf16.msra.mxu0 0
    %646 = vmatprep.subr.bf16.mxu0 0
    %647 = vmatpush1.bf16.msra.mxu0 0
    %648 = vmatprep.subr.bf16.mxu0 0
    %649 = vmatpush1.bf16.msra.mxu0 0
    %650 = vmatprep.subr.bf16.mxu0 0
    %651 = vmatpush1.bf16.msra.mxu0 0
    %652 = vmatprep.subr.bf16.mxu0 0
    %653 = vmatpush1.bf16.msra.mxu0 0
    %654 = vmatprep.subr.bf16.mxu0 0
    %655 = vmatpush1.bf16.msra.mxu0 0
    %656 = vmatprep.mubr.bf16.mxu0 0
    %657 = vmatmul.mubr.bf16.gmra.mrb[0].mxu0 %v622
    %v658 = vpop.f32.mrb[0].mxu0
    %v659 = vadd.f32 %v231, %v658
    %v660 = vpop.f32.mrb[0].mxu0
    %v661 = vadd.f32 %v235, %v660
    %v662 = vpop.f32.mrb[0].mxu0
    %v663 = vpop.f32.mrb[0].mxu0
    %664 = vdwg.mxu0
    %665 = vmatprep.subr.bf16.mxu0 %v322
    %666 = vmatpush1.bf16.msra.mxu0 %v319
    %667 = vmatprep.subr.bf16.mxu0 0
    %668 = vmatpush1.bf16.msra.mxu0 0
    %669 = vmatprep.subr.bf16.mxu0 0
    %670 = vmatpush1.bf16.msra.mxu0 0
    %671 = vmatprep.subr.bf16.mxu0 0
    %672 = vmatpush1.bf16.msra.mxu0 0
    %673 = vmatprep.subr.bf16.mxu0 0
    %674 = vmatpush1.bf16.msra.mxu0 0
    %675 = vmatprep.subr.bf16.mxu0 0
    %676 = vmatpush1.bf16.msra.mxu0 0
    %677 = vmatprep.subr.bf16.mxu0 0
    %678 = vmatpush1.bf16.msra.mxu0 0
    %679 = vmatprep.subr.bf16.mxu0 0
    %680 = vmatpush1.bf16.msra.mxu0 0
    %681 = vmatprep.subr.bf16.mxu0 0
    %682 = vmatpush1.bf16.msra.mxu0 0
    %683 = vmatprep.subr.bf16.mxu0 0
    %684 = vmatpush1.bf16.msra.mxu0 0
    %685 = vmatprep.subr.bf16.mxu0 0
    %686 = vmatpush1.bf16.msra.mxu0 0
    %687 = vmatprep.subr.bf16.mxu0 0
    %688 = vmatpush1.bf16.msra.mxu0 0
    %689 = vmatprep.subr.bf16.mxu0 0
    %690 = vmatpush1.bf16.msra.mxu0 0
    %691 = vmatprep.subr.bf16.mxu0 0
    %692 = vmatpush1.bf16.msra.mxu0 0
    %693 = vmatprep.subr.bf16.mxu0 0
    %694 = vmatpush1.bf16.msra.mxu0 0
    %695 = vmatprep.subr.bf16.mxu0 0
    %696 = vmatpush1.bf16.msra.mxu0 0
    %697 = vmatprep.mubr.bf16.mxu0 0
    %698 = vmatmul.mubr.bf16.gmra.mrb[0].mxu0 %v622
    %v699 = vpop.f32.mrb[0].mxu0
    %v700 = vadd.f32 %v239, %v699
    %v701 = vpop.f32.mrb[0].mxu0
    %v702 = vadd.f32 %v243, %v701
    %v703 = vpop.f32.mrb[0].mxu0
    %v704 = vpop.f32.mrb[0].mxu0
    %705 = vdwg.mxu0
    %v706 = vrot.slane %v256, 4
    %v707 = vrot.slane %v257, 3
    %v708 = vsel %vm265, %v707, %v706
    %v709 = vrot.slane %v258, 2
    %v710 = vsel %vm268, %v709, %v708
    %v711 = vrot.slane %v259, 1
    %v712 = vsel %vm271, %v711, %v710
    %v713 = vsel %vm274, %v260, %v712
    %v714 = vrot.slane %v261, 7
    %v715 = vsel %vm277, %v714, %v713
    %v716 = vrot.slane %v262, 6
    %v717 = vsel %vm280, %v716, %v715
    %v718 = vrot.slane %v263, 5
    %v719 = vsel %vm283, %v718, %v717
    %v720 = vpack.c.b16 %v719, %v719
    %v722 = vsel %vm304, %v720, 0
    %724 = vmatprep.subr.bf16.mxu0 %v316
    %725 = vmatpush1.bf16.msra.mxu0 %v313
    %726 = vmatprep.subr.bf16.mxu0 0
    %727 = vmatpush1.bf16.msra.mxu0 0
    %728 = vmatprep.subr.bf16.mxu0 0
    %729 = vmatpush1.bf16.msra.mxu0 0
    %730 = vmatprep.subr.bf16.mxu0 0
    %731 = vmatpush1.bf16.msra.mxu0 0
    %732 = vmatprep.subr.bf16.mxu0 0
    %733 = vmatpush1.bf16.msra.mxu0 0
    %734 = vmatprep.subr.bf16.mxu0 0
    %735 = vmatpush1.bf16.msra.mxu0 0
    %736 = vmatprep.subr.bf16.mxu0 0
    %737 = vmatpush1.bf16.msra.mxu0 0
    %738 = vmatprep.subr.bf16.mxu0 0
    %739 = vmatpush1.bf16.msra.mxu0 0
    %740 = vmatprep.subr.bf16.mxu0 0
    %741 = vmatpush1.bf16.msra.mxu0 0
    %742 = vmatprep.subr.bf16.mxu0 0
    %743 = vmatpush1.bf16.msra.mxu0 0
    %744 = vmatprep.subr.bf16.mxu0 0
    %745 = vmatpush1.bf16.msra.mxu0 0
    %746 = vmatprep.subr.bf16.mxu0 0
    %747 = vmatpush1.bf16.msra.mxu0 0
    %748 = vmatprep.subr.bf16.mxu0 0
    %749 = vmatpush1.bf16.msra.mxu0 0
    %750 = vmatprep.subr.bf16.mxu0 0
    %751 = vmatpush1.bf16.msra.mxu0 0
    %752 = vmatprep.subr.bf16.mxu0 0
    %753 = vmatpush1.bf16.msra.mxu0 0
    %754 = vmatprep.subr.bf16.mxu0 0
    %755 = vmatpush1.bf16.msra.mxu0 0
    %756 = vmatprep.mubr.bf16.mxu0 0
    %757 = vmatmul.mubr.bf16.gmra.mrb[0].mxu0 %v722
    %v758 = vpop.f32.mrb[0].mxu0
    %v759 = vadd.f32 %v231, %v758
    %v760 = vpop.f32.mrb[0].mxu0
    %v761 = vadd.f32 %v235, %v760
    %v762 = vpop.f32.mrb[0].mxu0
    %v763 = vpop.f32.mrb[0].mxu0
    %764 = vdwg.mxu0
    %765 = vmatprep.subr.bf16.mxu0 %v322
    %766 = vmatpush1.bf16.msra.mxu0 %v319
    %767 = vmatprep.subr.bf16.mxu0 0
    %768 = vmatpush1.bf16.msra.mxu0 0
    %769 = vmatprep.subr.bf16.mxu0 0
    %770 = vmatpush1.bf16.msra.mxu0 0
    %771 = vmatprep.subr.bf16.mxu0 0
    %772 = vmatpush1.bf16.msra.mxu0 0
    %773 = vmatprep.subr.bf16.mxu0 0
    %774 = vmatpush1.bf16.msra.mxu0 0
    %775 = vmatprep.subr.bf16.mxu0 0
    %776 = vmatpush1.bf16.msra.mxu0 0
    %777 = vmatprep.subr.bf16.mxu0 0
    %778 = vmatpush1.bf16.msra.mxu0 0
    %779 = vmatprep.subr.bf16.mxu0 0
    %780 = vmatpush1.bf16.msra.mxu0 0
    %781 = vmatprep.subr.bf16.mxu0 0
    %782 = vmatpush1.bf16.msra.mxu0 0
    %783 = vmatprep.subr.bf16.mxu0 0
    %784 = vmatpush1.bf16.msra.mxu0 0
    %785 = vmatprep.subr.bf16.mxu0 0
    %786 = vmatpush1.bf16.msra.mxu0 0
    %787 = vmatprep.subr.bf16.mxu0 0
    %788 = vmatpush1.bf16.msra.mxu0 0
    %789 = vmatprep.subr.bf16.mxu0 0
    %790 = vmatpush1.bf16.msra.mxu0 0
    %791 = vmatprep.subr.bf16.mxu0 0
    %792 = vmatpush1.bf16.msra.mxu0 0
    %793 = vmatprep.subr.bf16.mxu0 0
    %794 = vmatpush1.bf16.msra.mxu0 0
    %795 = vmatprep.subr.bf16.mxu0 0
    %796 = vmatpush1.bf16.msra.mxu0 0
    %797 = vmatprep.mubr.bf16.mxu0 0
    %798 = vmatmul.mubr.bf16.gmra.mrb[0].mxu0 %v722
    %v799 = vpop.f32.mrb[0].mxu0
    %v800 = vadd.f32 %v239, %v799
    %v801 = vpop.f32.mrb[0].mxu0
    %v802 = vadd.f32 %v243, %v801
    %v803 = vpop.f32.mrb[0].mxu0
    %v804 = vpop.f32.mrb[0].mxu0
    %805 = vdwg.mxu0
    %v806 = vrot.slane %v256, 5
    %v807 = vrot.slane %v257, 4
    %v808 = vsel %vm265, %v807, %v806
    %v809 = vrot.slane %v258, 3
    %v810 = vsel %vm268, %v809, %v808
    %v811 = vrot.slane %v259, 2
    %v812 = vsel %vm271, %v811, %v810
    %v813 = vrot.slane %v260, 1
    %v814 = vsel %vm274, %v813, %v812
    %v815 = vsel %vm277, %v261, %v814
    %v816 = vrot.slane %v262, 7
    %v817 = vsel %vm280, %v816, %v815
    %v818 = vrot.slane %v263, 6
    %v819 = vsel %vm283, %v818, %v817
    %v820 = vpack.c.b16 %v819, %v819
    %v822 = vsel %vm304, %v820, 0
    %824 = vmatprep.subr.bf16.mxu0 %v316
    %825 = vmatpush1.bf16.msra.mxu0 %v313
    %826 = vmatprep.subr.bf16.mxu0 0
    %827 = vmatpush1.bf16.msra.mxu0 0
    %828 = vmatprep.subr.bf16.mxu0 0
    %829 = vmatpush1.bf16.msra.mxu0 0
    %830 = vmatprep.subr.bf16.mxu0 0
    %831 = vmatpush1.bf16.msra.mxu0 0
    %832 = vmatprep.subr.bf16.mxu0 0
    %833 = vmatpush1.bf16.msra.mxu0 0
    %834 = vmatprep.subr.bf16.mxu0 0
    %835 = vmatpush1.bf16.msra.mxu0 0
    %836 = vmatprep.subr.bf16.mxu0 0
    %837 = vmatpush1.bf16.msra.mxu0 0
    %838 = vmatprep.subr.bf16.mxu0 0
    %839 = vmatpush1.bf16.msra.mxu0 0
    %840 = vmatprep.subr.bf16.mxu0 0
    %841 = vmatpush1.bf16.msra.mxu0 0
    %842 = vmatprep.subr.bf16.mxu0 0
    %843 = vmatpush1.bf16.msra.mxu0 0
    %844 = vmatprep.subr.bf16.mxu0 0
    %845 = vmatpush1.bf16.msra.mxu0 0
    %846 = vmatprep.subr.bf16.mxu0 0
    %847 = vmatpush1.bf16.msra.mxu0 0
    %848 = vmatprep.subr.bf16.mxu0 0
    %849 = vmatpush1.bf16.msra.mxu0 0
    %850 = vmatprep.subr.bf16.mxu0 0
    %851 = vmatpush1.bf16.msra.mxu0 0
    %852 = vmatprep.subr.bf16.mxu0 0
    %853 = vmatpush1.bf16.msra.mxu0 0
    %854 = vmatprep.subr.bf16.mxu0 0
    %855 = vmatpush1.bf16.msra.mxu0 0
    %856 = vmatprep.mubr.bf16.mxu0 0
    %857 = vmatmul.mubr.bf16.gmra.mrb[0].mxu0 %v822
    %v858 = vpop.f32.mrb[0].mxu0
    %v859 = vadd.f32 %v231, %v858
    %v860 = vpop.f32.mrb[0].mxu0
    %v861 = vadd.f32 %v235, %v860
    %v862 = vpop.f32.mrb[0].mxu0
    %v863 = vpop.f32.mrb[0].mxu0
    %864 = vdwg.mxu0
    %865 = vmatprep.subr.bf16.mxu0 %v322
    %866 = vmatpush1.bf16.msra.mxu0 %v319
    %867 = vmatprep.subr.bf16.mxu0 0
    %868 = vmatpush1.bf16.msra.mxu0 0
    %869 = vmatprep.subr.bf16.mxu0 0
    %870 = vmatpush1.bf16.msra.mxu0 0
    %871 = vmatprep.subr.bf16.mxu0 0
    %872 = vmatpush1.bf16.msra.mxu0 0
    %873 = vmatprep.subr.bf16.mxu0 0
    %874 = vmatpush1.bf16.msra.mxu0 0
    %875 = vmatprep.subr.bf16.mxu0 0
    %876 = vmatpush1.bf16.msra.mxu0 0
    %877 = vmatprep.subr.bf16.mxu0 0
    %878 = vmatpush1.bf16.msra.mxu0 0
    %879 = vmatprep.subr.bf16.mxu0 0
    %880 = vmatpush1.bf16.msra.mxu0 0
    %881 = vmatprep.subr.bf16.mxu0 0
    %882 = vmatpush1.bf16.msra.mxu0 0
    %883 = vmatprep.subr.bf16.mxu0 0
    %884 = vmatpush1.bf16.msra.mxu0 0
    %885 = vmatprep.subr.bf16.mxu0 0
    %886 = vmatpush1.bf16.msra.mxu0 0
    %887 = vmatprep.subr.bf16.mxu0 0
    %888 = vmatpush1.bf16.msra.mxu0 0
    %889 = vmatprep.subr.bf16.mxu0 0
    %890 = vmatpush1.bf16.msra.mxu0 0
    %891 = vmatprep.subr.bf16.mxu0 0
    %892 = vmatpush1.bf16.msra.mxu0 0
    %893 = vmatprep.subr.bf16.mxu0 0
    %894 = vmatpush1.bf16.msra.mxu0 0
    %895 = vmatprep.subr.bf16.mxu0 0
    %896 = vmatpush1.bf16.msra.mxu0 0
    %897 = vmatprep.mubr.bf16.mxu0 0
    %898 = vmatmul.mubr.bf16.gmra.mrb[0].mxu0 %v822
    %v899 = vpop.f32.mrb[0].mxu0
    %v900 = vadd.f32 %v239, %v899
    %v901 = vpop.f32.mrb[0].mxu0
    %v902 = vadd.f32 %v243, %v901
    %v903 = vpop.f32.mrb[0].mxu0
    %v904 = vpop.f32.mrb[0].mxu0
    %905 = vdwg.mxu0
    %v906 = vrot.slane %v256, 6
    %v907 = vrot.slane %v257, 5
    %v908 = vsel %vm265, %v907, %v906
    %v909 = vrot.slane %v258, 4
    %v910 = vsel %vm268, %v909, %v908
    %v911 = vrot.slane %v259, 3
    %v912 = vsel %vm271, %v911, %v910
    %v913 = vrot.slane %v260, 2
    %v914 = vsel %vm274, %v913, %v912
    %v915 = vrot.slane %v261, 1
    %v916 = vsel %vm277, %v915, %v914
    %v917 = vsel %vm280, %v262, %v916
    %v918 = vrot.slane %v263, 7
    %v919 = vsel %vm283, %v918, %v917
    %v920 = vpack.c.b16 %v919, %v919
    %v922 = vsel %vm304, %v920, 0
    %924 = vmatprep.subr.bf16.mxu0 %v316
    %925 = vmatpush1.bf16.msra.mxu0 %v313
    %926 = vmatprep.subr.bf16.mxu0 0
    %927 = vmatpush1.bf16.msra.mxu0 0
    %928 = vmatprep.subr.bf16.mxu0 0
    %929 = vmatpush1.bf16.msra.mxu0 0
    %930 = vmatprep.subr.bf16.mxu0 0
    %931 = vmatpush1.bf16.msra.mxu0 0
    %932 = vmatprep.subr.bf16.mxu0 0
    %933 = vmatpush1.bf16.msra.mxu0 0
    %934 = vmatprep.subr.bf16.mxu0 0
    %935 = vmatpush1.bf16.msra.mxu0 0
    %936 = vmatprep.subr.bf16.mxu0 0
    %937 = vmatpush1.bf16.msra.mxu0 0
    %938 = vmatprep.subr.bf16.mxu0 0
    %939 = vmatpush1.bf16.msra.mxu0 0
    %940 = vmatprep.subr.bf16.mxu0 0
    %941 = vmatpush1.bf16.msra.mxu0 0
    %942 = vmatprep.subr.bf16.mxu0 0
    %943 = vmatpush1.bf16.msra.mxu0 0
    %944 = vmatprep.subr.bf16.mxu0 0
    %945 = vmatpush1.bf16.msra.mxu0 0
    %946 = vmatprep.subr.bf16.mxu0 0
    %947 = vmatpush1.bf16.msra.mxu0 0
    %948 = vmatprep.subr.bf16.mxu0 0
    %949 = vmatpush1.bf16.msra.mxu0 0
    %950 = vmatprep.subr.bf16.mxu0 0
    %951 = vmatpush1.bf16.msra.mxu0 0
    %952 = vmatprep.subr.bf16.mxu0 0
    %953 = vmatpush1.bf16.msra.mxu0 0
    %954 = vmatprep.subr.bf16.mxu0 0
    %955 = vmatpush1.bf16.msra.mxu0 0
    %956 = vmatprep.mubr.bf16.mxu0 0
    %957 = vmatmul.mubr.bf16.gmra.mrb[0].mxu0 %v922
    %v958 = vpop.f32.mrb[0].mxu0
    %v959 = vadd.f32 %v231, %v958
    %v960 = vpop.f32.mrb[0].mxu0
    %v961 = vadd.f32 %v235, %v960
    %v962 = vpop.f32.mrb[0].mxu0
    %v963 = vpop.f32.mrb[0].mxu0
    %964 = vdwg.mxu0
    %965 = vmatprep.subr.bf16.mxu0 %v322
    %966 = vmatpush1.bf16.msra.mxu0 %v319
    %967 = vmatprep.subr.bf16.mxu0 0
    %968 = vmatpush1.bf16.msra.mxu0 0
    %969 = vmatprep.subr.bf16.mxu0 0
    %970 = vmatpush1.bf16.msra.mxu0 0
    %971 = vmatprep.subr.bf16.mxu0 0
    %972 = vmatpush1.bf16.msra.mxu0 0
    %973 = vmatprep.subr.bf16.mxu0 0
    %974 = vmatpush1.bf16.msra.mxu0 0
    %975 = vmatprep.subr.bf16.mxu0 0
    %976 = vmatpush1.bf16.msra.mxu0 0
    %977 = vmatprep.subr.bf16.mxu0 0
    %978 = vmatpush1.bf16.msra.mxu0 0
    %979 = vmatprep.subr.bf16.mxu0 0
    %980 = vmatpush1.bf16.msra.mxu0 0
    %981 = vmatprep.subr.bf16.mxu0 0
    %982 = vmatpush1.bf16.msra.mxu0 0
    %983 = vmatprep.subr.bf16.mxu0 0
    %984 = vmatpush1.bf16.msra.mxu0 0
    %985 = vmatprep.subr.bf16.mxu0 0
    %986 = vmatpush1.bf16.msra.mxu0 0
    %987 = vmatprep.subr.bf16.mxu0 0
    %988 = vmatpush1.bf16.msra.mxu0 0
    %989 = vmatprep.subr.bf16.mxu0 0
    %990 = vmatpush1.bf16.msra.mxu0 0
    %991 = vmatprep.subr.bf16.mxu0 0
    %992 = vmatpush1.bf16.msra.mxu0 0
    %993 = vmatprep.subr.bf16.mxu0 0
    %994 = vmatpush1.bf16.msra.mxu0 0
    %995 = vmatprep.subr.bf16.mxu0 0
    %996 = vmatpush1.bf16.msra.mxu0 0
    %997 = vmatprep.mubr.bf16.mxu0 0
    %998 = vmatmul.mubr.bf16.gmra.mrb[0].mxu0 %v922
    %v999 = vpop.f32.mrb[0].mxu0
    %v1000 = vadd.f32 %v239, %v999
    %v1001 = vpop.f32.mrb[0].mxu0
    %v1002 = vadd.f32 %v243, %v1001
    %v1003 = vpop.f32.mrb[0].mxu0
    %v1004 = vpop.f32.mrb[0].mxu0
    %1005 = vdwg.mxu0
    %v1038 = vunpack.c.l.b16 %v194
    %v1039 = vunpack.c.h.b16 %v194
    %v1040 = vunpack.c.l.b16 %v195
    %v1041 = vunpack.c.h.b16 %v195
    %v1042 = vunpack.c.l.b16 %v196
    %v1043 = vunpack.c.h.b16 %v196
    %v1044 = vunpack.c.l.b16 %v197
    %v1045 = vunpack.c.h.b16 %v197
    %v1046 = vunpack.c.l.b16 %v198
    %v1047 = vunpack.c.h.b16 %v198
    %v1048 = vunpack.c.l.b16 %v199
    %v1049 = vunpack.c.h.b16 %v199
    %v1050 = vunpack.c.l.b16 %v200
    %v1051 = vunpack.c.h.b16 %v200
    %v1052 = vunpack.c.l.b16 %v201
    %v1053 = vunpack.c.h.b16 %v201
    %v1054 = vunpack.c.l.b16 %v202
    %v1055 = vunpack.c.h.b16 %v202
    %v1056 = vunpack.c.l.b16 %v203
    %v1057 = vunpack.c.h.b16 %v203
    %v1058 = vunpack.c.l.b16 %v204
    %v1059 = vunpack.c.h.b16 %v204
    %v1060 = vunpack.c.l.b16 %v205
    %v1061 = vunpack.c.h.b16 %v205
    %v1062 = vunpack.c.l.b16 %v206
    %v1063 = vunpack.c.h.b16 %v206
    %v1064 = vunpack.c.l.b16 %v207
    %v1065 = vunpack.c.h.b16 %v207
    %v1066 = vunpack.c.l.b16 %v208
    %v1067 = vunpack.c.h.b16 %v208
    %v1068 = vunpack.c.l.b16 %v209
    %v1069 = vunpack.c.h.b16 %v209
    %v1070 = vunpack.c.l.b16 %v210
    %v1071 = vunpack.c.h.b16 %v210
    %v1072 = vunpack.c.l.b16 %v211
    %v1073 = vunpack.c.h.b16 %v211
    %v1074 = vunpack.c.l.b16 %v212
    %v1075 = vunpack.c.h.b16 %v212
    %v1076 = vunpack.c.l.b16 %v213
    %v1077 = vunpack.c.h.b16 %v213
    %v1078 = vunpack.c.l.b16 %v214
    %v1079 = vunpack.c.h.b16 %v214
    %v1080 = vunpack.c.l.b16 %v215
    %v1081 = vunpack.c.h.b16 %v215
    %v1082 = vunpack.c.l.b16 %v216
    %v1083 = vunpack.c.h.b16 %v216
    %v1084 = vunpack.c.l.b16 %v217
    %v1085 = vunpack.c.h.b16 %v217
    %v1086 = vunpack.c.l.b16 %v218
    %v1087 = vunpack.c.h.b16 %v218
    %v1088 = vunpack.c.l.b16 %v219
    %v1089 = vunpack.c.h.b16 %v219
    %v1090 = vunpack.c.l.b16 %v220
    %v1091 = vunpack.c.h.b16 %v220
    %v1092 = vunpack.c.l.b16 %v221
    %v1093 = vunpack.c.h.b16 %v221
    %v1094 = vunpack.c.l.b16 %v222
    %v1095 = vunpack.c.h.b16 %v222
    %v1096 = vunpack.c.l.b16 %v223
    %v1097 = vunpack.c.h.b16 %v223
    %v1098 = vunpack.c.l.b16 %v224
    %v1099 = vunpack.c.h.b16 %v224
    %v1100 = vunpack.c.l.b16 %v225
    %v1101 = vunpack.c.h.b16 %v225
    %v1102 = vpack.c.b16 %v1042, %v1038
    %v1103 = vpack.c.b16 %v1043, %v1039
    %v1104 = vpack.c.b16 %v1044, %v1040
    %v1105 = vpack.c.b16 %v1045, %v1041
    %v1106 = vpack.c.b16 %v1050, %v1046
    %v1107 = vpack.c.b16 %v1051, %v1047
    %v1108 = vpack.c.b16 %v1052, %v1048
    %v1109 = vpack.c.b16 %v1053, %v1049
    %v1110 = vpack.c.b16 %v1058, %v1054
    %v1111 = vpack.c.b16 %v1059, %v1055
    %v1112 = vpack.c.b16 %v1060, %v1056
    %v1113 = vpack.c.b16 %v1061, %v1057
    %v1114 = vpack.c.b16 %v1066, %v1062
    %v1115 = vpack.c.b16 %v1067, %v1063
    %v1116 = vpack.c.b16 %v1068, %v1064
    %v1117 = vpack.c.b16 %v1069, %v1065
    %v1118 = vpack.c.b16 %v1074, %v1070
    %v1119 = vpack.c.b16 %v1075, %v1071
    %v1120 = vpack.c.b16 %v1076, %v1072
    %v1121 = vpack.c.b16 %v1077, %v1073
    %v1122 = vpack.c.b16 %v1082, %v1078
    %v1123 = vpack.c.b16 %v1083, %v1079
    %v1124 = vpack.c.b16 %v1084, %v1080
    %v1125 = vpack.c.b16 %v1085, %v1081
    %v1126 = vpack.c.b16 %v1090, %v1086
    %v1127 = vpack.c.b16 %v1091, %v1087
    %v1128 = vpack.c.b16 %v1092, %v1088
    %v1129 = vpack.c.b16 %v1093, %v1089
    %v1130 = vpack.c.b16 %v1098, %v1094
    %v1131 = vpack.c.b16 %v1099, %v1095
    %v1132 = vpack.c.b16 %v1100, %v1096
    %v1133 = vpack.c.b16 %v1101, %v1097
    %1166 = vmatprep.subr.bf16.mxu0 %v1103
    %1167 = vmatpush1.bf16.msra.mxu0 %v1102
    %1168 = vmatprep.subr.bf16.mxu0 %v1107
    %1169 = vmatpush1.bf16.msra.mxu0 %v1106
    %1170 = vmatprep.subr.bf16.mxu0 %v1111
    %1171 = vmatpush1.bf16.msra.mxu0 %v1110
    %1172 = vmatprep.subr.bf16.mxu0 %v1115
    %1173 = vmatpush1.bf16.msra.mxu0 %v1114
    %1174 = vmatprep.subr.bf16.mxu0 %v1119
    %1175 = vmatpush1.bf16.msra.mxu0 %v1118
    %1176 = vmatprep.subr.bf16.mxu0 %v1123
    %1177 = vmatpush1.bf16.msra.mxu0 %v1122
    %1178 = vmatprep.subr.bf16.mxu0 %v1127
    %1179 = vmatpush1.bf16.msra.mxu0 %v1126
    %1180 = vmatprep.subr.bf16.mxu0 %v1131
    %1181 = vmatpush1.bf16.msra.mxu0 %v1130
    %1182 = vmatprep.subr.bf16.mxu0 0
    %1183 = vmatpush1.bf16.msra.mxu0 0
    %1184 = vmatprep.subr.bf16.mxu0 0
    %1185 = vmatpush1.bf16.msra.mxu0 0
    %1186 = vmatprep.subr.bf16.mxu0 0
    %1187 = vmatpush1.bf16.msra.mxu0 0
    %1188 = vmatprep.subr.bf16.mxu0 0
    %1189 = vmatpush1.bf16.msra.mxu0 0
    %1190 = vmatprep.subr.bf16.mxu0 0
    %1191 = vmatpush1.bf16.msra.mxu0 0
    %1192 = vmatprep.subr.bf16.mxu0 0
    %1193 = vmatpush1.bf16.msra.mxu0 0
    %1194 = vmatprep.subr.bf16.mxu0 0
    %1195 = vmatpush1.bf16.msra.mxu0 0
    %1196 = vmatprep.subr.bf16.mxu0 0
    %1197 = vmatpush1.bf16.msra.mxu0 0
    %1198 = vmatprep.mubr.bf16.mxu0 0
    %1199 = vmatmul.mubr.bf16.gmra.mrb[0].mxu0 0
    %v1200 = vpop.f32.mrb[0].mxu0
    %v1201 = vadd.f32 0.0, %v1200
    %v1202 = vpop.f32.mrb[0].mxu0
    %v1203 = vadd.f32 0.0, %v1202
    %v1204 = vpop.f32.mrb[0].mxu0
    %v1205 = vpop.f32.mrb[0].mxu0
    %1206 = vdwg.mxu0
    %1207 = vmatprep.subr.bf16.mxu0 %v1105
    %1208 = vmatpush1.bf16.msra.mxu0 %v1104
    %1209 = vmatprep.subr.bf16.mxu0 %v1109
    %1210 = vmatpush1.bf16.msra.mxu0 %v1108
    %1211 = vmatprep.subr.bf16.mxu0 %v1113
    %1212 = vmatpush1.bf16.msra.mxu0 %v1112
    %1213 = vmatprep.subr.bf16.mxu0 %v1117
    %1214 = vmatpush1.bf16.msra.mxu0 %v1116
    %1215 = vmatprep.subr.bf16.mxu0 %v1121
    %1216 = vmatpush1.bf16.msra.mxu0 %v1120
    %1217 = vmatprep.subr.bf16.mxu0 %v1125
    %1218 = vmatpush1.bf16.msra.mxu0 %v1124
    %1219 = vmatprep.subr.bf16.mxu0 %v1129
    %1220 = vmatpush1.bf16.msra.mxu0 %v1128
    %1221 = vmatprep.subr.bf16.mxu0 %v1133
    %1222 = vmatpush1.bf16.msra.mxu0 %v1132
    %1223 = vmatprep.subr.bf16.mxu0 0
    %1224 = vmatpush1.bf16.msra.mxu0 0
    %1225 = vmatprep.subr.bf16.mxu0 0
    %1226 = vmatpush1.bf16.msra.mxu0 0
    %1227 = vmatprep.subr.bf16.mxu0 0
    %1228 = vmatpush1.bf16.msra.mxu0 0
    %1229 = vmatprep.subr.bf16.mxu0 0
    %1230 = vmatpush1.bf16.msra.mxu0 0
    %1231 = vmatprep.subr.bf16.mxu0 0
    %1232 = vmatpush1.bf16.msra.mxu0 0
    %1233 = vmatprep.subr.bf16.mxu0 0
    %1234 = vmatpush1.bf16.msra.mxu0 0
    %1235 = vmatprep.subr.bf16.mxu0 0
    %1236 = vmatpush1.bf16.msra.mxu0 0
    %1237 = vmatprep.subr.bf16.mxu0 0
    %1238 = vmatpush1.bf16.msra.mxu0 0
    %1239 = vmatprep.mubr.bf16.mxu0 0
    %1240 = vmatmul.mubr.bf16.gmra.mrb[0].mxu0 0
    %v1241 = vpop.f32.mrb[0].mxu0
    %v1242 = vadd.f32 0.0, %v1241
    %v1243 = vpop.f32.mrb[0].mxu0
    %v1244 = vadd.f32 0.0, %v1243
    %v1245 = vpop.f32.mrb[0].mxu0
    %v1246 = vpop.f32.mrb[0].mxu0
    %1247 = vdwg.mxu0
    %v1248 = vadd.f32 %v359, %v1201
    %v1249 = vadd.f32 %v361, %v1203
    %v1250 = vadd.f32 %v400, %v1242
    %v1251 = vadd.f32 %v402, %v1244
    %v1252 = vsub.f32 0.0, %v1248
    %v1253 = vmul.f32 %v1252, 1.442695
    %v1254 = vpow.pop %v1253
    %v1255 = vadd.f32 %v1254, 1.0
    %v1256 = vrcp.pop %v1255
    %v1257 = vsub.f32 0.0, %v1249
    %v1258 = vmul.f32 %v1257, 1.442695
    %v1259 = vpow.pop %v1258
    %v1260 = vadd.f32 %v1259, 1.0
    %v1261 = vrcp.pop %v1260
    %v1262 = vtanh.pop %v1250
    %v1263 = vsub.f32 0.0, %v1251
    %v1264 = vmul.f32 %v1263, 1.442695
    %v1265 = vpow.pop %v1264
    %v1266 = vadd.f32 %v1265, 1.0
    %v1267 = vrcp.pop %v1266
    %v1268 = vmul.f32 %v1261, 0.0
    %v1269 = vmul.f32 %v1256, %v1262
    %v1270 = vadd.f32 %v1268, %v1269
    %v1271 = vtanh.pop %v1270
    %v1272 = vmul.f32 %v1267, %v1271
    %v1273 = vpack.c.bf16 %v1272, %v1272
    %1274 = vmatprep.subr.bf16.mxu0 %v1103
    %1275 = vmatpush1.bf16.msra.mxu0 %v1102
    %1276 = vmatprep.subr.bf16.mxu0 %v1107
    %1277 = vmatpush1.bf16.msra.mxu0 %v1106
    %1278 = vmatprep.subr.bf16.mxu0 %v1111
    %1279 = vmatpush1.bf16.msra.mxu0 %v1110
    %1280 = vmatprep.subr.bf16.mxu0 %v1115
    %1281 = vmatpush1.bf16.msra.mxu0 %v1114
    %1282 = vmatprep.subr.bf16.mxu0 %v1119
    %1283 = vmatpush1.bf16.msra.mxu0 %v1118
    %1284 = vmatprep.subr.bf16.mxu0 %v1123
    %1285 = vmatpush1.bf16.msra.mxu0 %v1122
    %1286 = vmatprep.subr.bf16.mxu0 %v1127
    %1287 = vmatpush1.bf16.msra.mxu0 %v1126
    %1288 = vmatprep.subr.bf16.mxu0 %v1131
    %1289 = vmatpush1.bf16.msra.mxu0 %v1130
    %1290 = vmatprep.subr.bf16.mxu0 0
    %1291 = vmatpush1.bf16.msra.mxu0 0
    %1292 = vmatprep.subr.bf16.mxu0 0
    %1293 = vmatpush1.bf16.msra.mxu0 0
    %1294 = vmatprep.subr.bf16.mxu0 0
    %1295 = vmatpush1.bf16.msra.mxu0 0
    %1296 = vmatprep.subr.bf16.mxu0 0
    %1297 = vmatpush1.bf16.msra.mxu0 0
    %1298 = vmatprep.subr.bf16.mxu0 0
    %1299 = vmatpush1.bf16.msra.mxu0 0
    %1300 = vmatprep.subr.bf16.mxu0 0
    %1301 = vmatpush1.bf16.msra.mxu0 0
    %1302 = vmatprep.subr.bf16.mxu0 0
    %1303 = vmatpush1.bf16.msra.mxu0 0
    %1304 = vmatprep.subr.bf16.mxu0 0
    %1305 = vmatpush1.bf16.msra.mxu0 0
    %1306 = vmatprep.mubr.bf16.mxu0 0
    %1307 = vmatmul.mubr.bf16.gmra.mrb[0].mxu0 %v1273
    %v1308 = vpop.f32.mrb[0].mxu0
    %v1309 = vadd.f32 0.0, %v1308
    %v1310 = vpop.f32.mrb[0].mxu0
    %v1311 = vadd.f32 0.0, %v1310
    %v1312 = vpop.f32.mrb[0].mxu0
    %v1313 = vpop.f32.mrb[0].mxu0
    %1314 = vdwg.mxu0
    %1315 = vmatprep.subr.bf16.mxu0 %v1105
    %1316 = vmatpush1.bf16.msra.mxu0 %v1104
    %1317 = vmatprep.subr.bf16.mxu0 %v1109
    %1318 = vmatpush1.bf16.msra.mxu0 %v1108
    %1319 = vmatprep.subr.bf16.mxu0 %v1113
    %1320 = vmatpush1.bf16.msra.mxu0 %v1112
    %1321 = vmatprep.subr.bf16.mxu0 %v1117
    %1322 = vmatpush1.bf16.msra.mxu0 %v1116
    %1323 = vmatprep.subr.bf16.mxu0 %v1121
    %1324 = vmatpush1.bf16.msra.mxu0 %v1120
    %1325 = vmatprep.subr.bf16.mxu0 %v1125
    %1326 = vmatpush1.bf16.msra.mxu0 %v1124
    %1327 = vmatprep.subr.bf16.mxu0 %v1129
    %1328 = vmatpush1.bf16.msra.mxu0 %v1128
    %1329 = vmatprep.subr.bf16.mxu0 %v1133
    %1330 = vmatpush1.bf16.msra.mxu0 %v1132
    %1331 = vmatprep.subr.bf16.mxu0 0
    %1332 = vmatpush1.bf16.msra.mxu0 0
    %1333 = vmatprep.subr.bf16.mxu0 0
    %1334 = vmatpush1.bf16.msra.mxu0 0
    %1335 = vmatprep.subr.bf16.mxu0 0
    %1336 = vmatpush1.bf16.msra.mxu0 0
    %1337 = vmatprep.subr.bf16.mxu0 0
    %1338 = vmatpush1.bf16.msra.mxu0 0
    %1339 = vmatprep.subr.bf16.mxu0 0
    %1340 = vmatpush1.bf16.msra.mxu0 0
    %1341 = vmatprep.subr.bf16.mxu0 0
    %1342 = vmatpush1.bf16.msra.mxu0 0
    %1343 = vmatprep.subr.bf16.mxu0 0
    %1344 = vmatpush1.bf16.msra.mxu0 0
    %1345 = vmatprep.subr.bf16.mxu0 0
    %1346 = vmatpush1.bf16.msra.mxu0 0
    %1347 = vmatprep.mubr.bf16.mxu0 0
    %1348 = vmatmul.mubr.bf16.gmra.mrb[0].mxu0 %v1273
    %v1349 = vpop.f32.mrb[0].mxu0
    %v1350 = vadd.f32 0.0, %v1349
    %v1351 = vpop.f32.mrb[0].mxu0
    %v1352 = vadd.f32 0.0, %v1351
    %v1353 = vpop.f32.mrb[0].mxu0
    %v1354 = vpop.f32.mrb[0].mxu0
    %1355 = vdwg.mxu0
    %v1356 = vadd.f32 %v459, %v1309
    %v1357 = vadd.f32 %v461, %v1311
    %v1358 = vadd.f32 %v500, %v1350
    %v1359 = vadd.f32 %v502, %v1352
    %v1360 = vsub.f32 0.0, %v1356
    %v1361 = vmul.f32 %v1360, 1.442695
    %v1362 = vpow.pop %v1361
    %v1363 = vadd.f32 %v1362, 1.0
    %v1364 = vrcp.pop %v1363
    %v1365 = vsub.f32 0.0, %v1357
    %v1366 = vmul.f32 %v1365, 1.442695
    %v1367 = vpow.pop %v1366
    %v1368 = vadd.f32 %v1367, 1.0
    %v1369 = vrcp.pop %v1368
    %v1370 = vtanh.pop %v1358
    %v1371 = vsub.f32 0.0, %v1359
    %v1372 = vmul.f32 %v1371, 1.442695
    %v1373 = vpow.pop %v1372
    %v1374 = vadd.f32 %v1373, 1.0
    %v1375 = vrcp.pop %v1374
    %v1376 = vmul.f32 %v1369, %v1270
    %v1377 = vmul.f32 %v1364, %v1370
    %v1378 = vadd.f32 %v1376, %v1377
    %v1379 = vtanh.pop %v1378
    %v1380 = vmul.f32 %v1375, %v1379
    %v1381 = vpack.c.bf16 %v1380, %v1380
    %1382 = vmatprep.subr.bf16.mxu0 %v1103
    %1383 = vmatpush1.bf16.msra.mxu0 %v1102
    %1384 = vmatprep.subr.bf16.mxu0 %v1107
    %1385 = vmatpush1.bf16.msra.mxu0 %v1106
    %1386 = vmatprep.subr.bf16.mxu0 %v1111
    %1387 = vmatpush1.bf16.msra.mxu0 %v1110
    %1388 = vmatprep.subr.bf16.mxu0 %v1115
    %1389 = vmatpush1.bf16.msra.mxu0 %v1114
    %1390 = vmatprep.subr.bf16.mxu0 %v1119
    %1391 = vmatpush1.bf16.msra.mxu0 %v1118
    %1392 = vmatprep.subr.bf16.mxu0 %v1123
    %1393 = vmatpush1.bf16.msra.mxu0 %v1122
    %1394 = vmatprep.subr.bf16.mxu0 %v1127
    %1395 = vmatpush1.bf16.msra.mxu0 %v1126
    %1396 = vmatprep.subr.bf16.mxu0 %v1131
    %1397 = vmatpush1.bf16.msra.mxu0 %v1130
    %1398 = vmatprep.subr.bf16.mxu0 0
    %1399 = vmatpush1.bf16.msra.mxu0 0
    %1400 = vmatprep.subr.bf16.mxu0 0
    %1401 = vmatpush1.bf16.msra.mxu0 0
    %1402 = vmatprep.subr.bf16.mxu0 0
    %1403 = vmatpush1.bf16.msra.mxu0 0
    %1404 = vmatprep.subr.bf16.mxu0 0
    %1405 = vmatpush1.bf16.msra.mxu0 0
    %1406 = vmatprep.subr.bf16.mxu0 0
    %1407 = vmatpush1.bf16.msra.mxu0 0
    %1408 = vmatprep.subr.bf16.mxu0 0
    %1409 = vmatpush1.bf16.msra.mxu0 0
    %1410 = vmatprep.subr.bf16.mxu0 0
    %1411 = vmatpush1.bf16.msra.mxu0 0
    %1412 = vmatprep.subr.bf16.mxu0 0
    %1413 = vmatpush1.bf16.msra.mxu0 0
    %1414 = vmatprep.mubr.bf16.mxu0 0
    %1415 = vmatmul.mubr.bf16.gmra.mrb[0].mxu0 %v1381
    %v1416 = vpop.f32.mrb[0].mxu0
    %v1417 = vadd.f32 0.0, %v1416
    %v1418 = vpop.f32.mrb[0].mxu0
    %v1419 = vadd.f32 0.0, %v1418
    %v1420 = vpop.f32.mrb[0].mxu0
    %v1421 = vpop.f32.mrb[0].mxu0
    %1422 = vdwg.mxu0
    %1423 = vmatprep.subr.bf16.mxu0 %v1105
    %1424 = vmatpush1.bf16.msra.mxu0 %v1104
    %1425 = vmatprep.subr.bf16.mxu0 %v1109
    %1426 = vmatpush1.bf16.msra.mxu0 %v1108
    %1427 = vmatprep.subr.bf16.mxu0 %v1113
    %1428 = vmatpush1.bf16.msra.mxu0 %v1112
    %1429 = vmatprep.subr.bf16.mxu0 %v1117
    %1430 = vmatpush1.bf16.msra.mxu0 %v1116
    %1431 = vmatprep.subr.bf16.mxu0 %v1121
    %1432 = vmatpush1.bf16.msra.mxu0 %v1120
    %1433 = vmatprep.subr.bf16.mxu0 %v1125
    %1434 = vmatpush1.bf16.msra.mxu0 %v1124
    %1435 = vmatprep.subr.bf16.mxu0 %v1129
    %1436 = vmatpush1.bf16.msra.mxu0 %v1128
    %1437 = vmatprep.subr.bf16.mxu0 %v1133
    %1438 = vmatpush1.bf16.msra.mxu0 %v1132
    %1439 = vmatprep.subr.bf16.mxu0 0
    %1440 = vmatpush1.bf16.msra.mxu0 0
    %1441 = vmatprep.subr.bf16.mxu0 0
    %1442 = vmatpush1.bf16.msra.mxu0 0
    %1443 = vmatprep.subr.bf16.mxu0 0
    %1444 = vmatpush1.bf16.msra.mxu0 0
    %1445 = vmatprep.subr.bf16.mxu0 0
    %1446 = vmatpush1.bf16.msra.mxu0 0
    %1447 = vmatprep.subr.bf16.mxu0 0
    %1448 = vmatpush1.bf16.msra.mxu0 0
    %1449 = vmatprep.subr.bf16.mxu0 0
    %1450 = vmatpush1.bf16.msra.mxu0 0
    %1451 = vmatprep.subr.bf16.mxu0 0
    %1452 = vmatpush1.bf16.msra.mxu0 0
    %1453 = vmatprep.subr.bf16.mxu0 0
    %1454 = vmatpush1.bf16.msra.mxu0 0
    %1455 = vmatprep.mubr.bf16.mxu0 0
    %1456 = vmatmul.mubr.bf16.gmra.mrb[0].mxu0 %v1381
    %v1457 = vpop.f32.mrb[0].mxu0
    %v1458 = vadd.f32 0.0, %v1457
    %v1459 = vpop.f32.mrb[0].mxu0
    %v1460 = vadd.f32 0.0, %v1459
    %v1461 = vpop.f32.mrb[0].mxu0
    %v1462 = vpop.f32.mrb[0].mxu0
    %1463 = vdwg.mxu0
    %v1464 = vadd.f32 %v559, %v1417
    %v1465 = vadd.f32 %v561, %v1419
    %v1466 = vadd.f32 %v600, %v1458
    %v1467 = vadd.f32 %v602, %v1460
    %v1468 = vsub.f32 0.0, %v1464
    %v1469 = vmul.f32 %v1468, 1.442695
    %v1470 = vpow.pop %v1469
    %v1471 = vadd.f32 %v1470, 1.0
    %v1472 = vrcp.pop %v1471
    %v1473 = vsub.f32 0.0, %v1465
    %v1474 = vmul.f32 %v1473, 1.442695
    %v1475 = vpow.pop %v1474
    %v1476 = vadd.f32 %v1475, 1.0
    %v1477 = vrcp.pop %v1476
    %v1478 = vtanh.pop %v1466
    %v1479 = vsub.f32 0.0, %v1467
    %v1480 = vmul.f32 %v1479, 1.442695
    %v1481 = vpow.pop %v1480
    %v1482 = vadd.f32 %v1481, 1.0
    %v1483 = vrcp.pop %v1482
    %v1484 = vmul.f32 %v1477, %v1378
    %v1485 = vmul.f32 %v1472, %v1478
    %v1486 = vadd.f32 %v1484, %v1485
    %v1487 = vtanh.pop %v1486
    %v1488 = vmul.f32 %v1483, %v1487
    %v1489 = vpack.c.bf16 %v1488, %v1488
    %1490 = vmatprep.subr.bf16.mxu0 %v1103
    %1491 = vmatpush1.bf16.msra.mxu0 %v1102
    %1492 = vmatprep.subr.bf16.mxu0 %v1107
    %1493 = vmatpush1.bf16.msra.mxu0 %v1106
    %1494 = vmatprep.subr.bf16.mxu0 %v1111
    %1495 = vmatpush1.bf16.msra.mxu0 %v1110
    %1496 = vmatprep.subr.bf16.mxu0 %v1115
    %1497 = vmatpush1.bf16.msra.mxu0 %v1114
    %1498 = vmatprep.subr.bf16.mxu0 %v1119
    %1499 = vmatpush1.bf16.msra.mxu0 %v1118
    %1500 = vmatprep.subr.bf16.mxu0 %v1123
    %1501 = vmatpush1.bf16.msra.mxu0 %v1122
    %1502 = vmatprep.subr.bf16.mxu0 %v1127
    %1503 = vmatpush1.bf16.msra.mxu0 %v1126
    %1504 = vmatprep.subr.bf16.mxu0 %v1131
    %1505 = vmatpush1.bf16.msra.mxu0 %v1130
    %1506 = vmatprep.subr.bf16.mxu0 0
    %1507 = vmatpush1.bf16.msra.mxu0 0
    %1508 = vmatprep.subr.bf16.mxu0 0
    %1509 = vmatpush1.bf16.msra.mxu0 0
    %1510 = vmatprep.subr.bf16.mxu0 0
    %1511 = vmatpush1.bf16.msra.mxu0 0
    %1512 = vmatprep.subr.bf16.mxu0 0
    %1513 = vmatpush1.bf16.msra.mxu0 0
    %1514 = vmatprep.subr.bf16.mxu0 0
    %1515 = vmatpush1.bf16.msra.mxu0 0
    %1516 = vmatprep.subr.bf16.mxu0 0
    %1517 = vmatpush1.bf16.msra.mxu0 0
    %1518 = vmatprep.subr.bf16.mxu0 0
    %1519 = vmatpush1.bf16.msra.mxu0 0
    %1520 = vmatprep.subr.bf16.mxu0 0
    %1521 = vmatpush1.bf16.msra.mxu0 0
    %1522 = vmatprep.mubr.bf16.mxu0 0
    %1523 = vmatmul.mubr.bf16.gmra.mrb[0].mxu0 %v1489
    %v1524 = vpop.f32.mrb[0].mxu0
    %v1525 = vadd.f32 0.0, %v1524
    %v1526 = vpop.f32.mrb[0].mxu0
    %v1527 = vadd.f32 0.0, %v1526
    %v1528 = vpop.f32.mrb[0].mxu0
    %v1529 = vpop.f32.mrb[0].mxu0
    %1530 = vdwg.mxu0
    %1531 = vmatprep.subr.bf16.mxu0 %v1105
    %1532 = vmatpush1.bf16.msra.mxu0 %v1104
    %1533 = vmatprep.subr.bf16.mxu0 %v1109
    %1534 = vmatpush1.bf16.msra.mxu0 %v1108
    %1535 = vmatprep.subr.bf16.mxu0 %v1113
    %1536 = vmatpush1.bf16.msra.mxu0 %v1112
    %1537 = vmatprep.subr.bf16.mxu0 %v1117
    %1538 = vmatpush1.bf16.msra.mxu0 %v1116
    %1539 = vmatprep.subr.bf16.mxu0 %v1121
    %1540 = vmatpush1.bf16.msra.mxu0 %v1120
    %1541 = vmatprep.subr.bf16.mxu0 %v1125
    %1542 = vmatpush1.bf16.msra.mxu0 %v1124
    %1543 = vmatprep.subr.bf16.mxu0 %v1129
    %1544 = vmatpush1.bf16.msra.mxu0 %v1128
    %1545 = vmatprep.subr.bf16.mxu0 %v1133
    %1546 = vmatpush1.bf16.msra.mxu0 %v1132
    %1547 = vmatprep.subr.bf16.mxu0 0
    %1548 = vmatpush1.bf16.msra.mxu0 0
    %1549 = vmatprep.subr.bf16.mxu0 0
    %1550 = vmatpush1.bf16.msra.mxu0 0
    %1551 = vmatprep.subr.bf16.mxu0 0
    %1552 = vmatpush1.bf16.msra.mxu0 0
    %1553 = vmatprep.subr.bf16.mxu0 0
    %1554 = vmatpush1.bf16.msra.mxu0 0
    %1555 = vmatprep.subr.bf16.mxu0 0
    %1556 = vmatpush1.bf16.msra.mxu0 0
    %1557 = vmatprep.subr.bf16.mxu0 0
    %1558 = vmatpush1.bf16.msra.mxu0 0
    %1559 = vmatprep.subr.bf16.mxu0 0
    %1560 = vmatpush1.bf16.msra.mxu0 0
    %1561 = vmatprep.subr.bf16.mxu0 0
    %1562 = vmatpush1.bf16.msra.mxu0 0
    %1563 = vmatprep.mubr.bf16.mxu0 0
    %1564 = vmatmul.mubr.bf16.gmra.mrb[0].mxu0 %v1489
    %v1565 = vpop.f32.mrb[0].mxu0
    %v1566 = vadd.f32 0.0, %v1565
    %v1567 = vpop.f32.mrb[0].mxu0
    %v1568 = vadd.f32 0.0, %v1567
    %v1569 = vpop.f32.mrb[0].mxu0
    %v1570 = vpop.f32.mrb[0].mxu0
    %1571 = vdwg.mxu0
    %v1572 = vadd.f32 %v659, %v1525
    %v1573 = vadd.f32 %v661, %v1527
    %v1574 = vadd.f32 %v700, %v1566
    %v1575 = vadd.f32 %v702, %v1568
    %v1576 = vsub.f32 0.0, %v1572
    %v1577 = vmul.f32 %v1576, 1.442695
    %v1578 = vpow.pop %v1577
    %v1579 = vadd.f32 %v1578, 1.0
    %v1580 = vrcp.pop %v1579
    %v1581 = vsub.f32 0.0, %v1573
    %v1582 = vmul.f32 %v1581, 1.442695
    %v1583 = vpow.pop %v1582
    %v1584 = vadd.f32 %v1583, 1.0
    %v1585 = vrcp.pop %v1584
    %v1586 = vtanh.pop %v1574
    %v1587 = vsub.f32 0.0, %v1575
    %v1588 = vmul.f32 %v1587, 1.442695
    %v1589 = vpow.pop %v1588
    %v1590 = vadd.f32 %v1589, 1.0
    %v1591 = vrcp.pop %v1590
    %v1592 = vmul.f32 %v1585, %v1486
    %v1593 = vmul.f32 %v1580, %v1586
    %v1594 = vadd.f32 %v1592, %v1593
    %v1595 = vtanh.pop %v1594
    %v1596 = vmul.f32 %v1591, %v1595
    %v1597 = vpack.c.bf16 %v1596, %v1596
    %1598 = vmatprep.subr.bf16.mxu0 %v1103
    %1599 = vmatpush1.bf16.msra.mxu0 %v1102
    %1600 = vmatprep.subr.bf16.mxu0 %v1107
    %1601 = vmatpush1.bf16.msra.mxu0 %v1106
    %1602 = vmatprep.subr.bf16.mxu0 %v1111
    %1603 = vmatpush1.bf16.msra.mxu0 %v1110
    %1604 = vmatprep.subr.bf16.mxu0 %v1115
    %1605 = vmatpush1.bf16.msra.mxu0 %v1114
    %1606 = vmatprep.subr.bf16.mxu0 %v1119
    %1607 = vmatpush1.bf16.msra.mxu0 %v1118
    %1608 = vmatprep.subr.bf16.mxu0 %v1123
    %1609 = vmatpush1.bf16.msra.mxu0 %v1122
    %1610 = vmatprep.subr.bf16.mxu0 %v1127
    %1611 = vmatpush1.bf16.msra.mxu0 %v1126
    %1612 = vmatprep.subr.bf16.mxu0 %v1131
    %1613 = vmatpush1.bf16.msra.mxu0 %v1130
    %1614 = vmatprep.subr.bf16.mxu0 0
    %1615 = vmatpush1.bf16.msra.mxu0 0
    %1616 = vmatprep.subr.bf16.mxu0 0
    %1617 = vmatpush1.bf16.msra.mxu0 0
    %1618 = vmatprep.subr.bf16.mxu0 0
    %1619 = vmatpush1.bf16.msra.mxu0 0
    %1620 = vmatprep.subr.bf16.mxu0 0
    %1621 = vmatpush1.bf16.msra.mxu0 0
    %1622 = vmatprep.subr.bf16.mxu0 0
    %1623 = vmatpush1.bf16.msra.mxu0 0
    %1624 = vmatprep.subr.bf16.mxu0 0
    %1625 = vmatpush1.bf16.msra.mxu0 0
    %1626 = vmatprep.subr.bf16.mxu0 0
    %1627 = vmatpush1.bf16.msra.mxu0 0
    %1628 = vmatprep.subr.bf16.mxu0 0
    %1629 = vmatpush1.bf16.msra.mxu0 0
    %1630 = vmatprep.mubr.bf16.mxu0 0
    %1631 = vmatmul.mubr.bf16.gmra.mrb[0].mxu0 %v1597
    %v1632 = vpop.f32.mrb[0].mxu0
    %v1633 = vadd.f32 0.0, %v1632
    %v1634 = vpop.f32.mrb[0].mxu0
    %v1635 = vadd.f32 0.0, %v1634
    %v1636 = vpop.f32.mrb[0].mxu0
    %v1637 = vpop.f32.mrb[0].mxu0
    %1638 = vdwg.mxu0
    %1639 = vmatprep.subr.bf16.mxu0 %v1105
    %1640 = vmatpush1.bf16.msra.mxu0 %v1104
    %1641 = vmatprep.subr.bf16.mxu0 %v1109
    %1642 = vmatpush1.bf16.msra.mxu0 %v1108
    %1643 = vmatprep.subr.bf16.mxu0 %v1113
    %1644 = vmatpush1.bf16.msra.mxu0 %v1112
    %1645 = vmatprep.subr.bf16.mxu0 %v1117
    %1646 = vmatpush1.bf16.msra.mxu0 %v1116
    %1647 = vmatprep.subr.bf16.mxu0 %v1121
    %1648 = vmatpush1.bf16.msra.mxu0 %v1120
    %1649 = vmatprep.subr.bf16.mxu0 %v1125
    %1650 = vmatpush1.bf16.msra.mxu0 %v1124
    %1651 = vmatprep.subr.bf16.mxu0 %v1129
    %1652 = vmatpush1.bf16.msra.mxu0 %v1128
    %1653 = vmatprep.subr.bf16.mxu0 %v1133
    %1654 = vmatpush1.bf16.msra.mxu0 %v1132
    %1655 = vmatprep.subr.bf16.mxu0 0
    %1656 = vmatpush1.bf16.msra.mxu0 0
    %1657 = vmatprep.subr.bf16.mxu0 0
    %1658 = vmatpush1.bf16.msra.mxu0 0
    %1659 = vmatprep.subr.bf16.mxu0 0
    %1660 = vmatpush1.bf16.msra.mxu0 0
    %1661 = vmatprep.subr.bf16.mxu0 0
    %1662 = vmatpush1.bf16.msra.mxu0 0
    %1663 = vmatprep.subr.bf16.mxu0 0
    %1664 = vmatpush1.bf16.msra.mxu0 0
    %1665 = vmatprep.subr.bf16.mxu0 0
    %1666 = vmatpush1.bf16.msra.mxu0 0
    %1667 = vmatprep.subr.bf16.mxu0 0
    %1668 = vmatpush1.bf16.msra.mxu0 0
    %1669 = vmatprep.subr.bf16.mxu0 0
    %1670 = vmatpush1.bf16.msra.mxu0 0
    %1671 = vmatprep.mubr.bf16.mxu0 0
    %1672 = vmatmul.mubr.bf16.gmra.mrb[0].mxu0 %v1597
    %v1673 = vpop.f32.mrb[0].mxu0
    %v1674 = vadd.f32 0.0, %v1673
    %v1675 = vpop.f32.mrb[0].mxu0
    %v1676 = vadd.f32 0.0, %v1675
    %v1677 = vpop.f32.mrb[0].mxu0
    %v1678 = vpop.f32.mrb[0].mxu0
    %1679 = vdwg.mxu0
    %v1680 = vadd.f32 %v759, %v1633
    %v1681 = vadd.f32 %v761, %v1635
    %v1682 = vadd.f32 %v800, %v1674
    %v1683 = vadd.f32 %v802, %v1676
    %v1684 = vsub.f32 0.0, %v1680
    %v1685 = vmul.f32 %v1684, 1.442695
    %v1686 = vpow.pop %v1685
    %v1687 = vadd.f32 %v1686, 1.0
    %v1688 = vrcp.pop %v1687
    %v1689 = vsub.f32 0.0, %v1681
    %v1690 = vmul.f32 %v1689, 1.442695
    %v1691 = vpow.pop %v1690
    %v1692 = vadd.f32 %v1691, 1.0
    %v1693 = vrcp.pop %v1692
    %v1694 = vtanh.pop %v1682
    %v1695 = vsub.f32 0.0, %v1683
    %v1696 = vmul.f32 %v1695, 1.442695
    %v1697 = vpow.pop %v1696
    %v1698 = vadd.f32 %v1697, 1.0
    %v1699 = vrcp.pop %v1698
    %v1700 = vmul.f32 %v1693, %v1594
    %v1701 = vmul.f32 %v1688, %v1694
    %v1702 = vadd.f32 %v1700, %v1701
    %v1703 = vtanh.pop %v1702
    %v1704 = vmul.f32 %v1699, %v1703
    %v1705 = vpack.c.bf16 %v1704, %v1704
    %1706 = vmatprep.subr.bf16.mxu0 %v1103
    %1707 = vmatpush1.bf16.msra.mxu0 %v1102
    %1708 = vmatprep.subr.bf16.mxu0 %v1107
    %1709 = vmatpush1.bf16.msra.mxu0 %v1106
    %1710 = vmatprep.subr.bf16.mxu0 %v1111
    %1711 = vmatpush1.bf16.msra.mxu0 %v1110
    %1712 = vmatprep.subr.bf16.mxu0 %v1115
    %1713 = vmatpush1.bf16.msra.mxu0 %v1114
    %1714 = vmatprep.subr.bf16.mxu0 %v1119
    %1715 = vmatpush1.bf16.msra.mxu0 %v1118
    %1716 = vmatprep.subr.bf16.mxu0 %v1123
    %1717 = vmatpush1.bf16.msra.mxu0 %v1122
    %1718 = vmatprep.subr.bf16.mxu0 %v1127
    %1719 = vmatpush1.bf16.msra.mxu0 %v1126
    %1720 = vmatprep.subr.bf16.mxu0 %v1131
    %1721 = vmatpush1.bf16.msra.mxu0 %v1130
    %1722 = vmatprep.subr.bf16.mxu0 0
    %1723 = vmatpush1.bf16.msra.mxu0 0
    %1724 = vmatprep.subr.bf16.mxu0 0
    %1725 = vmatpush1.bf16.msra.mxu0 0
    %1726 = vmatprep.subr.bf16.mxu0 0
    %1727 = vmatpush1.bf16.msra.mxu0 0
    %1728 = vmatprep.subr.bf16.mxu0 0
    %1729 = vmatpush1.bf16.msra.mxu0 0
    %1730 = vmatprep.subr.bf16.mxu0 0
    %1731 = vmatpush1.bf16.msra.mxu0 0
    %1732 = vmatprep.subr.bf16.mxu0 0
    %1733 = vmatpush1.bf16.msra.mxu0 0
    %1734 = vmatprep.subr.bf16.mxu0 0
    %1735 = vmatpush1.bf16.msra.mxu0 0
    %1736 = vmatprep.subr.bf16.mxu0 0
    %1737 = vmatpush1.bf16.msra.mxu0 0
    %1738 = vmatprep.mubr.bf16.mxu0 0
    %1739 = vmatmul.mubr.bf16.gmra.mrb[0].mxu0 %v1705
    %v1740 = vpop.f32.mrb[0].mxu0
    %v1741 = vadd.f32 0.0, %v1740
    %v1742 = vpop.f32.mrb[0].mxu0
    %v1743 = vadd.f32 0.0, %v1742
    %v1744 = vpop.f32.mrb[0].mxu0
    %v1745 = vpop.f32.mrb[0].mxu0
    %1746 = vdwg.mxu0
    %1747 = vmatprep.subr.bf16.mxu0 %v1105
    %1748 = vmatpush1.bf16.msra.mxu0 %v1104
    %1749 = vmatprep.subr.bf16.mxu0 %v1109
    %1750 = vmatpush1.bf16.msra.mxu0 %v1108
    %1751 = vmatprep.subr.bf16.mxu0 %v1113
    %1752 = vmatpush1.bf16.msra.mxu0 %v1112
    %1753 = vmatprep.subr.bf16.mxu0 %v1117
    %1754 = vmatpush1.bf16.msra.mxu0 %v1116
    %1755 = vmatprep.subr.bf16.mxu0 %v1121
    %1756 = vmatpush1.bf16.msra.mxu0 %v1120
    %1757 = vmatprep.subr.bf16.mxu0 %v1125
    %1758 = vmatpush1.bf16.msra.mxu0 %v1124
    %1759 = vmatprep.subr.bf16.mxu0 %v1129
    %1760 = vmatpush1.bf16.msra.mxu0 %v1128
    %1761 = vmatprep.subr.bf16.mxu0 %v1133
    %1762 = vmatpush1.bf16.msra.mxu0 %v1132
    %1763 = vmatprep.subr.bf16.mxu0 0
    %1764 = vmatpush1.bf16.msra.mxu0 0
    %1765 = vmatprep.subr.bf16.mxu0 0
    %1766 = vmatpush1.bf16.msra.mxu0 0
    %1767 = vmatprep.subr.bf16.mxu0 0
    %1768 = vmatpush1.bf16.msra.mxu0 0
    %1769 = vmatprep.subr.bf16.mxu0 0
    %1770 = vmatpush1.bf16.msra.mxu0 0
    %1771 = vmatprep.subr.bf16.mxu0 0
    %1772 = vmatpush1.bf16.msra.mxu0 0
    %1773 = vmatprep.subr.bf16.mxu0 0
    %1774 = vmatpush1.bf16.msra.mxu0 0
    %1775 = vmatprep.subr.bf16.mxu0 0
    %1776 = vmatpush1.bf16.msra.mxu0 0
    %1777 = vmatprep.subr.bf16.mxu0 0
    %1778 = vmatpush1.bf16.msra.mxu0 0
    %1779 = vmatprep.mubr.bf16.mxu0 0
    %1780 = vmatmul.mubr.bf16.gmra.mrb[0].mxu0 %v1705
    %v1781 = vpop.f32.mrb[0].mxu0
    %v1782 = vadd.f32 0.0, %v1781
    %v1783 = vpop.f32.mrb[0].mxu0
    %v1784 = vadd.f32 0.0, %v1783
    %v1785 = vpop.f32.mrb[0].mxu0
    %v1786 = vpop.f32.mrb[0].mxu0
    %1787 = vdwg.mxu0
    %v1788 = vadd.f32 %v859, %v1741
    %v1789 = vadd.f32 %v861, %v1743
    %v1790 = vadd.f32 %v900, %v1782
    %v1791 = vadd.f32 %v902, %v1784
    %v1792 = vsub.f32 0.0, %v1788
    %v1793 = vmul.f32 %v1792, 1.442695
    %v1794 = vpow.pop %v1793
    %v1795 = vadd.f32 %v1794, 1.0
    %v1796 = vrcp.pop %v1795
    %v1797 = vsub.f32 0.0, %v1789
    %v1798 = vmul.f32 %v1797, 1.442695
    %v1799 = vpow.pop %v1798
    %v1800 = vadd.f32 %v1799, 1.0
    %v1801 = vrcp.pop %v1800
    %v1802 = vtanh.pop %v1790
    %v1803 = vsub.f32 0.0, %v1791
    %v1804 = vmul.f32 %v1803, 1.442695
    %v1805 = vpow.pop %v1804
    %v1806 = vadd.f32 %v1805, 1.0
    %v1807 = vrcp.pop %v1806
    %v1808 = vmul.f32 %v1801, %v1702
    %v1809 = vmul.f32 %v1796, %v1802
    %v1810 = vadd.f32 %v1808, %v1809
    %v1811 = vtanh.pop %v1810
    %v1812 = vmul.f32 %v1807, %v1811
    %v1813 = vpack.c.bf16 %v1812, %v1812
    %1814 = vmatprep.subr.bf16.mxu0 %v1103
    %1815 = vmatpush1.bf16.msra.mxu0 %v1102
    %1816 = vmatprep.subr.bf16.mxu0 %v1107
    %1817 = vmatpush1.bf16.msra.mxu0 %v1106
    %1818 = vmatprep.subr.bf16.mxu0 %v1111
    %1819 = vmatpush1.bf16.msra.mxu0 %v1110
    %1820 = vmatprep.subr.bf16.mxu0 %v1115
    %1821 = vmatpush1.bf16.msra.mxu0 %v1114
    %1822 = vmatprep.subr.bf16.mxu0 %v1119
    %1823 = vmatpush1.bf16.msra.mxu0 %v1118
    %1824 = vmatprep.subr.bf16.mxu0 %v1123
    %1825 = vmatpush1.bf16.msra.mxu0 %v1122
    %1826 = vmatprep.subr.bf16.mxu0 %v1127
    %1827 = vmatpush1.bf16.msra.mxu0 %v1126
    %1828 = vmatprep.subr.bf16.mxu0 %v1131
    %1829 = vmatpush1.bf16.msra.mxu0 %v1130
    %1830 = vmatprep.subr.bf16.mxu0 0
    %1831 = vmatpush1.bf16.msra.mxu0 0
    %1832 = vmatprep.subr.bf16.mxu0 0
    %1833 = vmatpush1.bf16.msra.mxu0 0
    %1834 = vmatprep.subr.bf16.mxu0 0
    %1835 = vmatpush1.bf16.msra.mxu0 0
    %1836 = vmatprep.subr.bf16.mxu0 0
    %1837 = vmatpush1.bf16.msra.mxu0 0
    %1838 = vmatprep.subr.bf16.mxu0 0
    %1839 = vmatpush1.bf16.msra.mxu0 0
    %1840 = vmatprep.subr.bf16.mxu0 0
    %1841 = vmatpush1.bf16.msra.mxu0 0
    %1842 = vmatprep.subr.bf16.mxu0 0
    %1843 = vmatpush1.bf16.msra.mxu0 0
    %1844 = vmatprep.subr.bf16.mxu0 0
    %1845 = vmatpush1.bf16.msra.mxu0 0
    %1846 = vmatprep.mubr.bf16.mxu0 0
    %1847 = vmatmul.mubr.bf16.gmra.mrb[0].mxu0 %v1813
    %v1848 = vpop.f32.mrb[0].mxu0
    %v1849 = vadd.f32 0.0, %v1848
    %v1850 = vpop.f32.mrb[0].mxu0
    %v1851 = vadd.f32 0.0, %v1850
    %v1852 = vpop.f32.mrb[0].mxu0
    %v1853 = vpop.f32.mrb[0].mxu0
    %1854 = vdwg.mxu0
    %1855 = vmatprep.subr.bf16.mxu0 %v1105
    %1856 = vmatpush1.bf16.msra.mxu0 %v1104
    %1857 = vmatprep.subr.bf16.mxu0 %v1109
    %1858 = vmatpush1.bf16.msra.mxu0 %v1108
    %1859 = vmatprep.subr.bf16.mxu0 %v1113
    %1860 = vmatpush1.bf16.msra.mxu0 %v1112
    %1861 = vmatprep.subr.bf16.mxu0 %v1117
    %1862 = vmatpush1.bf16.msra.mxu0 %v1116
    %1863 = vmatprep.subr.bf16.mxu0 %v1121
    %1864 = vmatpush1.bf16.msra.mxu0 %v1120
    %1865 = vmatprep.subr.bf16.mxu0 %v1125
    %1866 = vmatpush1.bf16.msra.mxu0 %v1124
    %1867 = vmatprep.subr.bf16.mxu0 %v1129
    %1868 = vmatpush1.bf16.msra.mxu0 %v1128
    %1869 = vmatprep.subr.bf16.mxu0 %v1133
    %1870 = vmatpush1.bf16.msra.mxu0 %v1132
    %1871 = vmatprep.subr.bf16.mxu0 0
    %1872 = vmatpush1.bf16.msra.mxu0 0
    %1873 = vmatprep.subr.bf16.mxu0 0
    %1874 = vmatpush1.bf16.msra.mxu0 0
    %1875 = vmatprep.subr.bf16.mxu0 0
    %1876 = vmatpush1.bf16.msra.mxu0 0
    %1877 = vmatprep.subr.bf16.mxu0 0
    %1878 = vmatpush1.bf16.msra.mxu0 0
    %1879 = vmatprep.subr.bf16.mxu0 0
    %1880 = vmatpush1.bf16.msra.mxu0 0
    %1881 = vmatprep.subr.bf16.mxu0 0
    %1882 = vmatpush1.bf16.msra.mxu0 0
    %1883 = vmatprep.subr.bf16.mxu0 0
    %1884 = vmatpush1.bf16.msra.mxu0 0
    %1885 = vmatprep.subr.bf16.mxu0 0
    %1886 = vmatpush1.bf16.msra.mxu0 0
    %1887 = vmatprep.mubr.bf16.mxu0 0
    %1888 = vmatmul.mubr.bf16.gmra.mrb[0].mxu0 %v1813
    %v1889 = vpop.f32.mrb[0].mxu0
    %v1890 = vadd.f32 0.0, %v1889
    %v1891 = vpop.f32.mrb[0].mxu0
    %v1892 = vadd.f32 0.0, %v1891
    %v1893 = vpop.f32.mrb[0].mxu0
    %v1894 = vpop.f32.mrb[0].mxu0
    %1895 = vdwg.mxu0
    %v1896 = vadd.f32 %v959, %v1849
    %v1897 = vadd.f32 %v961, %v1851
    %v1898 = vadd.f32 %v1000, %v1890
    %v1899 = vadd.f32 %v1002, %v1892
    %v1900 = vsub.f32 0.0, %v1896
    %v1901 = vmul.f32 %v1900, 1.442695
    %v1902 = vpow.pop %v1901
    %v1903 = vadd.f32 %v1902, 1.0
    %v1904 = vrcp.pop %v1903
    %v1905 = vsub.f32 0.0, %v1897
    %v1906 = vmul.f32 %v1905, 1.442695
    %v1907 = vpow.pop %v1906
    %v1908 = vadd.f32 %v1907, 1.0
    %v1909 = vrcp.pop %v1908
    %v1910 = vtanh.pop %v1898
    %v1911 = vsub.f32 0.0, %v1899
    %v1912 = vmul.f32 %v1911, 1.442695
    %v1913 = vpow.pop %v1912
    %v1914 = vadd.f32 %v1913, 1.0
    %v1915 = vrcp.pop %v1914
    %v1916 = vmul.f32 %v1909, %v1810
    %v1917 = vmul.f32 %v1904, %v1910
    %v1918 = vadd.f32 %v1916, %v1917
    %v1919 = vtanh.pop %v1918
    %v1920 = vmul.f32 %v1915, %v1919
    %v1921 = vpack.c.bf16 %v1920, %v1920
    %v1922 = vld [vmem:[#allocation7] sm:$0xff]
    %v1923 = vld [vmem:[#allocation7 + $0x8] sm:$0xff]
    %v1924 = vld [vmem:[#allocation7 + $0x10] sm:$0xff]
    %v1925 = vld [vmem:[#allocation7 + $0x18] sm:$0xff]
    %v1926 = vld [vmem:[#allocation7 + $0x20] sm:$0xff]
    %v1927 = vld [vmem:[#allocation7 + $0x28] sm:$0xff]
    %v1928 = vld [vmem:[#allocation7 + $0x30] sm:$0xff]
    %v1929 = vld [vmem:[#allocation7 + $0x38] sm:$0xff]
    %v1930 = vld [vmem:[#allocation7 + $0x40] sm:$0xff]
    %v1931 = vld [vmem:[#allocation7 + $0x48] sm:$0xff]
    %v1932 = vld [vmem:[#allocation7 + $0x50] sm:$0xff]
    %v1933 = vld [vmem:[#allocation7 + $0x58] sm:$0xff]
    %v1934 = vld [vmem:[#allocation7 + $0x60] sm:$0xff]
    %v1935 = vld [vmem:[#allocation7 + $0x68] sm:$0xff]
    %v1936 = vld [vmem:[#allocation7 + $0x70] sm:$0xff]
    %v1937 = vld [vmem:[#allocation7 + $0x78] sm:$0xff]
    %v1938 = vld [vmem:[#allocation7 + $0x80] sm:$0xff]
    %v1939 = vld [vmem:[#allocation7 + $0x88] sm:$0xff]
    %v1940 = vld [vmem:[#allocation7 + $0x90] sm:$0xff]
    %v1941 = vld [vmem:[#allocation7 + $0x98] sm:$0xff]
    %v1942 = vld [vmem:[#allocation7 + $0xa0] sm:$0xff]
    %v1943 = vld [vmem:[#allocation7 + $0xa8] sm:$0xff]
    %v1944 = vld [vmem:[#allocation7 + $0xb0] sm:$0xff]
    %v1945 = vld [vmem:[#allocation7 + $0xb8] sm:$0xff]
    %v1946 = vld [vmem:[#allocation7 + $0xc0] sm:$0xff]
    %v1947 = vld [vmem:[#allocation7 + $0xc8] sm:$0xff]
    %v1948 = vld [vmem:[#allocation7 + $0xd0] sm:$0xff]
    %v1949 = vld [vmem:[#allocation7 + $0xd8] sm:$0xff]
    %v1950 = vld [vmem:[#allocation7 + $0xe0] sm:$0xff]
    %v1951 = vld [vmem:[#allocation7 + $0xe8] sm:$0xff]
    %v1952 = vld [vmem:[#allocation7 + $0xf0] sm:$0xff]
    %v1953 = vld [vmem:[#allocation7 + $0xf8] sm:$0xff]
    %v1954 = vld [vmem:[#allocation8] sm:$0xff]
    %v1955 = vld [vmem:[#allocation8 + $0x8] sm:$0xff]
    %v1956 = vld [vmem:[#allocation8 + $0x10] sm:$0xff]
    %v1957 = vld [vmem:[#allocation8 + $0x18] sm:$0xff]
    %v1958 = vld [vmem:[#allocation8 + $0x20] sm:$0xff]
    %v1959 = vld [vmem:[#allocation8 + $0x28] sm:$0xff]
    %v1960 = vld [vmem:[#allocation8 + $0x30] sm:$0xff]
    %v1961 = vld [vmem:[#allocation8 + $0x38] sm:$0xff]
    %v1962 = vld [vmem:[#allocation8 + $0x40] sm:$0xff]
    %v1963 = vld [vmem:[#allocation8 + $0x48] sm:$0xff]
    %v1964 = vld [vmem:[#allocation8 + $0x50] sm:$0xff]
    %v1965 = vld [vmem:[#allocation8 + $0x58] sm:$0xff]
    %v1966 = vld [vmem:[#allocation8 + $0x60] sm:$0xff]
    %v1967 = vld [vmem:[#allocation8 + $0x68] sm:$0xff]
    %v1968 = vld [vmem:[#allocation8 + $0x70] sm:$0xff]
    %v1969 = vld [vmem:[#allocation8 + $0x78] sm:$0xff]
    %v1970 = vld [vmem:[#allocation8 + $0x80] sm:$0xff]
    %v1971 = vld [vmem:[#allocation8 + $0x88] sm:$0xff]
    %v1972 = vld [vmem:[#allocation8 + $0x90] sm:$0xff]
    %v1973 = vld [vmem:[#allocation8 + $0x98] sm:$0xff]
    %v1974 = vld [vmem:[#allocation8 + $0xa0] sm:$0xff]
    %v1975 = vld [vmem:[#allocation8 + $0xa8] sm:$0xff]
    %v1976 = vld [vmem:[#allocation8 + $0xb0] sm:$0xff]
    %v1977 = vld [vmem:[#allocation8 + $0xb8] sm:$0xff]
    %v1978 = vld [vmem:[#allocation8 + $0xc0] sm:$0xff]
    %v1979 = vld [vmem:[#allocation8 + $0xc8] sm:$0xff]
    %v1980 = vld [vmem:[#allocation8 + $0xd0] sm:$0xff]
    %v1981 = vld [vmem:[#allocation8 + $0xd8] sm:$0xff]
    %v1982 = vld [vmem:[#allocation8 + $0xe0] sm:$0xff]
    %v1983 = vld [vmem:[#allocation8 + $0xe8] sm:$0xff]
    %v1984 = vld [vmem:[#allocation8 + $0xf0] sm:$0xff]
    %v1985 = vld [vmem:[#allocation8 + $0xf8] sm:$0xff]
    %v1986 = vld [vmem:[#allocation10] sm:$0xf]
    %v1988 = vlaneseq
    %v1989 = vshrl.u32 %v1988, 7
    %v1990 = vsub.s32 0, %v1989
    %v1991 = vrot.slane %v1986, %v1990
    %v1992 = vlaneseq
    %v1993 = vshrl.u32 %v1992, 7
    %v1994 = vsub.s32 1, %v1993
    %v1995 = vrot.slane %v1986, %v1994
    %v1996 = vlaneseq
    %v1997 = vshrl.u32 %v1996, 7
    %v1998 = vsub.s32 2, %v1997
    %v1999 = vrot.slane %v1986, %v1998
    %v2000 = vlaneseq
    %v2001 = vshrl.u32 %v2000, 7
    %v2002 = vsub.s32 3, %v2001
    %v2003 = vrot.slane %v1986, %v2002
    %v2040 = vunpack.c.l.b16 %v1922
    %v2041 = vunpack.c.h.b16 %v1922
    %v2042 = vunpack.c.l.b16 %v1923
    %v2043 = vunpack.c.h.b16 %v1923
    %v2044 = vunpack.c.l.b16 %v1924
    %v2045 = vunpack.c.h.b16 %v1924
    %v2046 = vunpack.c.l.b16 %v1925
    %v2047 = vunpack.c.h.b16 %v1925
    %v2048 = vunpack.c.l.b16 %v1926
    %v2049 = vunpack.c.h.b16 %v1926
    %v2050 = vunpack.c.l.b16 %v1927
    %v2051 = vunpack.c.h.b16 %v1927
    %v2052 = vunpack.c.l.b16 %v1928
    %v2053 = vunpack.c.h.b16 %v1928
    %v2054 = vunpack.c.l.b16 %v1929
    %v2055 = vunpack.c.h.b16 %v1929
    %v2056 = vunpack.c.l.b16 %v1930
    %v2057 = vunpack.c.h.b16 %v1930
    %v2058 = vunpack.c.l.b16 %v1931
    %v2059 = vunpack.c.h.b16 %v1931
    %v2060 = vunpack.c.l.b16 %v1932
    %v2061 = vunpack.c.h.b16 %v1932
    %v2062 = vunpack.c.l.b16 %v1933
    %v2063 = vunpack.c.h.b16 %v1933
    %v2064 = vunpack.c.l.b16 %v1934
    %v2065 = vunpack.c.h.b16 %v1934
    %v2066 = vunpack.c.l.b16 %v1935
    %v2067 = vunpack.c.h.b16 %v1935
    %v2068 = vunpack.c.l.b16 %v1936
    %v2069 = vunpack.c.h.b16 %v1936
    %v2070 = vunpack.c.l.b16 %v1937
    %v2071 = vunpack.c.h.b16 %v1937
    %v2072 = vunpack.c.l.b16 %v1938
    %v2073 = vunpack.c.h.b16 %v1938
    %v2074 = vunpack.c.l.b16 %v1939
    %v2075 = vunpack.c.h.b16 %v1939
    %v2076 = vunpack.c.l.b16 %v1940
    %v2077 = vunpack.c.h.b16 %v1940
    %v2078 = vunpack.c.l.b16 %v1941
    %v2079 = vunpack.c.h.b16 %v1941
    %v2080 = vunpack.c.l.b16 %v1942
    %v2081 = vunpack.c.h.b16 %v1942
    %v2082 = vunpack.c.l.b16 %v1943
    %v2083 = vunpack.c.h.b16 %v1943
    %v2084 = vunpack.c.l.b16 %v1944
    %v2085 = vunpack.c.h.b16 %v1944
    %v2086 = vunpack.c.l.b16 %v1945
    %v2087 = vunpack.c.h.b16 %v1945
    %v2088 = vunpack.c.l.b16 %v1946
    %v2089 = vunpack.c.h.b16 %v1946
    %v2090 = vunpack.c.l.b16 %v1947
    %v2091 = vunpack.c.h.b16 %v1947
    %v2092 = vunpack.c.l.b16 %v1948
    %v2093 = vunpack.c.h.b16 %v1948
    %v2094 = vunpack.c.l.b16 %v1949
    %v2095 = vunpack.c.h.b16 %v1949
    %v2096 = vunpack.c.l.b16 %v1950
    %v2097 = vunpack.c.h.b16 %v1950
    %v2098 = vunpack.c.l.b16 %v1951
    %v2099 = vunpack.c.h.b16 %v1951
    %v2100 = vunpack.c.l.b16 %v1952
    %v2101 = vunpack.c.h.b16 %v1952
    %v2102 = vunpack.c.l.b16 %v1953
    %v2103 = vunpack.c.h.b16 %v1953
    %v2104 = vpack.c.b16 %v2044, %v2040
    %v2105 = vpack.c.b16 %v2045, %v2041
    %v2106 = vpack.c.b16 %v2046, %v2042
    %v2107 = vpack.c.b16 %v2047, %v2043
    %v2108 = vpack.c.b16 %v2052, %v2048
    %v2109 = vpack.c.b16 %v2053, %v2049
    %v2110 = vpack.c.b16 %v2054, %v2050
    %v2111 = vpack.c.b16 %v2055, %v2051
    %v2112 = vpack.c.b16 %v2060, %v2056
    %v2113 = vpack.c.b16 %v2061, %v2057
    %v2114 = vpack.c.b16 %v2062, %v2058
    %v2115 = vpack.c.b16 %v2063, %v2059
    %v2116 = vpack.c.b16 %v2068, %v2064
    %v2117 = vpack.c.b16 %v2069, %v2065
    %v2118 = vpack.c.b16 %v2070, %v2066
    %v2119 = vpack.c.b16 %v2071, %v2067
    %v2120 = vpack.c.b16 %v2076, %v2072
    %v2121 = vpack.c.b16 %v2077, %v2073
    %v2122 = vpack.c.b16 %v2078, %v2074
    %v2123 = vpack.c.b16 %v2079, %v2075
    %v2124 = vpack.c.b16 %v2084, %v2080
    %v2125 = vpack.c.b16 %v2085, %v2081
    %v2126 = vpack.c.b16 %v2086, %v2082
    %v2127 = vpack.c.b16 %v2087, %v2083
    %v2128 = vpack.c.b16 %v2092, %v2088
    %v2129 = vpack.c.b16 %v2093, %v2089
    %v2130 = vpack.c.b16 %v2094, %v2090
    %v2131 = vpack.c.b16 %v2095, %v2091
    %v2132 = vpack.c.b16 %v2100, %v2096
    %v2133 = vpack.c.b16 %v2101, %v2097
    %v2134 = vpack.c.b16 %v2102, %v2098
    %v2135 = vpack.c.b16 %v2103, %v2099
    %2168 = vmatprep.subr.bf16.mxu0 %v2105
    %2169 = vmatpush1.bf16.msra.mxu0 %v2104
    %2170 = vmatprep.subr.bf16.mxu0 %v2109
    %2171 = vmatpush1.bf16.msra.mxu0 %v2108
    %2172 = vmatprep.subr.bf16.mxu0 %v2113
    %2173 = vmatpush1.bf16.msra.mxu0 %v2112
    %2174 = vmatprep.subr.bf16.mxu0 %v2117
    %2175 = vmatpush1.bf16.msra.mxu0 %v2116
    %2176 = vmatprep.subr.bf16.mxu0 %v2121
    %2177 = vmatpush1.bf16.msra.mxu0 %v2120
    %2178 = vmatprep.subr.bf16.mxu0 %v2125
    %2179 = vmatpush1.bf16.msra.mxu0 %v2124
    %2180 = vmatprep.subr.bf16.mxu0 %v2129
    %2181 = vmatpush1.bf16.msra.mxu0 %v2128
    %2182 = vmatprep.subr.bf16.mxu0 %v2133
    %2183 = vmatpush1.bf16.msra.mxu0 %v2132
    %2184 = vmatprep.subr.bf16.mxu0 0
    %2185 = vmatpush1.bf16.msra.mxu0 0
    %2186 = vmatprep.subr.bf16.mxu0 0
    %2187 = vmatpush1.bf16.msra.mxu0 0
    %2188 = vmatprep.subr.bf16.mxu0 0
    %2189 = vmatpush1.bf16.msra.mxu0 0
    %2190 = vmatprep.subr.bf16.mxu0 0
    %2191 = vmatpush1.bf16.msra.mxu0 0
    %2192 = vmatprep.subr.bf16.mxu0 0
    %2193 = vmatpush1.bf16.msra.mxu0 0
    %2194 = vmatprep.subr.bf16.mxu0 0
    %2195 = vmatpush1.bf16.msra.mxu0 0
    %2196 = vmatprep.subr.bf16.mxu0 0
    %2197 = vmatpush1.bf16.msra.mxu0 0
    %2198 = vmatprep.subr.bf16.mxu0 0
    %2199 = vmatpush1.bf16.msra.mxu0 0
    %2200 = vmatprep.mubr.bf16.mxu0 0
    %2201 = vmatmul.mubr.bf16.gmra.mrb[0].mxu0 %v1273
    %v2202 = vpop.f32.mrb[0].mxu0
    %v2203 = vadd.f32 %v1991, %v2202
    %v2204 = vpop.f32.mrb[0].mxu0
    %v2205 = vadd.f32 %v1995, %v2204
    %v2206 = vpop.f32.mrb[0].mxu0
    %v2207 = vpop.f32.mrb[0].mxu0
    %2208 = vdwg.mxu0
    %2209 = vmatprep.subr.bf16.mxu0 %v2107
    %2210 = vmatpush1.bf16.msra.mxu0 %v2106
    %2211 = vmatprep.subr.bf16.mxu0 %v2111
    %2212 = vmatpush1.bf16.msra.mxu0 %v2110
    %2213 = vmatprep.subr.bf16.mxu0 %v2115
    %2214 = vmatpush1.bf16.msra.mxu0 %v2114
    %2215 = vmatprep.subr.bf16.mxu0 %v2119
    %2216 = vmatpush1.bf16.msra.mxu0 %v2118
    %2217 = vmatprep.subr.bf16.mxu0 %v2123
    %2218 = vmatpush1.bf16.msra.mxu0 %v2122
    %2219 = vmatprep.subr.bf16.mxu0 %v2127
    %2220 = vmatpush1.bf16.msra.mxu0 %v2126
    %2221 = vmatprep.subr.bf16.mxu0 %v2131
    %2222 = vmatpush1.bf16.msra.mxu0 %v2130
    %2223 = vmatprep.subr.bf16.mxu0 %v2135
    %2224 = vmatpush1.bf16.msra.mxu0 %v2134
    %2225 = vmatprep.subr.bf16.mxu0 0
    %2226 = vmatpush1.bf16.msra.mxu0 0
    %2227 = vmatprep.subr.bf16.mxu0 0
    %2228 = vmatpush1.bf16.msra.mxu0 0
    %2229 = vmatprep.subr.bf16.mxu0 0
    %2230 = vmatpush1.bf16.msra.mxu0 0
    %2231 = vmatprep.subr.bf16.mxu0 0
    %2232 = vmatpush1.bf16.msra.mxu0 0
    %2233 = vmatprep.subr.bf16.mxu0 0
    %2234 = vmatpush1.bf16.msra.mxu0 0
    %2235 = vmatprep.subr.bf16.mxu0 0
    %2236 = vmatpush1.bf16.msra.mxu0 0
    %2237 = vmatprep.subr.bf16.mxu0 0
    %2238 = vmatpush1.bf16.msra.mxu0 0
    %2239 = vmatprep.subr.bf16.mxu0 0
    %2240 = vmatpush1.bf16.msra.mxu0 0
    %2241 = vmatprep.mubr.bf16.mxu0 0
    %2242 = vmatmul.mubr.bf16.gmra.mrb[0].mxu0 %v1273
    %v2243 = vpop.f32.mrb[0].mxu0
    %v2244 = vadd.f32 %v1999, %v2243
    %v2245 = vpop.f32.mrb[0].mxu0
    %v2246 = vadd.f32 %v2003, %v2245
    %v2247 = vpop.f32.mrb[0].mxu0
    %v2248 = vpop.f32.mrb[0].mxu0
    %2249 = vdwg.mxu0
    %2250 = vmatprep.subr.bf16.mxu0 %v2105
    %2251 = vmatpush1.bf16.msra.mxu0 %v2104
    %2252 = vmatprep.subr.bf16.mxu0 %v2109
    %2253 = vmatpush1.bf16.msra.mxu0 %v2108
    %2254 = vmatprep.subr.bf16.mxu0 %v2113
    %2255 = vmatpush1.bf16.msra.mxu0 %v2112
    %2256 = vmatprep.subr.bf16.mxu0 %v2117
    %2257 = vmatpush1.bf16.msra.mxu0 %v2116
    %2258 = vmatprep.subr.bf16.mxu0 %v2121
    %2259 = vmatpush1.bf16.msra.mxu0 %v2120
    %2260 = vmatprep.subr.bf16.mxu0 %v2125
    %2261 = vmatpush1.bf16.msra.mxu0 %v2124
    %2262 = vmatprep.subr.bf16.mxu0 %v2129
    %2263 = vmatpush1.bf16.msra.mxu0 %v2128
    %2264 = vmatprep.subr.bf16.mxu0 %v2133
    %2265 = vmatpush1.bf16.msra.mxu0 %v2132
    %2266 = vmatprep.subr.bf16.mxu0 0
    %2267 = vmatpush1.bf16.msra.mxu0 0
    %2268 = vmatprep.subr.bf16.mxu0 0
    %2269 = vmatpush1.bf16.msra.mxu0 0
    %2270 = vmatprep.subr.bf16.mxu0 0
    %2271 = vmatpush1.bf16.msra.mxu0 0
    %2272 = vmatprep.subr.bf16.mxu0 0
    %2273 = vmatpush1.bf16.msra.mxu0 0
    %2274 = vmatprep.subr.bf16.mxu0 0
    %2275 = vmatpush1.bf16.msra.mxu0 0
    %2276 = vmatprep.subr.bf16.mxu0 0
    %2277 = vmatpush1.bf16.msra.mxu0 0
    %2278 = vmatprep.subr.bf16.mxu0 0
    %2279 = vmatpush1.bf16.msra.mxu0 0
    %2280 = vmatprep.subr.bf16.mxu0 0
    %2281 = vmatpush1.bf16.msra.mxu0 0
    %2282 = vmatprep.mubr.bf16.mxu0 0
    %2283 = vmatmul.mubr.bf16.gmra.mrb[0].mxu0 %v1381
    %v2284 = vpop.f32.mrb[0].mxu0
    %v2285 = vadd.f32 %v1991, %v2284
    %v2286 = vpop.f32.mrb[0].mxu0
    %v2287 = vadd.f32 %v1995, %v2286
    %v2288 = vpop.f32.mrb[0].mxu0
    %v2289 = vpop.f32.mrb[0].mxu0
    %2290 = vdwg.mxu0
    %2291 = vmatprep.subr.bf16.mxu0 %v2107
    %2292 = vmatpush1.bf16.msra.mxu0 %v2106
    %2293 = vmatprep.subr.bf16.mxu0 %v2111
    %2294 = vmatpush1.bf16.msra.mxu0 %v2110
    %2295 = vmatprep.subr.bf16.mxu0 %v2115
    %2296 = vmatpush1.bf16.msra.mxu0 %v2114
    %2297 = vmatprep.subr.bf16.mxu0 %v2119
    %2298 = vmatpush1.bf16.msra.mxu0 %v2118
    %2299 = vmatprep.subr.bf16.mxu0 %v2123
    %2300 = vmatpush1.bf16.msra.mxu0 %v2122
    %2301 = vmatprep.subr.bf16.mxu0 %v2127
    %2302 = vmatpush1.bf16.msra.mxu0 %v2126
    %2303 = vmatprep.subr.bf16.mxu0 %v2131
    %2304 = vmatpush1.bf16.msra.mxu0 %v2130
    %2305 = vmatprep.subr.bf16.mxu0 %v2135
    %2306 = vmatpush1.bf16.msra.mxu0 %v2134
    %2307 = vmatprep.subr.bf16.mxu0 0
    %2308 = vmatpush1.bf16.msra.mxu0 0
    %2309 = vmatprep.subr.bf16.mxu0 0
    %2310 = vmatpush1.bf16.msra.mxu0 0
    %2311 = vmatprep.subr.bf16.mxu0 0
    %2312 = vmatpush1.bf16.msra.mxu0 0
    %2313 = vmatprep.subr.bf16.mxu0 0
    %2314 = vmatpush1.bf16.msra.mxu0 0
    %2315 = vmatprep.subr.bf16.mxu0 0
    %2316 = vmatpush1.bf16.msra.mxu0 0
    %2317 = vmatprep.subr.bf16.mxu0 0
    %2318 = vmatpush1.bf16.msra.mxu0 0
    %2319 = vmatprep.subr.bf16.mxu0 0
    %2320 = vmatpush1.bf16.msra.mxu0 0
    %2321 = vmatprep.subr.bf16.mxu0 0
    %2322 = vmatpush1.bf16.msra.mxu0 0
    %2323 = vmatprep.mubr.bf16.mxu0 0
    %2324 = vmatmul.mubr.bf16.gmra.mrb[0].mxu0 %v1381
    %v2325 = vpop.f32.mrb[0].mxu0
    %v2326 = vadd.f32 %v1999, %v2325
    %v2327 = vpop.f32.mrb[0].mxu0
    %v2328 = vadd.f32 %v2003, %v2327
    %v2329 = vpop.f32.mrb[0].mxu0
    %v2330 = vpop.f32.mrb[0].mxu0
    %2331 = vdwg.mxu0
    %2332 = vmatprep.subr.bf16.mxu0 %v2105
    %2333 = vmatpush1.bf16.msra.mxu0 %v2104
    %2334 = vmatprep.subr.bf16.mxu0 %v2109
    %2335 = vmatpush1.bf16.msra.mxu0 %v2108
    %2336 = vmatprep.subr.bf16.mxu0 %v2113
    %2337 = vmatpush1.bf16.msra.mxu0 %v2112
    %2338 = vmatprep.subr.bf16.mxu0 %v2117
    %2339 = vmatpush1.bf16.msra.mxu0 %v2116
    %2340 = vmatprep.subr.bf16.mxu0 %v2121
    %2341 = vmatpush1.bf16.msra.mxu0 %v2120
    %2342 = vmatprep.subr.bf16.mxu0 %v2125
    %2343 = vmatpush1.bf16.msra.mxu0 %v2124
    %2344 = vmatprep.subr.bf16.mxu0 %v2129
    %2345 = vmatpush1.bf16.msra.mxu0 %v2128
    %2346 = vmatprep.subr.bf16.mxu0 %v2133
    %2347 = vmatpush1.bf16.msra.mxu0 %v2132
    %2348 = vmatprep.subr.bf16.mxu0 0
    %2349 = vmatpush1.bf16.msra.mxu0 0
    %2350 = vmatprep.subr.bf16.mxu0 0
    %2351 = vmatpush1.bf16.msra.mxu0 0
    %2352 = vmatprep.subr.bf16.mxu0 0
    %2353 = vmatpush1.bf16.msra.mxu0 0
    %2354 = vmatprep.subr.bf16.mxu0 0
    %2355 = vmatpush1.bf16.msra.mxu0 0
    %2356 = vmatprep.subr.bf16.mxu0 0
    %2357 = vmatpush1.bf16.msra.mxu0 0
    %2358 = vmatprep.subr.bf16.mxu0 0
    %2359 = vmatpush1.bf16.msra.mxu0 0
    %2360 = vmatprep.subr.bf16.mxu0 0
    %2361 = vmatpush1.bf16.msra.mxu0 0
    %2362 = vmatprep.subr.bf16.mxu0 0
    %2363 = vmatpush1.bf16.msra.mxu0 0
    %2364 = vmatprep.mubr.bf16.mxu0 0
    %2365 = vmatmul.mubr.bf16.gmra.mrb[0].mxu0 %v1489
    %v2366 = vpop.f32.mrb[0].mxu0
    %v2367 = vadd.f32 %v1991, %v2366
    %v2368 = vpop.f32.mrb[0].mxu0
    %v2369 = vadd.f32 %v1995, %v2368
    %v2370 = vpop.f32.mrb[0].mxu0
    %v2371 = vpop.f32.mrb[0].mxu0
    %2372 = vdwg.mxu0
    %2373 = vmatprep.subr.bf16.mxu0 %v2107
    %2374 = vmatpush1.bf16.msra.mxu0 %v2106
    %2375 = vmatprep.subr.bf16.mxu0 %v2111
    %2376 = vmatpush1.bf16.msra.mxu0 %v2110
    %2377 = vmatprep.subr.bf16.mxu0 %v2115
    %2378 = vmatpush1.bf16.msra.mxu0 %v2114
    %2379 = vmatprep.subr.bf16.mxu0 %v2119
    %2380 = vmatpush1.bf16.msra.mxu0 %v2118
    %2381 = vmatprep.subr.bf16.mxu0 %v2123
    %2382 = vmatpush1.bf16.msra.mxu0 %v2122
    %2383 = vmatprep.subr.bf16.mxu0 %v2127
    %2384 = vmatpush1.bf16.msra.mxu0 %v2126
    %2385 = vmatprep.subr.bf16.mxu0 %v2131
    %2386 = vmatpush1.bf16.msra.mxu0 %v2130
    %2387 = vmatprep.subr.bf16.mxu0 %v2135
    %2388 = vmatpush1.bf16.msra.mxu0 %v2134
    %2389 = vmatprep.subr.bf16.mxu0 0
    %2390 = vmatpush1.bf16.msra.mxu0 0
    %2391 = vmatprep.subr.bf16.mxu0 0
    %2392 = vmatpush1.bf16.msra.mxu0 0
    %2393 = vmatprep.subr.bf16.mxu0 0
    %2394 = vmatpush1.bf16.msra.mxu0 0
    %2395 = vmatprep.subr.bf16.mxu0 0
    %2396 = vmatpush1.bf16.msra.mxu0 0
    %2397 = vmatprep.subr.bf16.mxu0 0
    %2398 = vmatpush1.bf16.msra.mxu0 0
    %2399 = vmatprep.subr.bf16.mxu0 0
    %2400 = vmatpush1.bf16.msra.mxu0 0
    %2401 = vmatprep.subr.bf16.mxu0 0
    %2402 = vmatpush1.bf16.msra.mxu0 0
    %2403 = vmatprep.subr.bf16.mxu0 0
    %2404 = vmatpush1.bf16.msra.mxu0 0
    %2405 = vmatprep.mubr.bf16.mxu0 0
    %2406 = vmatmul.mubr.bf16.gmra.mrb[0].mxu0 %v1489
    %v2407 = vpop.f32.mrb[0].mxu0
    %v2408 = vadd.f32 %v1999, %v2407
    %v2409 = vpop.f32.mrb[0].mxu0
    %v2410 = vadd.f32 %v2003, %v2409
    %v2411 = vpop.f32.mrb[0].mxu0
    %v2412 = vpop.f32.mrb[0].mxu0
    %2413 = vdwg.mxu0
    %2414 = vmatprep.subr.bf16.mxu0 %v2105
    %2415 = vmatpush1.bf16.msra.mxu0 %v2104
    %2416 = vmatprep.subr.bf16.mxu0 %v2109
    %2417 = vmatpush1.bf16.msra.mxu0 %v2108
    %2418 = vmatprep.subr.bf16.mxu0 %v2113
    %2419 = vmatpush1.bf16.msra.mxu0 %v2112
    %2420 = vmatprep.subr.bf16.mxu0 %v2117
    %2421 = vmatpush1.bf16.msra.mxu0 %v2116
    %2422 = vmatprep.subr.bf16.mxu0 %v2121
    %2423 = vmatpush1.bf16.msra.mxu0 %v2120
    %2424 = vmatprep.subr.bf16.mxu0 %v2125
    %2425 = vmatpush1.bf16.msra.mxu0 %v2124
    %2426 = vmatprep.subr.bf16.mxu0 %v2129
    %2427 = vmatpush1.bf16.msra.mxu0 %v2128
    %2428 = vmatprep.subr.bf16.mxu0 %v2133
    %2429 = vmatpush1.bf16.msra.mxu0 %v2132
    %2430 = vmatprep.subr.bf16.mxu0 0
    %2431 = vmatpush1.bf16.msra.mxu0 0
    %2432 = vmatprep.subr.bf16.mxu0 0
    %2433 = vmatpush1.bf16.msra.mxu0 0
    %2434 = vmatprep.subr.bf16.mxu0 0
    %2435 = vmatpush1.bf16.msra.mxu0 0
    %2436 = vmatprep.subr.bf16.mxu0 0
    %2437 = vmatpush1.bf16.msra.mxu0 0
    %2438 = vmatprep.subr.bf16.mxu0 0
    %2439 = vmatpush1.bf16.msra.mxu0 0
    %2440 = vmatprep.subr.bf16.mxu0 0
    %2441 = vmatpush1.bf16.msra.mxu0 0
    %2442 = vmatprep.subr.bf16.mxu0 0
    %2443 = vmatpush1.bf16.msra.mxu0 0
    %2444 = vmatprep.subr.bf16.mxu0 0
    %2445 = vmatpush1.bf16.msra.mxu0 0
    %2446 = vmatprep.mubr.bf16.mxu0 0
    %2447 = vmatmul.mubr.bf16.gmra.mrb[0].mxu0 %v1597
    %v2448 = vpop.f32.mrb[0].mxu0
    %v2449 = vadd.f32 %v1991, %v2448
    %v2450 = vpop.f32.mrb[0].mxu0
    %v2451 = vadd.f32 %v1995, %v2450
    %v2452 = vpop.f32.mrb[0].mxu0
    %v2453 = vpop.f32.mrb[0].mxu0
    %2454 = vdwg.mxu0
    %2455 = vmatprep.subr.bf16.mxu0 %v2107
    %2456 = vmatpush1.bf16.msra.mxu0 %v2106
    %2457 = vmatprep.subr.bf16.mxu0 %v2111
    %2458 = vmatpush1.bf16.msra.mxu0 %v2110
    %2459 = vmatprep.subr.bf16.mxu0 %v2115
    %2460 = vmatpush1.bf16.msra.mxu0 %v2114
    %2461 = vmatprep.subr.bf16.mxu0 %v2119
    %2462 = vmatpush1.bf16.msra.mxu0 %v2118
    %2463 = vmatprep.subr.bf16.mxu0 %v2123
    %2464 = vmatpush1.bf16.msra.mxu0 %v2122
    %2465 = vmatprep.subr.bf16.mxu0 %v2127
    %2466 = vmatpush1.bf16.msra.mxu0 %v2126
    %2467 = vmatprep.subr.bf16.mxu0 %v2131
    %2468 = vmatpush1.bf16.msra.mxu0 %v2130
    %2469 = vmatprep.subr.bf16.mxu0 %v2135
    %2470 = vmatpush1.bf16.msra.mxu0 %v2134
    %2471 = vmatprep.subr.bf16.mxu0 0
    %2472 = vmatpush1.bf16.msra.mxu0 0
    %2473 = vmatprep.subr.bf16.mxu0 0
    %2474 = vmatpush1.bf16.msra.mxu0 0
    %2475 = vmatprep.subr.bf16.mxu0 0
    %2476 = vmatpush1.bf16.msra.mxu0 0
    %2477 = vmatprep.subr.bf16.mxu0 0
    %2478 = vmatpush1.bf16.msra.mxu0 0
    %2479 = vmatprep.subr.bf16.mxu0 0
    %2480 = vmatpush1.bf16.msra.mxu0 0
    %2481 = vmatprep.subr.bf16.mxu0 0
    %2482 = vmatpush1.bf16.msra.mxu0 0
    %2483 = vmatprep.subr.bf16.mxu0 0
    %2484 = vmatpush1.bf16.msra.mxu0 0
    %2485 = vmatprep.subr.bf16.mxu0 0
    %2486 = vmatpush1.bf16.msra.mxu0 0
    %2487 = vmatprep.mubr.bf16.mxu0 0
    %2488 = vmatmul.mubr.bf16.gmra.mrb[0].mxu0 %v1597
    %v2489 = vpop.f32.mrb[0].mxu0
    %v2490 = vadd.f32 %v1999, %v2489
    %v2491 = vpop.f32.mrb[0].mxu0
    %v2492 = vadd.f32 %v2003, %v2491
    %v2493 = vpop.f32.mrb[0].mxu0
    %v2494 = vpop.f32.mrb[0].mxu0
    %2495 = vdwg.mxu0
    %2496 = vmatprep.subr.bf16.mxu0 %v2105
    %2497 = vmatpush1.bf16.msra.mxu0 %v2104
    %2498 = vmatprep.subr.bf16.mxu0 %v2109
    %2499 = vmatpush1.bf16.msra.mxu0 %v2108
    %2500 = vmatprep.subr.bf16.mxu0 %v2113
    %2501 = vmatpush1.bf16.msra.mxu0 %v2112
    %2502 = vmatprep.subr.bf16.mxu0 %v2117
    %2503 = vmatpush1.bf16.msra.mxu0 %v2116
    %2504 = vmatprep.subr.bf16.mxu0 %v2121
    %2505 = vmatpush1.bf16.msra.mxu0 %v2120
    %2506 = vmatprep.subr.bf16.mxu0 %v2125
    %2507 = vmatpush1.bf16.msra.mxu0 %v2124
    %2508 = vmatprep.subr.bf16.mxu0 %v2129
    %2509 = vmatpush1.bf16.msra.mxu0 %v2128
    %2510 = vmatprep.subr.bf16.mxu0 %v2133
    %2511 = vmatpush1.bf16.msra.mxu0 %v2132
    %2512 = vmatprep.subr.bf16.mxu0 0
    %2513 = vmatpush1.bf16.msra.mxu0 0
    %2514 = vmatprep.subr.bf16.mxu0 0
    %2515 = vmatpush1.bf16.msra.mxu0 0
    %2516 = vmatprep.subr.bf16.mxu0 0
    %2517 = vmatpush1.bf16.msra.mxu0 0
    %2518 = vmatprep.subr.bf16.mxu0 0
    %2519 = vmatpush1.bf16.msra.mxu0 0
    %2520 = vmatprep.subr.bf16.mxu0 0
    %2521 = vmatpush1.bf16.msra.mxu0 0
    %2522 = vmatprep.subr.bf16.mxu0 0
    %2523 = vmatpush1.bf16.msra.mxu0 0
    %2524 = vmatprep.subr.bf16.mxu0 0
    %2525 = vmatpush1.bf16.msra.mxu0 0
    %2526 = vmatprep.subr.bf16.mxu0 0
    %2527 = vmatpush1.bf16.msra.mxu0 0
    %2528 = vmatprep.mubr.bf16.mxu0 0
    %2529 = vmatmul.mubr.bf16.gmra.mrb[0].mxu0 %v1705
    %v2530 = vpop.f32.mrb[0].mxu0
    %v2531 = vadd.f32 %v1991, %v2530
    %v2532 = vpop.f32.mrb[0].mxu0
    %v2533 = vadd.f32 %v1995, %v2532
    %v2534 = vpop.f32.mrb[0].mxu0
    %v2535 = vpop.f32.mrb[0].mxu0
    %2536 = vdwg.mxu0
    %2537 = vmatprep.subr.bf16.mxu0 %v2107
    %2538 = vmatpush1.bf16.msra.mxu0 %v2106
    %2539 = vmatprep.subr.bf16.mxu0 %v2111
    %2540 = vmatpush1.bf16.msra.mxu0 %v2110
    %2541 = vmatprep.subr.bf16.mxu0 %v2115
    %2542 = vmatpush1.bf16.msra.mxu0 %v2114
    %2543 = vmatprep.subr.bf16.mxu0 %v2119
    %2544 = vmatpush1.bf16.msra.mxu0 %v2118
    %2545 = vmatprep.subr.bf16.mxu0 %v2123
    %2546 = vmatpush1.bf16.msra.mxu0 %v2122
    %2547 = vmatprep.subr.bf16.mxu0 %v2127
    %2548 = vmatpush1.bf16.msra.mxu0 %v2126
    %2549 = vmatprep.subr.bf16.mxu0 %v2131
    %2550 = vmatpush1.bf16.msra.mxu0 %v2130
    %2551 = vmatprep.subr.bf16.mxu0 %v2135
    %2552 = vmatpush1.bf16.msra.mxu0 %v2134
    %2553 = vmatprep.subr.bf16.mxu0 0
    %2554 = vmatpush1.bf16.msra.mxu0 0
    %2555 = vmatprep.subr.bf16.mxu0 0
    %2556 = vmatpush1.bf16.msra.mxu0 0
    %2557 = vmatprep.subr.bf16.mxu0 0
    %2558 = vmatpush1.bf16.msra.mxu0 0
    %2559 = vmatprep.subr.bf16.mxu0 0
    %2560 = vmatpush1.bf16.msra.mxu0 0
    %2561 = vmatprep.subr.bf16.mxu0 0
    %2562 = vmatpush1.bf16.msra.mxu0 0
    %2563 = vmatprep.subr.bf16.mxu0 0
    %2564 = vmatpush1.bf16.msra.mxu0 0
    %2565 = vmatprep.subr.bf16.mxu0 0
    %2566 = vmatpush1.bf16.msra.mxu0 0
    %2567 = vmatprep.subr.bf16.mxu0 0
    %2568 = vmatpush1.bf16.msra.mxu0 0
    %2569 = vmatprep.mubr.bf16.mxu0 0
    %2570 = vmatmul.mubr.bf16.gmra.mrb[0].mxu0 %v1705
    %v2571 = vpop.f32.mrb[0].mxu0
    %v2572 = vadd.f32 %v1999, %v2571
    %v2573 = vpop.f32.mrb[0].mxu0
    %v2574 = vadd.f32 %v2003, %v2573
    %v2575 = vpop.f32.mrb[0].mxu0
    %v2576 = vpop.f32.mrb[0].mxu0
    %2577 = vdwg.mxu0
    %2578 = vmatprep.subr.bf16.mxu0 %v2105
    %2579 = vmatpush1.bf16.msra.mxu0 %v2104
    %2580 = vmatprep.subr.bf16.mxu0 %v2109
    %2581 = vmatpush1.bf16.msra.mxu0 %v2108
    %2582 = vmatprep.subr.bf16.mxu0 %v2113
    %2583 = vmatpush1.bf16.msra.mxu0 %v2112
    %2584 = vmatprep.subr.bf16.mxu0 %v2117
    %2585 = vmatpush1.bf16.msra.mxu0 %v2116
    %2586 = vmatprep.subr.bf16.mxu0 %v2121
    %2587 = vmatpush1.bf16.msra.mxu0 %v2120
    %2588 = vmatprep.subr.bf16.mxu0 %v2125
    %2589 = vmatpush1.bf16.msra.mxu0 %v2124
    %2590 = vmatprep.subr.bf16.mxu0 %v2129
    %2591 = vmatpush1.bf16.msra.mxu0 %v2128
    %2592 = vmatprep.subr.bf16.mxu0 %v2133
    %2593 = vmatpush1.bf16.msra.mxu0 %v2132
    %2594 = vmatprep.subr.bf16.mxu0 0
    %2595 = vmatpush1.bf16.msra.mxu0 0
    %2596 = vmatprep.subr.bf16.mxu0 0
    %2597 = vmatpush1.bf16.msra.mxu0 0
    %2598 = vmatprep.subr.bf16.mxu0 0
    %2599 = vmatpush1.bf16.msra.mxu0 0
    %2600 = vmatprep.subr.bf16.mxu0 0
    %2601 = vmatpush1.bf16.msra.mxu0 0
    %2602 = vmatprep.subr.bf16.mxu0 0
    %2603 = vmatpush1.bf16.msra.mxu0 0
    %2604 = vmatprep.subr.bf16.mxu0 0
    %2605 = vmatpush1.bf16.msra.mxu0 0
    %2606 = vmatprep.subr.bf16.mxu0 0
    %2607 = vmatpush1.bf16.msra.mxu0 0
    %2608 = vmatprep.subr.bf16.mxu0 0
    %2609 = vmatpush1.bf16.msra.mxu0 0
    %2610 = vmatprep.mubr.bf16.mxu0 0
    %2611 = vmatmul.mubr.bf16.gmra.mrb[0].mxu0 %v1813
    %v2612 = vpop.f32.mrb[0].mxu0
    %v2613 = vadd.f32 %v1991, %v2612
    %v2614 = vpop.f32.mrb[0].mxu0
    %v2615 = vadd.f32 %v1995, %v2614
    %v2616 = vpop.f32.mrb[0].mxu0
    %v2617 = vpop.f32.mrb[0].mxu0
    %2618 = vdwg.mxu0
    %2619 = vmatprep.subr.bf16.mxu0 %v2107
    %2620 = vmatpush1.bf16.msra.mxu0 %v2106
    %2621 = vmatprep.subr.bf16.mxu0 %v2111
    %2622 = vmatpush1.bf16.msra.mxu0 %v2110
    %2623 = vmatprep.subr.bf16.mxu0 %v2115
    %2624 = vmatpush1.bf16.msra.mxu0 %v2114
    %2625 = vmatprep.subr.bf16.mxu0 %v2119
    %2626 = vmatpush1.bf16.msra.mxu0 %v2118
    %2627 = vmatprep.subr.bf16.mxu0 %v2123
    %2628 = vmatpush1.bf16.msra.mxu0 %v2122
    %2629 = vmatprep.subr.bf16.mxu0 %v2127
    %2630 = vmatpush1.bf16.msra.mxu0 %v2126
    %2631 = vmatprep.subr.bf16.mxu0 %v2131
    %2632 = vmatpush1.bf16.msra.mxu0 %v2130
    %2633 = vmatprep.subr.bf16.mxu0 %v2135
    %2634 = vmatpush1.bf16.msra.mxu0 %v2134
    %2635 = vmatprep.subr.bf16.mxu0 0
    %2636 = vmatpush1.bf16.msra.mxu0 0
    %2637 = vmatprep.subr.bf16.mxu0 0
    %2638 = vmatpush1.bf16.msra.mxu0 0
    %2639 = vmatprep.subr.bf16.mxu0 0
    %2640 = vmatpush1.bf16.msra.mxu0 0
    %2641 = vmatprep.subr.bf16.mxu0 0
    %2642 = vmatpush1.bf16.msra.mxu0 0
    %2643 = vmatprep.subr.bf16.mxu0 0
    %2644 = vmatpush1.bf16.msra.mxu0 0
    %2645 = vmatprep.subr.bf16.mxu0 0
    %2646 = vmatpush1.bf16.msra.mxu0 0
    %2647 = vmatprep.subr.bf16.mxu0 0
    %2648 = vmatpush1.bf16.msra.mxu0 0
    %2649 = vmatprep.subr.bf16.mxu0 0
    %2650 = vmatpush1.bf16.msra.mxu0 0
    %2651 = vmatprep.mubr.bf16.mxu0 0
    %2652 = vmatmul.mubr.bf16.gmra.mrb[0].mxu0 %v1813
    %v2653 = vpop.f32.mrb[0].mxu0
    %v2654 = vadd.f32 %v1999, %v2653
    %v2655 = vpop.f32.mrb[0].mxu0
    %v2656 = vadd.f32 %v2003, %v2655
    %v2657 = vpop.f32.mrb[0].mxu0
    %v2658 = vpop.f32.mrb[0].mxu0
    %2659 = vdwg.mxu0
    %2660 = vmatprep.subr.bf16.mxu0 %v2105
    %2661 = vmatpush1.bf16.msra.mxu0 %v2104
    %2662 = vmatprep.subr.bf16.mxu0 %v2109
    %2663 = vmatpush1.bf16.msra.mxu0 %v2108
    %2664 = vmatprep.subr.bf16.mxu0 %v2113
    %2665 = vmatpush1.bf16.msra.mxu0 %v2112
    %2666 = vmatprep.subr.bf16.mxu0 %v2117
    %2667 = vmatpush1.bf16.msra.mxu0 %v2116
    %2668 = vmatprep.subr.bf16.mxu0 %v2121
    %2669 = vmatpush1.bf16.msra.mxu0 %v2120
    %2670 = vmatprep.subr.bf16.mxu0 %v2125
    %2671 = vmatpush1.bf16.msra.mxu0 %v2124
    %2672 = vmatprep.subr.bf16.mxu0 %v2129
    %2673 = vmatpush1.bf16.msra.mxu0 %v2128
    %2674 = vmatprep.subr.bf16.mxu0 %v2133
    %2675 = vmatpush1.bf16.msra.mxu0 %v2132
    %2676 = vmatprep.subr.bf16.mxu0 0
    %2677 = vmatpush1.bf16.msra.mxu0 0
    %2678 = vmatprep.subr.bf16.mxu0 0
    %2679 = vmatpush1.bf16.msra.mxu0 0
    %2680 = vmatprep.subr.bf16.mxu0 0
    %2681 = vmatpush1.bf16.msra.mxu0 0
    %2682 = vmatprep.subr.bf16.mxu0 0
    %2683 = vmatpush1.bf16.msra.mxu0 0
    %2684 = vmatprep.subr.bf16.mxu0 0
    %2685 = vmatpush1.bf16.msra.mxu0 0
    %2686 = vmatprep.subr.bf16.mxu0 0
    %2687 = vmatpush1.bf16.msra.mxu0 0
    %2688 = vmatprep.subr.bf16.mxu0 0
    %2689 = vmatpush1.bf16.msra.mxu0 0
    %2690 = vmatprep.subr.bf16.mxu0 0
    %2691 = vmatpush1.bf16.msra.mxu0 0
    %2692 = vmatprep.mubr.bf16.mxu0 0
    %2693 = vmatmul.mubr.bf16.gmra.mrb[0].mxu0 %v1921
    %v2694 = vpop.f32.mrb[0].mxu0
    %v2695 = vadd.f32 %v1991, %v2694
    %v2696 = vpop.f32.mrb[0].mxu0
    %v2697 = vadd.f32 %v1995, %v2696
    %v2698 = vpop.f32.mrb[0].mxu0
    %v2699 = vpop.f32.mrb[0].mxu0
    %2700 = vdwg.mxu0
    %2701 = vmatprep.subr.bf16.mxu0 %v2107
    %2702 = vmatpush1.bf16.msra.mxu0 %v2106
    %2703 = vmatprep.subr.bf16.mxu0 %v2111
    %2704 = vmatpush1.bf16.msra.mxu0 %v2110
    %2705 = vmatprep.subr.bf16.mxu0 %v2115
    %2706 = vmatpush1.bf16.msra.mxu0 %v2114
    %2707 = vmatprep.subr.bf16.mxu0 %v2119
    %2708 = vmatpush1.bf16.msra.mxu0 %v2118
    %2709 = vmatprep.subr.bf16.mxu0 %v2123
    %2710 = vmatpush1.bf16.msra.mxu0 %v2122
    %2711 = vmatprep.subr.bf16.mxu0 %v2127
    %2712 = vmatpush1.bf16.msra.mxu0 %v2126
    %2713 = vmatprep.subr.bf16.mxu0 %v2131
    %2714 = vmatpush1.bf16.msra.mxu0 %v2130
    %2715 = vmatprep.subr.bf16.mxu0 %v2135
    %2716 = vmatpush1.bf16.msra.mxu0 %v2134
    %2717 = vmatprep.subr.bf16.mxu0 0
    %2718 = vmatpush1.bf16.msra.mxu0 0
    %2719 = vmatprep.subr.bf16.mxu0 0
    %2720 = vmatpush1.bf16.msra.mxu0 0
    %2721 = vmatprep.subr.bf16.mxu0 0
    %2722 = vmatpush1.bf16.msra.mxu0 0
    %2723 = vmatprep.subr.bf16.mxu0 0
    %2724 = vmatpush1.bf16.msra.mxu0 0
    %2725 = vmatprep.subr.bf16.mxu0 0
    %2726 = vmatpush1.bf16.msra.mxu0 0
    %2727 = vmatprep.subr.bf16.mxu0 0
    %2728 = vmatpush1.bf16.msra.mxu0 0
    %2729 = vmatprep.subr.bf16.mxu0 0
    %2730 = vmatpush1.bf16.msra.mxu0 0
    %2731 = vmatprep.subr.bf16.mxu0 0
    %2732 = vmatpush1.bf16.msra.mxu0 0
    %2733 = vmatprep.mubr.bf16.mxu0 0
    %2734 = vmatmul.mubr.bf16.gmra.mrb[0].mxu0 %v1921
    %v2735 = vpop.f32.mrb[0].mxu0
    %v2736 = vadd.f32 %v1999, %v2735
    %v2737 = vpop.f32.mrb[0].mxu0
    %v2738 = vadd.f32 %v2003, %v2737
    %v2739 = vpop.f32.mrb[0].mxu0
    %v2740 = vpop.f32.mrb[0].mxu0
    %2741 = vdwg.mxu0
    %v2774 = vunpack.c.l.b16 %v1954
    %v2775 = vunpack.c.h.b16 %v1954
    %v2776 = vunpack.c.l.b16 %v1955
    %v2777 = vunpack.c.h.b16 %v1955
    %v2778 = vunpack.c.l.b16 %v1956
    %v2779 = vunpack.c.h.b16 %v1956
    %v2780 = vunpack.c.l.b16 %v1957
    %v2781 = vunpack.c.h.b16 %v1957
    %v2782 = vunpack.c.l.b16 %v1958
    %v2783 = vunpack.c.h.b16 %v1958
    %v2784 = vunpack.c.l.b16 %v1959
    %v2785 = vunpack.c.h.b16 %v1959
    %v2786 = vunpack.c.l.b16 %v1960
    %v2787 = vunpack.c.h.b16 %v1960
    %v2788 = vunpack.c.l.b16 %v1961
    %v2789 = vunpack.c.h.b16 %v1961
    %v2790 = vunpack.c.l.b16 %v1962
    %v2791 = vunpack.c.h.b16 %v1962
    %v2792 = vunpack.c.l.b16 %v1963
    %v2793 = vunpack.c.h.b16 %v1963
    %v2794 = vunpack.c.l.b16 %v1964
    %v2795 = vunpack.c.h.b16 %v1964
    %v2796 = vunpack.c.l.b16 %v1965
    %v2797 = vunpack.c.h.b16 %v1965
    %v2798 = vunpack.c.l.b16 %v1966
    %v2799 = vunpack.c.h.b16 %v1966
    %v2800 = vunpack.c.l.b16 %v1967
    %v2801 = vunpack.c.h.b16 %v1967
    %v2802 = vunpack.c.l.b16 %v1968
    %v2803 = vunpack.c.h.b16 %v1968
    %v2804 = vunpack.c.l.b16 %v1969
    %v2805 = vunpack.c.h.b16 %v1969
    %v2806 = vunpack.c.l.b16 %v1970
    %v2807 = vunpack.c.h.b16 %v1970
    %v2808 = vunpack.c.l.b16 %v1971
    %v2809 = vunpack.c.h.b16 %v1971
    %v2810 = vunpack.c.l.b16 %v1972
    %v2811 = vunpack.c.h.b16 %v1972
    %v2812 = vunpack.c.l.b16 %v1973
    %v2813 = vunpack.c.h.b16 %v1973
    %v2814 = vunpack.c.l.b16 %v1974
    %v2815 = vunpack.c.h.b16 %v1974
    %v2816 = vunpack.c.l.b16 %v1975
    %v2817 = vunpack.c.h.b16 %v1975
    %v2818 = vunpack.c.l.b16 %v1976
    %v2819 = vunpack.c.h.b16 %v1976
    %v2820 = vunpack.c.l.b16 %v1977
    %v2821 = vunpack.c.h.b16 %v1977
    %v2822 = vunpack.c.l.b16 %v1978
    %v2823 = vunpack.c.h.b16 %v1978
    %v2824 = vunpack.c.l.b16 %v1979
    %v2825 = vunpack.c.h.b16 %v1979
    %v2826 = vunpack.c.l.b16 %v1980
    %v2827 = vunpack.c.h.b16 %v1980
    %v2828 = vunpack.c.l.b16 %v1981
    %v2829 = vunpack.c.h.b16 %v1981
    %v2830 = vunpack.c.l.b16 %v1982
    %v2831 = vunpack.c.h.b16 %v1982
    %v2832 = vunpack.c.l.b16 %v1983
    %v2833 = vunpack.c.h.b16 %v1983
    %v2834 = vunpack.c.l.b16 %v1984
    %v2835 = vunpack.c.h.b16 %v1984
    %v2836 = vunpack.c.l.b16 %v1985
    %v2837 = vunpack.c.h.b16 %v1985
    %v2838 = vpack.c.b16 %v2778, %v2774
    %v2839 = vpack.c.b16 %v2779, %v2775
    %v2840 = vpack.c.b16 %v2780, %v2776
    %v2841 = vpack.c.b16 %v2781, %v2777
    %v2842 = vpack.c.b16 %v2786, %v2782
    %v2843 = vpack.c.b16 %v2787, %v2783
    %v2844 = vpack.c.b16 %v2788, %v2784
    %v2845 = vpack.c.b16 %v2789, %v2785
    %v2846 = vpack.c.b16 %v2794, %v2790
    %v2847 = vpack.c.b16 %v2795, %v2791
    %v2848 = vpack.c.b16 %v2796, %v2792
    %v2849 = vpack.c.b16 %v2797, %v2793
    %v2850 = vpack.c.b16 %v2802, %v2798
    %v2851 = vpack.c.b16 %v2803, %v2799
    %v2852 = vpack.c.b16 %v2804, %v2800
    %v2853 = vpack.c.b16 %v2805, %v2801
    %v2854 = vpack.c.b16 %v2810, %v2806
    %v2855 = vpack.c.b16 %v2811, %v2807
    %v2856 = vpack.c.b16 %v2812, %v2808
    %v2857 = vpack.c.b16 %v2813, %v2809
    %v2858 = vpack.c.b16 %v2818, %v2814
    %v2859 = vpack.c.b16 %v2819, %v2815
    %v2860 = vpack.c.b16 %v2820, %v2816
    %v2861 = vpack.c.b16 %v2821, %v2817
    %v2862 = vpack.c.b16 %v2826, %v2822
    %v2863 = vpack.c.b16 %v2827, %v2823
    %v2864 = vpack.c.b16 %v2828, %v2824
    %v2865 = vpack.c.b16 %v2829, %v2825
    %v2866 = vpack.c.b16 %v2834, %v2830
    %v2867 = vpack.c.b16 %v2835, %v2831
    %v2868 = vpack.c.b16 %v2836, %v2832
    %v2869 = vpack.c.b16 %v2837, %v2833
    %2902 = vmatprep.subr.bf16.mxu0 %v2839
    %2903 = vmatpush1.bf16.msra.mxu0 %v2838
    %2904 = vmatprep.subr.bf16.mxu0 %v2843
    %2905 = vmatpush1.bf16.msra.mxu0 %v2842
    %2906 = vmatprep.subr.bf16.mxu0 %v2847
    %2907 = vmatpush1.bf16.msra.mxu0 %v2846
    %2908 = vmatprep.subr.bf16.mxu0 %v2851
    %2909 = vmatpush1.bf16.msra.mxu0 %v2850
    %2910 = vmatprep.subr.bf16.mxu0 %v2855
    %2911 = vmatpush1.bf16.msra.mxu0 %v2854
    %2912 = vmatprep.subr.bf16.mxu0 %v2859
    %2913 = vmatpush1.bf16.msra.mxu0 %v2858
    %2914 = vmatprep.subr.bf16.mxu0 %v2863
    %2915 = vmatpush1.bf16.msra.mxu0 %v2862
    %2916 = vmatprep.subr.bf16.mxu0 %v2867
    %2917 = vmatpush1.bf16.msra.mxu0 %v2866
    %2918 = vmatprep.subr.bf16.mxu0 0
    %2919 = vmatpush1.bf16.msra.mxu0 0
    %2920 = vmatprep.subr.bf16.mxu0 0
    %2921 = vmatpush1.bf16.msra.mxu0 0
    %2922 = vmatprep.subr.bf16.mxu0 0
    %2923 = vmatpush1.bf16.msra.mxu0 0
    %2924 = vmatprep.subr.bf16.mxu0 0
    %2925 = vmatpush1.bf16.msra.mxu0 0
    %2926 = vmatprep.subr.bf16.mxu0 0
    %2927 = vmatpush1.bf16.msra.mxu0 0
    %2928 = vmatprep.subr.bf16.mxu0 0
    %2929 = vmatpush1.bf16.msra.mxu0 0
    %2930 = vmatprep.subr.bf16.mxu0 0
    %2931 = vmatpush1.bf16.msra.mxu0 0
    %2932 = vmatprep.subr.bf16.mxu0 0
    %2933 = vmatpush1.bf16.msra.mxu0 0
    %2934 = vmatprep.mubr.bf16.mxu0 0
    %2935 = vmatmul.mubr.bf16.gmra.mrb[0].mxu0 0
    %v2936 = vpop.f32.mrb[0].mxu0
    %v2937 = vadd.f32 0.0, %v2936
    %v2938 = vpop.f32.mrb[0].mxu0
    %v2939 = vadd.f32 0.0, %v2938
    %v2940 = vpop.f32.mrb[0].mxu0
    %v2941 = vpop.f32.mrb[0].mxu0
    %2942 = vdwg.mxu0
    %2943 = vmatprep.subr.bf16.mxu0 %v2841
    %2944 = vmatpush1.bf16.msra.mxu0 %v2840
    %2945 = vmatprep.subr.bf16.mxu0 %v2845
    %2946 = vmatpush1.bf16.msra.mxu0 %v2844
    %2947 = vmatprep.subr.bf16.mxu0 %v2849
    %2948 = vmatpush1.bf16.msra.mxu0 %v2848
    %2949 = vmatprep.subr.bf16.mxu0 %v2853
    %2950 = vmatpush1.bf16.msra.mxu0 %v2852
    %2951 = vmatprep.subr.bf16.mxu0 %v2857
    %2952 = vmatpush1.bf16.msra.mxu0 %v2856
    %2953 = vmatprep.subr.bf16.mxu0 %v2861
    %2954 = vmatpush1.bf16.msra.mxu0 %v2860
    %2955 = vmatprep.subr.bf16.mxu0 %v2865
    %2956 = vmatpush1.bf16.msra.mxu0 %v2864
    %2957 = vmatprep.subr.bf16.mxu0 %v2869
    %2958 = vmatpush1.bf16.msra.mxu0 %v2868
    %2959 = vmatprep.subr.bf16.mxu0 0
    %2960 = vmatpush1.bf16.msra.mxu0 0
    %2961 = vmatprep.subr.bf16.mxu0 0
    %2962 = vmatpush1.bf16.msra.mxu0 0
    %2963 = vmatprep.subr.bf16.mxu0 0
    %2964 = vmatpush1.bf16.msra.mxu0 0
    %2965 = vmatprep.subr.bf16.mxu0 0
    %2966 = vmatpush1.bf16.msra.mxu0 0
    %2967 = vmatprep.subr.bf16.mxu0 0
    %2968 = vmatpush1.bf16.msra.mxu0 0
    %2969 = vmatprep.subr.bf16.mxu0 0
    %2970 = vmatpush1.bf16.msra.mxu0 0
    %2971 = vmatprep.subr.bf16.mxu0 0
    %2972 = vmatpush1.bf16.msra.mxu0 0
    %2973 = vmatprep.subr.bf16.mxu0 0
    %2974 = vmatpush1.bf16.msra.mxu0 0
    %2975 = vmatprep.mubr.bf16.mxu0 0
    %2976 = vmatmul.mubr.bf16.gmra.mrb[0].mxu0 0
    %v2977 = vpop.f32.mrb[0].mxu0
    %v2978 = vadd.f32 0.0, %v2977
    %v2979 = vpop.f32.mrb[0].mxu0
    %v2980 = vadd.f32 0.0, %v2979
    %v2981 = vpop.f32.mrb[0].mxu0
    %v2982 = vpop.f32.mrb[0].mxu0
    %2983 = vdwg.mxu0
    %v2984 = vadd.f32 %v2203, %v2937
    %v2985 = vadd.f32 %v2205, %v2939
    %v2986 = vadd.f32 %v2244, %v2978
    %v2987 = vadd.f32 %v2246, %v2980
    %v2988 = vsub.f32 0.0, %v2984
    %v2989 = vmul.f32 %v2988, 1.442695
    %v2990 = vpow.pop %v2989
    %v2991 = vadd.f32 %v2990, 1.0
    %v2992 = vrcp.pop %v2991
    %v2993 = vsub.f32 0.0, %v2985
    %v2994 = vmul.f32 %v2993, 1.442695
    %v2995 = vpow.pop %v2994
    %v2996 = vadd.f32 %v2995, 1.0
    %v2997 = vrcp.pop %v2996
    %v2998 = vtanh.pop %v2986
    %v2999 = vsub.f32 0.0, %v2987
    %v3000 = vmul.f32 %v2999, 1.442695
    %v3001 = vpow.pop %v3000
    %v3002 = vadd.f32 %v3001, 1.0
    %v3003 = vrcp.pop %v3002
    %v3004 = vmul.f32 %v2997, 0.0
    %v3005 = vmul.f32 %v2992, %v2998
    %v3006 = vadd.f32 %v3004, %v3005
    %v3007 = vtanh.pop %v3006
    %v3008 = vmul.f32 %v3003, %v3007
    %v3009 = vpack.c.bf16 %v3008, %v3008
    %3010 = vmatprep.subr.bf16.mxu0 %v2839
    %3011 = vmatpush1.bf16.msra.mxu0 %v2838
    %3012 = vmatprep.subr.bf16.mxu0 %v2843
    %3013 = vmatpush1.bf16.msra.mxu0 %v2842
    %3014 = vmatprep.subr.bf16.mxu0 %v2847
    %3015 = vmatpush1.bf16.msra.mxu0 %v2846
    %3016 = vmatprep.subr.bf16.mxu0 %v2851
    %3017 = vmatpush1.bf16.msra.mxu0 %v2850
    %3018 = vmatprep.subr.bf16.mxu0 %v2855
    %3019 = vmatpush1.bf16.msra.mxu0 %v2854
    %3020 = vmatprep.subr.bf16.mxu0 %v2859
    %3021 = vmatpush1.bf16.msra.mxu0 %v2858
    %3022 = vmatprep.subr.bf16.mxu0 %v2863
    %3023 = vmatpush1.bf16.msra.mxu0 %v2862
    %3024 = vmatprep.subr.bf16.mxu0 %v2867
    %3025 = vmatpush1.bf16.msra.mxu0 %v2866
    %3026 = vmatprep.subr.bf16.mxu0 0
    %3027 = vmatpush1.bf16.msra.mxu0 0
    %3028 = vmatprep.subr.bf16.mxu0 0
    %3029 = vmatpush1.bf16.msra.mxu0 0
    %3030 = vmatprep.subr.bf16.mxu0 0
    %3031 = vmatpush1.bf16.msra.mxu0 0
    %3032 = vmatprep.subr.bf16.mxu0 0
    %3033 = vmatpush1.bf16.msra.mxu0 0
    %3034 = vmatprep.subr.bf16.mxu0 0
    %3035 = vmatpush1.bf16.msra.mxu0 0
    %3036 = vmatprep.subr.bf16.mxu0 0
    %3037 = vmatpush1.bf16.msra.mxu0 0
    %3038 = vmatprep.subr.bf16.mxu0 0
    %3039 = vmatpush1.bf16.msra.mxu0 0
    %3040 = vmatprep.subr.bf16.mxu0 0
    %3041 = vmatpush1.bf16.msra.mxu0 0
    %3042 = vmatprep.mubr.bf16.mxu0 0
    %3043 = vmatmul.mubr.bf16.gmra.mrb[0].mxu0 %v3009
    %v3044 = vpop.f32.mrb[0].mxu0
    %v3045 = vadd.f32 0.0, %v3044
    %v3046 = vpop.f32.mrb[0].mxu0
    %v3047 = vadd.f32 0.0, %v3046
    %v3048 = vpop.f32.mrb[0].mxu0
    %v3049 = vpop.f32.mrb[0].mxu0
    %3050 = vdwg.mxu0
    %3051 = vmatprep.subr.bf16.mxu0 %v2841
    %3052 = vmatpush1.bf16.msra.mxu0 %v2840
    %3053 = vmatprep.subr.bf16.mxu0 %v2845
    %3054 = vmatpush1.bf16.msra.mxu0 %v2844
    %3055 = vmatprep.subr.bf16.mxu0 %v2849
    %3056 = vmatpush1.bf16.msra.mxu0 %v2848
    %3057 = vmatprep.subr.bf16.mxu0 %v2853
    %3058 = vmatpush1.bf16.msra.mxu0 %v2852
    %3059 = vmatprep.subr.bf16.mxu0 %v2857
    %3060 = vmatpush1.bf16.msra.mxu0 %v2856
    %3061 = vmatprep.subr.bf16.mxu0 %v2861
    %3062 = vmatpush1.bf16.msra.mxu0 %v2860
    %3063 = vmatprep.subr.bf16.mxu0 %v2865
    %3064 = vmatpush1.bf16.msra.mxu0 %v2864
    %3065 = vmatprep.subr.bf16.mxu0 %v2869
    %3066 = vmatpush1.bf16.msra.mxu0 %v2868
    %3067 = vmatprep.subr.bf16.mxu0 0
    %3068 = vmatpush1.bf16.msra.mxu0 0
    %3069 = vmatprep.subr.bf16.mxu0 0
    %3070 = vmatpush1.bf16.msra.mxu0 0
    %3071 = vmatprep.subr.bf16.mxu0 0
    %3072 = vmatpush1.bf16.msra.mxu0 0
    %3073 = vmatprep.subr.bf16.mxu0 0
    %3074 = vmatpush1.bf16.msra.mxu0 0
    %3075 = vmatprep.subr.bf16.mxu0 0
    %3076 = vmatpush1.bf16.msra.mxu0 0
    %3077 = vmatprep.subr.bf16.mxu0 0
    %3078 = vmatpush1.bf16.msra.mxu0 0
    %3079 = vmatprep.subr.bf16.mxu0 0
    %3080 = vmatpush1.bf16.msra.mxu0 0
    %3081 = vmatprep.subr.bf16.mxu0 0
    %3082 = vmatpush1.bf16.msra.mxu0 0
    %3083 = vmatprep.mubr.bf16.mxu0 0
    %3084 = vmatmul.mubr.bf16.gmra.mrb[0].mxu0 %v3009
    %v3085 = vpop.f32.mrb[0].mxu0
    %v3086 = vadd.f32 0.0, %v3085
    %v3087 = vpop.f32.mrb[0].mxu0
    %v3088 = vadd.f32 0.0, %v3087
    %v3089 = vpop.f32.mrb[0].mxu0
    %v3090 = vpop.f32.mrb[0].mxu0
    %3091 = vdwg.mxu0
    %v3092 = vadd.f32 %v2285, %v3045
    %v3093 = vadd.f32 %v2287, %v3047
    %v3094 = vadd.f32 %v2326, %v3086
    %v3095 = vadd.f32 %v2328, %v3088
    %v3096 = vsub.f32 0.0, %v3092
    %v3097 = vmul.f32 %v3096, 1.442695
    %v3098 = vpow.pop %v3097
    %v3099 = vadd.f32 %v3098, 1.0
    %v3100 = vrcp.pop %v3099
    %v3101 = vsub.f32 0.0, %v3093
    %v3102 = vmul.f32 %v3101, 1.442695
    %v3103 = vpow.pop %v3102
    %v3104 = vadd.f32 %v3103, 1.0
    %v3105 = vrcp.pop %v3104
    %v3106 = vtanh.pop %v3094
    %v3107 = vsub.f32 0.0, %v3095
    %v3108 = vmul.f32 %v3107, 1.442695
    %v3109 = vpow.pop %v3108
    %v3110 = vadd.f32 %v3109, 1.0
    %v3111 = vrcp.pop %v3110
    %v3112 = vmul.f32 %v3105, %v3006
    %v3113 = vmul.f32 %v3100, %v3106
    %v3114 = vadd.f32 %v3112, %v3113
    %v3115 = vtanh.pop %v3114
    %v3116 = vmul.f32 %v3111, %v3115
    %v3117 = vpack.c.bf16 %v3116, %v3116
    %3118 = vmatprep.subr.bf16.mxu0 %v2839
    %3119 = vmatpush1.bf16.msra.mxu0 %v2838
    %3120 = vmatprep.subr.bf16.mxu0 %v2843
    %3121 = vmatpush1.bf16.msra.mxu0 %v2842
    %3122 = vmatprep.subr.bf16.mxu0 %v2847
    %3123 = vmatpush1.bf16.msra.mxu0 %v2846
    %3124 = vmatprep.subr.bf16.mxu0 %v2851
    %3125 = vmatpush1.bf16.msra.mxu0 %v2850
    %3126 = vmatprep.subr.bf16.mxu0 %v2855
    %3127 = vmatpush1.bf16.msra.mxu0 %v2854
    %3128 = vmatprep.subr.bf16.mxu0 %v2859
    %3129 = vmatpush1.bf16.msra.mxu0 %v2858
    %3130 = vmatprep.subr.bf16.mxu0 %v2863
    %3131 = vmatpush1.bf16.msra.mxu0 %v2862
    %3132 = vmatprep.subr.bf16.mxu0 %v2867
    %3133 = vmatpush1.bf16.msra.mxu0 %v2866
    %3134 = vmatprep.subr.bf16.mxu0 0
    %3135 = vmatpush1.bf16.msra.mxu0 0
    %3136 = vmatprep.subr.bf16.mxu0 0
    %3137 = vmatpush1.bf16.msra.mxu0 0
    %3138 = vmatprep.subr.bf16.mxu0 0
    %3139 = vmatpush1.bf16.msra.mxu0 0
    %3140 = vmatprep.subr.bf16.mxu0 0
    %3141 = vmatpush1.bf16.msra.mxu0 0
    %3142 = vmatprep.subr.bf16.mxu0 0
    %3143 = vmatpush1.bf16.msra.mxu0 0
    %3144 = vmatprep.subr.bf16.mxu0 0
    %3145 = vmatpush1.bf16.msra.mxu0 0
    %3146 = vmatprep.subr.bf16.mxu0 0
    %3147 = vmatpush1.bf16.msra.mxu0 0
    %3148 = vmatprep.subr.bf16.mxu0 0
    %3149 = vmatpush1.bf16.msra.mxu0 0
    %3150 = vmatprep.mubr.bf16.mxu0 0
    %3151 = vmatmul.mubr.bf16.gmra.mrb[0].mxu0 %v3117
    %v3152 = vpop.f32.mrb[0].mxu0
    %v3153 = vadd.f32 0.0, %v3152
    %v3154 = vpop.f32.mrb[0].mxu0
    %v3155 = vadd.f32 0.0, %v3154
    %v3156 = vpop.f32.mrb[0].mxu0
    %v3157 = vpop.f32.mrb[0].mxu0
    %3158 = vdwg.mxu0
    %3159 = vmatprep.subr.bf16.mxu0 %v2841
    %3160 = vmatpush1.bf16.msra.mxu0 %v2840
    %3161 = vmatprep.subr.bf16.mxu0 %v2845
    %3162 = vmatpush1.bf16.msra.mxu0 %v2844
    %3163 = vmatprep.subr.bf16.mxu0 %v2849
    %3164 = vmatpush1.bf16.msra.mxu0 %v2848
    %3165 = vmatprep.subr.bf16.mxu0 %v2853
    %3166 = vmatpush1.bf16.msra.mxu0 %v2852
    %3167 = vmatprep.subr.bf16.mxu0 %v2857
    %3168 = vmatpush1.bf16.msra.mxu0 %v2856
    %3169 = vmatprep.subr.bf16.mxu0 %v2861
    %3170 = vmatpush1.bf16.msra.mxu0 %v2860
    %3171 = vmatprep.subr.bf16.mxu0 %v2865
    %3172 = vmatpush1.bf16.msra.mxu0 %v2864
    %3173 = vmatprep.subr.bf16.mxu0 %v2869
    %3174 = vmatpush1.bf16.msra.mxu0 %v2868
    %3175 = vmatprep.subr.bf16.mxu0 0
    %3176 = vmatpush1.bf16.msra.mxu0 0
    %3177 = vmatprep.subr.bf16.mxu0 0
    %3178 = vmatpush1.bf16.msra.mxu0 0
    %3179 = vmatprep.subr.bf16.mxu0 0
    %3180 = vmatpush1.bf16.msra.mxu0 0
    %3181 = vmatprep.subr.bf16.mxu0 0
    %3182 = vmatpush1.bf16.msra.mxu0 0
    %3183 = vmatprep.subr.bf16.mxu0 0
    %3184 = vmatpush1.bf16.msra.mxu0 0
    %3185 = vmatprep.subr.bf16.mxu0 0
    %3186 = vmatpush1.bf16.msra.mxu0 0
    %3187 = vmatprep.subr.bf16.mxu0 0
    %3188 = vmatpush1.bf16.msra.mxu0 0
    %3189 = vmatprep.subr.bf16.mxu0 0
    %3190 = vmatpush1.bf16.msra.mxu0 0
    %3191 = vmatprep.mubr.bf16.mxu0 0
    %3192 = vmatmul.mubr.bf16.gmra.mrb[0].mxu0 %v3117
    %v3193 = vpop.f32.mrb[0].mxu0
    %v3194 = vadd.f32 0.0, %v3193
    %v3195 = vpop.f32.mrb[0].mxu0
    %v3196 = vadd.f32 0.0, %v3195
    %v3197 = vpop.f32.mrb[0].mxu0
    %v3198 = vpop.f32.mrb[0].mxu0
    %3199 = vdwg.mxu0
    %v3200 = vadd.f32 %v2367, %v3153
    %v3201 = vadd.f32 %v2369, %v3155
    %v3202 = vadd.f32 %v2408, %v3194
    %v3203 = vadd.f32 %v2410, %v3196
    %v3204 = vsub.f32 0.0, %v3200
    %v3205 = vmul.f32 %v3204, 1.442695
    %v3206 = vpow.pop %v3205
    %v3207 = vadd.f32 %v3206, 1.0
    %v3208 = vrcp.pop %v3207
    %v3209 = vsub.f32 0.0, %v3201
    %v3210 = vmul.f32 %v3209, 1.442695
    %v3211 = vpow.pop %v3210
    %v3212 = vadd.f32 %v3211, 1.0
    %v3213 = vrcp.pop %v3212
    %v3214 = vtanh.pop %v3202
    %v3215 = vsub.f32 0.0, %v3203
    %v3216 = vmul.f32 %v3215, 1.442695
    %v3217 = vpow.pop %v3216
    %v3218 = vadd.f32 %v3217, 1.0
    %v3219 = vrcp.pop %v3218
    %v3220 = vmul.f32 %v3213, %v3114
    %v3221 = vmul.f32 %v3208, %v3214
    %v3222 = vadd.f32 %v3220, %v3221
    %v3223 = vtanh.pop %v3222
    %v3224 = vmul.f32 %v3219, %v3223
    %v3225 = vpack.c.bf16 %v3224, %v3224
    %3226 = vmatprep.subr.bf16.mxu0 %v2839
    %3227 = vmatpush1.bf16.msra.mxu0 %v2838
    %3228 = vmatprep.subr.bf16.mxu0 %v2843
    %3229 = vmatpush1.bf16.msra.mxu0 %v2842
    %3230 = vmatprep.subr.bf16.mxu0 %v2847
    %3231 = vmatpush1.bf16.msra.mxu0 %v2846
    %3232 = vmatprep.subr.bf16.mxu0 %v2851
    %3233 = vmatpush1.bf16.msra.mxu0 %v2850
    %3234 = vmatprep.subr.bf16.mxu0 %v2855
    %3235 = vmatpush1.bf16.msra.mxu0 %v2854
    %3236 = vmatprep.subr.bf16.mxu0 %v2859
    %3237 = vmatpush1.bf16.msra.mxu0 %v2858
    %3238 = vmatprep.subr.bf16.mxu0 %v2863
    %3239 = vmatpush1.bf16.msra.mxu0 %v2862
    %3240 = vmatprep.subr.bf16.mxu0 %v2867
    %3241 = vmatpush1.bf16.msra.mxu0 %v2866
    %3242 = vmatprep.subr.bf16.mxu0 0
    %3243 = vmatpush1.bf16.msra.mxu0 0
    %3244 = vmatprep.subr.bf16.mxu0 0
    %3245 = vmatpush1.bf16.msra.mxu0 0
    %3246 = vmatprep.subr.bf16.mxu0 0
    %3247 = vmatpush1.bf16.msra.mxu0 0
    %3248 = vmatprep.subr.bf16.mxu0 0
    %3249 = vmatpush1.bf16.msra.mxu0 0
    %3250 = vmatprep.subr.bf16.mxu0 0
    %3251 = vmatpush1.bf16.msra.mxu0 0
    %3252 = vmatprep.subr.bf16.mxu0 0
    %3253 = vmatpush1.bf16.msra.mxu0 0
    %3254 = vmatprep.subr.bf16.mxu0 0
    %3255 = vmatpush1.bf16.msra.mxu0 0
    %3256 = vmatprep.subr.bf16.mxu0 0
    %3257 = vmatpush1.bf16.msra.mxu0 0
    %3258 = vmatprep.mubr.bf16.mxu0 0
    %3259 = vmatmul.mubr.bf16.gmra.mrb[0].mxu0 %v3225
    %v3260 = vpop.f32.mrb[0].mxu0
    %v3261 = vadd.f32 0.0, %v3260
    %v3262 = vpop.f32.mrb[0].mxu0
    %v3263 = vadd.f32 0.0, %v3262
    %v3264 = vpop.f32.mrb[0].mxu0
    %v3265 = vpop.f32.mrb[0].mxu0
    %3266 = vdwg.mxu0
    %3267 = vmatprep.subr.bf16.mxu0 %v2841
    %3268 = vmatpush1.bf16.msra.mxu0 %v2840
    %3269 = vmatprep.subr.bf16.mxu0 %v2845
    %3270 = vmatpush1.bf16.msra.mxu0 %v2844
    %3271 = vmatprep.subr.bf16.mxu0 %v2849
    %3272 = vmatpush1.bf16.msra.mxu0 %v2848
    %3273 = vmatprep.subr.bf16.mxu0 %v2853
    %3274 = vmatpush1.bf16.msra.mxu0 %v2852
    %3275 = vmatprep.subr.bf16.mxu0 %v2857
    %3276 = vmatpush1.bf16.msra.mxu0 %v2856
    %3277 = vmatprep.subr.bf16.mxu0 %v2861
    %3278 = vmatpush1.bf16.msra.mxu0 %v2860
    %3279 = vmatprep.subr.bf16.mxu0 %v2865
    %3280 = vmatpush1.bf16.msra.mxu0 %v2864
    %3281 = vmatprep.subr.bf16.mxu0 %v2869
    %3282 = vmatpush1.bf16.msra.mxu0 %v2868
    %3283 = vmatprep.subr.bf16.mxu0 0
    %3284 = vmatpush1.bf16.msra.mxu0 0
    %3285 = vmatprep.subr.bf16.mxu0 0
    %3286 = vmatpush1.bf16.msra.mxu0 0
    %3287 = vmatprep.subr.bf16.mxu0 0
    %3288 = vmatpush1.bf16.msra.mxu0 0
    %3289 = vmatprep.subr.bf16.mxu0 0
    %3290 = vmatpush1.bf16.msra.mxu0 0
    %3291 = vmatprep.subr.bf16.mxu0 0
    %3292 = vmatpush1.bf16.msra.mxu0 0
    %3293 = vmatprep.subr.bf16.mxu0 0
    %3294 = vmatpush1.bf16.msra.mxu0 0
    %3295 = vmatprep.subr.bf16.mxu0 0
    %3296 = vmatpush1.bf16.msra.mxu0 0
    %3297 = vmatprep.subr.bf16.mxu0 0
    %3298 = vmatpush1.bf16.msra.mxu0 0
    %3299 = vmatprep.mubr.bf16.mxu0 0
    %3300 = vmatmul.mubr.bf16.gmra.mrb[0].mxu0 %v3225
    %v3301 = vpop.f32.mrb[0].mxu0
    %v3302 = vadd.f32 0.0, %v3301
    %v3303 = vpop.f32.mrb[0].mxu0
    %v3304 = vadd.f32 0.0, %v3303
    %v3305 = vpop.f32.mrb[0].mxu0
    %v3306 = vpop.f32.mrb[0].mxu0
    %3307 = vdwg.mxu0
    %v3308 = vadd.f32 %v2449, %v3261
    %v3309 = vadd.f32 %v2451, %v3263
    %v3310 = vadd.f32 %v2490, %v3302
    %v3311 = vadd.f32 %v2492, %v3304
    %v3312 = vsub.f32 0.0, %v3308
    %v3313 = vmul.f32 %v3312, 1.442695
    %v3314 = vpow.pop %v3313
    %v3315 = vadd.f32 %v3314, 1.0
    %v3316 = vrcp.pop %v3315
    %v3317 = vsub.f32 0.0, %v3309
    %v3318 = vmul.f32 %v3317, 1.442695
    %v3319 = vpow.pop %v3318
    %v3320 = vadd.f32 %v3319, 1.0
    %v3321 = vrcp.pop %v3320
    %v3322 = vtanh.pop %v3310
    %v3323 = vsub.f32 0.0, %v3311
    %v3324 = vmul.f32 %v3323, 1.442695
    %v3325 = vpow.pop %v3324
    %v3326 = vadd.f32 %v3325, 1.0
    %v3327 = vrcp.pop %v3326
    %v3328 = vmul.f32 %v3321, %v3222
    %v3329 = vmul.f32 %v3316, %v3322
    %v3330 = vadd.f32 %v3328, %v3329
    %v3331 = vtanh.pop %v3330
    %v3332 = vmul.f32 %v3327, %v3331
    %v3333 = vpack.c.bf16 %v3332, %v3332
    %3334 = vmatprep.subr.bf16.mxu0 %v2839
    %3335 = vmatpush1.bf16.msra.mxu0 %v2838
    %3336 = vmatprep.subr.bf16.mxu0 %v2843
    %3337 = vmatpush1.bf16.msra.mxu0 %v2842
    %3338 = vmatprep.subr.bf16.mxu0 %v2847
    %3339 = vmatpush1.bf16.msra.mxu0 %v2846
    %3340 = vmatprep.subr.bf16.mxu0 %v2851
    %3341 = vmatpush1.bf16.msra.mxu0 %v2850
    %3342 = vmatprep.subr.bf16.mxu0 %v2855
    %3343 = vmatpush1.bf16.msra.mxu0 %v2854
    %3344 = vmatprep.subr.bf16.mxu0 %v2859
    %3345 = vmatpush1.bf16.msra.mxu0 %v2858
    %3346 = vmatprep.subr.bf16.mxu0 %v2863
    %3347 = vmatpush1.bf16.msra.mxu0 %v2862
    %3348 = vmatprep.subr.bf16.mxu0 %v2867
    %3349 = vmatpush1.bf16.msra.mxu0 %v2866
    %3350 = vmatprep.subr.bf16.mxu0 0
    %3351 = vmatpush1.bf16.msra.mxu0 0
    %3352 = vmatprep.subr.bf16.mxu0 0
    %3353 = vmatpush1.bf16.msra.mxu0 0
    %3354 = vmatprep.subr.bf16.mxu0 0
    %3355 = vmatpush1.bf16.msra.mxu0 0
    %3356 = vmatprep.subr.bf16.mxu0 0
    %3357 = vmatpush1.bf16.msra.mxu0 0
    %3358 = vmatprep.subr.bf16.mxu0 0
    %3359 = vmatpush1.bf16.msra.mxu0 0
    %3360 = vmatprep.subr.bf16.mxu0 0
    %3361 = vmatpush1.bf16.msra.mxu0 0
    %3362 = vmatprep.subr.bf16.mxu0 0
    %3363 = vmatpush1.bf16.msra.mxu0 0
    %3364 = vmatprep.subr.bf16.mxu0 0
    %3365 = vmatpush1.bf16.msra.mxu0 0
    %3366 = vmatprep.mubr.bf16.mxu0 0
    %3367 = vmatmul.mubr.bf16.gmra.mrb[0].mxu0 %v3333
    %v3368 = vpop.f32.mrb[0].mxu0
    %v3369 = vadd.f32 0.0, %v3368
    %v3370 = vpop.f32.mrb[0].mxu0
    %v3371 = vadd.f32 0.0, %v3370
    %v3372 = vpop.f32.mrb[0].mxu0
    %v3373 = vpop.f32.mrb[0].mxu0
    %3374 = vdwg.mxu0
    %3375 = vmatprep.subr.bf16.mxu0 %v2841
    %3376 = vmatpush1.bf16.msra.mxu0 %v2840
    %3377 = vmatprep.subr.bf16.mxu0 %v2845
    %3378 = vmatpush1.bf16.msra.mxu0 %v2844
    %3379 = vmatprep.subr.bf16.mxu0 %v2849
    %3380 = vmatpush1.bf16.msra.mxu0 %v2848
    %3381 = vmatprep.subr.bf16.mxu0 %v2853
    %3382 = vmatpush1.bf16.msra.mxu0 %v2852
    %3383 = vmatprep.subr.bf16.mxu0 %v2857
    %3384 = vmatpush1.bf16.msra.mxu0 %v2856
    %3385 = vmatprep.subr.bf16.mxu0 %v2861
    %3386 = vmatpush1.bf16.msra.mxu0 %v2860
    %3387 = vmatprep.subr.bf16.mxu0 %v2865
    %3388 = vmatpush1.bf16.msra.mxu0 %v2864
    %3389 = vmatprep.subr.bf16.mxu0 %v2869
    %3390 = vmatpush1.bf16.msra.mxu0 %v2868
    %3391 = vmatprep.subr.bf16.mxu0 0
    %3392 = vmatpush1.bf16.msra.mxu0 0
    %3393 = vmatprep.subr.bf16.mxu0 0
    %3394 = vmatpush1.bf16.msra.mxu0 0
    %3395 = vmatprep.subr.bf16.mxu0 0
    %3396 = vmatpush1.bf16.msra.mxu0 0
    %3397 = vmatprep.subr.bf16.mxu0 0
    %3398 = vmatpush1.bf16.msra.mxu0 0
    %3399 = vmatprep.subr.bf16.mxu0 0
    %3400 = vmatpush1.bf16.msra.mxu0 0
    %3401 = vmatprep.subr.bf16.mxu0 0
    %3402 = vmatpush1.bf16.msra.mxu0 0
    %3403 = vmatprep.subr.bf16.mxu0 0
    %3404 = vmatpush1.bf16.msra.mxu0 0
    %3405 = vmatprep.subr.bf16.mxu0 0
    %3406 = vmatpush1.bf16.msra.mxu0 0
    %3407 = vmatprep.mubr.bf16.mxu0 0
    %3408 = vmatmul.mubr.bf16.gmra.mrb[0].mxu0 %v3333
    %v3409 = vpop.f32.mrb[0].mxu0
    %v3410 = vadd.f32 0.0, %v3409
    %v3411 = vpop.f32.mrb[0].mxu0
    %v3412 = vadd.f32 0.0, %v3411
    %v3413 = vpop.f32.mrb[0].mxu0
    %v3414 = vpop.f32.mrb[0].mxu0
    %3415 = vdwg.mxu0
    %v3416 = vadd.f32 %v2531, %v3369
    %v3417 = vadd.f32 %v2533, %v3371
    %v3418 = vadd.f32 %v2572, %v3410
    %v3419 = vadd.f32 %v2574, %v3412
    %v3420 = vsub.f32 0.0, %v3416
    %v3421 = vmul.f32 %v3420, 1.442695
    %v3422 = vpow.pop %v3421
    %v3423 = vadd.f32 %v3422, 1.0
    %v3424 = vrcp.pop %v3423
    %v3425 = vsub.f32 0.0, %v3417
    %v3426 = vmul.f32 %v3425, 1.442695
    %v3427 = vpow.pop %v3426
    %v3428 = vadd.f32 %v3427, 1.0
    %v3429 = vrcp.pop %v3428
    %v3430 = vtanh.pop %v3418
    %v3431 = vsub.f32 0.0, %v3419
    %v3432 = vmul.f32 %v3431, 1.442695
    %v3433 = vpow.pop %v3432
    %v3434 = vadd.f32 %v3433, 1.0
    %v3435 = vrcp.pop %v3434
    %v3436 = vmul.f32 %v3429, %v3330
    %v3437 = vmul.f32 %v3424, %v3430
    %v3438 = vadd.f32 %v3436, %v3437
    %v3439 = vtanh.pop %v3438
    %v3440 = vmul.f32 %v3435, %v3439
    %v3441 = vpack.c.bf16 %v3440, %v3440
    %3442 = vmatprep.subr.bf16.mxu0 %v2839
    %3443 = vmatpush1.bf16.msra.mxu0 %v2838
    %3444 = vmatprep.subr.bf16.mxu0 %v2843
    %3445 = vmatpush1.bf16.msra.mxu0 %v2842
    %3446 = vmatprep.subr.bf16.mxu0 %v2847
    %3447 = vmatpush1.bf16.msra.mxu0 %v2846
    %3448 = vmatprep.subr.bf16.mxu0 %v2851
    %3449 = vmatpush1.bf16.msra.mxu0 %v2850
    %3450 = vmatprep.subr.bf16.mxu0 %v2855
    %3451 = vmatpush1.bf16.msra.mxu0 %v2854
    %3452 = vmatprep.subr.bf16.mxu0 %v2859
    %3453 = vmatpush1.bf16.msra.mxu0 %v2858
    %3454 = vmatprep.subr.bf16.mxu0 %v2863
    %3455 = vmatpush1.bf16.msra.mxu0 %v2862
    %3456 = vmatprep.subr.bf16.mxu0 %v2867
    %3457 = vmatpush1.bf16.msra.mxu0 %v2866
    %3458 = vmatprep.subr.bf16.mxu0 0
    %3459 = vmatpush1.bf16.msra.mxu0 0
    %3460 = vmatprep.subr.bf16.mxu0 0
    %3461 = vmatpush1.bf16.msra.mxu0 0
    %3462 = vmatprep.subr.bf16.mxu0 0
    %3463 = vmatpush1.bf16.msra.mxu0 0
    %3464 = vmatprep.subr.bf16.mxu0 0
    %3465 = vmatpush1.bf16.msra.mxu0 0
    %3466 = vmatprep.subr.bf16.mxu0 0
    %3467 = vmatpush1.bf16.msra.mxu0 0
    %3468 = vmatprep.subr.bf16.mxu0 0
    %3469 = vmatpush1.bf16.msra.mxu0 0
    %3470 = vmatprep.subr.bf16.mxu0 0
    %3471 = vmatpush1.bf16.msra.mxu0 0
    %3472 = vmatprep.subr.bf16.mxu0 0
    %3473 = vmatpush1.bf16.msra.mxu0 0
    %3474 = vmatprep.mubr.bf16.mxu0 0
    %3475 = vmatmul.mubr.bf16.gmra.mrb[0].mxu0 %v3441
    %v3476 = vpop.f32.mrb[0].mxu0
    %v3477 = vadd.f32 0.0, %v3476
    %v3478 = vpop.f32.mrb[0].mxu0
    %v3479 = vadd.f32 0.0, %v3478
    %v3480 = vpop.f32.mrb[0].mxu0
    %v3481 = vpop.f32.mrb[0].mxu0
    %3482 = vdwg.mxu0
    %3483 = vmatprep.subr.bf16.mxu0 %v2841
    %3484 = vmatpush1.bf16.msra.mxu0 %v2840
    %3485 = vmatprep.subr.bf16.mxu0 %v2845
    %3486 = vmatpush1.bf16.msra.mxu0 %v2844
    %3487 = vmatprep.subr.bf16.mxu0 %v2849
    %3488 = vmatpush1.bf16.msra.mxu0 %v2848
    %3489 = vmatprep.subr.bf16.mxu0 %v2853
    %3490 = vmatpush1.bf16.msra.mxu0 %v2852
    %3491 = vmatprep.subr.bf16.mxu0 %v2857
    %3492 = vmatpush1.bf16.msra.mxu0 %v2856
    %3493 = vmatprep.subr.bf16.mxu0 %v2861
    %3494 = vmatpush1.bf16.msra.mxu0 %v2860
    %3495 = vmatprep.subr.bf16.mxu0 %v2865
    %3496 = vmatpush1.bf16.msra.mxu0 %v2864
    %3497 = vmatprep.subr.bf16.mxu0 %v2869
    %3498 = vmatpush1.bf16.msra.mxu0 %v2868
    %3499 = vmatprep.subr.bf16.mxu0 0
    %3500 = vmatpush1.bf16.msra.mxu0 0
    %3501 = vmatprep.subr.bf16.mxu0 0
    %3502 = vmatpush1.bf16.msra.mxu0 0
    %3503 = vmatprep.subr.bf16.mxu0 0
    %3504 = vmatpush1.bf16.msra.mxu0 0
    %3505 = vmatprep.subr.bf16.mxu0 0
    %3506 = vmatpush1.bf16.msra.mxu0 0
    %3507 = vmatprep.subr.bf16.mxu0 0
    %3508 = vmatpush1.bf16.msra.mxu0 0
    %3509 = vmatprep.subr.bf16.mxu0 0
    %3510 = vmatpush1.bf16.msra.mxu0 0
    %3511 = vmatprep.subr.bf16.mxu0 0
    %3512 = vmatpush1.bf16.msra.mxu0 0
    %3513 = vmatprep.subr.bf16.mxu0 0
    %3514 = vmatpush1.bf16.msra.mxu0 0
    %3515 = vmatprep.mubr.bf16.mxu0 0
    %3516 = vmatmul.mubr.bf16.gmra.mrb[0].mxu0 %v3441
    %v3517 = vpop.f32.mrb[0].mxu0
    %v3518 = vadd.f32 0.0, %v3517
    %v3519 = vpop.f32.mrb[0].mxu0
    %v3520 = vadd.f32 0.0, %v3519
    %v3521 = vpop.f32.mrb[0].mxu0
    %v3522 = vpop.f32.mrb[0].mxu0
    %3523 = vdwg.mxu0
    %v3524 = vadd.f32 %v2613, %v3477
    %v3525 = vadd.f32 %v2615, %v3479
    %v3526 = vadd.f32 %v2654, %v3518
    %v3527 = vadd.f32 %v2656, %v3520
    %v3528 = vsub.f32 0.0, %v3524
    %v3529 = vmul.f32 %v3528, 1.442695
    %v3530 = vpow.pop %v3529
    %v3531 = vadd.f32 %v3530, 1.0
    %v3532 = vrcp.pop %v3531
    %v3533 = vsub.f32 0.0, %v3525
    %v3534 = vmul.f32 %v3533, 1.442695
    %v3535 = vpow.pop %v3534
    %v3536 = vadd.f32 %v3535, 1.0
    %v3537 = vrcp.pop %v3536
    %v3538 = vtanh.pop %v3526
    %v3539 = vsub.f32 0.0, %v3527
    %v3540 = vmul.f32 %v3539, 1.442695
    %v3541 = vpow.pop %v3540
    %v3542 = vadd.f32 %v3541, 1.0
    %v3543 = vrcp.pop %v3542
    %v3544 = vmul.f32 %v3537, %v3438
    %v3545 = vmul.f32 %v3532, %v3538
    %v3546 = vadd.f32 %v3544, %v3545
    %v3547 = vtanh.pop %v3546
    %v3548 = vmul.f32 %v3543, %v3547
    %v3549 = vpack.c.bf16 %v3548, %v3548
    %3550 = vmatprep.subr.bf16.mxu0 %v2839
    %3551 = vmatpush1.bf16.msra.mxu0 %v2838
    %3552 = vmatprep.subr.bf16.mxu0 %v2843
    %3553 = vmatpush1.bf16.msra.mxu0 %v2842
    %3554 = vmatprep.subr.bf16.mxu0 %v2847
    %3555 = vmatpush1.bf16.msra.mxu0 %v2846
    %3556 = vmatprep.subr.bf16.mxu0 %v2851
    %3557 = vmatpush1.bf16.msra.mxu0 %v2850
    %3558 = vmatprep.subr.bf16.mxu0 %v2855
    %3559 = vmatpush1.bf16.msra.mxu0 %v2854
    %3560 = vmatprep.subr.bf16.mxu0 %v2859
    %3561 = vmatpush1.bf16.msra.mxu0 %v2858
    %3562 = vmatprep.subr.bf16.mxu0 %v2863
    %3563 = vmatpush1.bf16.msra.mxu0 %v2862
    %3564 = vmatprep.subr.bf16.mxu0 %v2867
    %3565 = vmatpush1.bf16.msra.mxu0 %v2866
    %3566 = vmatprep.subr.bf16.mxu0 0
    %3567 = vmatpush1.bf16.msra.mxu0 0
    %3568 = vmatprep.subr.bf16.mxu0 0
    %3569 = vmatpush1.bf16.msra.mxu0 0
    %3570 = vmatprep.subr.bf16.mxu0 0
    %3571 = vmatpush1.bf16.msra.mxu0 0
    %3572 = vmatprep.subr.bf16.mxu0 0
    %3573 = vmatpush1.bf16.msra.mxu0 0
    %3574 = vmatprep.subr.bf16.mxu0 0
    %3575 = vmatpush1.bf16.msra.mxu0 0
    %3576 = vmatprep.subr.bf16.mxu0 0
    %3577 = vmatpush1.bf16.msra.mxu0 0
    %3578 = vmatprep.subr.bf16.mxu0 0
    %3579 = vmatpush1.bf16.msra.mxu0 0
    %3580 = vmatprep.subr.bf16.mxu0 0
    %3581 = vmatpush1.bf16.msra.mxu0 0
    %3582 = vmatprep.mubr.bf16.mxu0 0
    %3583 = vmatmul.mubr.bf16.gmra.mrb[0].mxu0 %v3549
    %v3584 = vpop.f32.mrb[0].mxu0
    %v3585 = vadd.f32 0.0, %v3584
    %v3586 = vpop.f32.mrb[0].mxu0
    %v3587 = vadd.f32 0.0, %v3586
    %v3588 = vpop.f32.mrb[0].mxu0
    %v3589 = vpop.f32.mrb[0].mxu0
    %3590 = vdwg.mxu0
    %3591 = vmatprep.subr.bf16.mxu0 %v2841
    %3592 = vmatpush1.bf16.msra.mxu0 %v2840
    %3593 = vmatprep.subr.bf16.mxu0 %v2845
    %3594 = vmatpush1.bf16.msra.mxu0 %v2844
    %3595 = vmatprep.subr.bf16.mxu0 %v2849
    %3596 = vmatpush1.bf16.msra.mxu0 %v2848
    %3597 = vmatprep.subr.bf16.mxu0 %v2853
    %3598 = vmatpush1.bf16.msra.mxu0 %v2852
    %3599 = vmatprep.subr.bf16.mxu0 %v2857
    %3600 = vmatpush1.bf16.msra.mxu0 %v2856
    %3601 = vmatprep.subr.bf16.mxu0 %v2861
    %3602 = vmatpush1.bf16.msra.mxu0 %v2860
    %3603 = vmatprep.subr.bf16.mxu0 %v2865
    %3604 = vmatpush1.bf16.msra.mxu0 %v2864
    %3605 = vmatprep.subr.bf16.mxu0 %v2869
    %3606 = vmatpush1.bf16.msra.mxu0 %v2868
    %3607 = vmatprep.subr.bf16.mxu0 0
    %3608 = vmatpush1.bf16.msra.mxu0 0
    %3609 = vmatprep.subr.bf16.mxu0 0
    %3610 = vmatpush1.bf16.msra.mxu0 0
    %3611 = vmatprep.subr.bf16.mxu0 0
    %3612 = vmatpush1.bf16.msra.mxu0 0
    %3613 = vmatprep.subr.bf16.mxu0 0
    %3614 = vmatpush1.bf16.msra.mxu0 0
    %3615 = vmatprep.subr.bf16.mxu0 0
    %3616 = vmatpush1.bf16.msra.mxu0 0
    %3617 = vmatprep.subr.bf16.mxu0 0
    %3618 = vmatpush1.bf16.msra.mxu0 0
    %3619 = vmatprep.subr.bf16.mxu0 0
    %3620 = vmatpush1.bf16.msra.mxu0 0
    %3621 = vmatprep.subr.bf16.mxu0 0
    %3622 = vmatpush1.bf16.msra.mxu0 0
    %3623 = vmatprep.mubr.bf16.mxu0 0
    %3624 = vmatmul.mubr.bf16.gmra.mrb[0].mxu0 %v3549
    %v3625 = vpop.f32.mrb[0].mxu0
    %v3626 = vadd.f32 0.0, %v3625
    %v3627 = vpop.f32.mrb[0].mxu0
    %v3628 = vadd.f32 0.0, %v3627
    %v3629 = vpop.f32.mrb[0].mxu0
    %v3630 = vpop.f32.mrb[0].mxu0
    %3631 = vdwg.mxu0
    %v3632 = vadd.f32 %v2695, %v3585
    %v3633 = vadd.f32 %v2697, %v3587
    %v3634 = vadd.f32 %v2736, %v3626
    %v3635 = vadd.f32 %v2738, %v3628
    %v3636 = vsub.f32 0.0, %v3632
    %v3637 = vmul.f32 %v3636, 1.442695
    %v3638 = vpow.pop %v3637
    %v3639 = vadd.f32 %v3638, 1.0
    %v3640 = vrcp.pop %v3639
    %v3641 = vsub.f32 0.0, %v3633
    %v3642 = vmul.f32 %v3641, 1.442695
    %v3643 = vpow.pop %v3642
    %v3644 = vadd.f32 %v3643, 1.0
    %v3645 = vrcp.pop %v3644
    %v3646 = vtanh.pop %v3634
    %v3647 = vsub.f32 0.0, %v3635
    %v3648 = vmul.f32 %v3647, 1.442695
    %v3649 = vpow.pop %v3648
    %v3650 = vadd.f32 %v3649, 1.0
    %v3651 = vrcp.pop %v3650
    %v3652 = vmul.f32 %v3645, %v3546
    %v3653 = vmul.f32 %v3640, %v3646
    %v3654 = vadd.f32 %v3652, %v3653
    %v3655 = vtanh.pop %v3654
    %v3656 = vmul.f32 %v3651, %v3655
    %v3657 = vpack.c.bf16 %v3656, %v3656
    %v3658 = vld [vmem:[#allocation11] sm:$0xff]
    %v3659 = vld [vmem:[#allocation11 + $0x8] sm:$0xff]
    %v3660 = vld [vmem:[#allocation11 + $0x10] sm:$0xff]
    %v3661 = vld [vmem:[#allocation11 + $0x18] sm:$0xff]
    %v3662 = vld [vmem:[#allocation11 + $0x20] sm:$0xff]
    %v3663 = vld [vmem:[#allocation11 + $0x28] sm:$0xff]
    %v3664 = vld [vmem:[#allocation11 + $0x30] sm:$0xff]
    %v3665 = vld [vmem:[#allocation11 + $0x38] sm:$0xff]
    %v3666 = vld [vmem:[#allocation11 + $0x40] sm:$0xff]
    %v3667 = vld [vmem:[#allocation11 + $0x48] sm:$0xff]
    %v3668 = vld [vmem:[#allocation11 + $0x50] sm:$0xff]
    %v3669 = vld [vmem:[#allocation11 + $0x58] sm:$0xff]
    %v3670 = vld [vmem:[#allocation11 + $0x60] sm:$0xff]
    %v3671 = vld [vmem:[#allocation11 + $0x68] sm:$0xff]
    %v3672 = vld [vmem:[#allocation11 + $0x70] sm:$0xff]
    %v3673 = vld [vmem:[#allocation11 + $0x78] sm:$0xff]
    %v3674 = vld [vmem:[#allocation11 + $0x80] sm:$0xff]
    %v3675 = vld [vmem:[#allocation11 + $0x88] sm:$0xff]
    %v3676 = vld [vmem:[#allocation11 + $0x90] sm:$0xff]
    %v3677 = vld [vmem:[#allocation11 + $0x98] sm:$0xff]
    %v3678 = vld [vmem:[#allocation11 + $0xa0] sm:$0xff]
    %v3679 = vld [vmem:[#allocation11 + $0xa8] sm:$0xff]
    %v3680 = vld [vmem:[#allocation11 + $0xb0] sm:$0xff]
    %v3681 = vld [vmem:[#allocation11 + $0xb8] sm:$0xff]
    %v3682 = vld [vmem:[#allocation11 + $0xc0] sm:$0xff]
    %v3683 = vld [vmem:[#allocation11 + $0xc8] sm:$0xff]
    %v3684 = vld [vmem:[#allocation11 + $0xd0] sm:$0xff]
    %v3685 = vld [vmem:[#allocation11 + $0xd8] sm:$0xff]
    %v3686 = vld [vmem:[#allocation11 + $0xe0] sm:$0xff]
    %v3687 = vld [vmem:[#allocation11 + $0xe8] sm:$0xff]
    %v3688 = vld [vmem:[#allocation11 + $0xf0] sm:$0xff]
    %v3689 = vld [vmem:[#allocation11 + $0xf8] sm:$0xff]
    %v3690 = vld [vmem:[#allocation13] sm:$0xff]
    %v3691 = vld [vmem:[#allocation13 + $0x8] sm:$0xff]
    %v3692 = vld [vmem:[#allocation13 + $0x10] sm:$0xff]
    %v3693 = vld [vmem:[#allocation13 + $0x18] sm:$0xff]
    %v3694 = vld [vmem:[#allocation13 + $0x20] sm:$0xff]
    %v3695 = vld [vmem:[#allocation13 + $0x28] sm:$0xff]
    %v3696 = vld [vmem:[#allocation13 + $0x30] sm:$0xff]
    %v3697 = vld [vmem:[#allocation13 + $0x38] sm:$0xff]
    %v3698 = vld [vmem:[#allocation13 + $0x40] sm:$0xff]
    %v3699 = vld [vmem:[#allocation13 + $0x48] sm:$0xff]
    %v3700 = vld [vmem:[#allocation13 + $0x50] sm:$0xff]
    %v3701 = vld [vmem:[#allocation13 + $0x58] sm:$0xff]
    %v3702 = vld [vmem:[#allocation13 + $0x60] sm:$0xff]
    %v3703 = vld [vmem:[#allocation13 + $0x68] sm:$0xff]
    %v3704 = vld [vmem:[#allocation13 + $0x70] sm:$0xff]
    %v3705 = vld [vmem:[#allocation13 + $0x78] sm:$0xff]
    %v3706 = vld [vmem:[#allocation13 + $0x80] sm:$0xff]
    %v3707 = vld [vmem:[#allocation13 + $0x88] sm:$0xff]
    %v3708 = vld [vmem:[#allocation13 + $0x90] sm:$0xff]
    %v3709 = vld [vmem:[#allocation13 + $0x98] sm:$0xff]
    %v3710 = vld [vmem:[#allocation13 + $0xa0] sm:$0xff]
    %v3711 = vld [vmem:[#allocation13 + $0xa8] sm:$0xff]
    %v3712 = vld [vmem:[#allocation13 + $0xb0] sm:$0xff]
    %v3713 = vld [vmem:[#allocation13 + $0xb8] sm:$0xff]
    %v3714 = vld [vmem:[#allocation13 + $0xc0] sm:$0xff]
    %v3715 = vld [vmem:[#allocation13 + $0xc8] sm:$0xff]
    %v3716 = vld [vmem:[#allocation13 + $0xd0] sm:$0xff]
    %v3717 = vld [vmem:[#allocation13 + $0xd8] sm:$0xff]
    %v3718 = vld [vmem:[#allocation13 + $0xe0] sm:$0xff]
    %v3719 = vld [vmem:[#allocation13 + $0xe8] sm:$0xff]
    %v3720 = vld [vmem:[#allocation13 + $0xf0] sm:$0xff]
    %v3721 = vld [vmem:[#allocation13 + $0xf8] sm:$0xff]
    %v3722 = vld [vmem:[#allocation14] sm:$0xf]
    %v3724 = vlaneseq
    %v3725 = vshrl.u32 %v3724, 7
    %v3726 = vsub.s32 0, %v3725
    %v3727 = vrot.slane %v3722, %v3726
    %v3728 = vlaneseq
    %v3729 = vshrl.u32 %v3728, 7
    %v3730 = vsub.s32 1, %v3729
    %v3731 = vrot.slane %v3722, %v3730
    %v3732 = vlaneseq
    %v3733 = vshrl.u32 %v3732, 7
    %v3734 = vsub.s32 2, %v3733
    %v3735 = vrot.slane %v3722, %v3734
    %v3736 = vlaneseq
    %v3737 = vshrl.u32 %v3736, 7
    %v3738 = vsub.s32 3, %v3737
    %v3739 = vrot.slane %v3722, %v3738
    %v3776 = vunpack.c.l.b16 %v3658
    %v3777 = vunpack.c.h.b16 %v3658
    %v3778 = vunpack.c.l.b16 %v3659
    %v3779 = vunpack.c.h.b16 %v3659
    %v3780 = vunpack.c.l.b16 %v3660
    %v3781 = vunpack.c.h.b16 %v3660
    %v3782 = vunpack.c.l.b16 %v3661
    %v3783 = vunpack.c.h.b16 %v3661
    %v3784 = vunpack.c.l.b16 %v3662
    %v3785 = vunpack.c.h.b16 %v3662
    %v3786 = vunpack.c.l.b16 %v3663
    %v3787 = vunpack.c.h.b16 %v3663
    %v3788 = vunpack.c.l.b16 %v3664
    %v3789 = vunpack.c.h.b16 %v3664
    %v3790 = vunpack.c.l.b16 %v3665
    %v3791 = vunpack.c.h.b16 %v3665
    %v3792 = vunpack.c.l.b16 %v3666
    %v3793 = vunpack.c.h.b16 %v3666
    %v3794 = vunpack.c.l.b16 %v3667
    %v3795 = vunpack.c.h.b16 %v3667
    %v3796 = vunpack.c.l.b16 %v3668
    %v3797 = vunpack.c.h.b16 %v3668
    %v3798 = vunpack.c.l.b16 %v3669
    %v3799 = vunpack.c.h.b16 %v3669
    %v3800 = vunpack.c.l.b16 %v3670
    %v3801 = vunpack.c.h.b16 %v3670
    %v3802 = vunpack.c.l.b16 %v3671
    %v3803 = vunpack.c.h.b16 %v3671
    %v3804 = vunpack.c.l.b16 %v3672
    %v3805 = vunpack.c.h.b16 %v3672
    %v3806 = vunpack.c.l.b16 %v3673
    %v3807 = vunpack.c.h.b16 %v3673
    %v3808 = vunpack.c.l.b16 %v3674
    %v3809 = vunpack.c.h.b16 %v3674
    %v3810 = vunpack.c.l.b16 %v3675
    %v3811 = vunpack.c.h.b16 %v3675
    %v3812 = vunpack.c.l.b16 %v3676
    %v3813 = vunpack.c.h.b16 %v3676
    %v3814 = vunpack.c.l.b16 %v3677
    %v3815 = vunpack.c.h.b16 %v3677
    %v3816 = vunpack.c.l.b16 %v3678
    %v3817 = vunpack.c.h.b16 %v3678
    %v3818 = vunpack.c.l.b16 %v3679
    %v3819 = vunpack.c.h.b16 %v3679
    %v3820 = vunpack.c.l.b16 %v3680
    %v3821 = vunpack.c.h.b16 %v3680
    %v3822 = vunpack.c.l.b16 %v3681
    %v3823 = vunpack.c.h.b16 %v3681
    %v3824 = vunpack.c.l.b16 %v3682
    %v3825 = vunpack.c.h.b16 %v3682
    %v3826 = vunpack.c.l.b16 %v3683
    %v3827 = vunpack.c.h.b16 %v3683
    %v3828 = vunpack.c.l.b16 %v3684
    %v3829 = vunpack.c.h.b16 %v3684
    %v3830 = vunpack.c.l.b16 %v3685
    %v3831 = vunpack.c.h.b16 %v3685
    %v3832 = vunpack.c.l.b16 %v3686
    %v3833 = vunpack.c.h.b16 %v3686
    %v3834 = vunpack.c.l.b16 %v3687
    %v3835 = vunpack.c.h.b16 %v3687
    %v3836 = vunpack.c.l.b16 %v3688
    %v3837 = vunpack.c.h.b16 %v3688
    %v3838 = vunpack.c.l.b16 %v3689
    %v3839 = vunpack.c.h.b16 %v3689
    %v3840 = vpack.c.b16 %v3780, %v3776
    %v3841 = vpack.c.b16 %v3781, %v3777
    %v3842 = vpack.c.b16 %v3782, %v3778
    %v3843 = vpack.c.b16 %v3783, %v3779
    %v3844 = vpack.c.b16 %v3788, %v3784
    %v3845 = vpack.c.b16 %v3789, %v3785
    %v3846 = vpack.c.b16 %v3790, %v3786
    %v3847 = vpack.c.b16 %v3791, %v3787
    %v3848 = vpack.c.b16 %v3796, %v3792
    %v3849 = vpack.c.b16 %v3797, %v3793
    %v3850 = vpack.c.b16 %v3798, %v3794
    %v3851 = vpack.c.b16 %v3799, %v3795
    %v3852 = vpack.c.b16 %v3804, %v3800
    %v3853 = vpack.c.b16 %v3805, %v3801
    %v3854 = vpack.c.b16 %v3806, %v3802
    %v3855 = vpack.c.b16 %v3807, %v3803
    %v3856 = vpack.c.b16 %v3812, %v3808
    %v3857 = vpack.c.b16 %v3813, %v3809
    %v3858 = vpack.c.b16 %v3814, %v3810
    %v3859 = vpack.c.b16 %v3815, %v3811
    %v3860 = vpack.c.b16 %v3820, %v3816
    %v3861 = vpack.c.b16 %v3821, %v3817
    %v3862 = vpack.c.b16 %v3822, %v3818
    %v3863 = vpack.c.b16 %v3823, %v3819
    %v3864 = vpack.c.b16 %v3828, %v3824
    %v3865 = vpack.c.b16 %v3829, %v3825
    %v3866 = vpack.c.b16 %v3830, %v3826
    %v3867 = vpack.c.b16 %v3831, %v3827
    %v3868 = vpack.c.b16 %v3836, %v3832
    %v3869 = vpack.c.b16 %v3837, %v3833
    %v3870 = vpack.c.b16 %v3838, %v3834
    %v3871 = vpack.c.b16 %v3839, %v3835
    %3904 = vmatprep.subr.bf16.mxu0 %v3841
    %3905 = vmatpush1.bf16.msra.mxu0 %v3840
    %3906 = vmatprep.subr.bf16.mxu0 %v3845
    %3907 = vmatpush1.bf16.msra.mxu0 %v3844
    %3908 = vmatprep.subr.bf16.mxu0 %v3849
    %3909 = vmatpush1.bf16.msra.mxu0 %v3848
    %3910 = vmatprep.subr.bf16.mxu0 %v3853
    %3911 = vmatpush1.bf16.msra.mxu0 %v3852
    %3912 = vmatprep.subr.bf16.mxu0 %v3857
    %3913 = vmatpush1.bf16.msra.mxu0 %v3856
    %3914 = vmatprep.subr.bf16.mxu0 %v3861
    %3915 = vmatpush1.bf16.msra.mxu0 %v3860
    %3916 = vmatprep.subr.bf16.mxu0 %v3865
    %3917 = vmatpush1.bf16.msra.mxu0 %v3864
    %3918 = vmatprep.subr.bf16.mxu0 %v3869
    %3919 = vmatpush1.bf16.msra.mxu0 %v3868
    %3920 = vmatprep.subr.bf16.mxu0 0
    %3921 = vmatpush1.bf16.msra.mxu0 0
    %3922 = vmatprep.subr.bf16.mxu0 0
    %3923 = vmatpush1.bf16.msra.mxu0 0
    %3924 = vmatprep.subr.bf16.mxu0 0
    %3925 = vmatpush1.bf16.msra.mxu0 0
    %3926 = vmatprep.subr.bf16.mxu0 0
    %3927 = vmatpush1.bf16.msra.mxu0 0
    %3928 = vmatprep.subr.bf16.mxu0 0
    %3929 = vmatpush1.bf16.msra.mxu0 0
    %3930 = vmatprep.subr.bf16.mxu0 0
    %3931 = vmatpush1.bf16.msra.mxu0 0
    %3932 = vmatprep.subr.bf16.mxu0 0
    %3933 = vmatpush1.bf16.msra.mxu0 0
    %3934 = vmatprep.subr.bf16.mxu0 0
    %3935 = vmatpush1.bf16.msra.mxu0 0
    %3936 = vmatprep.mubr.bf16.mxu0 0
    %3937 = vmatmul.mubr.bf16.gmra.mrb[0].mxu0 %v3009
    %v3938 = vpop.f32.mrb[0].mxu0
    %v3939 = vadd.f32 %v3727, %v3938
    %v3940 = vpop.f32.mrb[0].mxu0
    %v3941 = vadd.f32 %v3731, %v3940
    %v3942 = vpop.f32.mrb[0].mxu0
    %v3943 = vpop.f32.mrb[0].mxu0
    %3944 = vdwg.mxu0
    %3945 = vmatprep.subr.bf16.mxu0 %v3843
    %3946 = vmatpush1.bf16.msra.mxu0 %v3842
    %3947 = vmatprep.subr.bf16.mxu0 %v3847
    %3948 = vmatpush1.bf16.msra.mxu0 %v3846
    %3949 = vmatprep.subr.bf16.mxu0 %v3851
    %3950 = vmatpush1.bf16.msra.mxu0 %v3850
    %3951 = vmatprep.subr.bf16.mxu0 %v3855
    %3952 = vmatpush1.bf16.msra.mxu0 %v3854
    %3953 = vmatprep.subr.bf16.mxu0 %v3859
    %3954 = vmatpush1.bf16.msra.mxu0 %v3858
    %3955 = vmatprep.subr.bf16.mxu0 %v3863
    %3956 = vmatpush1.bf16.msra.mxu0 %v3862
    %3957 = vmatprep.subr.bf16.mxu0 %v3867
    %3958 = vmatpush1.bf16.msra.mxu0 %v3866
    %3959 = vmatprep.subr.bf16.mxu0 %v3871
    %3960 = vmatpush1.bf16.msra.mxu0 %v3870
    %3961 = vmatprep.subr.bf16.mxu0 0
    %3962 = vmatpush1.bf16.msra.mxu0 0
    %3963 = vmatprep.subr.bf16.mxu0 0
    %3964 = vmatpush1.bf16.msra.mxu0 0
    %3965 = vmatprep.subr.bf16.mxu0 0
    %3966 = vmatpush1.bf16.msra.mxu0 0
    %3967 = vmatprep.subr.bf16.mxu0 0
    %3968 = vmatpush1.bf16.msra.mxu0 0
    %3969 = vmatprep.subr.bf16.mxu0 0
    %3970 = vmatpush1.bf16.msra.mxu0 0
    %3971 = vmatprep.subr.bf16.mxu0 0
    %3972 = vmatpush1.bf16.msra.mxu0 0
    %3973 = vmatprep.subr.bf16.mxu0 0
    %3974 = vmatpush1.bf16.msra.mxu0 0
    %3975 = vmatprep.subr.bf16.mxu0 0
    %3976 = vmatpush1.bf16.msra.mxu0 0
    %3977 = vmatprep.mubr.bf16.mxu0 0
    %3978 = vmatmul.mubr.bf16.gmra.mrb[0].mxu0 %v3009
    %v3979 = vpop.f32.mrb[0].mxu0
    %v3980 = vadd.f32 %v3735, %v3979
    %v3981 = vpop.f32.mrb[0].mxu0
    %v3982 = vadd.f32 %v3739, %v3981
    %v3983 = vpop.f32.mrb[0].mxu0
    %v3984 = vpop.f32.mrb[0].mxu0
    %3985 = vdwg.mxu0
    %3986 = vmatprep.subr.bf16.mxu0 %v3841
    %3987 = vmatpush1.bf16.msra.mxu0 %v3840
    %3988 = vmatprep.subr.bf16.mxu0 %v3845
    %3989 = vmatpush1.bf16.msra.mxu0 %v3844
    %3990 = vmatprep.subr.bf16.mxu0 %v3849
    %3991 = vmatpush1.bf16.msra.mxu0 %v3848
    %3992 = vmatprep.subr.bf16.mxu0 %v3853
    %3993 = vmatpush1.bf16.msra.mxu0 %v3852
    %3994 = vmatprep.subr.bf16.mxu0 %v3857
    %3995 = vmatpush1.bf16.msra.mxu0 %v3856
    %3996 = vmatprep.subr.bf16.mxu0 %v3861
    %3997 = vmatpush1.bf16.msra.mxu0 %v3860
    %3998 = vmatprep.subr.bf16.mxu0 %v3865
    %3999 = vmatpush1.bf16.msra.mxu0 %v3864
    %4000 = vmatprep.subr.bf16.mxu0 %v3869
    %4001 = vmatpush1.bf16.msra.mxu0 %v3868
    %4002 = vmatprep.subr.bf16.mxu0 0
    %4003 = vmatpush1.bf16.msra.mxu0 0
    %4004 = vmatprep.subr.bf16.mxu0 0
    %4005 = vmatpush1.bf16.msra.mxu0 0
    %4006 = vmatprep.subr.bf16.mxu0 0
    %4007 = vmatpush1.bf16.msra.mxu0 0
    %4008 = vmatprep.subr.bf16.mxu0 0
    %4009 = vmatpush1.bf16.msra.mxu0 0
    %4010 = vmatprep.subr.bf16.mxu0 0
    %4011 = vmatpush1.bf16.msra.mxu0 0
    %4012 = vmatprep.subr.bf16.mxu0 0
    %4013 = vmatpush1.bf16.msra.mxu0 0
    %4014 = vmatprep.subr.bf16.mxu0 0
    %4015 = vmatpush1.bf16.msra.mxu0 0
    %4016 = vmatprep.subr.bf16.mxu0 0
    %4017 = vmatpush1.bf16.msra.mxu0 0
    %4018 = vmatprep.mubr.bf16.mxu0 0
    %4019 = vmatmul.mubr.bf16.gmra.mrb[0].mxu0 %v3117
    %v4020 = vpop.f32.mrb[0].mxu0
    %v4021 = vadd.f32 %v3727, %v4020
    %v4022 = vpop.f32.mrb[0].mxu0
    %v4023 = vadd.f32 %v3731, %v4022
    %v4024 = vpop.f32.mrb[0].mxu0
    %v4025 = vpop.f32.mrb[0].mxu0
    %4026 = vdwg.mxu0
    %4027 = vmatprep.subr.bf16.mxu0 %v3843
    %4028 = vmatpush1.bf16.msra.mxu0 %v3842
    %4029 = vmatprep.subr.bf16.mxu0 %v3847
    %4030 = vmatpush1.bf16.msra.mxu0 %v3846
    %4031 = vmatprep.subr.bf16.mxu0 %v3851
    %4032 = vmatpush1.bf16.msra.mxu0 %v3850
    %4033 = vmatprep.subr.bf16.mxu0 %v3855
    %4034 = vmatpush1.bf16.msra.mxu0 %v3854
    %4035 = vmatprep.subr.bf16.mxu0 %v3859
    %4036 = vmatpush1.bf16.msra.mxu0 %v3858
    %4037 = vmatprep.subr.bf16.mxu0 %v3863
    %4038 = vmatpush1.bf16.msra.mxu0 %v3862
    %4039 = vmatprep.subr.bf16.mxu0 %v3867
    %4040 = vmatpush1.bf16.msra.mxu0 %v3866
    %4041 = vmatprep.subr.bf16.mxu0 %v3871
    %4042 = vmatpush1.bf16.msra.mxu0 %v3870
    %4043 = vmatprep.subr.bf16.mxu0 0
    %4044 = vmatpush1.bf16.msra.mxu0 0
    %4045 = vmatprep.subr.bf16.mxu0 0
    %4046 = vmatpush1.bf16.msra.mxu0 0
    %4047 = vmatprep.subr.bf16.mxu0 0
    %4048 = vmatpush1.bf16.msra.mxu0 0
    %4049 = vmatprep.subr.bf16.mxu0 0
    %4050 = vmatpush1.bf16.msra.mxu0 0
    %4051 = vmatprep.subr.bf16.mxu0 0
    %4052 = vmatpush1.bf16.msra.mxu0 0
    %4053 = vmatprep.subr.bf16.mxu0 0
    %4054 = vmatpush1.bf16.msra.mxu0 0
    %4055 = vmatprep.subr.bf16.mxu0 0
    %4056 = vmatpush1.bf16.msra.mxu0 0
    %4057 = vmatprep.subr.bf16.mxu0 0
    %4058 = vmatpush1.bf16.msra.mxu0 0
    %4059 = vmatprep.mubr.bf16.mxu0 0
    %4060 = vmatmul.mubr.bf16.gmra.mrb[0].mxu0 %v3117
    %v4061 = vpop.f32.mrb[0].mxu0
    %v4062 = vadd.f32 %v3735, %v4061
    %v4063 = vpop.f32.mrb[0].mxu0
    %v4064 = vadd.f32 %v3739, %v4063
    %v4065 = vpop.f32.mrb[0].mxu0
    %v4066 = vpop.f32.mrb[0].mxu0
    %4067 = vdwg.mxu0
    %4068 = vmatprep.subr.bf16.mxu0 %v3841
    %4069 = vmatpush1.bf16.msra.mxu0 %v3840
    %4070 = vmatprep.subr.bf16.mxu0 %v3845
    %4071 = vmatpush1.bf16.msra.mxu0 %v3844
    %4072 = vmatprep.subr.bf16.mxu0 %v3849
    %4073 = vmatpush1.bf16.msra.mxu0 %v3848
    %4074 = vmatprep.subr.bf16.mxu0 %v3853
    %4075 = vmatpush1.bf16.msra.mxu0 %v3852
    %4076 = vmatprep.subr.bf16.mxu0 %v3857
    %4077 = vmatpush1.bf16.msra.mxu0 %v3856
    %4078 = vmatprep.subr.bf16.mxu0 %v3861
    %4079 = vmatpush1.bf16.msra.mxu0 %v3860
    %4080 = vmatprep.subr.bf16.mxu0 %v3865
    %4081 = vmatpush1.bf16.msra.mxu0 %v3864
    %4082 = vmatprep.subr.bf16.mxu0 %v3869
    %4083 = vmatpush1.bf16.msra.mxu0 %v3868
    %4084 = vmatprep.subr.bf16.mxu0 0
    %4085 = vmatpush1.bf16.msra.mxu0 0
    %4086 = vmatprep.subr.bf16.mxu0 0
    %4087 = vmatpush1.bf16.msra.mxu0 0
    %4088 = vmatprep.subr.bf16.mxu0 0
    %4089 = vmatpush1.bf16.msra.mxu0 0
    %4090 = vmatprep.subr.bf16.mxu0 0
    %4091 = vmatpush1.bf16.msra.mxu0 0
    %4092 = vmatprep.subr.bf16.mxu0 0
    %4093 = vmatpush1.bf16.msra.mxu0 0
    %4094 = vmatprep.subr.bf16.mxu0 0
    %4095 = vmatpush1.bf16.msra.mxu0 0
    %4096 = vmatprep.subr.bf16.mxu0 0
    %4097 = vmatpush1.bf16.msra.mxu0 0
    %4098 = vmatprep.subr.bf16.mxu0 0
    %4099 = vmatpush1.bf16.msra.mxu0 0
    %4100 = vmatprep.mubr.bf16.mxu0 0
    %4101 = vmatmul.mubr.bf16.gmra.mrb[0].mxu0 %v3225
    %v4102 = vpop.f32.mrb[0].mxu0
    %v4103 = vadd.f32 %v3727, %v4102
    %v4104 = vpop.f32.mrb[0].mxu0
    %v4105 = vadd.f32 %v3731, %v4104
    %v4106 = vpop.f32.mrb[0].mxu0
    %v4107 = vpop.f32.mrb[0].mxu0
    %4108 = vdwg.mxu0
    %4109 = vmatprep.subr.bf16.mxu0 %v3843
    %4110 = vmatpush1.bf16.msra.mxu0 %v3842
    %4111 = vmatprep.subr.bf16.mxu0 %v3847
    %4112 = vmatpush1.bf16.msra.mxu0 %v3846
    %4113 = vmatprep.subr.bf16.mxu0 %v3851
    %4114 = vmatpush1.bf16.msra.mxu0 %v3850
    %4115 = vmatprep.subr.bf16.mxu0 %v3855
    %4116 = vmatpush1.bf16.msra.mxu0 %v3854
    %4117 = vmatprep.subr.bf16.mxu0 %v3859
    %4118 = vmatpush1.bf16.msra.mxu0 %v3858
    %4119 = vmatprep.subr.bf16.mxu0 %v3863
    %4120 = vmatpush1.bf16.msra.mxu0 %v3862
    %4121 = vmatprep.subr.bf16.mxu0 %v3867
    %4122 = vmatpush1.bf16.msra.mxu0 %v3866
    %4123 = vmatprep.subr.bf16.mxu0 %v3871
    %4124 = vmatpush1.bf16.msra.mxu0 %v3870
    %4125 = vmatprep.subr.bf16.mxu0 0
    %4126 = vmatpush1.bf16.msra.mxu0 0
    %4127 = vmatprep.subr.bf16.mxu0 0
    %4128 = vmatpush1.bf16.msra.mxu0 0
    %4129 = vmatprep.subr.bf16.mxu0 0
    %4130 = vmatpush1.bf16.msra.mxu0 0
    %4131 = vmatprep.subr.bf16.mxu0 0
    %4132 = vmatpush1.bf16.msra.mxu0 0
    %4133 = vmatprep.subr.bf16.mxu0 0
    %4134 = vmatpush1.bf16.msra.mxu0 0
    %4135 = vmatprep.subr.bf16.mxu0 0
    %4136 = vmatpush1.bf16.msra.mxu0 0
    %4137 = vmatprep.subr.bf16.mxu0 0
    %4138 = vmatpush1.bf16.msra.mxu0 0
    %4139 = vmatprep.subr.bf16.mxu0 0
    %4140 = vmatpush1.bf16.msra.mxu0 0
    %4141 = vmatprep.mubr.bf16.mxu0 0
    %4142 = vmatmul.mubr.bf16.gmra.mrb[0].mxu0 %v3225
    %v4143 = vpop.f32.mrb[0].mxu0
    %v4144 = vadd.f32 %v3735, %v4143
    %v4145 = vpop.f32.mrb[0].mxu0
    %v4146 = vadd.f32 %v3739, %v4145
    %v4147 = vpop.f32.mrb[0].mxu0
    %v4148 = vpop.f32.mrb[0].mxu0
    %4149 = vdwg.mxu0
    %4150 = vmatprep.subr.bf16.mxu0 %v3841
    %4151 = vmatpush1.bf16.msra.mxu0 %v3840
    %4152 = vmatprep.subr.bf16.mxu0 %v3845
    %4153 = vmatpush1.bf16.msra.mxu0 %v3844
    %4154 = vmatprep.subr.bf16.mxu0 %v3849
    %4155 = vmatpush1.bf16.msra.mxu0 %v3848
    %4156 = vmatprep.subr.bf16.mxu0 %v3853
    %4157 = vmatpush1.bf16.msra.mxu0 %v3852
    %4158 = vmatprep.subr.bf16.mxu0 %v3857
    %4159 = vmatpush1.bf16.msra.mxu0 %v3856
    %4160 = vmatprep.subr.bf16.mxu0 %v3861
    %4161 = vmatpush1.bf16.msra.mxu0 %v3860
    %4162 = vmatprep.subr.bf16.mxu0 %v3865
    %4163 = vmatpush1.bf16.msra.mxu0 %v3864
    %4164 = vmatprep.subr.bf16.mxu0 %v3869
    %4165 = vmatpush1.bf16.msra.mxu0 %v3868
    %4166 = vmatprep.subr.bf16.mxu0 0
    %4167 = vmatpush1.bf16.msra.mxu0 0
    %4168 = vmatprep.subr.bf16.mxu0 0
    %4169 = vmatpush1.bf16.msra.mxu0 0
    %4170 = vmatprep.subr.bf16.mxu0 0
    %4171 = vmatpush1.bf16.msra.mxu0 0
    %4172 = vmatprep.subr.bf16.mxu0 0
    %4173 = vmatpush1.bf16.msra.mxu0 0
    %4174 = vmatprep.subr.bf16.mxu0 0
    %4175 = vmatpush1.bf16.msra.mxu0 0
    %4176 = vmatprep.subr.bf16.mxu0 0
    %4177 = vmatpush1.bf16.msra.mxu0 0
    %4178 = vmatprep.subr.bf16.mxu0 0
    %4179 = vmatpush1.bf16.msra.mxu0 0
    %4180 = vmatprep.subr.bf16.mxu0 0
    %4181 = vmatpush1.bf16.msra.mxu0 0
    %4182 = vmatprep.mubr.bf16.mxu0 0
    %4183 = vmatmul.mubr.bf16.gmra.mrb[0].mxu0 %v3333
    %v4184 = vpop.f32.mrb[0].mxu0
    %v4185 = vadd.f32 %v3727, %v4184
    %v4186 = vpop.f32.mrb[0].mxu0
    %v4187 = vadd.f32 %v3731, %v4186
    %v4188 = vpop.f32.mrb[0].mxu0
    %v4189 = vpop.f32.mrb[0].mxu0
    %4190 = vdwg.mxu0
    %4191 = vmatprep.subr.bf16.mxu0 %v3843
    %4192 = vmatpush1.bf16.msra.mxu0 %v3842
    %4193 = vmatprep.subr.bf16.mxu0 %v3847
    %4194 = vmatpush1.bf16.msra.mxu0 %v3846
    %4195 = vmatprep.subr.bf16.mxu0 %v3851
    %4196 = vmatpush1.bf16.msra.mxu0 %v3850
    %4197 = vmatprep.subr.bf16.mxu0 %v3855
    %4198 = vmatpush1.bf16.msra.mxu0 %v3854
    %4199 = vmatprep.subr.bf16.mxu0 %v3859
    %4200 = vmatpush1.bf16.msra.mxu0 %v3858
    %4201 = vmatprep.subr.bf16.mxu0 %v3863
    %4202 = vmatpush1.bf16.msra.mxu0 %v3862
    %4203 = vmatprep.subr.bf16.mxu0 %v3867
    %4204 = vmatpush1.bf16.msra.mxu0 %v3866
    %4205 = vmatprep.subr.bf16.mxu0 %v3871
    %4206 = vmatpush1.bf16.msra.mxu0 %v3870
    %4207 = vmatprep.subr.bf16.mxu0 0
    %4208 = vmatpush1.bf16.msra.mxu0 0
    %4209 = vmatprep.subr.bf16.mxu0 0
    %4210 = vmatpush1.bf16.msra.mxu0 0
    %4211 = vmatprep.subr.bf16.mxu0 0
    %4212 = vmatpush1.bf16.msra.mxu0 0
    %4213 = vmatprep.subr.bf16.mxu0 0
    %4214 = vmatpush1.bf16.msra.mxu0 0
    %4215 = vmatprep.subr.bf16.mxu0 0
    %4216 = vmatpush1.bf16.msra.mxu0 0
    %4217 = vmatprep.subr.bf16.mxu0 0
    %4218 = vmatpush1.bf16.msra.mxu0 0
    %4219 = vmatprep.subr.bf16.mxu0 0
    %4220 = vmatpush1.bf16.msra.mxu0 0
    %4221 = vmatprep.subr.bf16.mxu0 0
    %4222 = vmatpush1.bf16.msra.mxu0 0
    %4223 = vmatprep.mubr.bf16.mxu0 0
    %4224 = vmatmul.mubr.bf16.gmra.mrb[0].mxu0 %v3333
    %v4225 = vpop.f32.mrb[0].mxu0
    %v4226 = vadd.f32 %v3735, %v4225
    %v4227 = vpop.f32.mrb[0].mxu0
    %v4228 = vadd.f32 %v3739, %v4227
    %v4229 = vpop.f32.mrb[0].mxu0
    %v4230 = vpop.f32.mrb[0].mxu0
    %4231 = vdwg.mxu0
    %4232 = vmatprep.subr.bf16.mxu0 %v3841
    %4233 = vmatpush1.bf16.msra.mxu0 %v3840
    %4234 = vmatprep.subr.bf16.mxu0 %v3845
    %4235 = vmatpush1.bf16.msra.mxu0 %v3844
    %4236 = vmatprep.subr.bf16.mxu0 %v3849
    %4237 = vmatpush1.bf16.msra.mxu0 %v3848
    %4238 = vmatprep.subr.bf16.mxu0 %v3853
    %4239 = vmatpush1.bf16.msra.mxu0 %v3852
    %4240 = vmatprep.subr.bf16.mxu0 %v3857
    %4241 = vmatpush1.bf16.msra.mxu0 %v3856
    %4242 = vmatprep.subr.bf16.mxu0 %v3861
    %4243 = vmatpush1.bf16.msra.mxu0 %v3860
    %4244 = vmatprep.subr.bf16.mxu0 %v3865
    %4245 = vmatpush1.bf16.msra.mxu0 %v3864
    %4246 = vmatprep.subr.bf16.mxu0 %v3869
    %4247 = vmatpush1.bf16.msra.mxu0 %v3868
    %4248 = vmatprep.subr.bf16.mxu0 0
    %4249 = vmatpush1.bf16.msra.mxu0 0
    %4250 = vmatprep.subr.bf16.mxu0 0
    %4251 = vmatpush1.bf16.msra.mxu0 0
    %4252 = vmatprep.subr.bf16.mxu0 0
    %4253 = vmatpush1.bf16.msra.mxu0 0
    %4254 = vmatprep.subr.bf16.mxu0 0
    %4255 = vmatpush1.bf16.msra.mxu0 0
    %4256 = vmatprep.subr.bf16.mxu0 0
    %4257 = vmatpush1.bf16.msra.mxu0 0
    %4258 = vmatprep.subr.bf16.mxu0 0
    %4259 = vmatpush1.bf16.msra.mxu0 0
    %4260 = vmatprep.subr.bf16.mxu0 0
    %4261 = vmatpush1.bf16.msra.mxu0 0
    %4262 = vmatprep.subr.bf16.mxu0 0
    %4263 = vmatpush1.bf16.msra.mxu0 0
    %4264 = vmatprep.mubr.bf16.mxu0 0
    %4265 = vmatmul.mubr.bf16.gmra.mrb[0].mxu0 %v3441
    %v4266 = vpop.f32.mrb[0].mxu0
    %v4267 = vadd.f32 %v3727, %v4266
    %v4268 = vpop.f32.mrb[0].mxu0
    %v4269 = vadd.f32 %v3731, %v4268
    %v4270 = vpop.f32.mrb[0].mxu0
    %v4271 = vpop.f32.mrb[0].mxu0
    %4272 = vdwg.mxu0
    %4273 = vmatprep.subr.bf16.mxu0 %v3843
    %4274 = vmatpush1.bf16.msra.mxu0 %v3842
    %4275 = vmatprep.subr.bf16.mxu0 %v3847
    %4276 = vmatpush1.bf16.msra.mxu0 %v3846
    %4277 = vmatprep.subr.bf16.mxu0 %v3851
    %4278 = vmatpush1.bf16.msra.mxu0 %v3850
    %4279 = vmatprep.subr.bf16.mxu0 %v3855
    %4280 = vmatpush1.bf16.msra.mxu0 %v3854
    %4281 = vmatprep.subr.bf16.mxu0 %v3859
    %4282 = vmatpush1.bf16.msra.mxu0 %v3858
    %4283 = vmatprep.subr.bf16.mxu0 %v3863
    %4284 = vmatpush1.bf16.msra.mxu0 %v3862
    %4285 = vmatprep.subr.bf16.mxu0 %v3867
    %4286 = vmatpush1.bf16.msra.mxu0 %v3866
    %4287 = vmatprep.subr.bf16.mxu0 %v3871
    %4288 = vmatpush1.bf16.msra.mxu0 %v3870
    %4289 = vmatprep.subr.bf16.mxu0 0
    %4290 = vmatpush1.bf16.msra.mxu0 0
    %4291 = vmatprep.subr.bf16.mxu0 0
    %4292 = vmatpush1.bf16.msra.mxu0 0
    %4293 = vmatprep.subr.bf16.mxu0 0
    %4294 = vmatpush1.bf16.msra.mxu0 0
    %4295 = vmatprep.subr.bf16.mxu0 0
    %4296 = vmatpush1.bf16.msra.mxu0 0
    %4297 = vmatprep.subr.bf16.mxu0 0
    %4298 = vmatpush1.bf16.msra.mxu0 0
    %4299 = vmatprep.subr.bf16.mxu0 0
    %4300 = vmatpush1.bf16.msra.mxu0 0
    %4301 = vmatprep.subr.bf16.mxu0 0
    %4302 = vmatpush1.bf16.msra.mxu0 0
    %4303 = vmatprep.subr.bf16.mxu0 0
    %4304 = vmatpush1.bf16.msra.mxu0 0
    %4305 = vmatprep.mubr.bf16.mxu0 0
    %4306 = vmatmul.mubr.bf16.gmra.mrb[0].mxu0 %v3441
    %v4307 = vpop.f32.mrb[0].mxu0
    %v4308 = vadd.f32 %v3735, %v4307
    %v4309 = vpop.f32.mrb[0].mxu0
    %v4310 = vadd.f32 %v3739, %v4309
    %v4311 = vpop.f32.mrb[0].mxu0
    %v4312 = vpop.f32.mrb[0].mxu0
    %4313 = vdwg.mxu0
    %4314 = vmatprep.subr.bf16.mxu0 %v3841
    %4315 = vmatpush1.bf16.msra.mxu0 %v3840
    %4316 = vmatprep.subr.bf16.mxu0 %v3845
    %4317 = vmatpush1.bf16.msra.mxu0 %v3844
    %4318 = vmatprep.subr.bf16.mxu0 %v3849
    %4319 = vmatpush1.bf16.msra.mxu0 %v3848
    %4320 = vmatprep.subr.bf16.mxu0 %v3853
    %4321 = vmatpush1.bf16.msra.mxu0 %v3852
    %4322 = vmatprep.subr.bf16.mxu0 %v3857
    %4323 = vmatpush1.bf16.msra.mxu0 %v3856
    %4324 = vmatprep.subr.bf16.mxu0 %v3861
    %4325 = vmatpush1.bf16.msra.mxu0 %v3860
    %4326 = vmatprep.subr.bf16.mxu0 %v3865
    %4327 = vmatpush1.bf16.msra.mxu0 %v3864
    %4328 = vmatprep.subr.bf16.mxu0 %v3869
    %4329 = vmatpush1.bf16.msra.mxu0 %v3868
    %4330 = vmatprep.subr.bf16.mxu0 0
    %4331 = vmatpush1.bf16.msra.mxu0 0
    %4332 = vmatprep.subr.bf16.mxu0 0
    %4333 = vmatpush1.bf16.msra.mxu0 0
    %4334 = vmatprep.subr.bf16.mxu0 0
    %4335 = vmatpush1.bf16.msra.mxu0 0
    %4336 = vmatprep.subr.bf16.mxu0 0
    %4337 = vmatpush1.bf16.msra.mxu0 0
    %4338 = vmatprep.subr.bf16.mxu0 0
    %4339 = vmatpush1.bf16.msra.mxu0 0
    %4340 = vmatprep.subr.bf16.mxu0 0
    %4341 = vmatpush1.bf16.msra.mxu0 0
    %4342 = vmatprep.subr.bf16.mxu0 0
    %4343 = vmatpush1.bf16.msra.mxu0 0
    %4344 = vmatprep.subr.bf16.mxu0 0
    %4345 = vmatpush1.bf16.msra.mxu0 0
    %4346 = vmatprep.mubr.bf16.mxu0 0
    %4347 = vmatmul.mubr.bf16.gmra.mrb[0].mxu0 %v3549
    %v4348 = vpop.f32.mrb[0].mxu0
    %v4349 = vadd.f32 %v3727, %v4348
    %v4350 = vpop.f32.mrb[0].mxu0
    %v4351 = vadd.f32 %v3731, %v4350
    %v4352 = vpop.f32.mrb[0].mxu0
    %v4353 = vpop.f32.mrb[0].mxu0
    %4354 = vdwg.mxu0
    %4355 = vmatprep.subr.bf16.mxu0 %v3843
    %4356 = vmatpush1.bf16.msra.mxu0 %v3842
    %4357 = vmatprep.subr.bf16.mxu0 %v3847
    %4358 = vmatpush1.bf16.msra.mxu0 %v3846
    %4359 = vmatprep.subr.bf16.mxu0 %v3851
    %4360 = vmatpush1.bf16.msra.mxu0 %v3850
    %4361 = vmatprep.subr.bf16.mxu0 %v3855
    %4362 = vmatpush1.bf16.msra.mxu0 %v3854
    %4363 = vmatprep.subr.bf16.mxu0 %v3859
    %4364 = vmatpush1.bf16.msra.mxu0 %v3858
    %4365 = vmatprep.subr.bf16.mxu0 %v3863
    %4366 = vmatpush1.bf16.msra.mxu0 %v3862
    %4367 = vmatprep.subr.bf16.mxu0 %v3867
    %4368 = vmatpush1.bf16.msra.mxu0 %v3866
    %4369 = vmatprep.subr.bf16.mxu0 %v3871
    %4370 = vmatpush1.bf16.msra.mxu0 %v3870
    %4371 = vmatprep.subr.bf16.mxu0 0
    %4372 = vmatpush1.bf16.msra.mxu0 0
    %4373 = vmatprep.subr.bf16.mxu0 0
    %4374 = vmatpush1.bf16.msra.mxu0 0
    %4375 = vmatprep.subr.bf16.mxu0 0
    %4376 = vmatpush1.bf16.msra.mxu0 0
    %4377 = vmatprep.subr.bf16.mxu0 0
    %4378 = vmatpush1.bf16.msra.mxu0 0
    %4379 = vmatprep.subr.bf16.mxu0 0
    %4380 = vmatpush1.bf16.msra.mxu0 0
    %4381 = vmatprep.subr.bf16.mxu0 0
    %4382 = vmatpush1.bf16.msra.mxu0 0
    %4383 = vmatprep.subr.bf16.mxu0 0
    %4384 = vmatpush1.bf16.msra.mxu0 0
    %4385 = vmatprep.subr.bf16.mxu0 0
    %4386 = vmatpush1.bf16.msra.mxu0 0
    %4387 = vmatprep.mubr.bf16.mxu0 0
    %4388 = vmatmul.mubr.bf16.gmra.mrb[0].mxu0 %v3549
    %v4389 = vpop.f32.mrb[0].mxu0
    %v4390 = vadd.f32 %v3735, %v4389
    %v4391 = vpop.f32.mrb[0].mxu0
    %v4392 = vadd.f32 %v3739, %v4391
    %v4393 = vpop.f32.mrb[0].mxu0
    %v4394 = vpop.f32.mrb[0].mxu0
    %4395 = vdwg.mxu0
    %4396 = vmatprep.subr.bf16.mxu0 %v3841
    %4397 = vmatpush1.bf16.msra.mxu0 %v3840
    %4398 = vmatprep.subr.bf16.mxu0 %v3845
    %4399 = vmatpush1.bf16.msra.mxu0 %v3844
    %4400 = vmatprep.subr.bf16.mxu0 %v3849
    %4401 = vmatpush1.bf16.msra.mxu0 %v3848
    %4402 = vmatprep.subr.bf16.mxu0 %v3853
    %4403 = vmatpush1.bf16.msra.mxu0 %v3852
    %4404 = vmatprep.subr.bf16.mxu0 %v3857
    %4405 = vmatpush1.bf16.msra.mxu0 %v3856
    %4406 = vmatprep.subr.bf16.mxu0 %v3861
    %4407 = vmatpush1.bf16.msra.mxu0 %v3860
    %4408 = vmatprep.subr.bf16.mxu0 %v3865
    %4409 = vmatpush1.bf16.msra.mxu0 %v3864
    %4410 = vmatprep.subr.bf16.mxu0 %v3869
    %4411 = vmatpush1.bf16.msra.mxu0 %v3868
    %4412 = vmatprep.subr.bf16.mxu0 0
    %4413 = vmatpush1.bf16.msra.mxu0 0
    %4414 = vmatprep.subr.bf16.mxu0 0
    %4415 = vmatpush1.bf16.msra.mxu0 0
    %4416 = vmatprep.subr.bf16.mxu0 0
    %4417 = vmatpush1.bf16.msra.mxu0 0
    %4418 = vmatprep.subr.bf16.mxu0 0
    %4419 = vmatpush1.bf16.msra.mxu0 0
    %4420 = vmatprep.subr.bf16.mxu0 0
    %4421 = vmatpush1.bf16.msra.mxu0 0
    %4422 = vmatprep.subr.bf16.mxu0 0
    %4423 = vmatpush1.bf16.msra.mxu0 0
    %4424 = vmatprep.subr.bf16.mxu0 0
    %4425 = vmatpush1.bf16.msra.mxu0 0
    %4426 = vmatprep.subr.bf16.mxu0 0
    %4427 = vmatpush1.bf16.msra.mxu0 0
    %4428 = vmatprep.mubr.bf16.mxu0 0
    %4429 = vmatmul.mubr.bf16.gmra.mrb[0].mxu0 %v3657
    %v4430 = vpop.f32.mrb[0].mxu0
    %v4431 = vadd.f32 %v3727, %v4430
    %v4432 = vpop.f32.mrb[0].mxu0
    %v4433 = vadd.f32 %v3731, %v4432
    %v4434 = vpop.f32.mrb[0].mxu0
    %v4435 = vpop.f32.mrb[0].mxu0
    %4436 = vdwg.mxu0
    %4437 = vmatprep.subr.bf16.mxu0 %v3843
    %4438 = vmatpush1.bf16.msra.mxu0 %v3842
    %4439 = vmatprep.subr.bf16.mxu0 %v3847
    %4440 = vmatpush1.bf16.msra.mxu0 %v3846
    %4441 = vmatprep.subr.bf16.mxu0 %v3851
    %4442 = vmatpush1.bf16.msra.mxu0 %v3850
    %4443 = vmatprep.subr.bf16.mxu0 %v3855
    %4444 = vmatpush1.bf16.msra.mxu0 %v3854
    %4445 = vmatprep.subr.bf16.mxu0 %v3859
    %4446 = vmatpush1.bf16.msra.mxu0 %v3858
    %4447 = vmatprep.subr.bf16.mxu0 %v3863
    %4448 = vmatpush1.bf16.msra.mxu0 %v3862
    %4449 = vmatprep.subr.bf16.mxu0 %v3867
    %4450 = vmatpush1.bf16.msra.mxu0 %v3866
    %4451 = vmatprep.subr.bf16.mxu0 %v3871
    %4452 = vmatpush1.bf16.msra.mxu0 %v3870
    %4453 = vmatprep.subr.bf16.mxu0 0
    %4454 = vmatpush1.bf16.msra.mxu0 0
    %4455 = vmatprep.subr.bf16.mxu0 0
    %4456 = vmatpush1.bf16.msra.mxu0 0
    %4457 = vmatprep.subr.bf16.mxu0 0
    %4458 = vmatpush1.bf16.msra.mxu0 0
    %4459 = vmatprep.subr.bf16.mxu0 0
    %4460 = vmatpush1.bf16.msra.mxu0 0
    %4461 = vmatprep.subr.bf16.mxu0 0
    %4462 = vmatpush1.bf16.msra.mxu0 0
    %4463 = vmatprep.subr.bf16.mxu0 0
    %4464 = vmatpush1.bf16.msra.mxu0 0
    %4465 = vmatprep.subr.bf16.mxu0 0
    %4466 = vmatpush1.bf16.msra.mxu0 0
    %4467 = vmatprep.subr.bf16.mxu0 0
    %4468 = vmatpush1.bf16.msra.mxu0 0
    %4469 = vmatprep.mubr.bf16.mxu0 0
    %4470 = vmatmul.mubr.bf16.gmra.mrb[0].mxu0 %v3657
    %v4471 = vpop.f32.mrb[0].mxu0
    %v4472 = vadd.f32 %v3735, %v4471
    %v4473 = vpop.f32.mrb[0].mxu0
    %v4474 = vadd.f32 %v3739, %v4473
    %v4475 = vpop.f32.mrb[0].mxu0
    %v4476 = vpop.f32.mrb[0].mxu0
    %4477 = vdwg.mxu0
    %v4510 = vunpack.c.l.b16 %v3690
    %v4511 = vunpack.c.h.b16 %v3690
    %v4512 = vunpack.c.l.b16 %v3691
    %v4513 = vunpack.c.h.b16 %v3691
    %v4514 = vunpack.c.l.b16 %v3692
    %v4515 = vunpack.c.h.b16 %v3692
    %v4516 = vunpack.c.l.b16 %v3693
    %v4517 = vunpack.c.h.b16 %v3693
    %v4518 = vunpack.c.l.b16 %v3694
    %v4519 = vunpack.c.h.b16 %v3694
    %v4520 = vunpack.c.l.b16 %v3695
    %v4521 = vunpack.c.h.b16 %v3695
    %v4522 = vunpack.c.l.b16 %v3696
    %v4523 = vunpack.c.h.b16 %v3696
    %v4524 = vunpack.c.l.b16 %v3697
    %v4525 = vunpack.c.h.b16 %v3697
    %v4526 = vunpack.c.l.b16 %v3698
    %v4527 = vunpack.c.h.b16 %v3698
    %v4528 = vunpack.c.l.b16 %v3699
    %v4529 = vunpack.c.h.b16 %v3699
    %v4530 = vunpack.c.l.b16 %v3700
    %v4531 = vunpack.c.h.b16 %v3700
    %v4532 = vunpack.c.l.b16 %v3701
    %v4533 = vunpack.c.h.b16 %v3701
    %v4534 = vunpack.c.l.b16 %v3702
    %v4535 = vunpack.c.h.b16 %v3702
    %v4536 = vunpack.c.l.b16 %v3703
    %v4537 = vunpack.c.h.b16 %v3703
    %v4538 = vunpack.c.l.b16 %v3704
    %v4539 = vunpack.c.h.b16 %v3704
    %v4540 = vunpack.c.l.b16 %v3705
    %v4541 = vunpack.c.h.b16 %v3705
    %v4542 = vunpack.c.l.b16 %v3706
    %v4543 = vunpack.c.h.b16 %v3706
    %v4544 = vunpack.c.l.b16 %v3707
    %v4545 = vunpack.c.h.b16 %v3707
    %v4546 = vunpack.c.l.b16 %v3708
    %v4547 = vunpack.c.h.b16 %v3708
    %v4548 = vunpack.c.l.b16 %v3709
    %v4549 = vunpack.c.h.b16 %v3709
    %v4550 = vunpack.c.l.b16 %v3710
    %v4551 = vunpack.c.h.b16 %v3710
    %v4552 = vunpack.c.l.b16 %v3711
    %v4553 = vunpack.c.h.b16 %v3711
    %v4554 = vunpack.c.l.b16 %v3712
    %v4555 = vunpack.c.h.b16 %v3712
    %v4556 = vunpack.c.l.b16 %v3713
    %v4557 = vunpack.c.h.b16 %v3713
    %v4558 = vunpack.c.l.b16 %v3714
    %v4559 = vunpack.c.h.b16 %v3714
    %v4560 = vunpack.c.l.b16 %v3715
    %v4561 = vunpack.c.h.b16 %v3715
    %v4562 = vunpack.c.l.b16 %v3716
    %v4563 = vunpack.c.h.b16 %v3716
    %v4564 = vunpack.c.l.b16 %v3717
    %v4565 = vunpack.c.h.b16 %v3717
    %v4566 = vunpack.c.l.b16 %v3718
    %v4567 = vunpack.c.h.b16 %v3718
    %v4568 = vunpack.c.l.b16 %v3719
    %v4569 = vunpack.c.h.b16 %v3719
    %v4570 = vunpack.c.l.b16 %v3720
    %v4571 = vunpack.c.h.b16 %v3720
    %v4572 = vunpack.c.l.b16 %v3721
    %v4573 = vunpack.c.h.b16 %v3721
    %v4574 = vpack.c.b16 %v4514, %v4510
    %v4575 = vpack.c.b16 %v4515, %v4511
    %v4576 = vpack.c.b16 %v4516, %v4512
    %v4577 = vpack.c.b16 %v4517, %v4513
    %v4578 = vpack.c.b16 %v4522, %v4518
    %v4579 = vpack.c.b16 %v4523, %v4519
    %v4580 = vpack.c.b16 %v4524, %v4520
    %v4581 = vpack.c.b16 %v4525, %v4521
    %v4582 = vpack.c.b16 %v4530, %v4526
    %v4583 = vpack.c.b16 %v4531, %v4527
    %v4584 = vpack.c.b16 %v4532, %v4528
    %v4585 = vpack.c.b16 %v4533, %v4529
    %v4586 = vpack.c.b16 %v4538, %v4534
    %v4587 = vpack.c.b16 %v4539, %v4535
    %v4588 = vpack.c.b16 %v4540, %v4536
    %v4589 = vpack.c.b16 %v4541, %v4537
    %v4590 = vpack.c.b16 %v4546, %v4542
    %v4591 = vpack.c.b16 %v4547, %v4543
    %v4592 = vpack.c.b16 %v4548, %v4544
    %v4593 = vpack.c.b16 %v4549, %v4545
    %v4594 = vpack.c.b16 %v4554, %v4550
    %v4595 = vpack.c.b16 %v4555, %v4551
    %v4596 = vpack.c.b16 %v4556, %v4552
    %v4597 = vpack.c.b16 %v4557, %v4553
    %v4598 = vpack.c.b16 %v4562, %v4558
    %v4599 = vpack.c.b16 %v4563, %v4559
    %v4600 = vpack.c.b16 %v4564, %v4560
    %v4601 = vpack.c.b16 %v4565, %v4561
    %v4602 = vpack.c.b16 %v4570, %v4566
    %v4603 = vpack.c.b16 %v4571, %v4567
    %v4604 = vpack.c.b16 %v4572, %v4568
    %v4605 = vpack.c.b16 %v4573, %v4569
    %4638 = vmatprep.subr.bf16.mxu0 %v4575
    %4639 = vmatpush1.bf16.msra.mxu0 %v4574
    %4640 = vmatprep.subr.bf16.mxu0 %v4579
    %4641 = vmatpush1.bf16.msra.mxu0 %v4578
    %4642 = vmatprep.subr.bf16.mxu0 %v4583
    %4643 = vmatpush1.bf16.msra.mxu0 %v4582
    %4644 = vmatprep.subr.bf16.mxu0 %v4587
    %4645 = vmatpush1.bf16.msra.mxu0 %v4586
    %4646 = vmatprep.subr.bf16.mxu0 %v4591
    %4647 = vmatpush1.bf16.msra.mxu0 %v4590
    %4648 = vmatprep.subr.bf16.mxu0 %v4595
    %4649 = vmatpush1.bf16.msra.mxu0 %v4594
    %4650 = vmatprep.subr.bf16.mxu0 %v4599
    %4651 = vmatpush1.bf16.msra.mxu0 %v4598
    %4652 = vmatprep.subr.bf16.mxu0 %v4603
    %4653 = vmatpush1.bf16.msra.mxu0 %v4602
    %4654 = vmatprep.subr.bf16.mxu0 0
    %4655 = vmatpush1.bf16.msra.mxu0 0
    %4656 = vmatprep.subr.bf16.mxu0 0
    %4657 = vmatpush1.bf16.msra.mxu0 0
    %4658 = vmatprep.subr.bf16.mxu0 0
    %4659 = vmatpush1.bf16.msra.mxu0 0
    %4660 = vmatprep.subr.bf16.mxu0 0
    %4661 = vmatpush1.bf16.msra.mxu0 0
    %4662 = vmatprep.subr.bf16.mxu0 0
    %4663 = vmatpush1.bf16.msra.mxu0 0
    %4664 = vmatprep.subr.bf16.mxu0 0
    %4665 = vmatpush1.bf16.msra.mxu0 0
    %4666 = vmatprep.subr.bf16.mxu0 0
    %4667 = vmatpush1.bf16.msra.mxu0 0
    %4668 = vmatprep.subr.bf16.mxu0 0
    %4669 = vmatpush1.bf16.msra.mxu0 0
    %4670 = vmatprep.mubr.bf16.mxu0 0
    %4671 = vmatmul.mubr.bf16.gmra.mrb[0].mxu0 0
    %v4672 = vpop.f32.mrb[0].mxu0
    %v4673 = vadd.f32 0.0, %v4672
    %v4674 = vpop.f32.mrb[0].mxu0
    %v4675 = vadd.f32 0.0, %v4674
    %v4676 = vpop.f32.mrb[0].mxu0
    %v4677 = vpop.f32.mrb[0].mxu0
    %4678 = vdwg.mxu0
    %4679 = vmatprep.subr.bf16.mxu0 %v4577
    %4680 = vmatpush1.bf16.msra.mxu0 %v4576
    %4681 = vmatprep.subr.bf16.mxu0 %v4581
    %4682 = vmatpush1.bf16.msra.mxu0 %v4580
    %4683 = vmatprep.subr.bf16.mxu0 %v4585
    %4684 = vmatpush1.bf16.msra.mxu0 %v4584
    %4685 = vmatprep.subr.bf16.mxu0 %v4589
    %4686 = vmatpush1.bf16.msra.mxu0 %v4588
    %4687 = vmatprep.subr.bf16.mxu0 %v4593
    %4688 = vmatpush1.bf16.msra.mxu0 %v4592
    %4689 = vmatprep.subr.bf16.mxu0 %v4597
    %4690 = vmatpush1.bf16.msra.mxu0 %v4596
    %4691 = vmatprep.subr.bf16.mxu0 %v4601
    %4692 = vmatpush1.bf16.msra.mxu0 %v4600
    %4693 = vmatprep.subr.bf16.mxu0 %v4605
    %4694 = vmatpush1.bf16.msra.mxu0 %v4604
    %4695 = vmatprep.subr.bf16.mxu0 0
    %4696 = vmatpush1.bf16.msra.mxu0 0
    %4697 = vmatprep.subr.bf16.mxu0 0
    %4698 = vmatpush1.bf16.msra.mxu0 0
    %4699 = vmatprep.subr.bf16.mxu0 0
    %4700 = vmatpush1.bf16.msra.mxu0 0
    %4701 = vmatprep.subr.bf16.mxu0 0
    %4702 = vmatpush1.bf16.msra.mxu0 0
    %4703 = vmatprep.subr.bf16.mxu0 0
    %4704 = vmatpush1.bf16.msra.mxu0 0
    %4705 = vmatprep.subr.bf16.mxu0 0
    %4706 = vmatpush1.bf16.msra.mxu0 0
    %4707 = vmatprep.subr.bf16.mxu0 0
    %4708 = vmatpush1.bf16.msra.mxu0 0
    %4709 = vmatprep.subr.bf16.mxu0 0
    %4710 = vmatpush1.bf16.msra.mxu0 0
    %4711 = vmatprep.mubr.bf16.mxu0 0
    %4712 = vmatmul.mubr.bf16.gmra.mrb[0].mxu0 0
    %v4713 = vpop.f32.mrb[0].mxu0
    %v4714 = vadd.f32 0.0, %v4713
    %v4715 = vpop.f32.mrb[0].mxu0
    %v4716 = vadd.f32 0.0, %v4715
    %v4717 = vpop.f32.mrb[0].mxu0
    %v4718 = vpop.f32.mrb[0].mxu0
    %4719 = vdwg.mxu0
    %v4720 = vadd.f32 %v3939, %v4673
    %v4721 = vadd.f32 %v3941, %v4675
    %v4722 = vadd.f32 %v3980, %v4714
    %v4723 = vadd.f32 %v3982, %v4716
    %v4724 = vsub.f32 0.0, %v4720
    %v4725 = vmul.f32 %v4724, 1.442695
    %v4726 = vpow.pop %v4725
    %v4727 = vadd.f32 %v4726, 1.0
    %v4728 = vrcp.pop %v4727
    %v4729 = vsub.f32 0.0, %v4721
    %v4730 = vmul.f32 %v4729, 1.442695
    %v4731 = vpow.pop %v4730
    %v4732 = vadd.f32 %v4731, 1.0
    %v4733 = vrcp.pop %v4732
    %v4734 = vtanh.pop %v4722
    %v4735 = vsub.f32 0.0, %v4723
    %v4736 = vmul.f32 %v4735, 1.442695
    %v4737 = vpow.pop %v4736
    %v4738 = vadd.f32 %v4737, 1.0
    %v4739 = vrcp.pop %v4738
    %v4740 = vmul.f32 %v4733, 0.0
    %v4741 = vmul.f32 %v4728, %v4734
    %v4742 = vadd.f32 %v4740, %v4741
    %v4743 = vtanh.pop %v4742
    %v4744 = vmul.f32 %v4739, %v4743
    %v4745 = vpack.c.bf16 %v4744, %v4744
    %4746 = vmatprep.subr.bf16.mxu0 %v4575
    %4747 = vmatpush1.bf16.msra.mxu0 %v4574
    %4748 = vmatprep.subr.bf16.mxu0 %v4579
    %4749 = vmatpush1.bf16.msra.mxu0 %v4578
    %4750 = vmatprep.subr.bf16.mxu0 %v4583
    %4751 = vmatpush1.bf16.msra.mxu0 %v4582
    %4752 = vmatprep.subr.bf16.mxu0 %v4587
    %4753 = vmatpush1.bf16.msra.mxu0 %v4586
    %4754 = vmatprep.subr.bf16.mxu0 %v4591
    %4755 = vmatpush1.bf16.msra.mxu0 %v4590
    %4756 = vmatprep.subr.bf16.mxu0 %v4595
    %4757 = vmatpush1.bf16.msra.mxu0 %v4594
    %4758 = vmatprep.subr.bf16.mxu0 %v4599
    %4759 = vmatpush1.bf16.msra.mxu0 %v4598
    %4760 = vmatprep.subr.bf16.mxu0 %v4603
    %4761 = vmatpush1.bf16.msra.mxu0 %v4602
    %4762 = vmatprep.subr.bf16.mxu0 0
    %4763 = vmatpush1.bf16.msra.mxu0 0
    %4764 = vmatprep.subr.bf16.mxu0 0
    %4765 = vmatpush1.bf16.msra.mxu0 0
    %4766 = vmatprep.subr.bf16.mxu0 0
    %4767 = vmatpush1.bf16.msra.mxu0 0
    %4768 = vmatprep.subr.bf16.mxu0 0
    %4769 = vmatpush1.bf16.msra.mxu0 0
    %4770 = vmatprep.subr.bf16.mxu0 0
    %4771 = vmatpush1.bf16.msra.mxu0 0
    %4772 = vmatprep.subr.bf16.mxu0 0
    %4773 = vmatpush1.bf16.msra.mxu0 0
    %4774 = vmatprep.subr.bf16.mxu0 0
    %4775 = vmatpush1.bf16.msra.mxu0 0
    %4776 = vmatprep.subr.bf16.mxu0 0
    %4777 = vmatpush1.bf16.msra.mxu0 0
    %4778 = vmatprep.mubr.bf16.mxu0 0
    %4779 = vmatmul.mubr.bf16.gmra.mrb[0].mxu0 %v4745
    %v4780 = vpop.f32.mrb[0].mxu0
    %v4781 = vadd.f32 0.0, %v4780
    %v4782 = vpop.f32.mrb[0].mxu0
    %v4783 = vadd.f32 0.0, %v4782
    %v4784 = vpop.f32.mrb[0].mxu0
    %v4785 = vpop.f32.mrb[0].mxu0
    %4786 = vdwg.mxu0
    %4787 = vmatprep.subr.bf16.mxu0 %v4577
    %4788 = vmatpush1.bf16.msra.mxu0 %v4576
    %4789 = vmatprep.subr.bf16.mxu0 %v4581
    %4790 = vmatpush1.bf16.msra.mxu0 %v4580
    %4791 = vmatprep.subr.bf16.mxu0 %v4585
    %4792 = vmatpush1.bf16.msra.mxu0 %v4584
    %4793 = vmatprep.subr.bf16.mxu0 %v4589
    %4794 = vmatpush1.bf16.msra.mxu0 %v4588
    %4795 = vmatprep.subr.bf16.mxu0 %v4593
    %4796 = vmatpush1.bf16.msra.mxu0 %v4592
    %4797 = vmatprep.subr.bf16.mxu0 %v4597
    %4798 = vmatpush1.bf16.msra.mxu0 %v4596
    %4799 = vmatprep.subr.bf16.mxu0 %v4601
    %4800 = vmatpush1.bf16.msra.mxu0 %v4600
    %4801 = vmatprep.subr.bf16.mxu0 %v4605
    %4802 = vmatpush1.bf16.msra.mxu0 %v4604
    %4803 = vmatprep.subr.bf16.mxu0 0
    %4804 = vmatpush1.bf16.msra.mxu0 0
    %4805 = vmatprep.subr.bf16.mxu0 0
    %4806 = vmatpush1.bf16.msra.mxu0 0
    %4807 = vmatprep.subr.bf16.mxu0 0
    %4808 = vmatpush1.bf16.msra.mxu0 0
    %4809 = vmatprep.subr.bf16.mxu0 0
    %4810 = vmatpush1.bf16.msra.mxu0 0
    %4811 = vmatprep.subr.bf16.mxu0 0
    %4812 = vmatpush1.bf16.msra.mxu0 0
    %4813 = vmatprep.subr.bf16.mxu0 0
    %4814 = vmatpush1.bf16.msra.mxu0 0
    %4815 = vmatprep.subr.bf16.mxu0 0
    %4816 = vmatpush1.bf16.msra.mxu0 0
    %4817 = vmatprep.subr.bf16.mxu0 0
    %4818 = vmatpush1.bf16.msra.mxu0 0
    %4819 = vmatprep.mubr.bf16.mxu0 0
    %4820 = vmatmul.mubr.bf16.gmra.mrb[0].mxu0 %v4745
    %v4821 = vpop.f32.mrb[0].mxu0
    %v4822 = vadd.f32 0.0, %v4821
    %v4823 = vpop.f32.mrb[0].mxu0
    %v4824 = vadd.f32 0.0, %v4823
    %v4825 = vpop.f32.mrb[0].mxu0
    %v4826 = vpop.f32.mrb[0].mxu0
    %4827 = vdwg.mxu0
    %v4828 = vadd.f32 %v4021, %v4781
    %v4829 = vadd.f32 %v4023, %v4783
    %v4830 = vadd.f32 %v4062, %v4822
    %v4831 = vadd.f32 %v4064, %v4824
    %v4832 = vsub.f32 0.0, %v4828
    %v4833 = vmul.f32 %v4832, 1.442695
    %v4834 = vpow.pop %v4833
    %v4835 = vadd.f32 %v4834, 1.0
    %v4836 = vrcp.pop %v4835
    %v4837 = vsub.f32 0.0, %v4829
    %v4838 = vmul.f32 %v4837, 1.442695
    %v4839 = vpow.pop %v4838
    %v4840 = vadd.f32 %v4839, 1.0
    %v4841 = vrcp.pop %v4840
    %v4842 = vtanh.pop %v4830
    %v4843 = vsub.f32 0.0, %v4831
    %v4844 = vmul.f32 %v4843, 1.442695
    %v4845 = vpow.pop %v4844
    %v4846 = vadd.f32 %v4845, 1.0
    %v4847 = vrcp.pop %v4846
    %v4848 = vmul.f32 %v4841, %v4742
    %v4849 = vmul.f32 %v4836, %v4842
    %v4850 = vadd.f32 %v4848, %v4849
    %v4851 = vtanh.pop %v4850
    %v4852 = vmul.f32 %v4847, %v4851
    %v4853 = vpack.c.bf16 %v4852, %v4852
    %4854 = vmatprep.subr.bf16.mxu0 %v4575
    %4855 = vmatpush1.bf16.msra.mxu0 %v4574
    %4856 = vmatprep.subr.bf16.mxu0 %v4579
    %4857 = vmatpush1.bf16.msra.mxu0 %v4578
    %4858 = vmatprep.subr.bf16.mxu0 %v4583
    %4859 = vmatpush1.bf16.msra.mxu0 %v4582
    %4860 = vmatprep.subr.bf16.mxu0 %v4587
    %4861 = vmatpush1.bf16.msra.mxu0 %v4586
    %4862 = vmatprep.subr.bf16.mxu0 %v4591
    %4863 = vmatpush1.bf16.msra.mxu0 %v4590
    %4864 = vmatprep.subr.bf16.mxu0 %v4595
    %4865 = vmatpush1.bf16.msra.mxu0 %v4594
    %4866 = vmatprep.subr.bf16.mxu0 %v4599
    %4867 = vmatpush1.bf16.msra.mxu0 %v4598
    %4868 = vmatprep.subr.bf16.mxu0 %v4603
    %4869 = vmatpush1.bf16.msra.mxu0 %v4602
    %4870 = vmatprep.subr.bf16.mxu0 0
    %4871 = vmatpush1.bf16.msra.mxu0 0
    %4872 = vmatprep.subr.bf16.mxu0 0
    %4873 = vmatpush1.bf16.msra.mxu0 0
    %4874 = vmatprep.subr.bf16.mxu0 0
    %4875 = vmatpush1.bf16.msra.mxu0 0
    %4876 = vmatprep.subr.bf16.mxu0 0
    %4877 = vmatpush1.bf16.msra.mxu0 0
    %4878 = vmatprep.subr.bf16.mxu0 0
    %4879 = vmatpush1.bf16.msra.mxu0 0
    %4880 = vmatprep.subr.bf16.mxu0 0
    %4881 = vmatpush1.bf16.msra.mxu0 0
    %4882 = vmatprep.subr.bf16.mxu0 0
    %4883 = vmatpush1.bf16.msra.mxu0 0
    %4884 = vmatprep.subr.bf16.mxu0 0
    %4885 = vmatpush1.bf16.msra.mxu0 0
    %4886 = vmatprep.mubr.bf16.mxu0 0
    %4887 = vmatmul.mubr.bf16.gmra.mrb[0].mxu0 %v4853
    %v4888 = vpop.f32.mrb[0].mxu0
    %v4889 = vadd.f32 0.0, %v4888
    %v4890 = vpop.f32.mrb[0].mxu0
    %v4891 = vadd.f32 0.0, %v4890
    %v4892 = vpop.f32.mrb[0].mxu0
    %v4893 = vpop.f32.mrb[0].mxu0
    %4894 = vdwg.mxu0
    %4895 = vmatprep.subr.bf16.mxu0 %v4577
    %4896 = vmatpush1.bf16.msra.mxu0 %v4576
    %4897 = vmatprep.subr.bf16.mxu0 %v4581
    %4898 = vmatpush1.bf16.msra.mxu0 %v4580
    %4899 = vmatprep.subr.bf16.mxu0 %v4585
    %4900 = vmatpush1.bf16.msra.mxu0 %v4584
    %4901 = vmatprep.subr.bf16.mxu0 %v4589
    %4902 = vmatpush1.bf16.msra.mxu0 %v4588
    %4903 = vmatprep.subr.bf16.mxu0 %v4593
    %4904 = vmatpush1.bf16.msra.mxu0 %v4592
    %4905 = vmatprep.subr.bf16.mxu0 %v4597
    %4906 = vmatpush1.bf16.msra.mxu0 %v4596
    %4907 = vmatprep.subr.bf16.mxu0 %v4601
    %4908 = vmatpush1.bf16.msra.mxu0 %v4600
    %4909 = vmatprep.subr.bf16.mxu0 %v4605
    %4910 = vmatpush1.bf16.msra.mxu0 %v4604
    %4911 = vmatprep.subr.bf16.mxu0 0
    %4912 = vmatpush1.bf16.msra.mxu0 0
    %4913 = vmatprep.subr.bf16.mxu0 0
    %4914 = vmatpush1.bf16.msra.mxu0 0
    %4915 = vmatprep.subr.bf16.mxu0 0
    %4916 = vmatpush1.bf16.msra.mxu0 0
    %4917 = vmatprep.subr.bf16.mxu0 0
    %4918 = vmatpush1.bf16.msra.mxu0 0
    %4919 = vmatprep.subr.bf16.mxu0 0
    %4920 = vmatpush1.bf16.msra.mxu0 0
    %4921 = vmatprep.subr.bf16.mxu0 0
    %4922 = vmatpush1.bf16.msra.mxu0 0
    %4923 = vmatprep.subr.bf16.mxu0 0
    %4924 = vmatpush1.bf16.msra.mxu0 0
    %4925 = vmatprep.subr.bf16.mxu0 0
    %4926 = vmatpush1.bf16.msra.mxu0 0
    %4927 = vmatprep.mubr.bf16.mxu0 0
    %4928 = vmatmul.mubr.bf16.gmra.mrb[0].mxu0 %v4853
    %v4929 = vpop.f32.mrb[0].mxu0
    %v4930 = vadd.f32 0.0, %v4929
    %v4931 = vpop.f32.mrb[0].mxu0
    %v4932 = vadd.f32 0.0, %v4931
    %v4933 = vpop.f32.mrb[0].mxu0
    %v4934 = vpop.f32.mrb[0].mxu0
    %4935 = vdwg.mxu0
    %v4936 = vadd.f32 %v4103, %v4889
    %v4937 = vadd.f32 %v4105, %v4891
    %v4938 = vadd.f32 %v4144, %v4930
    %v4939 = vadd.f32 %v4146, %v4932
    %v4940 = vsub.f32 0.0, %v4936
    %v4941 = vmul.f32 %v4940, 1.442695
    %v4942 = vpow.pop %v4941
    %v4943 = vadd.f32 %v4942, 1.0
    %v4944 = vrcp.pop %v4943
    %v4945 = vsub.f32 0.0, %v4937
    %v4946 = vmul.f32 %v4945, 1.442695
    %v4947 = vpow.pop %v4946
    %v4948 = vadd.f32 %v4947, 1.0
    %v4949 = vrcp.pop %v4948
    %v4950 = vtanh.pop %v4938
    %v4951 = vsub.f32 0.0, %v4939
    %v4952 = vmul.f32 %v4951, 1.442695
    %v4953 = vpow.pop %v4952
    %v4954 = vadd.f32 %v4953, 1.0
    %v4955 = vrcp.pop %v4954
    %v4956 = vmul.f32 %v4949, %v4850
    %v4957 = vmul.f32 %v4944, %v4950
    %v4958 = vadd.f32 %v4956, %v4957
    %v4959 = vtanh.pop %v4958
    %v4960 = vmul.f32 %v4955, %v4959
    %v4961 = vpack.c.bf16 %v4960, %v4960
    %4962 = vmatprep.subr.bf16.mxu0 %v4575
    %4963 = vmatpush1.bf16.msra.mxu0 %v4574
    %4964 = vmatprep.subr.bf16.mxu0 %v4579
    %4965 = vmatpush1.bf16.msra.mxu0 %v4578
    %4966 = vmatprep.subr.bf16.mxu0 %v4583
    %4967 = vmatpush1.bf16.msra.mxu0 %v4582
    %4968 = vmatprep.subr.bf16.mxu0 %v4587
    %4969 = vmatpush1.bf16.msra.mxu0 %v4586
    %4970 = vmatprep.subr.bf16.mxu0 %v4591
    %4971 = vmatpush1.bf16.msra.mxu0 %v4590
    %4972 = vmatprep.subr.bf16.mxu0 %v4595
    %4973 = vmatpush1.bf16.msra.mxu0 %v4594
    %4974 = vmatprep.subr.bf16.mxu0 %v4599
    %4975 = vmatpush1.bf16.msra.mxu0 %v4598
    %4976 = vmatprep.subr.bf16.mxu0 %v4603
    %4977 = vmatpush1.bf16.msra.mxu0 %v4602
    %4978 = vmatprep.subr.bf16.mxu0 0
    %4979 = vmatpush1.bf16.msra.mxu0 0
    %4980 = vmatprep.subr.bf16.mxu0 0
    %4981 = vmatpush1.bf16.msra.mxu0 0
    %4982 = vmatprep.subr.bf16.mxu0 0
    %4983 = vmatpush1.bf16.msra.mxu0 0
    %4984 = vmatprep.subr.bf16.mxu0 0
    %4985 = vmatpush1.bf16.msra.mxu0 0
    %4986 = vmatprep.subr.bf16.mxu0 0
    %4987 = vmatpush1.bf16.msra.mxu0 0
    %4988 = vmatprep.subr.bf16.mxu0 0
    %4989 = vmatpush1.bf16.msra.mxu0 0
    %4990 = vmatprep.subr.bf16.mxu0 0
    %4991 = vmatpush1.bf16.msra.mxu0 0
    %4992 = vmatprep.subr.bf16.mxu0 0
    %4993 = vmatpush1.bf16.msra.mxu0 0
    %4994 = vmatprep.mubr.bf16.mxu0 0
    %4995 = vmatmul.mubr.bf16.gmra.mrb[0].mxu0 %v4961
    %v4996 = vpop.f32.mrb[0].mxu0
    %v4997 = vadd.f32 0.0, %v4996
    %v4998 = vpop.f32.mrb[0].mxu0
    %v4999 = vadd.f32 0.0, %v4998
    %v5000 = vpop.f32.mrb[0].mxu0
    %v5001 = vpop.f32.mrb[0].mxu0
    %5002 = vdwg.mxu0
    %5003 = vmatprep.subr.bf16.mxu0 %v4577
    %5004 = vmatpush1.bf16.msra.mxu0 %v4576
    %5005 = vmatprep.subr.bf16.mxu0 %v4581
    %5006 = vmatpush1.bf16.msra.mxu0 %v4580
    %5007 = vmatprep.subr.bf16.mxu0 %v4585
    %5008 = vmatpush1.bf16.msra.mxu0 %v4584
    %5009 = vmatprep.subr.bf16.mxu0 %v4589
    %5010 = vmatpush1.bf16.msra.mxu0 %v4588
    %5011 = vmatprep.subr.bf16.mxu0 %v4593
    %5012 = vmatpush1.bf16.msra.mxu0 %v4592
    %5013 = vmatprep.subr.bf16.mxu0 %v4597
    %5014 = vmatpush1.bf16.msra.mxu0 %v4596
    %5015 = vmatprep.subr.bf16.mxu0 %v4601
    %5016 = vmatpush1.bf16.msra.mxu0 %v4600
    %5017 = vmatprep.subr.bf16.mxu0 %v4605
    %5018 = vmatpush1.bf16.msra.mxu0 %v4604
    %5019 = vmatprep.subr.bf16.mxu0 0
    %5020 = vmatpush1.bf16.msra.mxu0 0
    %5021 = vmatprep.subr.bf16.mxu0 0
    %5022 = vmatpush1.bf16.msra.mxu0 0
    %5023 = vmatprep.subr.bf16.mxu0 0
    %5024 = vmatpush1.bf16.msra.mxu0 0
    %5025 = vmatprep.subr.bf16.mxu0 0
    %5026 = vmatpush1.bf16.msra.mxu0 0
    %5027 = vmatprep.subr.bf16.mxu0 0
    %5028 = vmatpush1.bf16.msra.mxu0 0
    %5029 = vmatprep.subr.bf16.mxu0 0
    %5030 = vmatpush1.bf16.msra.mxu0 0
    %5031 = vmatprep.subr.bf16.mxu0 0
    %5032 = vmatpush1.bf16.msra.mxu0 0
    %5033 = vmatprep.subr.bf16.mxu0 0
    %5034 = vmatpush1.bf16.msra.mxu0 0
    %5035 = vmatprep.mubr.bf16.mxu0 0
    %5036 = vmatmul.mubr.bf16.gmra.mrb[0].mxu0 %v4961
    %v5037 = vpop.f32.mrb[0].mxu0
    %v5038 = vadd.f32 0.0, %v5037
    %v5039 = vpop.f32.mrb[0].mxu0
    %v5040 = vadd.f32 0.0, %v5039
    %v5041 = vpop.f32.mrb[0].mxu0
    %v5042 = vpop.f32.mrb[0].mxu0
    %5043 = vdwg.mxu0
    %v5044 = vadd.f32 %v4185, %v4997
    %v5045 = vadd.f32 %v4187, %v4999
    %v5046 = vadd.f32 %v4226, %v5038
    %v5047 = vadd.f32 %v4228, %v5040
    %v5048 = vsub.f32 0.0, %v5044
    %v5049 = vmul.f32 %v5048, 1.442695
    %v5050 = vpow.pop %v5049
    %v5051 = vadd.f32 %v5050, 1.0
    %v5052 = vrcp.pop %v5051
    %v5053 = vsub.f32 0.0, %v5045
    %v5054 = vmul.f32 %v5053, 1.442695
    %v5055 = vpow.pop %v5054
    %v5056 = vadd.f32 %v5055, 1.0
    %v5057 = vrcp.pop %v5056
    %v5058 = vtanh.pop %v5046
    %v5059 = vsub.f32 0.0, %v5047
    %v5060 = vmul.f32 %v5059, 1.442695
    %v5061 = vpow.pop %v5060
    %v5062 = vadd.f32 %v5061, 1.0
    %v5063 = vrcp.pop %v5062
    %v5064 = vmul.f32 %v5057, %v4958
    %v5065 = vmul.f32 %v5052, %v5058
    %v5066 = vadd.f32 %v5064, %v5065
    %v5067 = vtanh.pop %v5066
    %v5068 = vmul.f32 %v5063, %v5067
    %v5069 = vpack.c.bf16 %v5068, %v5068
    %5070 = vmatprep.subr.bf16.mxu0 %v4575
    %5071 = vmatpush1.bf16.msra.mxu0 %v4574
    %5072 = vmatprep.subr.bf16.mxu0 %v4579
    %5073 = vmatpush1.bf16.msra.mxu0 %v4578
    %5074 = vmatprep.subr.bf16.mxu0 %v4583
    %5075 = vmatpush1.bf16.msra.mxu0 %v4582
    %5076 = vmatprep.subr.bf16.mxu0 %v4587
    %5077 = vmatpush1.bf16.msra.mxu0 %v4586
    %5078 = vmatprep.subr.bf16.mxu0 %v4591
    %5079 = vmatpush1.bf16.msra.mxu0 %v4590
    %5080 = vmatprep.subr.bf16.mxu0 %v4595
    %5081 = vmatpush1.bf16.msra.mxu0 %v4594
    %5082 = vmatprep.subr.bf16.mxu0 %v4599
    %5083 = vmatpush1.bf16.msra.mxu0 %v4598
    %5084 = vmatprep.subr.bf16.mxu0 %v4603
    %5085 = vmatpush1.bf16.msra.mxu0 %v4602
    %5086 = vmatprep.subr.bf16.mxu0 0
    %5087 = vmatpush1.bf16.msra.mxu0 0
    %5088 = vmatprep.subr.bf16.mxu0 0
    %5089 = vmatpush1.bf16.msra.mxu0 0
    %5090 = vmatprep.subr.bf16.mxu0 0
    %5091 = vmatpush1.bf16.msra.mxu0 0
    %5092 = vmatprep.subr.bf16.mxu0 0
    %5093 = vmatpush1.bf16.msra.mxu0 0
    %5094 = vmatprep.subr.bf16.mxu0 0
    %5095 = vmatpush1.bf16.msra.mxu0 0
    %5096 = vmatprep.subr.bf16.mxu0 0
    %5097 = vmatpush1.bf16.msra.mxu0 0
    %5098 = vmatprep.subr.bf16.mxu0 0
    %5099 = vmatpush1.bf16.msra.mxu0 0
    %5100 = vmatprep.subr.bf16.mxu0 0
    %5101 = vmatpush1.bf16.msra.mxu0 0
    %5102 = vmatprep.mubr.bf16.mxu0 0
    %5103 = vmatmul.mubr.bf16.gmra.mrb[0].mxu0 %v5069
    %v5104 = vpop.f32.mrb[0].mxu0
    %v5105 = vadd.f32 0.0, %v5104
    %v5106 = vpop.f32.mrb[0].mxu0
    %v5107 = vadd.f32 0.0, %v5106
    %v5108 = vpop.f32.mrb[0].mxu0
    %v5109 = vpop.f32.mrb[0].mxu0
    %5110 = vdwg.mxu0
    %5111 = vmatprep.subr.bf16.mxu0 %v4577
    %5112 = vmatpush1.bf16.msra.mxu0 %v4576
    %5113 = vmatprep.subr.bf16.mxu0 %v4581
    %5114 = vmatpush1.bf16.msra.mxu0 %v4580
    %5115 = vmatprep.subr.bf16.mxu0 %v4585
    %5116 = vmatpush1.bf16.msra.mxu0 %v4584
    %5117 = vmatprep.subr.bf16.mxu0 %v4589
    %5118 = vmatpush1.bf16.msra.mxu0 %v4588
    %5119 = vmatprep.subr.bf16.mxu0 %v4593
    %5120 = vmatpush1.bf16.msra.mxu0 %v4592
    %5121 = vmatprep.subr.bf16.mxu0 %v4597
    %5122 = vmatpush1.bf16.msra.mxu0 %v4596
    %5123 = vmatprep.subr.bf16.mxu0 %v4601
    %5124 = vmatpush1.bf16.msra.mxu0 %v4600
    %5125 = vmatprep.subr.bf16.mxu0 %v4605
    %5126 = vmatpush1.bf16.msra.mxu0 %v4604
    %5127 = vmatprep.subr.bf16.mxu0 0
    %5128 = vmatpush1.bf16.msra.mxu0 0
    %5129 = vmatprep.subr.bf16.mxu0 0
    %5130 = vmatpush1.bf16.msra.mxu0 0
    %5131 = vmatprep.subr.bf16.mxu0 0
    %5132 = vmatpush1.bf16.msra.mxu0 0
    %5133 = vmatprep.subr.bf16.mxu0 0
    %5134 = vmatpush1.bf16.msra.mxu0 0
    %5135 = vmatprep.subr.bf16.mxu0 0
    %5136 = vmatpush1.bf16.msra.mxu0 0
    %5137 = vmatprep.subr.bf16.mxu0 0
    %5138 = vmatpush1.bf16.msra.mxu0 0
    %5139 = vmatprep.subr.bf16.mxu0 0
    %5140 = vmatpush1.bf16.msra.mxu0 0
    %5141 = vmatprep.subr.bf16.mxu0 0
    %5142 = vmatpush1.bf16.msra.mxu0 0
    %5143 = vmatprep.mubr.bf16.mxu0 0
    %5144 = vmatmul.mubr.bf16.gmra.mrb[0].mxu0 %v5069
    %v5145 = vpop.f32.mrb[0].mxu0
    %v5146 = vadd.f32 0.0, %v5145
    %v5147 = vpop.f32.mrb[0].mxu0
    %v5148 = vadd.f32 0.0, %v5147
    %v5149 = vpop.f32.mrb[0].mxu0
    %v5150 = vpop.f32.mrb[0].mxu0
    %5151 = vdwg.mxu0
    %v5152 = vadd.f32 %v4267, %v5105
    %v5153 = vadd.f32 %v4269, %v5107
    %v5154 = vadd.f32 %v4308, %v5146
    %v5155 = vadd.f32 %v4310, %v5148
    %v5156 = vsub.f32 0.0, %v5152
    %v5157 = vmul.f32 %v5156, 1.442695
    %v5158 = vpow.pop %v5157
    %v5159 = vadd.f32 %v5158, 1.0
    %v5160 = vrcp.pop %v5159
    %v5161 = vsub.f32 0.0, %v5153
    %v5162 = vmul.f32 %v5161, 1.442695
    %v5163 = vpow.pop %v5162
    %v5164 = vadd.f32 %v5163, 1.0
    %v5165 = vrcp.pop %v5164
    %v5166 = vtanh.pop %v5154
    %v5167 = vsub.f32 0.0, %v5155
    %v5168 = vmul.f32 %v5167, 1.442695
    %v5169 = vpow.pop %v5168
    %v5170 = vadd.f32 %v5169, 1.0
    %v5171 = vrcp.pop %v5170
    %v5172 = vmul.f32 %v5165, %v5066
    %v5173 = vmul.f32 %v5160, %v5166
    %v5174 = vadd.f32 %v5172, %v5173
    %v5175 = vtanh.pop %v5174
    %v5176 = vmul.f32 %v5171, %v5175
    %v5177 = vpack.c.bf16 %v5176, %v5176
    %5178 = vmatprep.subr.bf16.mxu0 %v4575
    %5179 = vmatpush1.bf16.msra.mxu0 %v4574
    %5180 = vmatprep.subr.bf16.mxu0 %v4579
    %5181 = vmatpush1.bf16.msra.mxu0 %v4578
    %5182 = vmatprep.subr.bf16.mxu0 %v4583
    %5183 = vmatpush1.bf16.msra.mxu0 %v4582
    %5184 = vmatprep.subr.bf16.mxu0 %v4587
    %5185 = vmatpush1.bf16.msra.mxu0 %v4586
    %5186 = vmatprep.subr.bf16.mxu0 %v4591
    %5187 = vmatpush1.bf16.msra.mxu0 %v4590
    %5188 = vmatprep.subr.bf16.mxu0 %v4595
    %5189 = vmatpush1.bf16.msra.mxu0 %v4594
    %5190 = vmatprep.subr.bf16.mxu0 %v4599
    %5191 = vmatpush1.bf16.msra.mxu0 %v4598
    %5192 = vmatprep.subr.bf16.mxu0 %v4603
    %5193 = vmatpush1.bf16.msra.mxu0 %v4602
    %5194 = vmatprep.subr.bf16.mxu0 0
    %5195 = vmatpush1.bf16.msra.mxu0 0
    %5196 = vmatprep.subr.bf16.mxu0 0
    %5197 = vmatpush1.bf16.msra.mxu0 0
    %5198 = vmatprep.subr.bf16.mxu0 0
    %5199 = vmatpush1.bf16.msra.mxu0 0
    %5200 = vmatprep.subr.bf16.mxu0 0
    %5201 = vmatpush1.bf16.msra.mxu0 0
    %5202 = vmatprep.subr.bf16.mxu0 0
    %5203 = vmatpush1.bf16.msra.mxu0 0
    %5204 = vmatprep.subr.bf16.mxu0 0
    %5205 = vmatpush1.bf16.msra.mxu0 0
    %5206 = vmatprep.subr.bf16.mxu0 0
    %5207 = vmatpush1.bf16.msra.mxu0 0
    %5208 = vmatprep.subr.bf16.mxu0 0
    %5209 = vmatpush1.bf16.msra.mxu0 0
    %5210 = vmatprep.mubr.bf16.mxu0 0
    %5211 = vmatmul.mubr.bf16.gmra.mrb[0].mxu0 %v5177
    %v5212 = vpop.f32.mrb[0].mxu0
    %v5213 = vadd.f32 0.0, %v5212
    %v5214 = vpop.f32.mrb[0].mxu0
    %v5215 = vadd.f32 0.0, %v5214
    %v5216 = vpop.f32.mrb[0].mxu0
    %v5217 = vpop.f32.mrb[0].mxu0
    %5218 = vdwg.mxu0
    %5219 = vmatprep.subr.bf16.mxu0 %v4577
    %5220 = vmatpush1.bf16.msra.mxu0 %v4576
    %5221 = vmatprep.subr.bf16.mxu0 %v4581
    %5222 = vmatpush1.bf16.msra.mxu0 %v4580
    %5223 = vmatprep.subr.bf16.mxu0 %v4585
    %5224 = vmatpush1.bf16.msra.mxu0 %v4584
    %5225 = vmatprep.subr.bf16.mxu0 %v4589
    %5226 = vmatpush1.bf16.msra.mxu0 %v4588
    %5227 = vmatprep.subr.bf16.mxu0 %v4593
    %5228 = vmatpush1.bf16.msra.mxu0 %v4592
    %5229 = vmatprep.subr.bf16.mxu0 %v4597
    %5230 = vmatpush1.bf16.msra.mxu0 %v4596
    %5231 = vmatprep.subr.bf16.mxu0 %v4601
    %5232 = vmatpush1.bf16.msra.mxu0 %v4600
    %5233 = vmatprep.subr.bf16.mxu0 %v4605
    %5234 = vmatpush1.bf16.msra.mxu0 %v4604
    %5235 = vmatprep.subr.bf16.mxu0 0
    %5236 = vmatpush1.bf16.msra.mxu0 0
    %5237 = vmatprep.subr.bf16.mxu0 0
    %5238 = vmatpush1.bf16.msra.mxu0 0
    %5239 = vmatprep.subr.bf16.mxu0 0
    %5240 = vmatpush1.bf16.msra.mxu0 0
    %5241 = vmatprep.subr.bf16.mxu0 0
    %5242 = vmatpush1.bf16.msra.mxu0 0
    %5243 = vmatprep.subr.bf16.mxu0 0
    %5244 = vmatpush1.bf16.msra.mxu0 0
    %5245 = vmatprep.subr.bf16.mxu0 0
    %5246 = vmatpush1.bf16.msra.mxu0 0
    %5247 = vmatprep.subr.bf16.mxu0 0
    %5248 = vmatpush1.bf16.msra.mxu0 0
    %5249 = vmatprep.subr.bf16.mxu0 0
    %5250 = vmatpush1.bf16.msra.mxu0 0
    %5251 = vmatprep.mubr.bf16.mxu0 0
    %5252 = vmatmul.mubr.bf16.gmra.mrb[0].mxu0 %v5177
    %v5253 = vpop.f32.mrb[0].mxu0
    %v5254 = vadd.f32 0.0, %v5253
    %v5255 = vpop.f32.mrb[0].mxu0
    %v5256 = vadd.f32 0.0, %v5255
    %v5257 = vpop.f32.mrb[0].mxu0
    %v5258 = vpop.f32.mrb[0].mxu0
    %5259 = vdwg.mxu0
    %v5260 = vadd.f32 %v4349, %v5213
    %v5261 = vadd.f32 %v4351, %v5215
    %v5262 = vadd.f32 %v4390, %v5254
    %v5263 = vadd.f32 %v4392, %v5256
    %v5264 = vsub.f32 0.0, %v5260
    %v5265 = vmul.f32 %v5264, 1.442695
    %v5266 = vpow.pop %v5265
    %v5267 = vadd.f32 %v5266, 1.0
    %v5268 = vrcp.pop %v5267
    %v5269 = vsub.f32 0.0, %v5261
    %v5270 = vmul.f32 %v5269, 1.442695
    %v5271 = vpow.pop %v5270
    %v5272 = vadd.f32 %v5271, 1.0
    %v5273 = vrcp.pop %v5272
    %v5274 = vtanh.pop %v5262
    %v5275 = vsub.f32 0.0, %v5263
    %v5276 = vmul.f32 %v5275, 1.442695
    %v5277 = vpow.pop %v5276
    %v5278 = vadd.f32 %v5277, 1.0
    %v5279 = vrcp.pop %v5278
    %v5280 = vmul.f32 %v5273, %v5174
    %v5281 = vmul.f32 %v5268, %v5274
    %v5282 = vadd.f32 %v5280, %v5281
    %v5283 = vtanh.pop %v5282
    %v5284 = vmul.f32 %v5279, %v5283
    %v5285 = vpack.c.bf16 %v5284, %v5284
    %5286 = vmatprep.subr.bf16.mxu0 %v4575
    %5287 = vmatpush1.bf16.msra.mxu0 %v4574
    %5288 = vmatprep.subr.bf16.mxu0 %v4579
    %5289 = vmatpush1.bf16.msra.mxu0 %v4578
    %5290 = vmatprep.subr.bf16.mxu0 %v4583
    %5291 = vmatpush1.bf16.msra.mxu0 %v4582
    %5292 = vmatprep.subr.bf16.mxu0 %v4587
    %5293 = vmatpush1.bf16.msra.mxu0 %v4586
    %5294 = vmatprep.subr.bf16.mxu0 %v4591
    %5295 = vmatpush1.bf16.msra.mxu0 %v4590
    %5296 = vmatprep.subr.bf16.mxu0 %v4595
    %5297 = vmatpush1.bf16.msra.mxu0 %v4594
    %5298 = vmatprep.subr.bf16.mxu0 %v4599
    %5299 = vmatpush1.bf16.msra.mxu0 %v4598
    %5300 = vmatprep.subr.bf16.mxu0 %v4603
    %5301 = vmatpush1.bf16.msra.mxu0 %v4602
    %5302 = vmatprep.subr.bf16.mxu0 0
    %5303 = vmatpush1.bf16.msra.mxu0 0
    %5304 = vmatprep.subr.bf16.mxu0 0
    %5305 = vmatpush1.bf16.msra.mxu0 0
    %5306 = vmatprep.subr.bf16.mxu0 0
    %5307 = vmatpush1.bf16.msra.mxu0 0
    %5308 = vmatprep.subr.bf16.mxu0 0
    %5309 = vmatpush1.bf16.msra.mxu0 0
    %5310 = vmatprep.subr.bf16.mxu0 0
    %5311 = vmatpush1.bf16.msra.mxu0 0
    %5312 = vmatprep.subr.bf16.mxu0 0
    %5313 = vmatpush1.bf16.msra.mxu0 0
    %5314 = vmatprep.subr.bf16.mxu0 0
    %5315 = vmatpush1.bf16.msra.mxu0 0
    %5316 = vmatprep.subr.bf16.mxu0 0
    %5317 = vmatpush1.bf16.msra.mxu0 0
    %5318 = vmatprep.mubr.bf16.mxu0 0
    %5319 = vmatmul.mubr.bf16.gmra.mrb[0].mxu0 %v5285
    %v5320 = vpop.f32.mrb[0].mxu0
    %v5321 = vadd.f32 0.0, %v5320
    %v5322 = vpop.f32.mrb[0].mxu0
    %v5323 = vadd.f32 0.0, %v5322
    %v5324 = vpop.f32.mrb[0].mxu0
    %v5325 = vpop.f32.mrb[0].mxu0
    %5326 = vdwg.mxu0
    %5327 = vmatprep.subr.bf16.mxu0 %v4577
    %5328 = vmatpush1.bf16.msra.mxu0 %v4576
    %5329 = vmatprep.subr.bf16.mxu0 %v4581
    %5330 = vmatpush1.bf16.msra.mxu0 %v4580
    %5331 = vmatprep.subr.bf16.mxu0 %v4585
    %5332 = vmatpush1.bf16.msra.mxu0 %v4584
    %5333 = vmatprep.subr.bf16.mxu0 %v4589
    %5334 = vmatpush1.bf16.msra.mxu0 %v4588
    %5335 = vmatprep.subr.bf16.mxu0 %v4593
    %5336 = vmatpush1.bf16.msra.mxu0 %v4592
    %5337 = vmatprep.subr.bf16.mxu0 %v4597
    %5338 = vmatpush1.bf16.msra.mxu0 %v4596
    %5339 = vmatprep.subr.bf16.mxu0 %v4601
    %5340 = vmatpush1.bf16.msra.mxu0 %v4600
    %5341 = vmatprep.subr.bf16.mxu0 %v4605
    %5342 = vmatpush1.bf16.msra.mxu0 %v4604
    %5343 = vmatprep.subr.bf16.mxu0 0
    %5344 = vmatpush1.bf16.msra.mxu0 0
    %5345 = vmatprep.subr.bf16.mxu0 0
    %5346 = vmatpush1.bf16.msra.mxu0 0
    %5347 = vmatprep.subr.bf16.mxu0 0
    %5348 = vmatpush1.bf16.msra.mxu0 0
    %5349 = vmatprep.subr.bf16.mxu0 0
    %5350 = vmatpush1.bf16.msra.mxu0 0
    %5351 = vmatprep.subr.bf16.mxu0 0
    %5352 = vmatpush1.bf16.msra.mxu0 0
    %5353 = vmatprep.subr.bf16.mxu0 0
    %5354 = vmatpush1.bf16.msra.mxu0 0
    %5355 = vmatprep.subr.bf16.mxu0 0
    %5356 = vmatpush1.bf16.msra.mxu0 0
    %5357 = vmatprep.subr.bf16.mxu0 0
    %5358 = vmatpush1.bf16.msra.mxu0 0
    %5359 = vmatprep.mubr.bf16.mxu0 0
    %5360 = vmatmul.mubr.bf16.gmra.mrb[0].mxu0 %v5285
    %v5361 = vpop.f32.mrb[0].mxu0
    %v5362 = vadd.f32 0.0, %v5361
    %v5363 = vpop.f32.mrb[0].mxu0
    %v5364 = vadd.f32 0.0, %v5363
    %v5365 = vpop.f32.mrb[0].mxu0
    %v5366 = vpop.f32.mrb[0].mxu0
    %5367 = vdwg.mxu0
    %v5368 = vadd.f32 %v4431, %v5321
    %v5369 = vadd.f32 %v4433, %v5323
    %v5370 = vadd.f32 %v4472, %v5362
    %v5371 = vadd.f32 %v4474, %v5364
    %v5372 = vsub.f32 0.0, %v5368
    %v5373 = vmul.f32 %v5372, 1.442695
    %v5374 = vpow.pop %v5373
    %v5375 = vadd.f32 %v5374, 1.0
    %v5376 = vrcp.pop %v5375
    %v5377 = vsub.f32 0.0, %v5369
    %v5378 = vmul.f32 %v5377, 1.442695
    %v5379 = vpow.pop %v5378
    %v5380 = vadd.f32 %v5379, 1.0
    %v5381 = vrcp.pop %v5380
    %v5382 = vtanh.pop %v5370
    %v5383 = vsub.f32 0.0, %v5371
    %v5384 = vmul.f32 %v5383, 1.442695
    %v5385 = vpow.pop %v5384
    %v5386 = vadd.f32 %v5385, 1.0
    %v5387 = vrcp.pop %v5386
    %v5388 = vmul.f32 %v5381, %v5282
    %v5389 = vmul.f32 %v5376, %v5382
    %v5390 = vadd.f32 %v5388, %v5389
    %v5391 = vtanh.pop %v5390
    %v5392 = vmul.f32 %v5387, %v5391
    %v5393 = vpack.c.bf16 %v5392, %v5392
    %v5394 = vld [vmem:[#allocation17] sm:$0x3]
    %v5396 = vlaneseq
    %v5397 = vshrl.u32 %v5396, 7
    %v5398 = vsub.s32 0, %v5397
    %v5399 = vrot.slane %v5394, %v5398
    %v5400 = vlaneseq
    %v5401 = vshrl.u32 %v5400, 7
    %v5402 = vsub.s32 1, %v5401
    %v5403 = vrot.slane %v5394, %v5402
    %v5406 = vld [vmem:[#allocation16] sm:$0xff]
    %v5407 = vld [vmem:[#allocation16 + $0x8] sm:$0xff]
    %v5408 = vld [vmem:[#allocation16 + $0x10] sm:$0xff]
    %v5409 = vld [vmem:[#allocation16 + $0x18] sm:$0xff]
    %v5410 = vld [vmem:[#allocation16 + $0x20] sm:$0xff]
    %v5411 = vld [vmem:[#allocation16 + $0x28] sm:$0xff]
    %v5412 = vld [vmem:[#allocation16 + $0x30] sm:$0xff]
    %v5413 = vld [vmem:[#allocation16 + $0x38] sm:$0xff]
    %v5414 = vld [vmem:[#allocation16 + $0x40] sm:$0xff]
    %v5415 = vld [vmem:[#allocation16 + $0x48] sm:$0xff]
    %v5416 = vld [vmem:[#allocation16 + $0x50] sm:$0xff]
    %v5417 = vld [vmem:[#allocation16 + $0x58] sm:$0xff]
    %v5418 = vld [vmem:[#allocation16 + $0x60] sm:$0xff]
    %v5419 = vld [vmem:[#allocation16 + $0x68] sm:$0xff]
    %v5420 = vld [vmem:[#allocation16 + $0x70] sm:$0xff]
    %v5421 = vld [vmem:[#allocation16 + $0x78] sm:$0xff]
    %v5438 = vunpack.c.l.b16 %v5406
    %v5439 = vunpack.c.h.b16 %v5406
    %v5440 = vunpack.c.l.b16 %v5407
    %v5441 = vunpack.c.h.b16 %v5407
    %v5442 = vunpack.c.l.b16 %v5408
    %v5443 = vunpack.c.h.b16 %v5408
    %v5444 = vunpack.c.l.b16 %v5409
    %v5445 = vunpack.c.h.b16 %v5409
    %v5446 = vunpack.c.l.b16 %v5410
    %v5447 = vunpack.c.h.b16 %v5410
    %v5448 = vunpack.c.l.b16 %v5411
    %v5449 = vunpack.c.h.b16 %v5411
    %v5450 = vunpack.c.l.b16 %v5412
    %v5451 = vunpack.c.h.b16 %v5412
    %v5452 = vunpack.c.l.b16 %v5413
    %v5453 = vunpack.c.h.b16 %v5413
    %v5454 = vunpack.c.l.b16 %v5414
    %v5455 = vunpack.c.h.b16 %v5414
    %v5456 = vunpack.c.l.b16 %v5415
    %v5457 = vunpack.c.h.b16 %v5415
    %v5458 = vunpack.c.l.b16 %v5416
    %v5459 = vunpack.c.h.b16 %v5416
    %v5460 = vunpack.c.l.b16 %v5417
    %v5461 = vunpack.c.h.b16 %v5417
    %v5462 = vunpack.c.l.b16 %v5418
    %v5463 = vunpack.c.h.b16 %v5418
    %v5464 = vunpack.c.l.b16 %v5419
    %v5465 = vunpack.c.h.b16 %v5419
    %v5466 = vunpack.c.l.b16 %v5420
    %v5467 = vunpack.c.h.b16 %v5420
    %v5468 = vunpack.c.l.b16 %v5421
    %v5469 = vunpack.c.h.b16 %v5421
    %v5470 = vpack.c.b16 %v5440, %v5438
    %v5471 = vpack.c.b16 %v5441, %v5439
    %v5472 = vpack.c.b16 %v5444, %v5442
    %v5473 = vpack.c.b16 %v5445, %v5443
    %v5474 = vpack.c.b16 %v5448, %v5446
    %v5475 = vpack.c.b16 %v5449, %v5447
    %v5476 = vpack.c.b16 %v5452, %v5450
    %v5477 = vpack.c.b16 %v5453, %v5451
    %v5478 = vpack.c.b16 %v5456, %v5454
    %v5479 = vpack.c.b16 %v5457, %v5455
    %v5480 = vpack.c.b16 %v5460, %v5458
    %v5481 = vpack.c.b16 %v5461, %v5459
    %v5482 = vpack.c.b16 %v5464, %v5462
    %v5483 = vpack.c.b16 %v5465, %v5463
    %v5484 = vpack.c.b16 %v5468, %v5466
    %v5485 = vpack.c.b16 %v5469, %v5467
    %5502 = vmatprep.subr.bf16.mxu0 %v5471
    %5503 = vmatpush1.bf16.msra.mxu0 %v5470
    %5504 = vmatprep.subr.bf16.mxu0 %v5473
    %5505 = vmatpush1.bf16.msra.mxu0 %v5472
    %5506 = vmatprep.subr.bf16.mxu0 %v5475
    %5507 = vmatpush1.bf16.msra.mxu0 %v5474
    %5508 = vmatprep.subr.bf16.mxu0 %v5477
    %5509 = vmatpush1.bf16.msra.mxu0 %v5476
    %5510 = vmatprep.subr.bf16.mxu0 %v5479
    %5511 = vmatpush1.bf16.msra.mxu0 %v5478
    %5512 = vmatprep.subr.bf16.mxu0 %v5481
    %5513 = vmatpush1.bf16.msra.mxu0 %v5480
    %5514 = vmatprep.subr.bf16.mxu0 %v5483
    %5515 = vmatpush1.bf16.msra.mxu0 %v5482
    %5516 = vmatprep.subr.bf16.mxu0 %v5485
    %5517 = vmatpush1.bf16.msra.mxu0 %v5484
    %5518 = vmatprep.subr.bf16.mxu0 0
    %5519 = vmatpush1.bf16.msra.mxu0 0
    %5520 = vmatprep.subr.bf16.mxu0 0
    %5521 = vmatpush1.bf16.msra.mxu0 0
    %5522 = vmatprep.subr.bf16.mxu0 0
    %5523 = vmatpush1.bf16.msra.mxu0 0
    %5524 = vmatprep.subr.bf16.mxu0 0
    %5525 = vmatpush1.bf16.msra.mxu0 0
    %5526 = vmatprep.subr.bf16.mxu0 0
    %5527 = vmatpush1.bf16.msra.mxu0 0
    %5528 = vmatprep.subr.bf16.mxu0 0
    %5529 = vmatpush1.bf16.msra.mxu0 0
    %5530 = vmatprep.subr.bf16.mxu0 0
    %5531 = vmatpush1.bf16.msra.mxu0 0
    %5532 = vmatprep.subr.bf16.mxu0 0
    %5533 = vmatpush1.bf16.msra.mxu0 0
    %5534 = vmatprep.mubr.bf16.mxu0 0
    %5535 = vmatmul.mubr.bf16.gmra.mrb[0].mxu0 %v4745
    %v5536 = vpop.f32.mrb[0].mxu0
    %v5537 = vadd.f32 0.0, %v5536
    %v5538 = vpop.f32.mrb[0].mxu0
    %v5539 = vadd.f32 0.0, %v5538
    %v5540 = vpop.f32.mrb[0].mxu0
    %v5541 = vpop.f32.mrb[0].mxu0
    %5542 = vdwg.mxu0
    %v5543 = vadd.f32 %v5399, %v5537
    %v5544 = vadd.f32 %v5403, %v5539
    %s5545 = scalar_lea.vmem [#allocation16], 128
    %v5546 = vld [vmem:[%s5545] sm:$0xff]
    %v5547 = vld [vmem:[%s5545 + $0x8] sm:$0xff]
    %v5548 = vld [vmem:[%s5545 + $0x10] sm:$0xff]
    %v5549 = vld [vmem:[%s5545 + $0x18] sm:$0xff]
    %v5550 = vld [vmem:[%s5545 + $0x20] sm:$0xff]
    %v5551 = vld [vmem:[%s5545 + $0x28] sm:$0xff]
    %v5552 = vld [vmem:[%s5545 + $0x30] sm:$0xff]
    %v5553 = vld [vmem:[%s5545 + $0x38] sm:$0xff]
    %v5554 = vld [vmem:[%s5545 + $0x40] sm:$0xff]
    %v5555 = vld [vmem:[%s5545 + $0x48] sm:$0xff]
    %v5556 = vld [vmem:[%s5545 + $0x50] sm:$0xff]
    %v5557 = vld [vmem:[%s5545 + $0x58] sm:$0xff]
    %v5558 = vld [vmem:[%s5545 + $0x60] sm:$0xff]
    %v5559 = vld [vmem:[%s5545 + $0x68] sm:$0xff]
    %v5560 = vld [vmem:[%s5545 + $0x70] sm:$0xff]
    %v5561 = vld [vmem:[%s5545 + $0x78] sm:$0xff]
    %v5578 = vunpack.c.l.b16 %v5546
    %v5579 = vunpack.c.h.b16 %v5546
    %v5580 = vunpack.c.l.b16 %v5547
    %v5581 = vunpack.c.h.b16 %v5547
    %v5582 = vunpack.c.l.b16 %v5548
    %v5583 = vunpack.c.h.b16 %v5548
    %v5584 = vunpack.c.l.b16 %v5549
    %v5585 = vunpack.c.h.b16 %v5549
    %v5586 = vunpack.c.l.b16 %v5550
    %v5587 = vunpack.c.h.b16 %v5550
    %v5588 = vunpack.c.l.b16 %v5551
    %v5589 = vunpack.c.h.b16 %v5551
    %v5590 = vunpack.c.l.b16 %v5552
    %v5591 = vunpack.c.h.b16 %v5552
    %v5592 = vunpack.c.l.b16 %v5553
    %v5593 = vunpack.c.h.b16 %v5553
    %v5594 = vunpack.c.l.b16 %v5554
    %v5595 = vunpack.c.h.b16 %v5554
    %v5596 = vunpack.c.l.b16 %v5555
    %v5597 = vunpack.c.h.b16 %v5555
    %v5598 = vunpack.c.l.b16 %v5556
    %v5599 = vunpack.c.h.b16 %v5556
    %v5600 = vunpack.c.l.b16 %v5557
    %v5601 = vunpack.c.h.b16 %v5557
    %v5602 = vunpack.c.l.b16 %v5558
    %v5603 = vunpack.c.h.b16 %v5558
    %v5604 = vunpack.c.l.b16 %v5559
    %v5605 = vunpack.c.h.b16 %v5559
    %v5606 = vunpack.c.l.b16 %v5560
    %v5607 = vunpack.c.h.b16 %v5560
    %v5608 = vunpack.c.l.b16 %v5561
    %v5609 = vunpack.c.h.b16 %v5561
    %v5610 = vpack.c.b16 %v5580, %v5578
    %v5611 = vpack.c.b16 %v5581, %v5579
    %v5612 = vpack.c.b16 %v5584, %v5582
    %v5613 = vpack.c.b16 %v5585, %v5583
    %v5614 = vpack.c.b16 %v5588, %v5586
    %v5615 = vpack.c.b16 %v5589, %v5587
    %v5616 = vpack.c.b16 %v5592, %v5590
    %v5617 = vpack.c.b16 %v5593, %v5591
    %v5618 = vpack.c.b16 %v5596, %v5594
    %v5619 = vpack.c.b16 %v5597, %v5595
    %v5620 = vpack.c.b16 %v5600, %v5598
    %v5621 = vpack.c.b16 %v5601, %v5599
    %v5622 = vpack.c.b16 %v5604, %v5602
    %v5623 = vpack.c.b16 %v5605, %v5603
    %v5624 = vpack.c.b16 %v5608, %v5606
    %v5625 = vpack.c.b16 %v5609, %v5607
    %5642 = vmatprep.subr.bf16.mxu0 %v5611
    %5643 = vmatpush1.bf16.msra.mxu0 %v5610
    %5644 = vmatprep.subr.bf16.mxu0 %v5613
    %5645 = vmatpush1.bf16.msra.mxu0 %v5612
    %5646 = vmatprep.subr.bf16.mxu0 %v5615
    %5647 = vmatpush1.bf16.msra.mxu0 %v5614
    %5648 = vmatprep.subr.bf16.mxu0 %v5617
    %5649 = vmatpush1.bf16.msra.mxu0 %v5616
    %5650 = vmatprep.subr.bf16.mxu0 %v5619
    %5651 = vmatpush1.bf16.msra.mxu0 %v5618
    %5652 = vmatprep.subr.bf16.mxu0 %v5621
    %5653 = vmatpush1.bf16.msra.mxu0 %v5620
    %5654 = vmatprep.subr.bf16.mxu0 %v5623
    %5655 = vmatpush1.bf16.msra.mxu0 %v5622
    %5656 = vmatprep.subr.bf16.mxu0 %v5625
    %5657 = vmatpush1.bf16.msra.mxu0 %v5624
    %5658 = vmatprep.subr.bf16.mxu0 0
    %5659 = vmatpush1.bf16.msra.mxu0 0
    %5660 = vmatprep.subr.bf16.mxu0 0
    %5661 = vmatpush1.bf16.msra.mxu0 0
    %5662 = vmatprep.subr.bf16.mxu0 0
    %5663 = vmatpush1.bf16.msra.mxu0 0
    %5664 = vmatprep.subr.bf16.mxu0 0
    %5665 = vmatpush1.bf16.msra.mxu0 0
    %5666 = vmatprep.subr.bf16.mxu0 0
    %5667 = vmatpush1.bf16.msra.mxu0 0
    %5668 = vmatprep.subr.bf16.mxu0 0
    %5669 = vmatpush1.bf16.msra.mxu0 0
    %5670 = vmatprep.subr.bf16.mxu0 0
    %5671 = vmatpush1.bf16.msra.mxu0 0
    %5672 = vmatprep.subr.bf16.mxu0 0
    %5673 = vmatpush1.bf16.msra.mxu0 0
    %5674 = vmatprep.mubr.bf16.mxu0 0
    %5675 = vmatmul.mubr.bf16.gmra.mrb[0].mxu0 %v4853
    %v5676 = vpop.f32.mrb[0].mxu0
    %v5677 = vadd.f32 0.0, %v5676
    %v5678 = vpop.f32.mrb[0].mxu0
    %v5679 = vadd.f32 0.0, %v5678
    %v5680 = vpop.f32.mrb[0].mxu0
    %v5681 = vpop.f32.mrb[0].mxu0
    %5682 = vdwg.mxu0
    %v5683 = vadd.f32 %v5543, %v5677
    %v5684 = vadd.f32 %v5544, %v5679
    %s5685 = scalar_lea.vmem [#allocation16], 256
    %v5686 = vld [vmem:[%s5685] sm:$0xff]
    %v5687 = vld [vmem:[%s5685 + $0x8] sm:$0xff]
    %v5688 = vld [vmem:[%s5685 + $0x10] sm:$0xff]
    %v5689 = vld [vmem:[%s5685 + $0x18] sm:$0xff]
    %v5690 = vld [vmem:[%s5685 + $0x20] sm:$0xff]
    %v5691 = vld [vmem:[%s5685 + $0x28] sm:$0xff]
    %v5692 = vld [vmem:[%s5685 + $0x30] sm:$0xff]
    %v5693 = vld [vmem:[%s5685 + $0x38] sm:$0xff]
    %v5694 = vld [vmem:[%s5685 + $0x40] sm:$0xff]
    %v5695 = vld [vmem:[%s5685 + $0x48] sm:$0xff]
    %v5696 = vld [vmem:[%s5685 + $0x50] sm:$0xff]
    %v5697 = vld [vmem:[%s5685 + $0x58] sm:$0xff]
    %v5698 = vld [vmem:[%s5685 + $0x60] sm:$0xff]
    %v5699 = vld [vmem:[%s5685 + $0x68] sm:$0xff]
    %v5700 = vld [vmem:[%s5685 + $0x70] sm:$0xff]
    %v5701 = vld [vmem:[%s5685 + $0x78] sm:$0xff]
    %v5718 = vunpack.c.l.b16 %v5686
    %v5719 = vunpack.c.h.b16 %v5686
    %v5720 = vunpack.c.l.b16 %v5687
    %v5721 = vunpack.c.h.b16 %v5687
    %v5722 = vunpack.c.l.b16 %v5688
    %v5723 = vunpack.c.h.b16 %v5688
    %v5724 = vunpack.c.l.b16 %v5689
    %v5725 = vunpack.c.h.b16 %v5689
    %v5726 = vunpack.c.l.b16 %v5690
    %v5727 = vunpack.c.h.b16 %v5690
    %v5728 = vunpack.c.l.b16 %v5691
    %v5729 = vunpack.c.h.b16 %v5691
    %v5730 = vunpack.c.l.b16 %v5692
    %v5731 = vunpack.c.h.b16 %v5692
    %v5732 = vunpack.c.l.b16 %v5693
    %v5733 = vunpack.c.h.b16 %v5693
    %v5734 = vunpack.c.l.b16 %v5694
    %v5735 = vunpack.c.h.b16 %v5694
    %v5736 = vunpack.c.l.b16 %v5695
    %v5737 = vunpack.c.h.b16 %v5695
    %v5738 = vunpack.c.l.b16 %v5696
    %v5739 = vunpack.c.h.b16 %v5696
    %v5740 = vunpack.c.l.b16 %v5697
    %v5741 = vunpack.c.h.b16 %v5697
    %v5742 = vunpack.c.l.b16 %v5698
    %v5743 = vunpack.c.h.b16 %v5698
    %v5744 = vunpack.c.l.b16 %v5699
    %v5745 = vunpack.c.h.b16 %v5699
    %v5746 = vunpack.c.l.b16 %v5700
    %v5747 = vunpack.c.h.b16 %v5700
    %v5748 = vunpack.c.l.b16 %v5701
    %v5749 = vunpack.c.h.b16 %v5701
    %v5750 = vpack.c.b16 %v5720, %v5718
    %v5751 = vpack.c.b16 %v5721, %v5719
    %v5752 = vpack.c.b16 %v5724, %v5722
    %v5753 = vpack.c.b16 %v5725, %v5723
    %v5754 = vpack.c.b16 %v5728, %v5726
    %v5755 = vpack.c.b16 %v5729, %v5727
    %v5756 = vpack.c.b16 %v5732, %v5730
    %v5757 = vpack.c.b16 %v5733, %v5731
    %v5758 = vpack.c.b16 %v5736, %v5734
    %v5759 = vpack.c.b16 %v5737, %v5735
    %v5760 = vpack.c.b16 %v5740, %v5738
    %v5761 = vpack.c.b16 %v5741, %v5739
    %v5762 = vpack.c.b16 %v5744, %v5742
    %v5763 = vpack.c.b16 %v5745, %v5743
    %v5764 = vpack.c.b16 %v5748, %v5746
    %v5765 = vpack.c.b16 %v5749, %v5747
    %5782 = vmatprep.subr.bf16.mxu0 %v5751
    %5783 = vmatpush1.bf16.msra.mxu0 %v5750
    %5784 = vmatprep.subr.bf16.mxu0 %v5753
    %5785 = vmatpush1.bf16.msra.mxu0 %v5752
    %5786 = vmatprep.subr.bf16.mxu0 %v5755
    %5787 = vmatpush1.bf16.msra.mxu0 %v5754
    %5788 = vmatprep.subr.bf16.mxu0 %v5757
    %5789 = vmatpush1.bf16.msra.mxu0 %v5756
    %5790 = vmatprep.subr.bf16.mxu0 %v5759
    %5791 = vmatpush1.bf16.msra.mxu0 %v5758
    %5792 = vmatprep.subr.bf16.mxu0 %v5761
    %5793 = vmatpush1.bf16.msra.mxu0 %v5760
    %5794 = vmatprep.subr.bf16.mxu0 %v5763
    %5795 = vmatpush1.bf16.msra.mxu0 %v5762
    %5796 = vmatprep.subr.bf16.mxu0 %v5765
    %5797 = vmatpush1.bf16.msra.mxu0 %v5764
    %5798 = vmatprep.subr.bf16.mxu0 0
    %5799 = vmatpush1.bf16.msra.mxu0 0
    %5800 = vmatprep.subr.bf16.mxu0 0
    %5801 = vmatpush1.bf16.msra.mxu0 0
    %5802 = vmatprep.subr.bf16.mxu0 0
    %5803 = vmatpush1.bf16.msra.mxu0 0
    %5804 = vmatprep.subr.bf16.mxu0 0
    %5805 = vmatpush1.bf16.msra.mxu0 0
    %5806 = vmatprep.subr.bf16.mxu0 0
    %5807 = vmatpush1.bf16.msra.mxu0 0
    %5808 = vmatprep.subr.bf16.mxu0 0
    %5809 = vmatpush1.bf16.msra.mxu0 0
    %5810 = vmatprep.subr.bf16.mxu0 0
    %5811 = vmatpush1.bf16.msra.mxu0 0
    %5812 = vmatprep.subr.bf16.mxu0 0
    %5813 = vmatpush1.bf16.msra.mxu0 0
    %5814 = vmatprep.mubr.bf16.mxu0 0
    %5815 = vmatmul.mubr.bf16.gmra.mrb[0].mxu0 %v4961
    %v5816 = vpop.f32.mrb[0].mxu0
    %v5817 = vadd.f32 0.0, %v5816
    %v5818 = vpop.f32.mrb[0].mxu0
    %v5819 = vadd.f32 0.0, %v5818
    %v5820 = vpop.f32.mrb[0].mxu0
    %v5821 = vpop.f32.mrb[0].mxu0
    %5822 = vdwg.mxu0
    %v5823 = vadd.f32 %v5683, %v5817
    %v5824 = vadd.f32 %v5684, %v5819
    %s5825 = scalar_lea.vmem [#allocation16], 384
    %v5826 = vld [vmem:[%s5825] sm:$0xff]
    %v5827 = vld [vmem:[%s5825 + $0x8] sm:$0xff]
    %v5828 = vld [vmem:[%s5825 + $0x10] sm:$0xff]
    %v5829 = vld [vmem:[%s5825 + $0x18] sm:$0xff]
    %v5830 = vld [vmem:[%s5825 + $0x20] sm:$0xff]
    %v5831 = vld [vmem:[%s5825 + $0x28] sm:$0xff]
    %v5832 = vld [vmem:[%s5825 + $0x30] sm:$0xff]
    %v5833 = vld [vmem:[%s5825 + $0x38] sm:$0xff]
    %v5834 = vld [vmem:[%s5825 + $0x40] sm:$0xff]
    %v5835 = vld [vmem:[%s5825 + $0x48] sm:$0xff]
    %v5836 = vld [vmem:[%s5825 + $0x50] sm:$0xff]
    %v5837 = vld [vmem:[%s5825 + $0x58] sm:$0xff]
    %v5838 = vld [vmem:[%s5825 + $0x60] sm:$0xff]
    %v5839 = vld [vmem:[%s5825 + $0x68] sm:$0xff]
    %v5840 = vld [vmem:[%s5825 + $0x70] sm:$0xff]
    %v5841 = vld [vmem:[%s5825 + $0x78] sm:$0xff]
    %v5858 = vunpack.c.l.b16 %v5826
    %v5859 = vunpack.c.h.b16 %v5826
    %v5860 = vunpack.c.l.b16 %v5827
    %v5861 = vunpack.c.h.b16 %v5827
    %v5862 = vunpack.c.l.b16 %v5828
    %v5863 = vunpack.c.h.b16 %v5828
    %v5864 = vunpack.c.l.b16 %v5829
    %v5865 = vunpack.c.h.b16 %v5829
    %v5866 = vunpack.c.l.b16 %v5830
    %v5867 = vunpack.c.h.b16 %v5830
    %v5868 = vunpack.c.l.b16 %v5831
    %v5869 = vunpack.c.h.b16 %v5831
    %v5870 = vunpack.c.l.b16 %v5832
    %v5871 = vunpack.c.h.b16 %v5832
    %v5872 = vunpack.c.l.b16 %v5833
    %v5873 = vunpack.c.h.b16 %v5833
    %v5874 = vunpack.c.l.b16 %v5834
    %v5875 = vunpack.c.h.b16 %v5834
    %v5876 = vunpack.c.l.b16 %v5835
    %v5877 = vunpack.c.h.b16 %v5835
    %v5878 = vunpack.c.l.b16 %v5836
    %v5879 = vunpack.c.h.b16 %v5836
    %v5880 = vunpack.c.l.b16 %v5837
    %v5881 = vunpack.c.h.b16 %v5837
    %v5882 = vunpack.c.l.b16 %v5838
    %v5883 = vunpack.c.h.b16 %v5838
    %v5884 = vunpack.c.l.b16 %v5839
    %v5885 = vunpack.c.h.b16 %v5839
    %v5886 = vunpack.c.l.b16 %v5840
    %v5887 = vunpack.c.h.b16 %v5840
    %v5888 = vunpack.c.l.b16 %v5841
    %v5889 = vunpack.c.h.b16 %v5841
    %v5890 = vpack.c.b16 %v5860, %v5858
    %v5891 = vpack.c.b16 %v5861, %v5859
    %v5892 = vpack.c.b16 %v5864, %v5862
    %v5893 = vpack.c.b16 %v5865, %v5863
    %v5894 = vpack.c.b16 %v5868, %v5866
    %v5895 = vpack.c.b16 %v5869, %v5867
    %v5896 = vpack.c.b16 %v5872, %v5870
    %v5897 = vpack.c.b16 %v5873, %v5871
    %v5898 = vpack.c.b16 %v5876, %v5874
    %v5899 = vpack.c.b16 %v5877, %v5875
    %v5900 = vpack.c.b16 %v5880, %v5878
    %v5901 = vpack.c.b16 %v5881, %v5879
    %v5902 = vpack.c.b16 %v5884, %v5882
    %v5903 = vpack.c.b16 %v5885, %v5883
    %v5904 = vpack.c.b16 %v5888, %v5886
    %v5905 = vpack.c.b16 %v5889, %v5887
    %5922 = vmatprep.subr.bf16.mxu0 %v5891
    %5923 = vmatpush1.bf16.msra.mxu0 %v5890
    %5924 = vmatprep.subr.bf16.mxu0 %v5893
    %5925 = vmatpush1.bf16.msra.mxu0 %v5892
    %5926 = vmatprep.subr.bf16.mxu0 %v5895
    %5927 = vmatpush1.bf16.msra.mxu0 %v5894
    %5928 = vmatprep.subr.bf16.mxu0 %v5897
    %5929 = vmatpush1.bf16.msra.mxu0 %v5896
    %5930 = vmatprep.subr.bf16.mxu0 %v5899
    %5931 = vmatpush1.bf16.msra.mxu0 %v5898
    %5932 = vmatprep.subr.bf16.mxu0 %v5901
    %5933 = vmatpush1.bf16.msra.mxu0 %v5900
    %5934 = vmatprep.subr.bf16.mxu0 %v5903
    %5935 = vmatpush1.bf16.msra.mxu0 %v5902
    %5936 = vmatprep.subr.bf16.mxu0 %v5905
    %5937 = vmatpush1.bf16.msra.mxu0 %v5904
    %5938 = vmatprep.subr.bf16.mxu0 0
    %5939 = vmatpush1.bf16.msra.mxu0 0
    %5940 = vmatprep.subr.bf16.mxu0 0
    %5941 = vmatpush1.bf16.msra.mxu0 0
    %5942 = vmatprep.subr.bf16.mxu0 0
    %5943 = vmatpush1.bf16.msra.mxu0 0
    %5944 = vmatprep.subr.bf16.mxu0 0
    %5945 = vmatpush1.bf16.msra.mxu0 0
    %5946 = vmatprep.subr.bf16.mxu0 0
    %5947 = vmatpush1.bf16.msra.mxu0 0
    %5948 = vmatprep.subr.bf16.mxu0 0
    %5949 = vmatpush1.bf16.msra.mxu0 0
    %5950 = vmatprep.subr.bf16.mxu0 0
    %5951 = vmatpush1.bf16.msra.mxu0 0
    %5952 = vmatprep.subr.bf16.mxu0 0
    %5953 = vmatpush1.bf16.msra.mxu0 0
    %5954 = vmatprep.mubr.bf16.mxu0 0
    %5955 = vmatmul.mubr.bf16.gmra.mrb[0].mxu0 %v5069
    %v5956 = vpop.f32.mrb[0].mxu0
    %v5957 = vadd.f32 0.0, %v5956
    %v5958 = vpop.f32.mrb[0].mxu0
    %v5959 = vadd.f32 0.0, %v5958
    %v5960 = vpop.f32.mrb[0].mxu0
    %v5961 = vpop.f32.mrb[0].mxu0
    %5962 = vdwg.mxu0
    %v5963 = vadd.f32 %v5823, %v5957
    %v5964 = vadd.f32 %v5824, %v5959
    %s5965 = scalar_lea.vmem [#allocation16], 512
    %v5966 = vld [vmem:[%s5965] sm:$0xff]
    %v5967 = vld [vmem:[%s5965 + $0x8] sm:$0xff]
    %v5968 = vld [vmem:[%s5965 + $0x10] sm:$0xff]
    %v5969 = vld [vmem:[%s5965 + $0x18] sm:$0xff]
    %v5970 = vld [vmem:[%s5965 + $0x20] sm:$0xff]
    %v5971 = vld [vmem:[%s5965 + $0x28] sm:$0xff]
    %v5972 = vld [vmem:[%s5965 + $0x30] sm:$0xff]
    %v5973 = vld [vmem:[%s5965 + $0x38] sm:$0xff]
    %v5974 = vld [vmem:[%s5965 + $0x40] sm:$0xff]
    %v5975 = vld [vmem:[%s5965 + $0x48] sm:$0xff]
    %v5976 = vld [vmem:[%s5965 + $0x50] sm:$0xff]
    %v5977 = vld [vmem:[%s5965 + $0x58] sm:$0xff]
    %v5978 = vld [vmem:[%s5965 + $0x60] sm:$0xff]
    %v5979 = vld [vmem:[%s5965 + $0x68] sm:$0xff]
    %v5980 = vld [vmem:[%s5965 + $0x70] sm:$0xff]
    %v5981 = vld [vmem:[%s5965 + $0x78] sm:$0xff]
    %v5998 = vunpack.c.l.b16 %v5966
    %v5999 = vunpack.c.h.b16 %v5966
    %v6000 = vunpack.c.l.b16 %v5967
    %v6001 = vunpack.c.h.b16 %v5967
    %v6002 = vunpack.c.l.b16 %v5968
    %v6003 = vunpack.c.h.b16 %v5968
    %v6004 = vunpack.c.l.b16 %v5969
    %v6005 = vunpack.c.h.b16 %v5969
    %v6006 = vunpack.c.l.b16 %v5970
    %v6007 = vunpack.c.h.b16 %v5970
    %v6008 = vunpack.c.l.b16 %v5971
    %v6009 = vunpack.c.h.b16 %v5971
    %v6010 = vunpack.c.l.b16 %v5972
    %v6011 = vunpack.c.h.b16 %v5972
    %v6012 = vunpack.c.l.b16 %v5973
    %v6013 = vunpack.c.h.b16 %v5973
    %v6014 = vunpack.c.l.b16 %v5974
    %v6015 = vunpack.c.h.b16 %v5974
    %v6016 = vunpack.c.l.b16 %v5975
    %v6017 = vunpack.c.h.b16 %v5975
    %v6018 = vunpack.c.l.b16 %v5976
    %v6019 = vunpack.c.h.b16 %v5976
    %v6020 = vunpack.c.l.b16 %v5977
    %v6021 = vunpack.c.h.b16 %v5977
    %v6022 = vunpack.c.l.b16 %v5978
    %v6023 = vunpack.c.h.b16 %v5978
    %v6024 = vunpack.c.l.b16 %v5979
    %v6025 = vunpack.c.h.b16 %v5979
    %v6026 = vunpack.c.l.b16 %v5980
    %v6027 = vunpack.c.h.b16 %v5980
    %v6028 = vunpack.c.l.b16 %v5981
    %v6029 = vunpack.c.h.b16 %v5981
    %v6030 = vpack.c.b16 %v6000, %v5998
    %v6031 = vpack.c.b16 %v6001, %v5999
    %v6032 = vpack.c.b16 %v6004, %v6002
    %v6033 = vpack.c.b16 %v6005, %v6003
    %v6034 = vpack.c.b16 %v6008, %v6006
    %v6035 = vpack.c.b16 %v6009, %v6007
    %v6036 = vpack.c.b16 %v6012, %v6010
    %v6037 = vpack.c.b16 %v6013, %v6011
    %v6038 = vpack.c.b16 %v6016, %v6014
    %v6039 = vpack.c.b16 %v6017, %v6015
    %v6040 = vpack.c.b16 %v6020, %v6018
    %v6041 = vpack.c.b16 %v6021, %v6019
    %v6042 = vpack.c.b16 %v6024, %v6022
    %v6043 = vpack.c.b16 %v6025, %v6023
    %v6044 = vpack.c.b16 %v6028, %v6026
    %v6045 = vpack.c.b16 %v6029, %v6027
    %6062 = vmatprep.subr.bf16.mxu0 %v6031
    %6063 = vmatpush1.bf16.msra.mxu0 %v6030
    %6064 = vmatprep.subr.bf16.mxu0 %v6033
    %6065 = vmatpush1.bf16.msra.mxu0 %v6032
    %6066 = vmatprep.subr.bf16.mxu0 %v6035
    %6067 = vmatpush1.bf16.msra.mxu0 %v6034
    %6068 = vmatprep.subr.bf16.mxu0 %v6037
    %6069 = vmatpush1.bf16.msra.mxu0 %v6036
    %6070 = vmatprep.subr.bf16.mxu0 %v6039
    %6071 = vmatpush1.bf16.msra.mxu0 %v6038
    %6072 = vmatprep.subr.bf16.mxu0 %v6041
    %6073 = vmatpush1.bf16.msra.mxu0 %v6040
    %6074 = vmatprep.subr.bf16.mxu0 %v6043
    %6075 = vmatpush1.bf16.msra.mxu0 %v6042
    %6076 = vmatprep.subr.bf16.mxu0 %v6045
    %6077 = vmatpush1.bf16.msra.mxu0 %v6044
    %6078 = vmatprep.subr.bf16.mxu0 0
    %6079 = vmatpush1.bf16.msra.mxu0 0
    %6080 = vmatprep.subr.bf16.mxu0 0
    %6081 = vmatpush1.bf16.msra.mxu0 0
    %6082 = vmatprep.subr.bf16.mxu0 0
    %6083 = vmatpush1.bf16.msra.mxu0 0
    %6084 = vmatprep.subr.bf16.mxu0 0
    %6085 = vmatpush1.bf16.msra.mxu0 0
    %6086 = vmatprep.subr.bf16.mxu0 0
    %6087 = vmatpush1.bf16.msra.mxu0 0
    %6088 = vmatprep.subr.bf16.mxu0 0
    %6089 = vmatpush1.bf16.msra.mxu0 0
    %6090 = vmatprep.subr.bf16.mxu0 0
    %6091 = vmatpush1.bf16.msra.mxu0 0
    %6092 = vmatprep.subr.bf16.mxu0 0
    %6093 = vmatpush1.bf16.msra.mxu0 0
    %6094 = vmatprep.mubr.bf16.mxu0 0
    %6095 = vmatmul.mubr.bf16.gmra.mrb[0].mxu0 %v5177
    %v6096 = vpop.f32.mrb[0].mxu0
    %v6097 = vadd.f32 0.0, %v6096
    %v6098 = vpop.f32.mrb[0].mxu0
    %v6099 = vadd.f32 0.0, %v6098
    %v6100 = vpop.f32.mrb[0].mxu0
    %v6101 = vpop.f32.mrb[0].mxu0
    %6102 = vdwg.mxu0
    %v6103 = vadd.f32 %v5963, %v6097
    %v6104 = vadd.f32 %v5964, %v6099
    %s6105 = scalar_lea.vmem [#allocation16], 640
    %v6106 = vld [vmem:[%s6105] sm:$0xff]
    %v6107 = vld [vmem:[%s6105 + $0x8] sm:$0xff]
    %v6108 = vld [vmem:[%s6105 + $0x10] sm:$0xff]
    %v6109 = vld [vmem:[%s6105 + $0x18] sm:$0xff]
    %v6110 = vld [vmem:[%s6105 + $0x20] sm:$0xff]
    %v6111 = vld [vmem:[%s6105 + $0x28] sm:$0xff]
    %v6112 = vld [vmem:[%s6105 + $0x30] sm:$0xff]
    %v6113 = vld [vmem:[%s6105 + $0x38] sm:$0xff]
    %v6114 = vld [vmem:[%s6105 + $0x40] sm:$0xff]
    %v6115 = vld [vmem:[%s6105 + $0x48] sm:$0xff]
    %v6116 = vld [vmem:[%s6105 + $0x50] sm:$0xff]
    %v6117 = vld [vmem:[%s6105 + $0x58] sm:$0xff]
    %v6118 = vld [vmem:[%s6105 + $0x60] sm:$0xff]
    %v6119 = vld [vmem:[%s6105 + $0x68] sm:$0xff]
    %v6120 = vld [vmem:[%s6105 + $0x70] sm:$0xff]
    %v6121 = vld [vmem:[%s6105 + $0x78] sm:$0xff]
    %v6138 = vunpack.c.l.b16 %v6106
    %v6139 = vunpack.c.h.b16 %v6106
    %v6140 = vunpack.c.l.b16 %v6107
    %v6141 = vunpack.c.h.b16 %v6107
    %v6142 = vunpack.c.l.b16 %v6108
    %v6143 = vunpack.c.h.b16 %v6108
    %v6144 = vunpack.c.l.b16 %v6109
    %v6145 = vunpack.c.h.b16 %v6109
    %v6146 = vunpack.c.l.b16 %v6110
    %v6147 = vunpack.c.h.b16 %v6110
    %v6148 = vunpack.c.l.b16 %v6111
    %v6149 = vunpack.c.h.b16 %v6111
    %v6150 = vunpack.c.l.b16 %v6112
    %v6151 = vunpack.c.h.b16 %v6112
    %v6152 = vunpack.c.l.b16 %v6113
    %v6153 = vunpack.c.h.b16 %v6113
    %v6154 = vunpack.c.l.b16 %v6114
    %v6155 = vunpack.c.h.b16 %v6114
    %v6156 = vunpack.c.l.b16 %v6115
    %v6157 = vunpack.c.h.b16 %v6115
    %v6158 = vunpack.c.l.b16 %v6116
    %v6159 = vunpack.c.h.b16 %v6116
    %v6160 = vunpack.c.l.b16 %v6117
    %v6161 = vunpack.c.h.b16 %v6117
    %v6162 = vunpack.c.l.b16 %v6118
    %v6163 = vunpack.c.h.b16 %v6118
    %v6164 = vunpack.c.l.b16 %v6119
    %v6165 = vunpack.c.h.b16 %v6119
    %v6166 = vunpack.c.l.b16 %v6120
    %v6167 = vunpack.c.h.b16 %v6120
    %v6168 = vunpack.c.l.b16 %v6121
    %v6169 = vunpack.c.h.b16 %v6121
    %v6170 = vpack.c.b16 %v6140, %v6138
    %v6171 = vpack.c.b16 %v6141, %v6139
    %v6172 = vpack.c.b16 %v6144, %v6142
    %v6173 = vpack.c.b16 %v6145, %v6143
    %v6174 = vpack.c.b16 %v6148, %v6146
    %v6175 = vpack.c.b16 %v6149, %v6147
    %v6176 = vpack.c.b16 %v6152, %v6150
    %v6177 = vpack.c.b16 %v6153, %v6151
    %v6178 = vpack.c.b16 %v6156, %v6154
    %v6179 = vpack.c.b16 %v6157, %v6155
    %v6180 = vpack.c.b16 %v6160, %v6158
    %v6181 = vpack.c.b16 %v6161, %v6159
    %v6182 = vpack.c.b16 %v6164, %v6162
    %v6183 = vpack.c.b16 %v6165, %v6163
    %v6184 = vpack.c.b16 %v6168, %v6166
    %v6185 = vpack.c.b16 %v6169, %v6167
    %6202 = vmatprep.subr.bf16.mxu0 %v6171
    %6203 = vmatpush1.bf16.msra.mxu0 %v6170
    %6204 = vmatprep.subr.bf16.mxu0 %v6173
    %6205 = vmatpush1.bf16.msra.mxu0 %v6172
    %6206 = vmatprep.subr.bf16.mxu0 %v6175
    %6207 = vmatpush1.bf16.msra.mxu0 %v6174
    %6208 = vmatprep.subr.bf16.mxu0 %v6177
    %6209 = vmatpush1.bf16.msra.mxu0 %v6176
    %6210 = vmatprep.subr.bf16.mxu0 %v6179
    %6211 = vmatpush1.bf16.msra.mxu0 %v6178
    %6212 = vmatprep.subr.bf16.mxu0 %v6181
    %6213 = vmatpush1.bf16.msra.mxu0 %v6180
    %6214 = vmatprep.subr.bf16.mxu0 %v6183
    %6215 = vmatpush1.bf16.msra.mxu0 %v6182
    %6216 = vmatprep.subr.bf16.mxu0 %v6185
    %6217 = vmatpush1.bf16.msra.mxu0 %v6184
    %6218 = vmatprep.subr.bf16.mxu0 0
    %6219 = vmatpush1.bf16.msra.mxu0 0
    %6220 = vmatprep.subr.bf16.mxu0 0
    %6221 = vmatpush1.bf16.msra.mxu0 0
    %6222 = vmatprep.subr.bf16.mxu0 0
    %6223 = vmatpush1.bf16.msra.mxu0 0
    %6224 = vmatprep.subr.bf16.mxu0 0
    %6225 = vmatpush1.bf16.msra.mxu0 0
    %6226 = vmatprep.subr.bf16.mxu0 0
    %6227 = vmatpush1.bf16.msra.mxu0 0
    %6228 = vmatprep.subr.bf16.mxu0 0
    %6229 = vmatpush1.bf16.msra.mxu0 0
    %6230 = vmatprep.subr.bf16.mxu0 0
    %6231 = vmatpush1.bf16.msra.mxu0 0
    %6232 = vmatprep.subr.bf16.mxu0 0
    %6233 = vmatpush1.bf16.msra.mxu0 0
    %6234 = vmatprep.mubr.bf16.mxu0 0
    %6235 = vmatmul.mubr.bf16.gmra.mrb[0].mxu0 %v5285
    %v6236 = vpop.f32.mrb[0].mxu0
    %v6237 = vadd.f32 0.0, %v6236
    %v6238 = vpop.f32.mrb[0].mxu0
    %v6239 = vadd.f32 0.0, %v6238
    %v6240 = vpop.f32.mrb[0].mxu0
    %v6241 = vpop.f32.mrb[0].mxu0
    %6242 = vdwg.mxu0
    %v6243 = vadd.f32 %v6103, %v6237
    %v6244 = vadd.f32 %v6104, %v6239
    %s6245 = scalar_lea.vmem [#allocation16], 768
    %v6246 = vld [vmem:[%s6245] sm:$0xff]
    %v6247 = vld [vmem:[%s6245 + $0x8] sm:$0xff]
    %v6248 = vld [vmem:[%s6245 + $0x10] sm:$0xff]
    %v6249 = vld [vmem:[%s6245 + $0x18] sm:$0xff]
    %v6250 = vld [vmem:[%s6245 + $0x20] sm:$0xff]
    %v6251 = vld [vmem:[%s6245 + $0x28] sm:$0xff]
    %v6252 = vld [vmem:[%s6245 + $0x30] sm:$0xff]
    %v6253 = vld [vmem:[%s6245 + $0x38] sm:$0xff]
    %v6254 = vld [vmem:[%s6245 + $0x40] sm:$0xff]
    %v6255 = vld [vmem:[%s6245 + $0x48] sm:$0xff]
    %v6256 = vld [vmem:[%s6245 + $0x50] sm:$0xff]
    %v6257 = vld [vmem:[%s6245 + $0x58] sm:$0xff]
    %v6258 = vld [vmem:[%s6245 + $0x60] sm:$0xff]
    %v6259 = vld [vmem:[%s6245 + $0x68] sm:$0xff]
    %v6260 = vld [vmem:[%s6245 + $0x70] sm:$0xff]
    %v6261 = vld [vmem:[%s6245 + $0x78] sm:$0xff]
    %v6278 = vunpack.c.l.b16 %v6246
    %v6279 = vunpack.c.h.b16 %v6246
    %v6280 = vunpack.c.l.b16 %v6247
    %v6281 = vunpack.c.h.b16 %v6247
    %v6282 = vunpack.c.l.b16 %v6248
    %v6283 = vunpack.c.h.b16 %v6248
    %v6284 = vunpack.c.l.b16 %v6249
    %v6285 = vunpack.c.h.b16 %v6249
    %v6286 = vunpack.c.l.b16 %v6250
    %v6287 = vunpack.c.h.b16 %v6250
    %v6288 = vunpack.c.l.b16 %v6251
    %v6289 = vunpack.c.h.b16 %v6251
    %v6290 = vunpack.c.l.b16 %v6252
    %v6291 = vunpack.c.h.b16 %v6252
    %v6292 = vunpack.c.l.b16 %v6253
    %v6293 = vunpack.c.h.b16 %v6253
    %v6294 = vunpack.c.l.b16 %v6254
    %v6295 = vunpack.c.h.b16 %v6254
    %v6296 = vunpack.c.l.b16 %v6255
    %v6297 = vunpack.c.h.b16 %v6255
    %v6298 = vunpack.c.l.b16 %v6256
    %v6299 = vunpack.c.h.b16 %v6256
    %v6300 = vunpack.c.l.b16 %v6257
    %v6301 = vunpack.c.h.b16 %v6257
    %v6302 = vunpack.c.l.b16 %v6258
    %v6303 = vunpack.c.h.b16 %v6258
    %v6304 = vunpack.c.l.b16 %v6259
    %v6305 = vunpack.c.h.b16 %v6259
    %v6306 = vunpack.c.l.b16 %v6260
    %v6307 = vunpack.c.h.b16 %v6260
    %v6308 = vunpack.c.l.b16 %v6261
    %v6309 = vunpack.c.h.b16 %v6261
    %v6310 = vpack.c.b16 %v6280, %v6278
    %v6311 = vpack.c.b16 %v6281, %v6279
    %v6312 = vpack.c.b16 %v6284, %v6282
    %v6313 = vpack.c.b16 %v6285, %v6283
    %v6314 = vpack.c.b16 %v6288, %v6286
    %v6315 = vpack.c.b16 %v6289, %v6287
    %v6316 = vpack.c.b16 %v6292, %v6290
    %v6317 = vpack.c.b16 %v6293, %v6291
    %v6318 = vpack.c.b16 %v6296, %v6294
    %v6319 = vpack.c.b16 %v6297, %v6295
    %v6320 = vpack.c.b16 %v6300, %v6298
    %v6321 = vpack.c.b16 %v6301, %v6299
    %v6322 = vpack.c.b16 %v6304, %v6302
    %v6323 = vpack.c.b16 %v6305, %v6303
    %v6324 = vpack.c.b16 %v6308, %v6306
    %v6325 = vpack.c.b16 %v6309, %v6307
    %6342 = vmatprep.subr.bf16.mxu0 %v6311
    %6343 = vmatpush1.bf16.msra.mxu0 %v6310
    %6344 = vmatprep.subr.bf16.mxu0 %v6313
    %6345 = vmatpush1.bf16.msra.mxu0 %v6312
    %6346 = vmatprep.subr.bf16.mxu0 %v6315
    %6347 = vmatpush1.bf16.msra.mxu0 %v6314
    %6348 = vmatprep.subr.bf16.mxu0 %v6317
    %6349 = vmatpush1.bf16.msra.mxu0 %v6316
    %6350 = vmatprep.subr.bf16.mxu0 %v6319
    %6351 = vmatpush1.bf16.msra.mxu0 %v6318
    %6352 = vmatprep.subr.bf16.mxu0 %v6321
    %6353 = vmatpush1.bf16.msra.mxu0 %v6320
    %6354 = vmatprep.subr.bf16.mxu0 %v6323
    %6355 = vmatpush1.bf16.msra.mxu0 %v6322
    %6356 = vmatprep.subr.bf16.mxu0 %v6325
    %6357 = vmatpush1.bf16.msra.mxu0 %v6324
    %6358 = vmatprep.subr.bf16.mxu0 0
    %6359 = vmatpush1.bf16.msra.mxu0 0
    %6360 = vmatprep.subr.bf16.mxu0 0
    %6361 = vmatpush1.bf16.msra.mxu0 0
    %6362 = vmatprep.subr.bf16.mxu0 0
    %6363 = vmatpush1.bf16.msra.mxu0 0
    %6364 = vmatprep.subr.bf16.mxu0 0
    %6365 = vmatpush1.bf16.msra.mxu0 0
    %6366 = vmatprep.subr.bf16.mxu0 0
    %6367 = vmatpush1.bf16.msra.mxu0 0
    %6368 = vmatprep.subr.bf16.mxu0 0
    %6369 = vmatpush1.bf16.msra.mxu0 0
    %6370 = vmatprep.subr.bf16.mxu0 0
    %6371 = vmatpush1.bf16.msra.mxu0 0
    %6372 = vmatprep.subr.bf16.mxu0 0
    %6373 = vmatpush1.bf16.msra.mxu0 0
    %6374 = vmatprep.mubr.bf16.mxu0 0
    %6375 = vmatmul.mubr.bf16.gmra.mrb[0].mxu0 %v5393
    %v6376 = vpop.f32.mrb[0].mxu0
    %v6377 = vadd.f32 0.0, %v6376
    %v6378 = vpop.f32.mrb[0].mxu0
    %v6379 = vadd.f32 0.0, %v6378
    %v6380 = vpop.f32.mrb[0].mxu0
    %v6381 = vpop.f32.mrb[0].mxu0
    %6382 = vdwg.mxu0
    %v6383 = vadd.f32 %v6243, %v6377
    %v6384 = vadd.f32 %v6244, %v6379
    %vm6385 = vcmp.gt.f32.partialorder %v6383, 0.0
    %vm6386 = vcmp.gt.f32.partialorder %v6384, 0.0
    %v6387 = vmul.f32 %v6383, 0.01
    %v6388 = vmul.f32 %v6384, 0.01
    %v6389 = vsel %vm6385, %v6383, %v6387
    %v6390 = vsel %vm6386, %v6384, %v6388
    %v6391 = vpack.c.bf16 %v6389, %v6389
    %v6392 = vpack.c.bf16 %v6390, %v6390
    %v6393 = vld [vmem:[%s12] sm:$0xf]
    %v6394 = vld [vmem:[%s12 + $0x4] sm:$0xf]
    %v6395 = vld [vmem:[%s12 + $0x8] sm:$0xf]
    %v6396 = vld [vmem:[%s12 + $0xc] sm:$0xf]
    %v6397 = vld [vmem:[%s12 + $0x10] sm:$0xf]
    %v6398 = vld [vmem:[%s12 + $0x14] sm:$0xf]
    %v6399 = vld [vmem:[%s12 + $0x18] sm:$0xf]
    %v6400 = vld [vmem:[%s12 + $0x1c] sm:$0xf]
    %v6401 = vld [vmem:[%s12 + $0x20] sm:$0xf]
    %v6402 = vld [vmem:[%s12 + $0x24] sm:$0xf]
    %v6403 = vld [vmem:[%s12 + $0x28] sm:$0xf]
    %v6404 = vld [vmem:[%s12 + $0x2c] sm:$0xf]
    %v6405 = vld [vmem:[%s12 + $0x30] sm:$0xf]
    %v6406 = vld [vmem:[%s12 + $0x34] sm:$0xf]
    %v6407 = vld [vmem:[%s12 + $0x38] sm:$0xf]
    %v6408 = vld [vmem:[%s12 + $0x3c] sm:$0xf]
    %v6409 = vld [vmem:[%s12 + $0x40] sm:$0xf]
    %v6410 = vld [vmem:[%s12 + $0x44] sm:$0xf]
    %v6411 = vld [vmem:[%s12 + $0x48] sm:$0xf]
    %v6412 = vld [vmem:[%s12 + $0x4c] sm:$0xf]
    %v6413 = vld [vmem:[%s12 + $0x50] sm:$0xf]
    %v6414 = vld [vmem:[%s12 + $0x54] sm:$0xf]
    %v6415 = vld [vmem:[%s12 + $0x58] sm:$0xf]
    %v6416 = vld [vmem:[%s12 + $0x5c] sm:$0xf]
    %v6417 = vld [vmem:[%s12 + $0x60] sm:$0xf]
    %v6418 = vld [vmem:[%s12 + $0x64] sm:$0xf]
    %v6419 = vld [vmem:[%s12 + $0x68] sm:$0xf]
    %v6420 = vld [vmem:[%s12 + $0x6c] sm:$0xf]
    %v6421 = vld [vmem:[%s12 + $0x70] sm:$0xf]
    %v6422 = vld [vmem:[%s12 + $0x74] sm:$0xf]
    %v6423 = vld [vmem:[%s12 + $0x78] sm:$0xf]
    %v6424 = vld [vmem:[%s12 + $0x7c] sm:$0xf]
    %v6425 = vld [vmem:[%s13] sm:$0x1]
    %v6427 = vlaneseq
    %v6428 = vshrl.u32 %v6427, 7
    %v6429 = vsub.s32 0, %v6428
    %v6430 = vrot.slane %v6425, %v6429
    %v6464 = vunpack.c.l.b16 %v6393
    %v6465 = vunpack.c.l.b16 %v6394
    %v6466 = vunpack.c.l.b16 %v6395
    %v6467 = vunpack.c.l.b16 %v6396
    %v6468 = vunpack.c.l.b16 %v6397
    %v6469 = vunpack.c.l.b16 %v6398
    %v6470 = vunpack.c.l.b16 %v6399
    %v6471 = vunpack.c.l.b16 %v6400
    %v6472 = vunpack.c.l.b16 %v6401
    %v6473 = vunpack.c.l.b16 %v6402
    %v6474 = vunpack.c.l.b16 %v6403
    %v6475 = vunpack.c.l.b16 %v6404
    %v6476 = vunpack.c.l.b16 %v6405
    %v6477 = vunpack.c.l.b16 %v6406
    %v6478 = vunpack.c.l.b16 %v6407
    %v6479 = vunpack.c.l.b16 %v6408
    %v6480 = vunpack.c.l.b16 %v6409
    %v6481 = vunpack.c.l.b16 %v6410
    %v6482 = vunpack.c.l.b16 %v6411
    %v6483 = vunpack.c.l.b16 %v6412
    %v6484 = vunpack.c.l.b16 %v6413
    %v6485 = vunpack.c.l.b16 %v6414
    %v6486 = vunpack.c.l.b16 %v6415
    %v6487 = vunpack.c.l.b16 %v6416
    %v6488 = vunpack.c.l.b16 %v6417
    %v6489 = vunpack.c.l.b16 %v6418
    %v6490 = vunpack.c.l.b16 %v6419
    %v6491 = vunpack.c.l.b16 %v6420
    %v6492 = vunpack.c.l.b16 %v6421
    %v6493 = vunpack.c.l.b16 %v6422
    %v6494 = vunpack.c.l.b16 %v6423
    %v6495 = vunpack.c.l.b16 %v6424
    %v6496 = vpack.c.b16 %v6465, %v6464
    %v6497 = vpack.c.b16 %v6467, %v6466
    %v6498 = vpack.c.b16 %v6469, %v6468
    %v6499 = vpack.c.b16 %v6471, %v6470
    %v6500 = vpack.c.b16 %v6473, %v6472
    %v6501 = vpack.c.b16 %v6475, %v6474
    %v6502 = vpack.c.b16 %v6477, %v6476
    %v6503 = vpack.c.b16 %v6479, %v6478
    %v6504 = vpack.c.b16 %v6481, %v6480
    %v6505 = vpack.c.b16 %v6483, %v6482
    %v6506 = vpack.c.b16 %v6485, %v6484
    %v6507 = vpack.c.b16 %v6487, %v6486
    %v6508 = vpack.c.b16 %v6489, %v6488
    %v6509 = vpack.c.b16 %v6491, %v6490
    %v6510 = vpack.c.b16 %v6493, %v6492
    %v6511 = vpack.c.b16 %v6495, %v6494
    %6528 = vmatprep.subr.bf16.mxu0 0
    %6529 = vmatpush1.bf16.msra.mxu0 %v6496
    %6530 = vmatprep.subr.bf16.mxu0 0
    %6531 = vmatpush1.bf16.msra.mxu0 %v6497
    %6532 = vmatprep.subr.bf16.mxu0 0
    %6533 = vmatpush1.bf16.msra.mxu0 %v6498
    %6534 = vmatprep.subr.bf16.mxu0 0
    %6535 = vmatpush1.bf16.msra.mxu0 %v6499
    %6536 = vmatprep.subr.bf16.mxu0 0
    %6537 = vmatpush1.bf16.msra.mxu0 %v6500
    %6538 = vmatprep.subr.bf16.mxu0 0
    %6539 = vmatpush1.bf16.msra.mxu0 %v6501
    %6540 = vmatprep.subr.bf16.mxu0 0
    %6541 = vmatpush1.bf16.msra.mxu0 %v6502
    %6542 = vmatprep.subr.bf16.mxu0 0
    %6543 = vmatpush1.bf16.msra.mxu0 %v6503
    %6544 = vmatprep.subr.bf16.mxu0 0
    %6545 = vmatpush1.bf16.msra.mxu0 %v6504
    %6546 = vmatprep.subr.bf16.mxu0 0
    %6547 = vmatpush1.bf16.msra.mxu0 %v6505
    %6548 = vmatprep.subr.bf16.mxu0 0
    %6549 = vmatpush1.bf16.msra.mxu0 %v6506
    %6550 = vmatprep.subr.bf16.mxu0 0
    %6551 = vmatpush1.bf16.msra.mxu0 %v6507
    %6552 = vmatprep.subr.bf16.mxu0 0
    %6553 = vmatpush1.bf16.msra.mxu0 %v6508
    %6554 = vmatprep.subr.bf16.mxu0 0
    %6555 = vmatpush1.bf16.msra.mxu0 %v6509
    %6556 = vmatprep.subr.bf16.mxu0 0
    %6557 = vmatpush1.bf16.msra.mxu0 %v6510
    %6558 = vmatprep.subr.bf16.mxu0 0
    %6559 = vmatpush1.bf16.msra.mxu0 %v6511
    %6560 = vmatprep.mubr.bf16.mxu0 %v6392
    %6561 = vmatmul.mubr.bf16.gmra.mrb[0].mxu0 %v6391
    %v6562 = vpop.f32.mrb[0].mxu0
    %v6563 = vadd.f32 %v6430, %v6562
    %v6564 = vpop.f32.mrb[0].mxu0
    %v6565 = vpop.f32.mrb[0].mxu0
    %v6566 = vpop.f32.mrb[0].mxu0
    %6567 = vdwg.mxu0
    %6568 = vst [vmem:[#allocation19] sm:$0xff] %v6563
    // Predicated region
    $region98: #{tpu_custom_call.1} parent=1 // pred_check
      _
    $region99: #{tpu_custom_call.1} parent=1 // pred_check_branch
      %6570 = sbr.rel (0) target = $region101
    $region100: #{tpu_custom_call.1} parent=1 // pred_region
      %s6572 = ssub.s32 128, 128
      %6573 = vsyncadd [#allocation4], %s6572
      %s6575 = sshll.u32 [#allocation19], 4
      %s6576 = int_to_ptr.vmem [resolvable:$true] %s6575
      %6578 = dma.vmem_to_hbm [thread:$0]  %s6576, 128, %s14, [#allocation4]
    $region101: #{tpu_custom_call.1} parent=1 // pred_fallthru
      _
    // Predicated region
    $region102: #{tpu_custom_call.1} parent=1 // pred_check
      _
    $region103: #{tpu_custom_call.1} parent=1 // pred_check_branch
      %6580 = sbr.rel (0) target = $region105
    $region104: #{tpu_custom_call.1} parent=1 // pred_region
      %6581 = dma.done [#allocation4], 128
    $region105: #{tpu_custom_call.1} parent=1 // pred_fallthru
      _
    %6582 = vsyncpa [#allocation3], 1
    %6583 = vsyncpa [#allocation6], 1
    %6584 = vsyncpa [#allocation9], 1
    %6585 = vsyncpa [#allocation12], 1
    %6586 = vsyncpa [#allocation15], 1
    %6587 = vsyncpa [#allocation18], 1
    %6588 = vsyncpa [#allocation4], 1

</llo_original>
